<compile_context>
chip_gen: v7x
topology: tpu7x:2x2x1
jax: 0.10.0
libtpu: 0.0.40
codegen_flags: <defaults>
</compile_context>

<pallas_src>
import functools

import jax
import jax.numpy as jnp
from jax import lax
from jax.experimental import pallas as pl
from jax.experimental.pallas import tpu as pltpu

C_IN = 3
C_PAD = 8            # input channels padded 3 -> 8 with zeros
C_MID = 64
C_OUT = 64
KH = KW = 3
NTAP = KH * KW       # 9
K2 = NTAP * C_MID    # 576 (tightly packed im2col K)


def _convblock1_kernel(x_ref, w1_ref, b1_ref, w2_ref, b2_ref, o_ref,
                       h1_ref, patch_ref, *, nb, H, W):
    Ho, Wo = H - (KH - 1), W - (KW - 1)
    Hp, Wp = Ho // 2, Wo // 2
    M = nb * H * W                           # conv2 rows over the full (y, x) grid

    # ---- Conv2d(3,64,k=1): one matmul, f32 accumulation, f32 bias, ReLU. ----
    h1 = jnp.dot(x_ref[...], w1_ref[...], preferred_element_type=jnp.float32)
    h1_ref[...] = jnp.maximum(h1 + b1_ref[...], 0.0).astype(jnp.bfloat16)

    # ---- im2col for Conv2d(64,64,k=3): tap (dy,dx) is rows [dy*W+dx, dy*W+dx+M)
    # of the flat h1 (contiguous row windows -> no gather relayouts).  Taps are
    # packed tightly (K=576) and written as 128-lane pairs + one 64-lane tail. ----
    offs = [dy * W + dx for dy in range(KH) for dx in range(KW)]
    for p in range(NTAP // 2):
        a, b = offs[2 * p], offs[2 * p + 1]
        patch_ref[:, 2 * p * C_MID:(2 * p + 2) * C_MID] = jnp.concatenate(
            [h1_ref[a:a + M, :], h1_ref[b:b + M, :]], axis=-1)
    last = offs[NTAP - 1]
    patch_ref[:, (NTAP - 1) * C_MID:] = h1_ref[last:last + M, :]

    # ---- One K=576 matmul (MXU accumulates across all 9 taps), bias + ReLU. ----
    acc = jnp.dot(patch_ref[...], w2_ref[...], preferred_element_type=jnp.float32)
    h2 = jnp.maximum(acc + b2_ref[...], 0.0).reshape(nb, H, W, C_OUT)

    # ---- MaxPool2d(2, stride=2), floor mode, vectorized over the whole block.
    # Only the valid conv2 region [:Ho, :Wo) is ever read. ----
    tw = h2[:, :2 * Hp, :2 * Wp, :].reshape(nb, 2 * Hp, Wp, 2, C_OUT)
    wmax = jnp.maximum(tw[:, :, :, 0, :], tw[:, :, :, 1, :])        # (nb, 2Hp, Wp, C)
    th = wmax.reshape(nb, Hp, 2, Wp, C_OUT)
    hp = jnp.maximum(th[:, :, 0, :, :], th[:, :, 1, :, :])          # (nb, Hp, Wp, C)

    # single lane-dense store (last dim = Wp*C_OUT)
    o_ref[...] = hp.reshape(nb, Hp, Wp * C_OUT).astype(o_ref.dtype)


def _num_tensorcores():
    try:
        kind = jax.devices()[0].device_kind.lower()
    except Exception:
        return 1
    return 2 if any(t in kind for t in ("v7", "7x", "v4", "v5p")) else 1


def _vmem_capacity_bytes():
    try:
        return int(pltpu.get_tpu_info().vmem_capacity_bytes)
    except Exception:
        return 64 * 2 ** 20


def convblock1_forward(x_nchw, params):
    """x_nchw: (N, 3, H, W) f32 -> (N, 64, (H-2)//2, (W-2)//2) f32."""
    w1, b1, w2, b2 = params          # (3,64), (64,), (3,3,64,64) HWIO, (64,)
    N, cin, H, W = x_nchw.shape
    assert cin == C_IN and H >= KH and W >= KW
    Ho, Wo = H - (KH - 1), W - (KW - 1)
    Hp, Wp = Ho // 2, Wo // 2

    # ---- images per grid step from a per-chip VMEM budget; keep >= 2 grid steps
    # only when the chip has 2+ TensorCores (megacore / v7x). ----
    per_image = H * W * (
        K2 * 2              # patch scratch (bf16)
        + C_MID * 2         # flat h1 scratch (bf16)
        + C_MID * 4 * 2     # f32 conv2 result + pooling intermediates (headroom)
        + C_PAD * 2 * 2     # double-buffered input block (bf16)
        + C_OUT * 2         # double-buffered f32 output block (/4 spatial * 4 B)
    )
    fixed = 2 * 2 ** 20
    budget = max(4 * 2 ** 20, int(0.4 * _vmem_capacity_bytes()))
    nb_cap = max(1, (budget - fixed) // per_image)
    if _num_tensorcores() >= 2 and N >= 2:
        nb_cap = min(nb_cap, N // 2)
    nb_cap = min(int(nb_cap), N, 64)
    nb = next(c for c in range(nb_cap, 0, -1) if N % c == 0)
    G = N // nb

    PAD = ((2 * W + 2 + 7) // 8) * 8        # zero slack rows so tap windows stay in-bounds
    M = nb * H * W
    Mp = M + PAD

    # ---- flat bf16 input: (G*Mp, 8), channels padded with zeros, PAD zero rows/group ----
    x = jnp.transpose(x_nchw, (0, 2, 3, 1)).astype(jnp.float32)             # NHWC
    x = jnp.pad(x, ((0, 0), (0, 0), (0, 0), (0, C_PAD - C_IN)))
    x = x.reshape(G, M, C_PAD)
    x = jnp.pad(x, ((0, 0), (0, PAD), (0, 0)))
    x = x.reshape(G * Mp, C_PAD).astype(jnp.bfloat16)

    w1p = jnp.pad(w1.astype(jnp.float32),
                  ((0, C_PAD - C_IN), (0, 0))).astype(jnp.bfloat16)          # (8, 64)
    b1r = b1.reshape(1, C_MID).astype(jnp.float32)
    w2r = w2.astype(jnp.float32).reshape(K2, C_OUT).astype(jnp.bfloat16)     # (576, 64)
    b2r = b2.reshape(1, C_OUT).astype(jnp.float32)

    flops = N * H * W * 2 * (C_PAD * C_MID + K2 * C_OUT)
    bytes_accessed = int(x.size * 2 + w1p.size * 2 + w2r.size * 2
                         + (b1r.size + b2r.size) * 4 + N * Hp * Wp * C_OUT * 4)
    vmem_limit = int(min(0.9 * _vmem_capacity_bytes(),
                         max(32 * 2 ** 20, 2 * (fixed + nb * per_image))))

    kernel = functools.partial(_convblock1_kernel, nb=nb, H=H, W=W)

    out = pl.pallas_call(
        kernel,
        out_shape=jax.ShapeDtypeStruct((N, Hp, Wp * C_OUT), jnp.float32),
        grid_spec=pltpu.PrefetchScalarGridSpec(
            num_scalar_prefetch=0,
            grid=(G,),
            in_specs=[
                pl.BlockSpec((Mp, C_PAD), lambda n: (n, 0)),
                pl.BlockSpec((C_PAD, C_MID), lambda n: (0, 0)),
                pl.BlockSpec((1, C_MID), lambda n: (0, 0)),
                pl.BlockSpec((K2, C_OUT), lambda n: (0, 0)),
                pl.BlockSpec((1, C_OUT), lambda n: (0, 0)),
            ],
            out_specs=pl.BlockSpec((nb, Hp, Wp * C_OUT), lambda n: (n, 0, 0)),
            scratch_shapes=[
                pltpu.VMEM((Mp, C_MID), jnp.bfloat16),      # flat h1
                pltpu.VMEM((M, K2), jnp.bfloat16),          # tightly packed im2col patch
            ],
        ),
        compiler_params=pltpu.CompilerParams(
            dimension_semantics=("parallel",),
            vmem_limit_bytes=vmem_limit),
        cost_estimate=pl.CostEstimate(
            flops=flops, transcendentals=0, bytes_accessed=bytes_accessed),
    )(x, w1p, b1r, w2r, b2r)

    out = out.reshape(N, Hp, Wp, C_OUT)
    return jnp.transpose(out, (0, 3, 1, 2))                                  # NCHW


def convblock1_reference(x_nchw, params):
    """Plain-JAX f32 reference matching the PyTorch module semantics."""
    w1, b1, w2, b2 = params
    x = jnp.transpose(x_nchw, (0, 2, 3, 1)).astype(jnp.float32)              # NHWC
    y = jnp.einsum('nhwc,co->nhwo', x, w1) + b1
    y = jnp.maximum(y, 0.0)
    y = lax.conv_general_dilated(y, w2, (1, 1), 'VALID',
                                 dimension_numbers=('NHWC', 'HWIO', 'NHWC')) + b2
    y = jnp.maximum(y, 0.0)
    y = lax.reduce_window(y, -jnp.inf, lax.max,
                          (1, 2, 2, 1), (1, 2, 2, 1), 'VALID')
    return jnp.transpose(y, (0, 3, 1, 2))


if __name__ == "__main__":
    key = jax.random.PRNGKey(0)
    kx, k1, k2, k3, k4 = jax.random.split(key, 5)

    # small shapes consistent with the module: NCHW input, 3 channels required
    x = jax.random.normal(kx, (2, 3, 16, 16), jnp.float32)

    w1 = 0.2 * jax.random.normal(k1, (C_IN, C_MID), jnp.float32)             # IO
    b1 = 0.1 * jax.random.normal(k2, (C_MID,), jnp.float32)
    w2 = 0.05 * jax.random.normal(k3, (KH, KW, C_MID, C_OUT), jnp.float32)   # HWIO
    b2 = 0.1 * jax.random.normal(k4, (C_OUT,), jnp.float32)
    params = (w1, b1, w2, b2)

    out = convblock1_forward(x, params)
    out = jax.block_until_ready(out)

    ref = convblock1_reference(x, params)
    assert out.shape == (2, C_OUT, 7, 7), out.shape
    # bf16 MXU inputs with f32 accumulation -> slightly looser tolerance than pure f32
    assert jnp.allclose(out, ref, rtol=2e-2, atol=2e-2), \
        float(jnp.max(jnp.abs(out - ref)))

    print("KERNEL_OK")
</pallas_src>

<mosaic_0001>
module attributes {stable_mosaic.version = 11 : i64} {
  func.func @_convblock1_kernel(%arg0: i32, %arg1: memref<552x8xbf16, #tpu.memory_space<vmem>>, %arg2: memref<8x64xbf16, #tpu.memory_space<vmem>>, %arg3: memref<1x64xf32, #tpu.memory_space<vmem>>, %arg4: memref<576x64xbf16, #tpu.memory_space<vmem>>, %arg5: memref<1x64xf32, #tpu.memory_space<vmem>>, %arg6: memref<2x7x448xf32, #tpu.memory_space<vmem>>, %arg7: memref<552x64xbf16, #tpu.memory_space<vmem>>, %arg8: memref<512x576xbf16, #tpu.memory_space<vmem>>) attributes {dimension_semantics = [#tpu.dimension_semantics<parallel>], iteration_bounds = array<i64: 1>, scalar_prefetch = 0 : i64, scratch_operands = 2 : i64, tpu.core_type = #tpu.core_type<tc>, window_params = [{transform_indices = @transform_0, window_bounds = array<i64: 552, 8>}, {pipeline_mode = #tpu.pipeline_mode<synchronous>, transform_indices = @transform_1, window_bounds = array<i64: 8, 64>}, {pipeline_mode = #tpu.pipeline_mode<synchronous>, transform_indices = @transform_2, window_bounds = array<i64: 1, 64>}, {pipeline_mode = #tpu.pipeline_mode<synchronous>, transform_indices = @transform_3, window_bounds = array<i64: 576, 64>}, {pipeline_mode = #tpu.pipeline_mode<synchronous>, transform_indices = @transform_4, window_bounds = array<i64: 1, 64>}, {transform_indices = @transform_5, window_bounds = array<i64: 2, 7, 448>}]} {
    %c0 = arith.constant 0 : index
    %c0_0 = arith.constant 0 : index
    %0 = vector.load %arg1[%c0, %c0_0] : memref<552x8xbf16, #tpu.memory_space<vmem>>, vector<552x8xbf16>
    %c0_1 = arith.constant 0 : index
    %c0_2 = arith.constant 0 : index
    %1 = vector.load %arg2[%c0_1, %c0_2] : memref<8x64xbf16, #tpu.memory_space<vmem>>, vector<8x64xbf16>
    %cst = arith.constant dense<0.000000e+00> : vector<552x64xf32>
    %2 = tpu.matmul %0, %1, %cst {dimension_numbers = #tpu.dot_dimension_numbers<[1], [0], [0], [1], [0, 0, 1, 1], [], []>} : vector<552x8xbf16>, vector<8x64xbf16>, vector<552x64xf32> -> vector<552x64xf32>
    %c0_3 = arith.constant 0 : index
    %c0_4 = arith.constant 0 : index
    %3 = vector.load %arg3[%c0_3, %c0_4] : memref<1x64xf32, #tpu.memory_space<vmem>>, vector<1x64xf32>
    %4 = vector.broadcast %3 : vector<1x64xf32> to vector<552x64xf32>
    %5 = arith.addf %2, %4 : vector<552x64xf32>
    %cst_5 = arith.constant 0.000000e+00 : f32
    %6 = vector.broadcast %cst_5 : f32 to vector<552x64xf32>
    %7 = arith.maximumf %5, %6 : vector<552x64xf32>
    %8 = arith.truncf %7 : vector<552x64xf32> to vector<552x64xbf16>
    %c0_6 = arith.constant 0 : index
    %c0_7 = arith.constant 0 : index
    %9 = vector.load %arg7[%c0_6, %c0_7] : memref<552x64xbf16, #tpu.memory_space<vmem>>, vector<552x64xbf16>
    tpu.vector_store %arg7[%c0_6, %c0_7], %8 {strides = array<i32>} : memref<552x64xbf16, #tpu.memory_space<vmem>>, vector<552x64xbf16>,
    %c0_8 = arith.constant 0 : index
    %c0_9 = arith.constant 0 : index
    %10 = vector.load %arg7[%c0_8, %c0_9] : memref<552x64xbf16, #tpu.memory_space<vmem>>, vector<512x64xbf16>
    %c1 = arith.constant 1 : index
    %c0_10 = arith.constant 0 : index
    %11 = vector.load %arg7[%c1, %c0_10] : memref<552x64xbf16, #tpu.memory_space<vmem>>, vector<512x64xbf16>
    %12 = tpu.concatenate %10, %11 in 1 : vector<512x64xbf16>, vector<512x64xbf16> -> vector<512x128xbf16>
    %c0_11 = arith.constant 0 : index
    %c0_12 = arith.constant 0 : index
    %13 = vector.load %arg8[%c0_11, %c0_12] : memref<512x576xbf16, #tpu.memory_space<vmem>>, vector<512x128xbf16>
    tpu.vector_store %arg8[%c0_11, %c0_12], %12 {strides = array<i32>} : memref<512x576xbf16, #tpu.memory_space<vmem>>, vector<512x128xbf16>,
    %c2 = arith.constant 2 : index
    %c0_13 = arith.constant 0 : index
    %14 = vector.load %arg7[%c2, %c0_13] : memref<552x64xbf16, #tpu.memory_space<vmem>>, vector<512x64xbf16>
    %c16 = arith.constant 16 : index
    %c0_14 = arith.constant 0 : index
    %15 = vector.load %arg7[%c16, %c0_14] : memref<552x64xbf16, #tpu.memory_space<vmem>>, vector<512x64xbf16>
    %16 = tpu.concatenate %14, %15 in 1 : vector<512x64xbf16>, vector<512x64xbf16> -> vector<512x128xbf16>
    %c0_15 = arith.constant 0 : index
    %c128 = arith.constant 128 : index
    %17 = vector.load %arg8[%c0_15, %c128] : memref<512x576xbf16, #tpu.memory_space<vmem>>, vector<512x128xbf16>
    tpu.vector_store %arg8[%c0_15, %c128], %16 {strides = array<i32>} : memref<512x576xbf16, #tpu.memory_space<vmem>>, vector<512x128xbf16>,
    %c17 = arith.constant 17 : index
    %c0_16 = arith.constant 0 : index
    %18 = vector.load %arg7[%c17, %c0_16] : memref<552x64xbf16, #tpu.memory_space<vmem>>, vector<512x64xbf16>
    %c18 = arith.constant 18 : index
    %c0_17 = arith.constant 0 : index
    %19 = vector.load %arg7[%c18, %c0_17] : memref<552x64xbf16, #tpu.memory_space<vmem>>, vector<512x64xbf16>
    %20 = tpu.concatenate %18, %19 in 1 : vector<512x64xbf16>, vector<512x64xbf16> -> vector<512x128xbf16>
    %c0_18 = arith.constant 0 : index
    %c256 = arith.constant 256 : index
    %21 = vector.load %arg8[%c0_18, %c256] : memref<512x576xbf16, #tpu.memory_space<vmem>>, vector<512x128xbf16>
    tpu.vector_store %arg8[%c0_18, %c256], %20 {strides = array<i32>} : memref<512x576xbf16, #tpu.memory_space<vmem>>, vector<512x128xbf16>,
    %c32 = arith.constant 32 : index
    %c0_19 = arith.constant 0 : index
    %22 = vector.load %arg7[%c32, %c0_19] : memref<552x64xbf16, #tpu.memory_space<vmem>>, vector<512x64xbf16>
    %c33 = arith.constant 33 : index
    %c0_20 = arith.constant 0 : index
    %23 = vector.load %arg7[%c33, %c0_20] : memref<552x64xbf16, #tpu.memory_space<vmem>>, vector<512x64xbf16>
    %24 = tpu.concatenate %22, %23 in 1 : vector<512x64xbf16>, vector<512x64xbf16> -> vector<512x128xbf16>
    %c0_21 = arith.constant 0 : index
    %c384 = arith.constant 384 : index
    %25 = vector.load %arg8[%c0_21, %c384] : memref<512x576xbf16, #tpu.memory_space<vmem>>, vector<512x128xbf16>
    tpu.vector_store %arg8[%c0_21, %c384], %24 {strides = array<i32>} : memref<512x576xbf16, #tpu.memory_space<vmem>>, vector<512x128xbf16>,
    %c34 = arith.constant 34 : index
    %c0_22 = arith.constant 0 : index
    %26 = vector.load %arg7[%c34, %c0_22] : memref<552x64xbf16, #tpu.memory_space<vmem>>, vector<512x64xbf16>
    %c0_23 = arith.constant 0 : index
    %c512 = arith.constant 512 : index
    %27 = vector.load %arg8[%c0_23, %c512] : memref<512x576xbf16, #tpu.memory_space<vmem>>, vector<512x64xbf16>
    tpu.vector_store %arg8[%c0_23, %c512], %26 {strides = array<i32>} : memref<512x576xbf16, #tpu.memory_space<vmem>>, vector<512x64xbf16>,
    %c0_24 = arith.constant 0 : index
    %c0_25 = arith.constant 0 : index
    %28 = vector.load %arg8[%c0_24, %c0_25] : memref<512x576xbf16, #tpu.memory_space<vmem>>, vector<512x576xbf16>
    %c0_26 = arith.constant 0 : index
    %c0_27 = arith.constant 0 : index
    %29 = vector.load %arg4[%c0_26, %c0_27] : memref<576x64xbf16, #tpu.memory_space<vmem>>, vector<576x64xbf16>
    %cst_28 = arith.constant dense<0.000000e+00> : vector<512x64xf32>
    %30 = tpu.matmul %28, %29, %cst_28 {dimension_numbers = #tpu.dot_dimension_numbers<[1], [0], [0], [1], [0, 0, 1, 1], [], []>} : vector<512x576xbf16>, vector<576x64xbf16>, vector<512x64xf32> -> vector<512x64xf32>
    %c0_29 = arith.constant 0 : index
    %c0_30 = arith.constant 0 : index
    %31 = vector.load %arg5[%c0_29, %c0_30] : memref<1x64xf32, #tpu.memory_space<vmem>>, vector<1x64xf32>
    %32 = vector.broadcast %31 : vector<1x64xf32> to vector<512x64xf32>
    %33 = arith.addf %30, %32 : vector<512x64xf32>
    %cst_31 = arith.constant 0.000000e+00 : f32
    %34 = vector.broadcast %cst_31 : f32 to vector<512x64xf32>
    %35 = arith.maximumf %33, %34 : vector<512x64xf32>
    %36 = vector.shape_cast %35 : vector<512x64xf32> to vector<2x16x16x64xf32>
    %37 = vector.extract_strided_slice %36 {offsets = [0, 0, 0, 0], sizes = [2, 14, 14, 64], strides = [1, 1, 1, 1]} : vector<2x16x16x64xf32> to vector<2x14x14x64xf32>
    %38 = vector.shape_cast %37 : vector<2x14x14x64xf32> to vector<2x14x7x2x64xf32>
    %39 = vector.extract_strided_slice %38 {offsets = [0, 0, 0, 0, 0], sizes = [2, 14, 7, 1, 64], strides = [1, 1, 1, 1, 1]} : vector<2x14x7x2x64xf32> to vector<2x14x7x1x64xf32>
    %40 = vector.shape_cast %39 : vector<2x14x7x1x64xf32> to vector<2x14x7x64xf32>
    %41 = vector.extract_strided_slice %38 {offsets = [0, 0, 0, 1, 0], sizes = [2, 14, 7, 1, 64], strides = [1, 1, 1, 1, 1]} : vector<2x14x7x2x64xf32> to vector<2x14x7x1x64xf32>
    %42 = vector.shape_cast %41 : vector<2x14x7x1x64xf32> to vector<2x14x7x64xf32>
    %43 = arith.maximumf %40, %42 : vector<2x14x7x64xf32>
    %44 = vector.shape_cast %43 : vector<2x14x7x64xf32> to vector<2x7x2x7x64xf32>
    %45 = vector.extract_strided_slice %44 {offsets = [0, 0, 0, 0, 0], sizes = [2, 7, 1, 7, 64], strides = [1, 1, 1, 1, 1]} : vector<2x7x2x7x64xf32> to vector<2x7x1x7x64xf32>
    %46 = vector.shape_cast %45 : vector<2x7x1x7x64xf32> to vector<2x7x7x64xf32>
    %47 = vector.extract_strided_slice %44 {offsets = [0, 0, 1, 0, 0], sizes = [2, 7, 1, 7, 64], strides = [1, 1, 1, 1, 1]} : vector<2x7x2x7x64xf32> to vector<2x7x1x7x64xf32>
    %48 = vector.shape_cast %47 : vector<2x7x1x7x64xf32> to vector<2x7x7x64xf32>
    %49 = arith.maximumf %46, %48 : vector<2x7x7x64xf32>
    %50 = vector.shape_cast %49 : vector<2x7x7x64xf32> to vector<2x7x448xf32>
    %c0_32 = arith.constant 0 : index
    %c0_33 = arith.constant 0 : index
    %c0_34 = arith.constant 0 : index
    %51 = vector.load %arg6[%c0_32, %c0_33, %c0_34] : memref<2x7x448xf32, #tpu.memory_space<vmem>>, vector<2x7x448xf32>
    tpu.vector_store %arg6[%c0_32, %c0_33, %c0_34], %50 {strides = array<i32>} : memref<2x7x448xf32, #tpu.memory_space<vmem>>, vector<2x7x448xf32>,
    return
  }
  func.func @transform_0(%arg0: i32) -> (i32, i32) {
    %c0_i32 = arith.constant 0 : i32
    %c0_i32_0 = arith.constant 0 : i32
    return %arg0, %c0_i32 : i32, i32
  }
  func.func @transform_1(%arg0: i32) -> (i32, i32) {
    %c0_i32 = arith.constant 0 : i32
    %c0_i32_0 = arith.constant 0 : i32
    %c0_i32_1 = arith.constant 0 : i32
    return %c0_i32, %c0_i32_0 : i32, i32
  }
  func.func @transform_2(%arg0: i32) -> (i32, i32) {
    %c0_i32 = arith.constant 0 : i32
    %c0_i32_0 = arith.constant 0 : i32
    %c0_i32_1 = arith.constant 0 : i32
    return %c0_i32, %c0_i32_0 : i32, i32
  }
  func.func @transform_3(%arg0: i32) -> (i32, i32) {
    %c0_i32 = arith.constant 0 : i32
    %c0_i32_0 = arith.constant 0 : i32
    %c0_i32_1 = arith.constant 0 : i32
    return %c0_i32, %c0_i32_0 : i32, i32
  }
  func.func @transform_4(%arg0: i32) -> (i32, i32) {
    %c0_i32 = arith.constant 0 : i32
    %c0_i32_0 = arith.constant 0 : i32
    %c0_i32_1 = arith.constant 0 : i32
    return %c0_i32, %c0_i32_0 : i32, i32
  }
  func.func @transform_5(%arg0: i32) -> (i32, i32, i32) {
    %c0_i32 = arith.constant 0 : i32
    %c0_i32_0 = arith.constant 0 : i32
    %c0_i32_1 = arith.constant 0 : i32
    return %arg0, %c0_i32, %c0_i32_0 : i32, i32, i32
  }
}

</mosaic_0001>

<llo_original>
// kernel: tpu_custom_call.1
$region0: #{tpu_custom_call.1}
  #allocation0 [shape = 'u32[]', space=smem, size = 0x4, offset = 0x4, fixed_abs, tag = 'smem constant byte address 0x4 - core index']
  #allocation1 [shape = 'u32[144,128]{1,0:T(1,128)}', space=vmem, size = 0x12000, scoped, tag = 'internal scratch']
  #allocation2 [shape = 'bf16[552,64]{1,0:T(8,128)(2,1)}', space=vmem, size = 0x22800, scoped, tag = 'scratch operand']
  #allocation3 [shape = 'bf16[512,576]{1,0:T(16,128)(2,1)}', space=vmem, size = 0xa0000, scoped, tag = 'scratch operand']
  %s0 = inlined_call_operand.vmem [shape: bf16[552,8], index: 0, kind: input, shape index: {}]
  %s1 = inlined_call_operand.vmem [shape: bf16[8,64], index: 1, kind: input, shape index: {}]
  %s2 = inlined_call_operand.vmem [shape: f32[1,64], index: 2, kind: input, shape index: {}]
  %s3 = inlined_call_operand.vmem [shape: bf16[576,64], index: 3, kind: input, shape index: {}]
  %s4 = inlined_call_operand.vmem [shape: f32[1,64], index: 4, kind: input, shape index: {}]
  %s5 = inlined_call_operand.vmem [shape: f32[2,7,448], index: 5, kind: output, shape index: {}]
  %s6 = sld [smem:[#allocation0]]
  $region30: #{tpu_custom_call.1} parent=0
    _
  %s8 = ssub.s32 1, %s6
  %s9 = scalar_select 0, %s8, %s6
  // Predicated region
  $region2: #{tpu_custom_call.1} parent=0 // pred_check
    _
  $region3: #{tpu_custom_call.1} parent=0 // pred_check_branch
    %11 = sbr.rel (0) target = $region5
  $region4: #{tpu_custom_call.1} parent=0 // pred_region
    _
  $region5: #{tpu_custom_call.1} parent=0 // pred_fallthru
    _
  // Predicated region
  $region6: #{tpu_custom_call.1} parent=0 // pred_check
    _
  $region7: #{tpu_custom_call.1} parent=0 // pred_check_branch
    %13 = sbr.rel (0) target = $region9
  $region8: #{tpu_custom_call.1} parent=0 // pred_region
    _
  $region9: #{tpu_custom_call.1} parent=0 // pred_fallthru
    _
  // Predicated region
  $region10: #{tpu_custom_call.1} parent=0 // pred_check
    _
  $region11: #{tpu_custom_call.1} parent=0 // pred_check_branch
    %15 = sbr.rel (0) target = $region13
  $region12: #{tpu_custom_call.1} parent=0 // pred_region
    _
  $region13: #{tpu_custom_call.1} parent=0 // pred_fallthru
    _
  // Predicated region
  $region14: #{tpu_custom_call.1} parent=0 // pred_check
    _
  $region15: #{tpu_custom_call.1} parent=0 // pred_check_branch
    %17 = sbr.rel (0) target = $region17
  $region16: #{tpu_custom_call.1} parent=0 // pred_region
    _
  $region17: #{tpu_custom_call.1} parent=0 // pred_fallthru
    _
  // Predicated region
  $region18: #{tpu_custom_call.1} parent=0 // pred_check
    _
  $region19: #{tpu_custom_call.1} parent=0 // pred_check_branch
    %19 = sbr.rel (0) target = $region21
  $region20: #{tpu_custom_call.1} parent=0 // pred_region
    _
  $region21: #{tpu_custom_call.1} parent=0 // pred_fallthru
    _
  %v21 = vld [vmem:[%s0] sm:$0xf]
  %v22 = vld [vmem:[%s0 + $0x4] sm:$0xf]
  %v23 = vld [vmem:[%s0 + $0x8] sm:$0xf]
  %v24 = vld [vmem:[%s0 + $0xc] sm:$0xf]
  %v25 = vld [vmem:[%s0 + $0x10] sm:$0xf]
  %v26 = vld [vmem:[%s0 + $0x14] sm:$0xf]
  %v27 = vld [vmem:[%s0 + $0x18] sm:$0xf]
  %v28 = vld [vmem:[%s0 + $0x1c] sm:$0xf]
  %v29 = vld [vmem:[%s0 + $0x20] sm:$0xf]
  %v30 = vld [vmem:[%s0 + $0x24] sm:$0xf]
  %v31 = vld [vmem:[%s0 + $0x28] sm:$0xf]
  %v32 = vld [vmem:[%s0 + $0x2c] sm:$0xf]
  %v33 = vld [vmem:[%s0 + $0x30] sm:$0xf]
  %v34 = vld [vmem:[%s0 + $0x34] sm:$0xf]
  %v35 = vld [vmem:[%s0 + $0x38] sm:$0xf]
  %v36 = vld [vmem:[%s0 + $0x3c] sm:$0xf]
  %v37 = vld [vmem:[%s0 + $0x40] sm:$0xf]
  %v38 = vld [vmem:[%s0 + $0x44] sm:$0xf]
  %v39 = vld [vmem:[%s0 + $0x48] sm:$0xf]
  %v40 = vld [vmem:[%s0 + $0x4c] sm:$0xf]
  %v41 = vld [vmem:[%s0 + $0x50] sm:$0xf]
  %v42 = vld [vmem:[%s0 + $0x54] sm:$0xf]
  %v43 = vld [vmem:[%s0 + $0x58] sm:$0xf]
  %v44 = vld [vmem:[%s0 + $0x5c] sm:$0xf]
  %v45 = vld [vmem:[%s0 + $0x60] sm:$0xf]
  %v46 = vld [vmem:[%s0 + $0x64] sm:$0xf]
  %v47 = vld [vmem:[%s0 + $0x68] sm:$0xf]
  %v48 = vld [vmem:[%s0 + $0x6c] sm:$0xf]
  %v49 = vld [vmem:[%s0 + $0x70] sm:$0xf]
  %v50 = vld [vmem:[%s0 + $0x74] sm:$0xf]
  %v51 = vld [vmem:[%s0 + $0x78] sm:$0xf]
  %v52 = vld [vmem:[%s0 + $0x7c] sm:$0xf]
  %v53 = vld [vmem:[%s0 + $0x80] sm:$0xf]
  %v54 = vld [vmem:[%s0 + $0x84] sm:$0xf]
  %v55 = vld [vmem:[%s0 + $0x88] sm:$0xf]
  %v56 = vld [vmem:[%s0 + $0x8c] sm:$0xf]
  %v57 = vld [vmem:[%s0 + $0x90] sm:$0xf]
  %v58 = vld [vmem:[%s0 + $0x94] sm:$0xf]
  %v59 = vld [vmem:[%s0 + $0x98] sm:$0xf]
  %v60 = vld [vmem:[%s0 + $0x9c] sm:$0xf]
  %v61 = vld [vmem:[%s0 + $0xa0] sm:$0xf]
  %v62 = vld [vmem:[%s0 + $0xa4] sm:$0xf]
  %v63 = vld [vmem:[%s0 + $0xa8] sm:$0xf]
  %v64 = vld [vmem:[%s0 + $0xac] sm:$0xf]
  %v65 = vld [vmem:[%s0 + $0xb0] sm:$0xf]
  %v66 = vld [vmem:[%s0 + $0xb4] sm:$0xf]
  %v67 = vld [vmem:[%s0 + $0xb8] sm:$0xf]
  %v68 = vld [vmem:[%s0 + $0xbc] sm:$0xf]
  %v69 = vld [vmem:[%s0 + $0xc0] sm:$0xf]
  %v70 = vld [vmem:[%s0 + $0xc4] sm:$0xf]
  %v71 = vld [vmem:[%s0 + $0xc8] sm:$0xf]
  %v72 = vld [vmem:[%s0 + $0xcc] sm:$0xf]
  %v73 = vld [vmem:[%s0 + $0xd0] sm:$0xf]
  %v74 = vld [vmem:[%s0 + $0xd4] sm:$0xf]
  %v75 = vld [vmem:[%s0 + $0xd8] sm:$0xf]
  %v76 = vld [vmem:[%s0 + $0xdc] sm:$0xf]
  %v77 = vld [vmem:[%s0 + $0xe0] sm:$0xf]
  %v78 = vld [vmem:[%s0 + $0xe4] sm:$0xf]
  %v79 = vld [vmem:[%s0 + $0xe8] sm:$0xf]
  %v80 = vld [vmem:[%s0 + $0xec] sm:$0xf]
  %v81 = vld [vmem:[%s0 + $0xf0] sm:$0xf]
  %v82 = vld [vmem:[%s0 + $0xf4] sm:$0xf]
  %v83 = vld [vmem:[%s0 + $0xf8] sm:$0xf]
  %v84 = vld [vmem:[%s0 + $0xfc] sm:$0xf]
  %v85 = vld [vmem:[%s0 + $0x100] sm:$0xf]
  %v86 = vld [vmem:[%s0 + $0x104] sm:$0xf]
  %v87 = vld [vmem:[%s0 + $0x108] sm:$0xf]
  %v88 = vld [vmem:[%s0 + $0x10c] sm:$0xf]
  %v89 = vld [vmem:[%s0 + $0x110] sm:$0xf]
  %v90 = vld [vmem:[%s1] sm:$0xf]
  %v91 = vld [vmem:[%s2] sm:$0x1]
  %v93 = vlaneseq
  %v94 = vshrl.u32 %v93, 7
  %v95 = vsub.s32 0, %v94
  %v96 = vrot.slane %v91, %v95
  %v167 = vunpack.c.l.b16 %v21
  %v168 = vunpack.c.l.b16 %v22
  %v169 = vunpack.c.l.b16 %v23
  %v170 = vunpack.c.l.b16 %v24
  %v171 = vunpack.c.l.b16 %v25
  %v172 = vunpack.c.l.b16 %v26
  %v173 = vunpack.c.l.b16 %v27
  %v174 = vunpack.c.l.b16 %v28
  %v175 = vunpack.c.l.b16 %v29
  %v176 = vunpack.c.l.b16 %v30
  %v177 = vunpack.c.l.b16 %v31
  %v178 = vunpack.c.l.b16 %v32
  %v179 = vunpack.c.l.b16 %v33
  %v180 = vunpack.c.l.b16 %v34
  %v181 = vunpack.c.l.b16 %v35
  %v182 = vunpack.c.l.b16 %v36
  %v183 = vunpack.c.l.b16 %v37
  %v184 = vunpack.c.l.b16 %v38
  %v185 = vunpack.c.l.b16 %v39
  %v186 = vunpack.c.l.b16 %v40
  %v187 = vunpack.c.l.b16 %v41
  %v188 = vunpack.c.l.b16 %v42
  %v189 = vunpack.c.l.b16 %v43
  %v190 = vunpack.c.l.b16 %v44
  %v191 = vunpack.c.l.b16 %v45
  %v192 = vunpack.c.l.b16 %v46
  %v193 = vunpack.c.l.b16 %v47
  %v194 = vunpack.c.l.b16 %v48
  %v195 = vunpack.c.l.b16 %v49
  %v196 = vunpack.c.l.b16 %v50
  %v197 = vunpack.c.l.b16 %v51
  %v198 = vunpack.c.l.b16 %v52
  %v199 = vunpack.c.l.b16 %v53
  %v200 = vunpack.c.l.b16 %v54
  %v201 = vunpack.c.l.b16 %v55
  %v202 = vunpack.c.l.b16 %v56
  %v203 = vunpack.c.l.b16 %v57
  %v204 = vunpack.c.l.b16 %v58
  %v205 = vunpack.c.l.b16 %v59
  %v206 = vunpack.c.l.b16 %v60
  %v207 = vunpack.c.l.b16 %v61
  %v208 = vunpack.c.l.b16 %v62
  %v209 = vunpack.c.l.b16 %v63
  %v210 = vunpack.c.l.b16 %v64
  %v211 = vunpack.c.l.b16 %v65
  %v212 = vunpack.c.l.b16 %v66
  %v213 = vunpack.c.l.b16 %v67
  %v214 = vunpack.c.l.b16 %v68
  %v215 = vunpack.c.l.b16 %v69
  %v216 = vunpack.c.l.b16 %v70
  %v217 = vunpack.c.l.b16 %v71
  %v218 = vunpack.c.l.b16 %v72
  %v219 = vunpack.c.l.b16 %v73
  %v220 = vunpack.c.l.b16 %v74
  %v221 = vunpack.c.l.b16 %v75
  %v222 = vunpack.c.l.b16 %v76
  %v223 = vunpack.c.l.b16 %v77
  %v224 = vunpack.c.l.b16 %v78
  %v225 = vunpack.c.l.b16 %v79
  %v226 = vunpack.c.l.b16 %v80
  %v227 = vunpack.c.l.b16 %v81
  %v228 = vunpack.c.l.b16 %v82
  %v229 = vunpack.c.l.b16 %v83
  %v230 = vunpack.c.l.b16 %v84
  %v231 = vunpack.c.l.b16 %v85
  %v232 = vunpack.c.l.b16 %v86
  %v233 = vunpack.c.l.b16 %v87
  %v234 = vunpack.c.l.b16 %v88
  %v235 = vunpack.c.l.b16 %v89
  %v236 = vpack.c.b16 %v168, %v167
  %v237 = vpack.c.b16 %v170, %v169
  %v238 = vpack.c.b16 %v172, %v171
  %v239 = vpack.c.b16 %v174, %v173
  %v240 = vpack.c.b16 %v176, %v175
  %v241 = vpack.c.b16 %v178, %v177
  %v242 = vpack.c.b16 %v180, %v179
  %v243 = vpack.c.b16 %v182, %v181
  %v244 = vpack.c.b16 %v184, %v183
  %v245 = vpack.c.b16 %v186, %v185
  %v246 = vpack.c.b16 %v188, %v187
  %v247 = vpack.c.b16 %v190, %v189
  %v248 = vpack.c.b16 %v192, %v191
  %v249 = vpack.c.b16 %v194, %v193
  %v250 = vpack.c.b16 %v196, %v195
  %v251 = vpack.c.b16 %v198, %v197
  %v252 = vpack.c.b16 %v200, %v199
  %v253 = vpack.c.b16 %v202, %v201
  %v254 = vpack.c.b16 %v204, %v203
  %v255 = vpack.c.b16 %v206, %v205
  %v256 = vpack.c.b16 %v208, %v207
  %v257 = vpack.c.b16 %v210, %v209
  %v258 = vpack.c.b16 %v212, %v211
  %v259 = vpack.c.b16 %v214, %v213
  %v260 = vpack.c.b16 %v216, %v215
  %v261 = vpack.c.b16 %v218, %v217
  %v262 = vpack.c.b16 %v220, %v219
  %v263 = vpack.c.b16 %v222, %v221
  %v264 = vpack.c.b16 %v224, %v223
  %v265 = vpack.c.b16 %v226, %v225
  %v266 = vpack.c.b16 %v228, %v227
  %v267 = vpack.c.b16 %v230, %v229
  %v268 = vpack.c.b16 %v232, %v231
  %v269 = vpack.c.b16 %v234, %v233
  %v270 = vpack.c.b16 %v235, %v235
  %vm271 = vcmask 64512
  %v273 = vsel %vm271, %v236, 0
  %v276 = vsel %vm271, %v237, 0
  %v279 = vsel %vm271, %v238, 0
  %v282 = vsel %vm271, %v239, 0
  %v285 = vsel %vm271, %v240, 0
  %v288 = vsel %vm271, %v241, 0
  %v291 = vsel %vm271, %v242, 0
  %v294 = vsel %vm271, %v243, 0
  %v297 = vsel %vm271, %v244, 0
  %v300 = vsel %vm271, %v245, 0
  %v303 = vsel %vm271, %v246, 0
  %v306 = vsel %vm271, %v247, 0
  %v309 = vsel %vm271, %v248, 0
  %v312 = vsel %vm271, %v249, 0
  %v315 = vsel %vm271, %v250, 0
  %v318 = vsel %vm271, %v251, 0
  %v321 = vsel %vm271, %v252, 0
  %v324 = vsel %vm271, %v253, 0
  %v327 = vsel %vm271, %v254, 0
  %v330 = vsel %vm271, %v255, 0
  %v333 = vsel %vm271, %v256, 0
  %v336 = vsel %vm271, %v257, 0
  %v339 = vsel %vm271, %v258, 0
  %v342 = vsel %vm271, %v259, 0
  %v345 = vsel %vm271, %v260, 0
  %v348 = vsel %vm271, %v261, 0
  %v351 = vsel %vm271, %v262, 0
  %v354 = vsel %vm271, %v263, 0
  %v357 = vsel %vm271, %v264, 0
  %v360 = vsel %vm271, %v265, 0
  %v363 = vsel %vm271, %v266, 0
  %v366 = vsel %vm271, %v267, 0
  %v369 = vsel %vm271, %v268, 0
  %v372 = vsel %vm271, %v269, 0
  %v375 = vsel %vm271, %v270, 0
  %vm377 = vcmask 1043456
  %v379 = vsel %vm377, %v90, 0
  %381 = vmatprep.subr.bf16.mxu0 0
  %382 = vmatpush1.bf16.msra.mxu0 %v379
  %383 = vmatprep.subr.bf16.mxu0 0
  %384 = vmatpush1.bf16.msra.mxu0 0
  %385 = vmatprep.subr.bf16.mxu0 0
  %386 = vmatpush1.bf16.msra.mxu0 0
  %387 = vmatprep.subr.bf16.mxu0 0
  %388 = vmatpush1.bf16.msra.mxu0 0
  %389 = vmatprep.subr.bf16.mxu0 0
  %390 = vmatpush1.bf16.msra.mxu0 0
  %391 = vmatprep.subr.bf16.mxu0 0
  %392 = vmatpush1.bf16.msra.mxu0 0
  %393 = vmatprep.subr.bf16.mxu0 0
  %394 = vmatpush1.bf16.msra.mxu0 0
  %395 = vmatprep.subr.bf16.mxu0 0
  %396 = vmatpush1.bf16.msra.mxu0 0
  %397 = vmatprep.subr.bf16.mxu0 0
  %398 = vmatpush1.bf16.msra.mxu0 0
  %399 = vmatprep.subr.bf16.mxu0 0
  %400 = vmatpush1.bf16.msra.mxu0 0
  %401 = vmatprep.subr.bf16.mxu0 0
  %402 = vmatpush1.bf16.msra.mxu0 0
  %403 = vmatprep.subr.bf16.mxu0 0
  %404 = vmatpush1.bf16.msra.mxu0 0
  %405 = vmatprep.subr.bf16.mxu0 0
  %406 = vmatpush1.bf16.msra.mxu0 0
  %407 = vmatprep.subr.bf16.mxu0 0
  %408 = vmatpush1.bf16.msra.mxu0 0
  %409 = vmatprep.subr.bf16.mxu0 0
  %410 = vmatpush1.bf16.msra.mxu0 0
  %411 = vmatprep.subr.bf16.mxu0 0
  %412 = vmatpush1.bf16.msra.mxu0 0
  %413 = vmatprep.mubr.bf16.mxu0 0
  %414 = vmatmul.mubr.bf16.gmra.mrb[0].mxu0 %v273
  %v415 = vpop.f32.mrb[0].mxu0
  %v416 = vadd.f32 %v96, %v415
  %v417 = vpop.f32.mrb[0].mxu0
  %v418 = vpop.f32.mrb[0].mxu0
  %v419 = vadd.f32 %v96, %v418
  %v420 = vpop.f32.mrb[0].mxu0
  %421 = vmatprep.mubr.bf16.mxu0 0
  %422 = vmatmul.mubr.bf16.gmra.mrb[0].mxu0 %v276
  %v423 = vpop.f32.mrb[0].mxu0
  %v424 = vadd.f32 %v96, %v423
  %v425 = vpop.f32.mrb[0].mxu0
  %v426 = vpop.f32.mrb[0].mxu0
  %v427 = vadd.f32 %v96, %v426
  %v428 = vpop.f32.mrb[0].mxu0
  %429 = vmatprep.mubr.bf16.mxu0 0
  %430 = vmatmul.mubr.bf16.gmra.mrb[0].mxu0 %v279
  %v431 = vpop.f32.mrb[0].mxu0
  %v432 = vadd.f32 %v96, %v431
  %v433 = vpop.f32.mrb[0].mxu0
  %v434 = vpop.f32.mrb[0].mxu0
  %v435 = vadd.f32 %v96, %v434
  %v436 = vpop.f32.mrb[0].mxu0
  %437 = vmatprep.mubr.bf16.mxu0 0
  %438 = vmatmul.mubr.bf16.gmra.mrb[0].mxu0 %v282
  %v439 = vpop.f32.mrb[0].mxu0
  %v440 = vadd.f32 %v96, %v439
  %v441 = vpop.f32.mrb[0].mxu0
  %v442 = vpop.f32.mrb[0].mxu0
  %v443 = vadd.f32 %v96, %v442
  %v444 = vpop.f32.mrb[0].mxu0
  %445 = vmatprep.mubr.bf16.mxu0 0
  %446 = vmatmul.mubr.bf16.gmra.mrb[0].mxu0 %v285
  %v447 = vpop.f32.mrb[0].mxu0
  %v448 = vadd.f32 %v96, %v447
  %v449 = vpop.f32.mrb[0].mxu0
  %v450 = vpop.f32.mrb[0].mxu0
  %v451 = vadd.f32 %v96, %v450
  %v452 = vpop.f32.mrb[0].mxu0
  %453 = vmatprep.mubr.bf16.mxu0 0
  %454 = vmatmul.mubr.bf16.gmra.mrb[0].mxu0 %v288
  %v455 = vpop.f32.mrb[0].mxu0
  %v456 = vadd.f32 %v96, %v455
  %v457 = vpop.f32.mrb[0].mxu0
  %v458 = vpop.f32.mrb[0].mxu0
  %v459 = vadd.f32 %v96, %v458
  %v460 = vpop.f32.mrb[0].mxu0
  %461 = vmatprep.mubr.bf16.mxu0 0
  %462 = vmatmul.mubr.bf16.gmra.mrb[0].mxu0 %v291
  %v463 = vpop.f32.mrb[0].mxu0
  %v464 = vadd.f32 %v96, %v463
  %v465 = vpop.f32.mrb[0].mxu0
  %v466 = vpop.f32.mrb[0].mxu0
  %v467 = vadd.f32 %v96, %v466
  %v468 = vpop.f32.mrb[0].mxu0
  %469 = vmatprep.mubr.bf16.mxu0 0
  %470 = vmatmul.mubr.bf16.gmra.mrb[0].mxu0 %v294
  %v471 = vpop.f32.mrb[0].mxu0
  %v472 = vadd.f32 %v96, %v471
  %v473 = vpop.f32.mrb[0].mxu0
  %v474 = vpop.f32.mrb[0].mxu0
  %v475 = vadd.f32 %v96, %v474
  %v476 = vpop.f32.mrb[0].mxu0
  %477 = vmatprep.mubr.bf16.mxu0 0
  %478 = vmatmul.mubr.bf16.gmra.mrb[0].mxu0 %v297
  %v479 = vpop.f32.mrb[0].mxu0
  %v480 = vadd.f32 %v96, %v479
  %v481 = vpop.f32.mrb[0].mxu0
  %v482 = vpop.f32.mrb[0].mxu0
  %v483 = vadd.f32 %v96, %v482
  %v484 = vpop.f32.mrb[0].mxu0
  %485 = vmatprep.mubr.bf16.mxu0 0
  %486 = vmatmul.mubr.bf16.gmra.mrb[0].mxu0 %v300
  %v487 = vpop.f32.mrb[0].mxu0
  %v488 = vadd.f32 %v96, %v487
  %v489 = vpop.f32.mrb[0].mxu0
  %v490 = vpop.f32.mrb[0].mxu0
  %v491 = vadd.f32 %v96, %v490
  %v492 = vpop.f32.mrb[0].mxu0
  %493 = vmatprep.mubr.bf16.mxu0 0
  %494 = vmatmul.mubr.bf16.gmra.mrb[0].mxu0 %v303
  %v495 = vpop.f32.mrb[0].mxu0
  %v496 = vadd.f32 %v96, %v495
  %v497 = vpop.f32.mrb[0].mxu0
  %v498 = vpop.f32.mrb[0].mxu0
  %v499 = vadd.f32 %v96, %v498
  %v500 = vpop.f32.mrb[0].mxu0
  %501 = vmatprep.mubr.bf16.mxu0 0
  %502 = vmatmul.mubr.bf16.gmra.mrb[0].mxu0 %v306
  %v503 = vpop.f32.mrb[0].mxu0
  %v504 = vadd.f32 %v96, %v503
  %v505 = vpop.f32.mrb[0].mxu0
  %v506 = vpop.f32.mrb[0].mxu0
  %v507 = vadd.f32 %v96, %v506
  %v508 = vpop.f32.mrb[0].mxu0
  %509 = vmatprep.mubr.bf16.mxu0 0
  %510 = vmatmul.mubr.bf16.gmra.mrb[0].mxu0 %v309
  %v511 = vpop.f32.mrb[0].mxu0
  %v512 = vadd.f32 %v96, %v511
  %v513 = vpop.f32.mrb[0].mxu0
  %v514 = vpop.f32.mrb[0].mxu0
  %v515 = vadd.f32 %v96, %v514
  %v516 = vpop.f32.mrb[0].mxu0
  %517 = vmatprep.mubr.bf16.mxu0 0
  %518 = vmatmul.mubr.bf16.gmra.mrb[0].mxu0 %v312
  %v519 = vpop.f32.mrb[0].mxu0
  %v520 = vadd.f32 %v96, %v519
  %v521 = vpop.f32.mrb[0].mxu0
  %v522 = vpop.f32.mrb[0].mxu0
  %v523 = vadd.f32 %v96, %v522
  %v524 = vpop.f32.mrb[0].mxu0
  %525 = vmatprep.mubr.bf16.mxu0 0
  %526 = vmatmul.mubr.bf16.gmra.mrb[0].mxu0 %v315
  %v527 = vpop.f32.mrb[0].mxu0
  %v528 = vadd.f32 %v96, %v527
  %v529 = vpop.f32.mrb[0].mxu0
  %v530 = vpop.f32.mrb[0].mxu0
  %v531 = vadd.f32 %v96, %v530
  %v532 = vpop.f32.mrb[0].mxu0
  %533 = vmatprep.mubr.bf16.mxu0 0
  %534 = vmatmul.mubr.bf16.gmra.mrb[0].mxu0 %v318
  %v535 = vpop.f32.mrb[0].mxu0
  %v536 = vadd.f32 %v96, %v535
  %v537 = vpop.f32.mrb[0].mxu0
  %v538 = vpop.f32.mrb[0].mxu0
  %v539 = vadd.f32 %v96, %v538
  %v540 = vpop.f32.mrb[0].mxu0
  %541 = vmatprep.mubr.bf16.mxu0 0
  %542 = vmatmul.mubr.bf16.gmra.mrb[0].mxu0 %v321
  %v543 = vpop.f32.mrb[0].mxu0
  %v544 = vadd.f32 %v96, %v543
  %v545 = vpop.f32.mrb[0].mxu0
  %v546 = vpop.f32.mrb[0].mxu0
  %v547 = vadd.f32 %v96, %v546
  %v548 = vpop.f32.mrb[0].mxu0
  %549 = vmatprep.mubr.bf16.mxu0 0
  %550 = vmatmul.mubr.bf16.gmra.mrb[0].mxu0 %v324
  %v551 = vpop.f32.mrb[0].mxu0
  %v552 = vadd.f32 %v96, %v551
  %v553 = vpop.f32.mrb[0].mxu0
  %v554 = vpop.f32.mrb[0].mxu0
  %v555 = vadd.f32 %v96, %v554
  %v556 = vpop.f32.mrb[0].mxu0
  %557 = vmatprep.mubr.bf16.mxu0 0
  %558 = vmatmul.mubr.bf16.gmra.mrb[0].mxu0 %v327
  %v559 = vpop.f32.mrb[0].mxu0
  %v560 = vadd.f32 %v96, %v559
  %v561 = vpop.f32.mrb[0].mxu0
  %v562 = vpop.f32.mrb[0].mxu0
  %v563 = vadd.f32 %v96, %v562
  %v564 = vpop.f32.mrb[0].mxu0
  %565 = vmatprep.mubr.bf16.mxu0 0
  %566 = vmatmul.mubr.bf16.gmra.mrb[0].mxu0 %v330
  %v567 = vpop.f32.mrb[0].mxu0
  %v568 = vadd.f32 %v96, %v567
  %v569 = vpop.f32.mrb[0].mxu0
  %v570 = vpop.f32.mrb[0].mxu0
  %v571 = vadd.f32 %v96, %v570
  %v572 = vpop.f32.mrb[0].mxu0
  %573 = vmatprep.mubr.bf16.mxu0 0
  %574 = vmatmul.mubr.bf16.gmra.mrb[0].mxu0 %v333
  %v575 = vpop.f32.mrb[0].mxu0
  %v576 = vadd.f32 %v96, %v575
  %v577 = vpop.f32.mrb[0].mxu0
  %v578 = vpop.f32.mrb[0].mxu0
  %v579 = vadd.f32 %v96, %v578
  %v580 = vpop.f32.mrb[0].mxu0
  %581 = vmatprep.mubr.bf16.mxu0 0
  %582 = vmatmul.mubr.bf16.gmra.mrb[0].mxu0 %v336
  %v583 = vpop.f32.mrb[0].mxu0
  %v584 = vadd.f32 %v96, %v583
  %v585 = vpop.f32.mrb[0].mxu0
  %v586 = vpop.f32.mrb[0].mxu0
  %v587 = vadd.f32 %v96, %v586
  %v588 = vpop.f32.mrb[0].mxu0
  %589 = vmatprep.mubr.bf16.mxu0 0
  %590 = vmatmul.mubr.bf16.gmra.mrb[0].mxu0 %v339
  %v591 = vpop.f32.mrb[0].mxu0
  %v592 = vadd.f32 %v96, %v591
  %v593 = vpop.f32.mrb[0].mxu0
  %v594 = vpop.f32.mrb[0].mxu0
  %v595 = vadd.f32 %v96, %v594
  %v596 = vpop.f32.mrb[0].mxu0
  %597 = vmatprep.mubr.bf16.mxu0 0
  %598 = vmatmul.mubr.bf16.gmra.mrb[0].mxu0 %v342
  %v599 = vpop.f32.mrb[0].mxu0
  %v600 = vadd.f32 %v96, %v599
  %v601 = vpop.f32.mrb[0].mxu0
  %v602 = vpop.f32.mrb[0].mxu0
  %v603 = vadd.f32 %v96, %v602
  %v604 = vpop.f32.mrb[0].mxu0
  %605 = vmatprep.mubr.bf16.mxu0 0
  %606 = vmatmul.mubr.bf16.gmra.mrb[0].mxu0 %v345
  %v607 = vpop.f32.mrb[0].mxu0
  %v608 = vadd.f32 %v96, %v607
  %v609 = vpop.f32.mrb[0].mxu0
  %v610 = vpop.f32.mrb[0].mxu0
  %v611 = vadd.f32 %v96, %v610
  %v612 = vpop.f32.mrb[0].mxu0
  %613 = vmatprep.mubr.bf16.mxu0 0
  %614 = vmatmul.mubr.bf16.gmra.mrb[0].mxu0 %v348
  %v615 = vpop.f32.mrb[0].mxu0
  %v616 = vadd.f32 %v96, %v615
  %v617 = vpop.f32.mrb[0].mxu0
  %v618 = vpop.f32.mrb[0].mxu0
  %v619 = vadd.f32 %v96, %v618
  %v620 = vpop.f32.mrb[0].mxu0
  %621 = vmatprep.mubr.bf16.mxu0 0
  %622 = vmatmul.mubr.bf16.gmra.mrb[0].mxu0 %v351
  %v623 = vpop.f32.mrb[0].mxu0
  %v624 = vadd.f32 %v96, %v623
  %v625 = vpop.f32.mrb[0].mxu0
  %v626 = vpop.f32.mrb[0].mxu0
  %v627 = vadd.f32 %v96, %v626
  %v628 = vpop.f32.mrb[0].mxu0
  %629 = vmatprep.mubr.bf16.mxu0 0
  %630 = vmatmul.mubr.bf16.gmra.mrb[0].mxu0 %v354
  %v631 = vpop.f32.mrb[0].mxu0
  %v632 = vadd.f32 %v96, %v631
  %v633 = vpop.f32.mrb[0].mxu0
  %v634 = vpop.f32.mrb[0].mxu0
  %v635 = vadd.f32 %v96, %v634
  %v636 = vpop.f32.mrb[0].mxu0
  %637 = vmatprep.mubr.bf16.mxu0 0
  %638 = vmatmul.mubr.bf16.gmra.mrb[0].mxu0 %v357
  %v639 = vpop.f32.mrb[0].mxu0
  %v640 = vadd.f32 %v96, %v639
  %v641 = vpop.f32.mrb[0].mxu0
  %v642 = vpop.f32.mrb[0].mxu0
  %v643 = vadd.f32 %v96, %v642
  %v644 = vpop.f32.mrb[0].mxu0
  %645 = vmatprep.mubr.bf16.mxu0 0
  %646 = vmatmul.mubr.bf16.gmra.mrb[0].mxu0 %v360
  %v647 = vpop.f32.mrb[0].mxu0
  %v648 = vadd.f32 %v96, %v647
  %v649 = vpop.f32.mrb[0].mxu0
  %v650 = vpop.f32.mrb[0].mxu0
  %v651 = vadd.f32 %v96, %v650
  %v652 = vpop.f32.mrb[0].mxu0
  %653 = vmatprep.mubr.bf16.mxu0 0
  %654 = vmatmul.mubr.bf16.gmra.mrb[0].mxu0 %v363
  %v655 = vpop.f32.mrb[0].mxu0
  %v656 = vadd.f32 %v96, %v655
  %v657 = vpop.f32.mrb[0].mxu0
  %v658 = vpop.f32.mrb[0].mxu0
  %v659 = vadd.f32 %v96, %v658
  %v660 = vpop.f32.mrb[0].mxu0
  %661 = vmatprep.mubr.bf16.mxu0 0
  %662 = vmatmul.mubr.bf16.gmra.mrb[0].mxu0 %v366
  %v663 = vpop.f32.mrb[0].mxu0
  %v664 = vadd.f32 %v96, %v663
  %v665 = vpop.f32.mrb[0].mxu0
  %v666 = vpop.f32.mrb[0].mxu0
  %v667 = vadd.f32 %v96, %v666
  %v668 = vpop.f32.mrb[0].mxu0
  %669 = vmatprep.mubr.bf16.mxu0 0
  %670 = vmatmul.mubr.bf16.gmra.mrb[0].mxu0 %v369
  %v671 = vpop.f32.mrb[0].mxu0
  %v672 = vadd.f32 %v96, %v671
  %v673 = vpop.f32.mrb[0].mxu0
  %v674 = vpop.f32.mrb[0].mxu0
  %v675 = vadd.f32 %v96, %v674
  %v676 = vpop.f32.mrb[0].mxu0
  %677 = vmatprep.mubr.bf16.mxu0 0
  %678 = vmatmul.mubr.bf16.gmra.mrb[0].mxu0 %v372
  %v679 = vpop.f32.mrb[0].mxu0
  %v680 = vadd.f32 %v96, %v679
  %v681 = vpop.f32.mrb[0].mxu0
  %v682 = vpop.f32.mrb[0].mxu0
  %v683 = vadd.f32 %v96, %v682
  %v684 = vpop.f32.mrb[0].mxu0
  %685 = vmatprep.mubr.bf16.mxu0 0
  %686 = vmatmul.mubr.bf16.gmra.mrb[0].mxu0 %v375
  %v687 = vpop.f32.mrb[0].mxu0
  %v688 = vadd.f32 %v96, %v687
  %v689 = vpop.f32.mrb[0].mxu0
  %v690 = vpop.f32.mrb[0].mxu0
  %v691 = vpop.f32.mrb[0].mxu0
  %692 = vdwg.mxu0
  %v693 = vmax.f32 %v416, 0.0
  %v694 = vmax.f32 %v419, 0.0
  %v695 = vmax.f32 %v424, 0.0
  %v696 = vmax.f32 %v427, 0.0
  %v697 = vmax.f32 %v432, 0.0
  %v698 = vmax.f32 %v435, 0.0
  %v699 = vmax.f32 %v440, 0.0
  %v700 = vmax.f32 %v443, 0.0
  %v701 = vmax.f32 %v448, 0.0
  %v702 = vmax.f32 %v451, 0.0
  %v703 = vmax.f32 %v456, 0.0
  %v704 = vmax.f32 %v459, 0.0
  %v705 = vmax.f32 %v464, 0.0
  %v706 = vmax.f32 %v467, 0.0
  %v707 = vmax.f32 %v472, 0.0
  %v708 = vmax.f32 %v475, 0.0
  %v709 = vmax.f32 %v480, 0.0
  %v710 = vmax.f32 %v483, 0.0
  %v711 = vmax.f32 %v488, 0.0
  %v712 = vmax.f32 %v491, 0.0
  %v713 = vmax.f32 %v496, 0.0
  %v714 = vmax.f32 %v499, 0.0
  %v715 = vmax.f32 %v504, 0.0
  %v716 = vmax.f32 %v507, 0.0
  %v717 = vmax.f32 %v512, 0.0
  %v718 = vmax.f32 %v515, 0.0
  %v719 = vmax.f32 %v520, 0.0
  %v720 = vmax.f32 %v523, 0.0
  %v721 = vmax.f32 %v528, 0.0
  %v722 = vmax.f32 %v531, 0.0
  %v723 = vmax.f32 %v536, 0.0
  %v724 = vmax.f32 %v539, 0.0
  %v725 = vmax.f32 %v544, 0.0
  %v726 = vmax.f32 %v547, 0.0
  %v727 = vmax.f32 %v552, 0.0
  %v728 = vmax.f32 %v555, 0.0
  %v729 = vmax.f32 %v560, 0.0
  %v730 = vmax.f32 %v563, 0.0
  %v731 = vmax.f32 %v568, 0.0
  %v732 = vmax.f32 %v571, 0.0
  %v733 = vmax.f32 %v576, 0.0
  %v734 = vmax.f32 %v579, 0.0
  %v735 = vmax.f32 %v584, 0.0
  %v736 = vmax.f32 %v587, 0.0
  %v737 = vmax.f32 %v592, 0.0
  %v738 = vmax.f32 %v595, 0.0
  %v739 = vmax.f32 %v600, 0.0
  %v740 = vmax.f32 %v603, 0.0
  %v741 = vmax.f32 %v608, 0.0
  %v742 = vmax.f32 %v611, 0.0
  %v743 = vmax.f32 %v616, 0.0
  %v744 = vmax.f32 %v619, 0.0
  %v745 = vmax.f32 %v624, 0.0
  %v746 = vmax.f32 %v627, 0.0
  %v747 = vmax.f32 %v632, 0.0
  %v748 = vmax.f32 %v635, 0.0
  %v749 = vmax.f32 %v640, 0.0
  %v750 = vmax.f32 %v643, 0.0
  %v751 = vmax.f32 %v648, 0.0
  %v752 = vmax.f32 %v651, 0.0
  %v753 = vmax.f32 %v656, 0.0
  %v754 = vmax.f32 %v659, 0.0
  %v755 = vmax.f32 %v664, 0.0
  %v756 = vmax.f32 %v667, 0.0
  %v757 = vmax.f32 %v672, 0.0
  %v758 = vmax.f32 %v675, 0.0
  %v759 = vmax.f32 %v680, 0.0
  %v760 = vmax.f32 %v683, 0.0
  %v761 = vmax.f32 %v688, 0.0
  %v762 = vpack.c.bf16 %v694, %v693
  %v763 = vpack.c.bf16 %v696, %v695
  %v764 = vpack.c.bf16 %v698, %v697
  %v765 = vpack.c.bf16 %v700, %v699
  %v766 = vpack.c.bf16 %v702, %v701
  %v767 = vpack.c.bf16 %v704, %v703
  %v768 = vpack.c.bf16 %v706, %v705
  %v769 = vpack.c.bf16 %v708, %v707
  %v770 = vpack.c.bf16 %v710, %v709
  %v771 = vpack.c.bf16 %v712, %v711
  %v772 = vpack.c.bf16 %v714, %v713
  %v773 = vpack.c.bf16 %v716, %v715
  %v774 = vpack.c.bf16 %v718, %v717
  %v775 = vpack.c.bf16 %v720, %v719
  %v776 = vpack.c.bf16 %v722, %v721
  %v777 = vpack.c.bf16 %v724, %v723
  %v778 = vpack.c.bf16 %v726, %v725
  %v779 = vpack.c.bf16 %v728, %v727
  %v780 = vpack.c.bf16 %v730, %v729
  %v781 = vpack.c.bf16 %v732, %v731
  %v782 = vpack.c.bf16 %v734, %v733
  %v783 = vpack.c.bf16 %v736, %v735
  %v784 = vpack.c.bf16 %v738, %v737
  %v785 = vpack.c.bf16 %v740, %v739
  %v786 = vpack.c.bf16 %v742, %v741
  %v787 = vpack.c.bf16 %v744, %v743
  %v788 = vpack.c.bf16 %v746, %v745
  %v789 = vpack.c.bf16 %v748, %v747
  %v790 = vpack.c.bf16 %v750, %v749
  %v791 = vpack.c.bf16 %v752, %v751
  %v792 = vpack.c.bf16 %v754, %v753
  %v793 = vpack.c.bf16 %v756, %v755
  %v794 = vpack.c.bf16 %v758, %v757
  %v795 = vpack.c.bf16 %v760, %v759
  %v796 = vpack.c.bf16 %v761, %v761
  %v832 = vunpack.c.l.b16 %v762
  %v833 = vunpack.c.h.b16 %v762
  %v834 = vunpack.c.l.b16 %v763
  %v835 = vunpack.c.h.b16 %v763
  %v836 = vunpack.c.l.b16 %v764
  %v837 = vunpack.c.h.b16 %v764
  %v838 = vunpack.c.l.b16 %v765
  %v839 = vunpack.c.h.b16 %v765
  %v840 = vunpack.c.l.b16 %v766
  %v841 = vunpack.c.h.b16 %v766
  %v842 = vunpack.c.l.b16 %v767
  %v843 = vunpack.c.h.b16 %v767
  %v844 = vunpack.c.l.b16 %v768
  %v845 = vunpack.c.h.b16 %v768
  %v846 = vunpack.c.l.b16 %v769
  %v847 = vunpack.c.h.b16 %v769
  %v848 = vunpack.c.l.b16 %v770
  %v849 = vunpack.c.h.b16 %v770
  %v850 = vunpack.c.l.b16 %v771
  %v851 = vunpack.c.h.b16 %v771
  %v852 = vunpack.c.l.b16 %v772
  %v853 = vunpack.c.h.b16 %v772
  %v854 = vunpack.c.l.b16 %v773
  %v855 = vunpack.c.h.b16 %v773
  %v856 = vunpack.c.l.b16 %v774
  %v857 = vunpack.c.h.b16 %v774
  %v858 = vunpack.c.l.b16 %v775
  %v859 = vunpack.c.h.b16 %v775
  %v860 = vunpack.c.l.b16 %v776
  %v861 = vunpack.c.h.b16 %v776
  %v862 = vunpack.c.l.b16 %v777
  %v863 = vunpack.c.h.b16 %v777
  %v864 = vunpack.c.l.b16 %v778
  %v865 = vunpack.c.h.b16 %v778
  %v866 = vunpack.c.l.b16 %v779
  %v867 = vunpack.c.h.b16 %v779
  %v868 = vunpack.c.l.b16 %v780
  %v869 = vunpack.c.h.b16 %v780
  %v870 = vunpack.c.l.b16 %v781
  %v871 = vunpack.c.h.b16 %v781
  %v872 = vunpack.c.l.b16 %v782
  %v873 = vunpack.c.h.b16 %v782
  %v874 = vunpack.c.l.b16 %v783
  %v875 = vunpack.c.h.b16 %v783
  %v876 = vunpack.c.l.b16 %v784
  %v877 = vunpack.c.h.b16 %v784
  %v878 = vunpack.c.l.b16 %v785
  %v879 = vunpack.c.h.b16 %v785
  %v880 = vunpack.c.l.b16 %v786
  %v881 = vunpack.c.h.b16 %v786
  %v882 = vunpack.c.l.b16 %v787
  %v883 = vunpack.c.h.b16 %v787
  %v884 = vunpack.c.l.b16 %v788
  %v885 = vunpack.c.h.b16 %v788
  %v886 = vunpack.c.l.b16 %v789
  %v887 = vunpack.c.h.b16 %v789
  %v888 = vunpack.c.l.b16 %v790
  %v889 = vunpack.c.h.b16 %v790
  %v890 = vunpack.c.l.b16 %v791
  %v891 = vunpack.c.h.b16 %v791
  %v892 = vunpack.c.l.b16 %v792
  %v893 = vunpack.c.h.b16 %v792
  %v894 = vunpack.c.l.b16 %v793
  %v895 = vunpack.c.h.b16 %v793
  %v896 = vunpack.c.l.b16 %v794
  %v897 = vunpack.c.h.b16 %v794
  %v898 = vunpack.c.l.b16 %v795
  %v899 = vunpack.c.h.b16 %v795
  %v900 = vunpack.c.l.b16 %v796
  %v901 = vpack.c.b16 %v832, %v832
  %v902 = vpack.c.b16 %v833, %v833
  %v903 = vpack.c.b16 %v834, %v834
  %v904 = vpack.c.b16 %v835, %v835
  %v905 = vpack.c.b16 %v836, %v836
  %v906 = vpack.c.b16 %v837, %v837
  %v907 = vpack.c.b16 %v838, %v838
  %v908 = vpack.c.b16 %v839, %v839
  %v909 = vpack.c.b16 %v840, %v840
  %v910 = vpack.c.b16 %v841, %v841
  %v911 = vpack.c.b16 %v842, %v842
  %v912 = vpack.c.b16 %v843, %v843
  %v913 = vpack.c.b16 %v844, %v844
  %v914 = vpack.c.b16 %v845, %v845
  %v915 = vpack.c.b16 %v846, %v846
  %v916 = vpack.c.b16 %v847, %v847
  %v917 = vpack.c.b16 %v848, %v848
  %v918 = vpack.c.b16 %v849, %v849
  %v919 = vpack.c.b16 %v850, %v850
  %v920 = vpack.c.b16 %v851, %v851
  %v921 = vpack.c.b16 %v852, %v852
  %v922 = vpack.c.b16 %v853, %v853
  %v923 = vpack.c.b16 %v854, %v854
  %v924 = vpack.c.b16 %v855, %v855
  %v925 = vpack.c.b16 %v856, %v856
  %v926 = vpack.c.b16 %v857, %v857
  %v927 = vpack.c.b16 %v858, %v858
  %v928 = vpack.c.b16 %v859, %v859
  %v929 = vpack.c.b16 %v860, %v860
  %v930 = vpack.c.b16 %v861, %v861
  %v931 = vpack.c.b16 %v862, %v862
  %v932 = vpack.c.b16 %v863, %v863
  %v933 = vpack.c.b16 %v864, %v864
  %v934 = vpack.c.b16 %v865, %v865
  %v935 = vpack.c.b16 %v866, %v866
  %v936 = vpack.c.b16 %v867, %v867
  %v937 = vpack.c.b16 %v868, %v868
  %v938 = vpack.c.b16 %v869, %v869
  %v939 = vpack.c.b16 %v870, %v870
  %v940 = vpack.c.b16 %v871, %v871
  %v941 = vpack.c.b16 %v872, %v872
  %v942 = vpack.c.b16 %v873, %v873
  %v943 = vpack.c.b16 %v874, %v874
  %v944 = vpack.c.b16 %v875, %v875
  %v945 = vpack.c.b16 %v876, %v876
  %v946 = vpack.c.b16 %v877, %v877
  %v947 = vpack.c.b16 %v878, %v878
  %v948 = vpack.c.b16 %v879, %v879
  %v949 = vpack.c.b16 %v880, %v880
  %v950 = vpack.c.b16 %v881, %v881
  %v951 = vpack.c.b16 %v882, %v882
  %v952 = vpack.c.b16 %v883, %v883
  %v953 = vpack.c.b16 %v884, %v884
  %v954 = vpack.c.b16 %v885, %v885
  %v955 = vpack.c.b16 %v886, %v886
  %v956 = vpack.c.b16 %v887, %v887
  %v957 = vpack.c.b16 %v888, %v888
  %v958 = vpack.c.b16 %v889, %v889
  %v959 = vpack.c.b16 %v890, %v890
  %v960 = vpack.c.b16 %v891, %v891
  %v961 = vpack.c.b16 %v892, %v892
  %v962 = vpack.c.b16 %v893, %v893
  %v963 = vpack.c.b16 %v894, %v894
  %v964 = vpack.c.b16 %v895, %v895
  %v965 = vpack.c.b16 %v896, %v896
  %v966 = vpack.c.b16 %v897, %v897
  %v967 = vpack.c.b16 %v898, %v898
  %v968 = vpack.c.b16 %v899, %v899
  %v969 = vpack.c.b16 %v900, %v900
  %vm1039 = vcmask 519168
  %1040 = vst.msk [vmem:[#allocation2] sm:$0xf] %vm1039, %v901
  %1041 = vst.msk [vmem:[#allocation2 + $0x4] sm:$0xf] %vm1039, %v902
  %1042 = vst.msk [vmem:[#allocation2 + $0x8] sm:$0xf] %vm1039, %v903
  %1043 = vst.msk [vmem:[#allocation2 + $0xc] sm:$0xf] %vm1039, %v904
  %1044 = vst.msk [vmem:[#allocation2 + $0x10] sm:$0xf] %vm1039, %v905
  %1045 = vst.msk [vmem:[#allocation2 + $0x14] sm:$0xf] %vm1039, %v906
  %1046 = vst.msk [vmem:[#allocation2 + $0x18] sm:$0xf] %vm1039, %v907
  %1047 = vst.msk [vmem:[#allocation2 + $0x1c] sm:$0xf] %vm1039, %v908
  %1048 = vst.msk [vmem:[#allocation2 + $0x20] sm:$0xf] %vm1039, %v909
  %1049 = vst.msk [vmem:[#allocation2 + $0x24] sm:$0xf] %vm1039, %v910
  %1050 = vst.msk [vmem:[#allocation2 + $0x28] sm:$0xf] %vm1039, %v911
  %1051 = vst.msk [vmem:[#allocation2 + $0x2c] sm:$0xf] %vm1039, %v912
  %1052 = vst.msk [vmem:[#allocation2 + $0x30] sm:$0xf] %vm1039, %v913
  %1053 = vst.msk [vmem:[#allocation2 + $0x34] sm:$0xf] %vm1039, %v914
  %1054 = vst.msk [vmem:[#allocation2 + $0x38] sm:$0xf] %vm1039, %v915
  %1055 = vst.msk [vmem:[#allocation2 + $0x3c] sm:$0xf] %vm1039, %v916
  %1056 = vst.msk [vmem:[#allocation2 + $0x40] sm:$0xf] %vm1039, %v917
  %1057 = vst.msk [vmem:[#allocation2 + $0x44] sm:$0xf] %vm1039, %v918
  %1058 = vst.msk [vmem:[#allocation2 + $0x48] sm:$0xf] %vm1039, %v919
  %1059 = vst.msk [vmem:[#allocation2 + $0x4c] sm:$0xf] %vm1039, %v920
  %1060 = vst.msk [vmem:[#allocation2 + $0x50] sm:$0xf] %vm1039, %v921
  %1061 = vst.msk [vmem:[#allocation2 + $0x54] sm:$0xf] %vm1039, %v922
  %1062 = vst.msk [vmem:[#allocation2 + $0x58] sm:$0xf] %vm1039, %v923
  %1063 = vst.msk [vmem:[#allocation2 + $0x5c] sm:$0xf] %vm1039, %v924
  %1064 = vst.msk [vmem:[#allocation2 + $0x60] sm:$0xf] %vm1039, %v925
  %1065 = vst.msk [vmem:[#allocation2 + $0x64] sm:$0xf] %vm1039, %v926
  %1066 = vst.msk [vmem:[#allocation2 + $0x68] sm:$0xf] %vm1039, %v927
  %1067 = vst.msk [vmem:[#allocation2 + $0x6c] sm:$0xf] %vm1039, %v928
  %1068 = vst.msk [vmem:[#allocation2 + $0x70] sm:$0xf] %vm1039, %v929
  %1069 = vst.msk [vmem:[#allocation2 + $0x74] sm:$0xf] %vm1039, %v930
  %1070 = vst.msk [vmem:[#allocation2 + $0x78] sm:$0xf] %vm1039, %v931
  %1071 = vst.msk [vmem:[#allocation2 + $0x7c] sm:$0xf] %vm1039, %v932
  %1072 = vst.msk [vmem:[#allocation2 + $0x80] sm:$0xf] %vm1039, %v933
  %1073 = vst.msk [vmem:[#allocation2 + $0x84] sm:$0xf] %vm1039, %v934
  %1074 = vst.msk [vmem:[#allocation2 + $0x88] sm:$0xf] %vm1039, %v935
  %1075 = vst.msk [vmem:[#allocation2 + $0x8c] sm:$0xf] %vm1039, %v936
  %1076 = vst.msk [vmem:[#allocation2 + $0x90] sm:$0xf] %vm1039, %v937
  %1077 = vst.msk [vmem:[#allocation2 + $0x94] sm:$0xf] %vm1039, %v938
  %1078 = vst.msk [vmem:[#allocation2 + $0x98] sm:$0xf] %vm1039, %v939
  %1079 = vst.msk [vmem:[#allocation2 + $0x9c] sm:$0xf] %vm1039, %v940
  %1080 = vst.msk [vmem:[#allocation2 + $0xa0] sm:$0xf] %vm1039, %v941
  %1081 = vst.msk [vmem:[#allocation2 + $0xa4] sm:$0xf] %vm1039, %v942
  %1082 = vst.msk [vmem:[#allocation2 + $0xa8] sm:$0xf] %vm1039, %v943
  %1083 = vst.msk [vmem:[#allocation2 + $0xac] sm:$0xf] %vm1039, %v944
  %1084 = vst.msk [vmem:[#allocation2 + $0xb0] sm:$0xf] %vm1039, %v945
  %1085 = vst.msk [vmem:[#allocation2 + $0xb4] sm:$0xf] %vm1039, %v946
  %1086 = vst.msk [vmem:[#allocation2 + $0xb8] sm:$0xf] %vm1039, %v947
  %1087 = vst.msk [vmem:[#allocation2 + $0xbc] sm:$0xf] %vm1039, %v948
  %1088 = vst.msk [vmem:[#allocation2 + $0xc0] sm:$0xf] %vm1039, %v949
  %1089 = vst.msk [vmem:[#allocation2 + $0xc4] sm:$0xf] %vm1039, %v950
  %1090 = vst.msk [vmem:[#allocation2 + $0xc8] sm:$0xf] %vm1039, %v951
  %1091 = vst.msk [vmem:[#allocation2 + $0xcc] sm:$0xf] %vm1039, %v952
  %1092 = vst.msk [vmem:[#allocation2 + $0xd0] sm:$0xf] %vm1039, %v953
  %1093 = vst.msk [vmem:[#allocation2 + $0xd4] sm:$0xf] %vm1039, %v954
  %1094 = vst.msk [vmem:[#allocation2 + $0xd8] sm:$0xf] %vm1039, %v955
  %1095 = vst.msk [vmem:[#allocation2 + $0xdc] sm:$0xf] %vm1039, %v956
  %1096 = vst.msk [vmem:[#allocation2 + $0xe0] sm:$0xf] %vm1039, %v957
  %1097 = vst.msk [vmem:[#allocation2 + $0xe4] sm:$0xf] %vm1039, %v958
  %1098 = vst.msk [vmem:[#allocation2 + $0xe8] sm:$0xf] %vm1039, %v959
  %1099 = vst.msk [vmem:[#allocation2 + $0xec] sm:$0xf] %vm1039, %v960
  %1100 = vst.msk [vmem:[#allocation2 + $0xf0] sm:$0xf] %vm1039, %v961
  %1101 = vst.msk [vmem:[#allocation2 + $0xf4] sm:$0xf] %vm1039, %v962
  %1102 = vst.msk [vmem:[#allocation2 + $0xf8] sm:$0xf] %vm1039, %v963
  %1103 = vst.msk [vmem:[#allocation2 + $0xfc] sm:$0xf] %vm1039, %v964
  %1104 = vst.msk [vmem:[#allocation2 + $0x100] sm:$0xf] %vm1039, %v965
  %1105 = vst.msk [vmem:[#allocation2 + $0x104] sm:$0xf] %vm1039, %v966
  %1106 = vst.msk [vmem:[#allocation2 + $0x108] sm:$0xf] %vm1039, %v967
  %1107 = vst.msk [vmem:[#allocation2 + $0x10c] sm:$0xf] %vm1039, %v968
  %1108 = vst.msk [vmem:[#allocation2 + $0x110] sm:$0xf] %vm1039, %v969
  %v1109 = vld [vmem:[#allocation2] sm:$0xf]
  %v1110 = vld [vmem:[#allocation2 + $0x4] sm:$0xf]
  %v1111 = vld [vmem:[#allocation2 + $0x8] sm:$0xf]
  %v1112 = vld [vmem:[#allocation2 + $0xc] sm:$0xf]
  %v1113 = vld [vmem:[#allocation2 + $0x10] sm:$0xf]
  %v1114 = vld [vmem:[#allocation2 + $0x14] sm:$0xf]
  %v1115 = vld [vmem:[#allocation2 + $0x18] sm:$0xf]
  %v1116 = vld [vmem:[#allocation2 + $0x1c] sm:$0xf]
  %v1117 = vld [vmem:[#allocation2 + $0x20] sm:$0xf]
  %v1118 = vld [vmem:[#allocation2 + $0x24] sm:$0xf]
  %v1119 = vld [vmem:[#allocation2 + $0x28] sm:$0xf]
  %v1120 = vld [vmem:[#allocation2 + $0x2c] sm:$0xf]
  %v1121 = vld [vmem:[#allocation2 + $0x30] sm:$0xf]
  %v1122 = vld [vmem:[#allocation2 + $0x34] sm:$0xf]
  %v1123 = vld [vmem:[#allocation2 + $0x38] sm:$0xf]
  %v1124 = vld [vmem:[#allocation2 + $0x3c] sm:$0xf]
  %v1125 = vld [vmem:[#allocation2 + $0x40] sm:$0xf]
  %v1126 = vld [vmem:[#allocation2 + $0x44] sm:$0xf]
  %v1127 = vld [vmem:[#allocation2 + $0x48] sm:$0xf]
  %v1128 = vld [vmem:[#allocation2 + $0x4c] sm:$0xf]
  %v1129 = vld [vmem:[#allocation2 + $0x50] sm:$0xf]
  %v1130 = vld [vmem:[#allocation2 + $0x54] sm:$0xf]
  %v1131 = vld [vmem:[#allocation2 + $0x58] sm:$0xf]
  %v1132 = vld [vmem:[#allocation2 + $0x5c] sm:$0xf]
  %v1133 = vld [vmem:[#allocation2 + $0x60] sm:$0xf]
  %v1134 = vld [vmem:[#allocation2 + $0x64] sm:$0xf]
  %v1135 = vld [vmem:[#allocation2 + $0x68] sm:$0xf]
  %v1136 = vld [vmem:[#allocation2 + $0x6c] sm:$0xf]
  %v1137 = vld [vmem:[#allocation2 + $0x70] sm:$0xf]
  %v1138 = vld [vmem:[#allocation2 + $0x74] sm:$0xf]
  %v1139 = vld [vmem:[#allocation2 + $0x78] sm:$0xf]
  %v1140 = vld [vmem:[#allocation2 + $0x7c] sm:$0xf]
  %v1141 = vld [vmem:[#allocation2 + $0x80] sm:$0xf]
  %v1142 = vld [vmem:[#allocation2 + $0x84] sm:$0xf]
  %v1143 = vld [vmem:[#allocation2 + $0x88] sm:$0xf]
  %v1144 = vld [vmem:[#allocation2 + $0x8c] sm:$0xf]
  %v1145 = vld [vmem:[#allocation2 + $0x90] sm:$0xf]
  %v1146 = vld [vmem:[#allocation2 + $0x94] sm:$0xf]
  %v1147 = vld [vmem:[#allocation2 + $0x98] sm:$0xf]
  %v1148 = vld [vmem:[#allocation2 + $0x9c] sm:$0xf]
  %v1149 = vld [vmem:[#allocation2 + $0xa0] sm:$0xf]
  %v1150 = vld [vmem:[#allocation2 + $0xa4] sm:$0xf]
  %v1151 = vld [vmem:[#allocation2 + $0xa8] sm:$0xf]
  %v1152 = vld [vmem:[#allocation2 + $0xac] sm:$0xf]
  %v1153 = vld [vmem:[#allocation2 + $0xb0] sm:$0xf]
  %v1154 = vld [vmem:[#allocation2 + $0xb4] sm:$0xf]
  %v1155 = vld [vmem:[#allocation2 + $0xb8] sm:$0xf]
  %v1156 = vld [vmem:[#allocation2 + $0xbc] sm:$0xf]
  %v1157 = vld [vmem:[#allocation2 + $0xc0] sm:$0xf]
  %v1158 = vld [vmem:[#allocation2 + $0xc4] sm:$0xf]
  %v1159 = vld [vmem:[#allocation2 + $0xc8] sm:$0xf]
  %v1160 = vld [vmem:[#allocation2 + $0xcc] sm:$0xf]
  %v1161 = vld [vmem:[#allocation2 + $0xd0] sm:$0xf]
  %v1162 = vld [vmem:[#allocation2 + $0xd4] sm:$0xf]
  %v1163 = vld [vmem:[#allocation2 + $0xd8] sm:$0xf]
  %v1164 = vld [vmem:[#allocation2 + $0xdc] sm:$0xf]
  %v1165 = vld [vmem:[#allocation2 + $0xe0] sm:$0xf]
  %v1166 = vld [vmem:[#allocation2 + $0xe4] sm:$0xf]
  %v1167 = vld [vmem:[#allocation2 + $0xe8] sm:$0xf]
  %v1168 = vld [vmem:[#allocation2 + $0xec] sm:$0xf]
  %v1169 = vld [vmem:[#allocation2 + $0xf0] sm:$0xf]
  %v1170 = vld [vmem:[#allocation2 + $0xf4] sm:$0xf]
  %v1171 = vld [vmem:[#allocation2 + $0xf8] sm:$0xf]
  %v1172 = vld [vmem:[#allocation2 + $0xfc] sm:$0xf]
  %v1173 = vld [vmem:[#allocation2 + $0x100] sm:$0x1]
  %v1238 = vunpack.c.l.b16 %v1109
  %v1239 = vunpack.c.l.b16 %v1110
  %v1240 = vunpack.c.l.b16 %v1111
  %v1241 = vunpack.c.l.b16 %v1112
  %v1242 = vunpack.c.l.b16 %v1113
  %v1243 = vunpack.c.l.b16 %v1114
  %v1244 = vunpack.c.l.b16 %v1115
  %v1245 = vunpack.c.l.b16 %v1116
  %v1246 = vunpack.c.l.b16 %v1117
  %v1247 = vunpack.c.l.b16 %v1118
  %v1248 = vunpack.c.l.b16 %v1119
  %v1249 = vunpack.c.l.b16 %v1120
  %v1250 = vunpack.c.l.b16 %v1121
  %v1251 = vunpack.c.l.b16 %v1122
  %v1252 = vunpack.c.l.b16 %v1123
  %v1253 = vunpack.c.l.b16 %v1124
  %v1254 = vunpack.c.l.b16 %v1125
  %v1255 = vunpack.c.l.b16 %v1126
  %v1256 = vunpack.c.l.b16 %v1127
  %v1257 = vunpack.c.l.b16 %v1128
  %v1258 = vunpack.c.l.b16 %v1129
  %v1259 = vunpack.c.l.b16 %v1130
  %v1260 = vunpack.c.l.b16 %v1131
  %v1261 = vunpack.c.l.b16 %v1132
  %v1262 = vunpack.c.l.b16 %v1133
  %v1263 = vunpack.c.l.b16 %v1134
  %v1264 = vunpack.c.l.b16 %v1135
  %v1265 = vunpack.c.l.b16 %v1136
  %v1266 = vunpack.c.l.b16 %v1137
  %v1267 = vunpack.c.l.b16 %v1138
  %v1268 = vunpack.c.l.b16 %v1139
  %v1269 = vunpack.c.l.b16 %v1140
  %v1270 = vunpack.c.l.b16 %v1141
  %v1271 = vunpack.c.l.b16 %v1142
  %v1272 = vunpack.c.l.b16 %v1143
  %v1273 = vunpack.c.l.b16 %v1144
  %v1274 = vunpack.c.l.b16 %v1145
  %v1275 = vunpack.c.l.b16 %v1146
  %v1276 = vunpack.c.l.b16 %v1147
  %v1277 = vunpack.c.l.b16 %v1148
  %v1278 = vunpack.c.l.b16 %v1149
  %v1279 = vunpack.c.l.b16 %v1150
  %v1280 = vunpack.c.l.b16 %v1151
  %v1281 = vunpack.c.l.b16 %v1152
  %v1282 = vunpack.c.l.b16 %v1153
  %v1283 = vunpack.c.l.b16 %v1154
  %v1284 = vunpack.c.l.b16 %v1155
  %v1285 = vunpack.c.l.b16 %v1156
  %v1286 = vunpack.c.l.b16 %v1157
  %v1287 = vunpack.c.l.b16 %v1158
  %v1288 = vunpack.c.l.b16 %v1159
  %v1289 = vunpack.c.l.b16 %v1160
  %v1290 = vunpack.c.l.b16 %v1161
  %v1291 = vunpack.c.l.b16 %v1162
  %v1292 = vunpack.c.l.b16 %v1163
  %v1293 = vunpack.c.l.b16 %v1164
  %v1294 = vunpack.c.l.b16 %v1165
  %v1295 = vunpack.c.l.b16 %v1166
  %v1296 = vunpack.c.l.b16 %v1167
  %v1297 = vunpack.c.l.b16 %v1168
  %v1298 = vunpack.c.l.b16 %v1169
  %v1299 = vunpack.c.l.b16 %v1170
  %v1300 = vunpack.c.l.b16 %v1171
  %v1301 = vunpack.c.l.b16 %v1172
  %v1302 = vpack.c.b16 %v1239, %v1238
  %v1303 = vpack.c.b16 %v1241, %v1240
  %v1304 = vpack.c.b16 %v1243, %v1242
  %v1305 = vpack.c.b16 %v1245, %v1244
  %v1306 = vpack.c.b16 %v1247, %v1246
  %v1307 = vpack.c.b16 %v1249, %v1248
  %v1308 = vpack.c.b16 %v1251, %v1250
  %v1309 = vpack.c.b16 %v1253, %v1252
  %v1310 = vpack.c.b16 %v1255, %v1254
  %v1311 = vpack.c.b16 %v1257, %v1256
  %v1312 = vpack.c.b16 %v1259, %v1258
  %v1313 = vpack.c.b16 %v1261, %v1260
  %v1314 = vpack.c.b16 %v1263, %v1262
  %v1315 = vpack.c.b16 %v1265, %v1264
  %v1316 = vpack.c.b16 %v1267, %v1266
  %v1317 = vpack.c.b16 %v1269, %v1268
  %v1318 = vpack.c.b16 %v1271, %v1270
  %v1319 = vpack.c.b16 %v1273, %v1272
  %v1320 = vpack.c.b16 %v1275, %v1274
  %v1321 = vpack.c.b16 %v1277, %v1276
  %v1322 = vpack.c.b16 %v1279, %v1278
  %v1323 = vpack.c.b16 %v1281, %v1280
  %v1324 = vpack.c.b16 %v1283, %v1282
  %v1325 = vpack.c.b16 %v1285, %v1284
  %v1326 = vpack.c.b16 %v1287, %v1286
  %v1327 = vpack.c.b16 %v1289, %v1288
  %v1328 = vpack.c.b16 %v1291, %v1290
  %v1329 = vpack.c.b16 %v1293, %v1292
  %v1330 = vpack.c.b16 %v1295, %v1294
  %v1331 = vpack.c.b16 %v1297, %v1296
  %v1332 = vpack.c.b16 %v1299, %v1298
  %v1333 = vpack.c.b16 %v1301, %v1300
  %v1335 = vunpack.c.l.b16 %v1173
  %v1336 = vpack.c.b16 %v1335, %v1335
  %vm1337 = vsmask.f32 7424
  %v1339 = vshrl.u32 %v1302, 16
  %v1341 = vshll.u32 %v1302, 16
  %v1343 = vrot.slane %v1341, 1
  %v1344 = vor.u32 %v1339, %v1343
  %v1346 = vshll.u32 %v1303, 16
  %v1348 = vrot.slane %v1346, 1
  %v1349 = vsel %vm1337, %v1344, %v1348
  %v1350 = vshrl.u32 %v1303, 16
  %v1352 = vor.u32 %v1350, %v1348
  %v1354 = vshll.u32 %v1304, 16
  %v1356 = vrot.slane %v1354, 1
  %v1357 = vsel %vm1337, %v1352, %v1356
  %v1358 = vshrl.u32 %v1304, 16
  %v1360 = vor.u32 %v1358, %v1356
  %v1362 = vshll.u32 %v1305, 16
  %v1364 = vrot.slane %v1362, 1
  %v1365 = vsel %vm1337, %v1360, %v1364
  %v1366 = vshrl.u32 %v1305, 16
  %v1368 = vor.u32 %v1366, %v1364
  %v1370 = vshll.u32 %v1306, 16
  %v1372 = vrot.slane %v1370, 1
  %v1373 = vsel %vm1337, %v1368, %v1372
  %v1374 = vshrl.u32 %v1306, 16
  %v1376 = vor.u32 %v1374, %v1372
  %v1378 = vshll.u32 %v1307, 16
  %v1380 = vrot.slane %v1378, 1
  %v1381 = vsel %vm1337, %v1376, %v1380
  %v1382 = vshrl.u32 %v1307, 16
  %v1384 = vor.u32 %v1382, %v1380
  %v1386 = vshll.u32 %v1308, 16
  %v1388 = vrot.slane %v1386, 1
  %v1389 = vsel %vm1337, %v1384, %v1388
  %v1390 = vshrl.u32 %v1308, 16
  %v1392 = vor.u32 %v1390, %v1388
  %v1394 = vshll.u32 %v1309, 16
  %v1396 = vrot.slane %v1394, 1
  %v1397 = vsel %vm1337, %v1392, %v1396
  %v1398 = vshrl.u32 %v1309, 16
  %v1400 = vor.u32 %v1398, %v1396
  %v1402 = vshll.u32 %v1310, 16
  %v1404 = vrot.slane %v1402, 1
  %v1405 = vsel %vm1337, %v1400, %v1404
  %v1406 = vshrl.u32 %v1310, 16
  %v1408 = vor.u32 %v1406, %v1404
  %v1410 = vshll.u32 %v1311, 16
  %v1412 = vrot.slane %v1410, 1
  %v1413 = vsel %vm1337, %v1408, %v1412
  %v1414 = vshrl.u32 %v1311, 16
  %v1416 = vor.u32 %v1414, %v1412
  %v1418 = vshll.u32 %v1312, 16
  %v1420 = vrot.slane %v1418, 1
  %v1421 = vsel %vm1337, %v1416, %v1420
  %v1422 = vshrl.u32 %v1312, 16
  %v1424 = vor.u32 %v1422, %v1420
  %v1426 = vshll.u32 %v1313, 16
  %v1428 = vrot.slane %v1426, 1
  %v1429 = vsel %vm1337, %v1424, %v1428
  %v1430 = vshrl.u32 %v1313, 16
  %v1432 = vor.u32 %v1430, %v1428
  %v1434 = vshll.u32 %v1314, 16
  %v1436 = vrot.slane %v1434, 1
  %v1437 = vsel %vm1337, %v1432, %v1436
  %v1438 = vshrl.u32 %v1314, 16
  %v1440 = vor.u32 %v1438, %v1436
  %v1442 = vshll.u32 %v1315, 16
  %v1444 = vrot.slane %v1442, 1
  %v1445 = vsel %vm1337, %v1440, %v1444
  %v1446 = vshrl.u32 %v1315, 16
  %v1448 = vor.u32 %v1446, %v1444
  %v1450 = vshll.u32 %v1316, 16
  %v1452 = vrot.slane %v1450, 1
  %v1453 = vsel %vm1337, %v1448, %v1452
  %v1454 = vshrl.u32 %v1316, 16
  %v1456 = vor.u32 %v1454, %v1452
  %v1458 = vshll.u32 %v1317, 16
  %v1460 = vrot.slane %v1458, 1
  %v1461 = vsel %vm1337, %v1456, %v1460
  %v1462 = vshrl.u32 %v1317, 16
  %v1464 = vor.u32 %v1462, %v1460
  %v1466 = vshll.u32 %v1318, 16
  %v1468 = vrot.slane %v1466, 1
  %v1469 = vsel %vm1337, %v1464, %v1468
  %v1470 = vshrl.u32 %v1318, 16
  %v1472 = vor.u32 %v1470, %v1468
  %v1474 = vshll.u32 %v1319, 16
  %v1476 = vrot.slane %v1474, 1
  %v1477 = vsel %vm1337, %v1472, %v1476
  %v1478 = vshrl.u32 %v1319, 16
  %v1480 = vor.u32 %v1478, %v1476
  %v1482 = vshll.u32 %v1320, 16
  %v1484 = vrot.slane %v1482, 1
  %v1485 = vsel %vm1337, %v1480, %v1484
  %v1486 = vshrl.u32 %v1320, 16
  %v1488 = vor.u32 %v1486, %v1484
  %v1490 = vshll.u32 %v1321, 16
  %v1492 = vrot.slane %v1490, 1
  %v1493 = vsel %vm1337, %v1488, %v1492
  %v1494 = vshrl.u32 %v1321, 16
  %v1496 = vor.u32 %v1494, %v1492
  %v1498 = vshll.u32 %v1322, 16
  %v1500 = vrot.slane %v1498, 1
  %v1501 = vsel %vm1337, %v1496, %v1500
  %v1502 = vshrl.u32 %v1322, 16
  %v1504 = vor.u32 %v1502, %v1500
  %v1506 = vshll.u32 %v1323, 16
  %v1508 = vrot.slane %v1506, 1
  %v1509 = vsel %vm1337, %v1504, %v1508
  %v1510 = vshrl.u32 %v1323, 16
  %v1512 = vor.u32 %v1510, %v1508
  %v1514 = vshll.u32 %v1324, 16
  %v1516 = vrot.slane %v1514, 1
  %v1517 = vsel %vm1337, %v1512, %v1516
  %v1518 = vshrl.u32 %v1324, 16
  %v1520 = vor.u32 %v1518, %v1516
  %v1522 = vshll.u32 %v1325, 16
  %v1524 = vrot.slane %v1522, 1
  %v1525 = vsel %vm1337, %v1520, %v1524
  %v1526 = vshrl.u32 %v1325, 16
  %v1528 = vor.u32 %v1526, %v1524
  %v1530 = vshll.u32 %v1326, 16
  %v1532 = vrot.slane %v1530, 1
  %v1533 = vsel %vm1337, %v1528, %v1532
  %v1534 = vshrl.u32 %v1326, 16
  %v1536 = vor.u32 %v1534, %v1532
  %v1538 = vshll.u32 %v1327, 16
  %v1540 = vrot.slane %v1538, 1
  %v1541 = vsel %vm1337, %v1536, %v1540
  %v1542 = vshrl.u32 %v1327, 16
  %v1544 = vor.u32 %v1542, %v1540
  %v1546 = vshll.u32 %v1328, 16
  %v1548 = vrot.slane %v1546, 1
  %v1549 = vsel %vm1337, %v1544, %v1548
  %v1550 = vshrl.u32 %v1328, 16
  %v1552 = vor.u32 %v1550, %v1548
  %v1554 = vshll.u32 %v1329, 16
  %v1556 = vrot.slane %v1554, 1
  %v1557 = vsel %vm1337, %v1552, %v1556
  %v1558 = vshrl.u32 %v1329, 16
  %v1560 = vor.u32 %v1558, %v1556
  %v1562 = vshll.u32 %v1330, 16
  %v1564 = vrot.slane %v1562, 1
  %v1565 = vsel %vm1337, %v1560, %v1564
  %v1566 = vshrl.u32 %v1330, 16
  %v1568 = vor.u32 %v1566, %v1564
  %v1570 = vshll.u32 %v1331, 16
  %v1572 = vrot.slane %v1570, 1
  %v1573 = vsel %vm1337, %v1568, %v1572
  %v1574 = vshrl.u32 %v1331, 16
  %v1576 = vor.u32 %v1574, %v1572
  %v1578 = vshll.u32 %v1332, 16
  %v1580 = vrot.slane %v1578, 1
  %v1581 = vsel %vm1337, %v1576, %v1580
  %v1582 = vshrl.u32 %v1332, 16
  %v1584 = vor.u32 %v1582, %v1580
  %v1586 = vshll.u32 %v1333, 16
  %v1588 = vrot.slane %v1586, 1
  %v1589 = vsel %vm1337, %v1584, %v1588
  %v1590 = vshrl.u32 %v1333, 16
  %v1592 = vor.u32 %v1590, %v1588
  %v1594 = vshll.u32 %v1336, 16
  %v1596 = vrot.slane %v1594, 1
  %v1597 = vsel %vm1337, %v1592, %v1596
  %1598 = vrot.lane.b32.xlu0 %v1349, 64
  %v1599 = vpop.permute.xlu0 %1598
  %1600 = vrot.lane.b32.xlu0 %v1357, 64
  %v1601 = vpop.permute.xlu0 %1600
  %1602 = vrot.lane.b32.xlu0 %v1365, 64
  %v1603 = vpop.permute.xlu0 %1602
  %1604 = vrot.lane.b32.xlu0 %v1373, 64
  %v1605 = vpop.permute.xlu0 %1604
  %1606 = vrot.lane.b32.xlu0 %v1381, 64
  %v1607 = vpop.permute.xlu0 %1606
  %1608 = vrot.lane.b32.xlu0 %v1389, 64
  %v1609 = vpop.permute.xlu0 %1608
  %1610 = vrot.lane.b32.xlu0 %v1397, 64
  %v1611 = vpop.permute.xlu0 %1610
  %1612 = vrot.lane.b32.xlu0 %v1405, 64
  %v1613 = vpop.permute.xlu0 %1612
  %1614 = vrot.lane.b32.xlu0 %v1413, 64
  %v1615 = vpop.permute.xlu0 %1614
  %1616 = vrot.lane.b32.xlu0 %v1421, 64
  %v1617 = vpop.permute.xlu0 %1616
  %1618 = vrot.lane.b32.xlu0 %v1429, 64
  %v1619 = vpop.permute.xlu0 %1618
  %1620 = vrot.lane.b32.xlu0 %v1437, 64
  %v1621 = vpop.permute.xlu0 %1620
  %1622 = vrot.lane.b32.xlu0 %v1445, 64
  %v1623 = vpop.permute.xlu0 %1622
  %1624 = vrot.lane.b32.xlu0 %v1453, 64
  %v1625 = vpop.permute.xlu0 %1624
  %1626 = vrot.lane.b32.xlu0 %v1461, 64
  %v1627 = vpop.permute.xlu0 %1626
  %1628 = vrot.lane.b32.xlu0 %v1469, 64
  %v1629 = vpop.permute.xlu0 %1628
  %1630 = vrot.lane.b32.xlu0 %v1477, 64
  %v1631 = vpop.permute.xlu0 %1630
  %1632 = vrot.lane.b32.xlu0 %v1485, 64
  %v1633 = vpop.permute.xlu0 %1632
  %1634 = vrot.lane.b32.xlu0 %v1493, 64
  %v1635 = vpop.permute.xlu0 %1634
  %1636 = vrot.lane.b32.xlu0 %v1501, 64
  %v1637 = vpop.permute.xlu0 %1636
  %1638 = vrot.lane.b32.xlu0 %v1509, 64
  %v1639 = vpop.permute.xlu0 %1638
  %1640 = vrot.lane.b32.xlu0 %v1517, 64
  %v1641 = vpop.permute.xlu0 %1640
  %1642 = vrot.lane.b32.xlu0 %v1525, 64
  %v1643 = vpop.permute.xlu0 %1642
  %1644 = vrot.lane.b32.xlu0 %v1533, 64
  %v1645 = vpop.permute.xlu0 %1644
  %1646 = vrot.lane.b32.xlu0 %v1541, 64
  %v1647 = vpop.permute.xlu0 %1646
  %1648 = vrot.lane.b32.xlu0 %v1549, 64
  %v1649 = vpop.permute.xlu0 %1648
  %1650 = vrot.lane.b32.xlu0 %v1557, 64
  %v1651 = vpop.permute.xlu0 %1650
  %1652 = vrot.lane.b32.xlu0 %v1565, 64
  %v1653 = vpop.permute.xlu0 %1652
  %1654 = vrot.lane.b32.xlu0 %v1573, 64
  %v1655 = vpop.permute.xlu0 %1654
  %1656 = vrot.lane.b32.xlu0 %v1581, 64
  %v1657 = vpop.permute.xlu0 %1656
  %1658 = vrot.lane.b32.xlu0 %v1589, 64
  %v1659 = vpop.permute.xlu0 %1658
  %1660 = vrot.lane.b32.xlu0 %v1597, 64
  %v1661 = vpop.permute.xlu0 %1660
  %vm1662 = vcmask 523264
  %v1664 = vsel %vm1662, %v1302, %v1599
  %v1667 = vsel %vm1662, %v1303, %v1601
  %v1670 = vsel %vm1662, %v1304, %v1603
  %v1673 = vsel %vm1662, %v1305, %v1605
  %v1676 = vsel %vm1662, %v1306, %v1607
  %v1679 = vsel %vm1662, %v1307, %v1609
  %v1682 = vsel %vm1662, %v1308, %v1611
  %v1685 = vsel %vm1662, %v1309, %v1613
  %v1688 = vsel %vm1662, %v1310, %v1615
  %v1691 = vsel %vm1662, %v1311, %v1617
  %v1694 = vsel %vm1662, %v1312, %v1619
  %v1697 = vsel %vm1662, %v1313, %v1621
  %v1700 = vsel %vm1662, %v1314, %v1623
  %v1703 = vsel %vm1662, %v1315, %v1625
  %v1706 = vsel %vm1662, %v1316, %v1627
  %v1709 = vsel %vm1662, %v1317, %v1629
  %v1712 = vsel %vm1662, %v1318, %v1631
  %v1715 = vsel %vm1662, %v1319, %v1633
  %v1718 = vsel %vm1662, %v1320, %v1635
  %v1721 = vsel %vm1662, %v1321, %v1637
  %v1724 = vsel %vm1662, %v1322, %v1639
  %v1727 = vsel %vm1662, %v1323, %v1641
  %v1730 = vsel %vm1662, %v1324, %v1643
  %v1733 = vsel %vm1662, %v1325, %v1645
  %v1736 = vsel %vm1662, %v1326, %v1647
  %v1739 = vsel %vm1662, %v1327, %v1649
  %v1742 = vsel %vm1662, %v1328, %v1651
  %v1745 = vsel %vm1662, %v1329, %v1653
  %v1748 = vsel %vm1662, %v1330, %v1655
  %v1751 = vsel %vm1662, %v1331, %v1657
  %v1754 = vsel %vm1662, %v1332, %v1659
  %v1757 = vsel %vm1662, %v1333, %v1661
  %1759 = vst [vmem:[#allocation3] sm:$0xff] %v1664
  %1760 = vst [vmem:[#allocation3 + $0x28] sm:$0xff] %v1667
  %1761 = vst [vmem:[#allocation3 + $0x50] sm:$0xff] %v1670
  %1762 = vst [vmem:[#allocation3 + $0x78] sm:$0xff] %v1673
  %1763 = vst [vmem:[#allocation3 + $0xa0] sm:$0xff] %v1676
  %1764 = vst [vmem:[#allocation3 + $0xc8] sm:$0xff] %v1679
  %1765 = vst [vmem:[#allocation3 + $0xf0] sm:$0xff] %v1682
  %1766 = vst [vmem:[#allocation3 + $0x118] sm:$0xff] %v1685
  %1767 = vst [vmem:[#allocation3 + $0x140] sm:$0xff] %v1688
  %1768 = vst [vmem:[#allocation3 + $0x168] sm:$0xff] %v1691
  %1769 = vst [vmem:[#allocation3 + $0x190] sm:$0xff] %v1694
  %1770 = vst [vmem:[#allocation3 + $0x1b8] sm:$0xff] %v1697
  %1771 = vst [vmem:[#allocation3 + $0x1e0] sm:$0xff] %v1700
  %1772 = vst [vmem:[#allocation3 + $0x208] sm:$0xff] %v1703
  %1773 = vst [vmem:[#allocation3 + $0x230] sm:$0xff] %v1706
  %1774 = vst [vmem:[#allocation3 + $0x258] sm:$0xff] %v1709
  %1775 = vst [vmem:[#allocation3 + $0x280] sm:$0xff] %v1712
  %1776 = vst [vmem:[#allocation3 + $0x2a8] sm:$0xff] %v1715
  %1777 = vst [vmem:[#allocation3 + $0x2d0] sm:$0xff] %v1718
  %1778 = vst [vmem:[#allocation3 + $0x2f8] sm:$0xff] %v1721
  %1779 = vst [vmem:[#allocation3 + $0x320] sm:$0xff] %v1724
  %1780 = vst [vmem:[#allocation3 + $0x348] sm:$0xff] %v1727
  %1781 = vst [vmem:[#allocation3 + $0x370] sm:$0xff] %v1730
  %1782 = vst [vmem:[#allocation3 + $0x398] sm:$0xff] %v1733
  %1783 = vst [vmem:[#allocation3 + $0x3c0] sm:$0xff] %v1736
  %1784 = vst [vmem:[#allocation3 + $0x3e8] sm:$0xff] %v1739
  %1785 = vst [vmem:[#allocation3 + $0x410] sm:$0xff] %v1742
  %1786 = vst [vmem:[#allocation3 + $0x438] sm:$0xff] %v1745
  %1787 = vst [vmem:[#allocation3 + $0x460] sm:$0xff] %v1748
  %1788 = vst [vmem:[#allocation3 + $0x488] sm:$0xff] %v1751
  %1789 = vst [vmem:[#allocation3 + $0x4b0] sm:$0xff] %v1754
  %1790 = vst [vmem:[#allocation3 + $0x4d8] sm:$0xff] %v1757
  %v1791 = vld [vmem:[#allocation2] sm:$0xe]
  %v1792 = vld [vmem:[#allocation2 + $0x4] sm:$0xf]
  %v1793 = vld [vmem:[#allocation2 + $0x8] sm:$0xf]
  %v1794 = vld [vmem:[#allocation2 + $0xc] sm:$0xf]
  %v1795 = vld [vmem:[#allocation2 + $0x10] sm:$0xf]
  %v1796 = vld [vmem:[#allocation2 + $0x14] sm:$0xf]
  %v1797 = vld [vmem:[#allocation2 + $0x18] sm:$0xf]
  %v1798 = vld [vmem:[#allocation2 + $0x1c] sm:$0xf]
  %v1799 = vld [vmem:[#allocation2 + $0x20] sm:$0xf]
  %v1800 = vld [vmem:[#allocation2 + $0x24] sm:$0xf]
  %v1801 = vld [vmem:[#allocation2 + $0x28] sm:$0xf]
  %v1802 = vld [vmem:[#allocation2 + $0x2c] sm:$0xf]
  %v1803 = vld [vmem:[#allocation2 + $0x30] sm:$0xf]
  %v1804 = vld [vmem:[#allocation2 + $0x34] sm:$0xf]
  %v1805 = vld [vmem:[#allocation2 + $0x38] sm:$0xf]
  %v1806 = vld [vmem:[#allocation2 + $0x3c] sm:$0xf]
  %v1807 = vld [vmem:[#allocation2 + $0x40] sm:$0xf]
  %v1808 = vld [vmem:[#allocation2 + $0x44] sm:$0xf]
  %v1809 = vld [vmem:[#allocation2 + $0x48] sm:$0xf]
  %v1810 = vld [vmem:[#allocation2 + $0x4c] sm:$0xf]
  %v1811 = vld [vmem:[#allocation2 + $0x50] sm:$0xf]
  %v1812 = vld [vmem:[#allocation2 + $0x54] sm:$0xf]
  %v1813 = vld [vmem:[#allocation2 + $0x58] sm:$0xf]
  %v1814 = vld [vmem:[#allocation2 + $0x5c] sm:$0xf]
  %v1815 = vld [vmem:[#allocation2 + $0x60] sm:$0xf]
  %v1816 = vld [vmem:[#allocation2 + $0x64] sm:$0xf]
  %v1817 = vld [vmem:[#allocation2 + $0x68] sm:$0xf]
  %v1818 = vld [vmem:[#allocation2 + $0x6c] sm:$0xf]
  %v1819 = vld [vmem:[#allocation2 + $0x70] sm:$0xf]
  %v1820 = vld [vmem:[#allocation2 + $0x74] sm:$0xf]
  %v1821 = vld [vmem:[#allocation2 + $0x78] sm:$0xf]
  %v1822 = vld [vmem:[#allocation2 + $0x7c] sm:$0xf]
  %v1823 = vld [vmem:[#allocation2 + $0x80] sm:$0xf]
  %v1824 = vld [vmem:[#allocation2 + $0x84] sm:$0xf]
  %v1825 = vld [vmem:[#allocation2 + $0x88] sm:$0xf]
  %v1826 = vld [vmem:[#allocation2 + $0x8c] sm:$0xf]
  %v1827 = vld [vmem:[#allocation2 + $0x90] sm:$0xf]
  %v1828 = vld [vmem:[#allocation2 + $0x94] sm:$0xf]
  %v1829 = vld [vmem:[#allocation2 + $0x98] sm:$0xf]
  %v1830 = vld [vmem:[#allocation2 + $0x9c] sm:$0xf]
  %v1831 = vld [vmem:[#allocation2 + $0xa0] sm:$0xf]
  %v1832 = vld [vmem:[#allocation2 + $0xa4] sm:$0xf]
  %v1833 = vld [vmem:[#allocation2 + $0xa8] sm:$0xf]
  %v1834 = vld [vmem:[#allocation2 + $0xac] sm:$0xf]
  %v1835 = vld [vmem:[#allocation2 + $0xb0] sm:$0xf]
  %v1836 = vld [vmem:[#allocation2 + $0xb4] sm:$0xf]
  %v1837 = vld [vmem:[#allocation2 + $0xb8] sm:$0xf]
  %v1838 = vld [vmem:[#allocation2 + $0xbc] sm:$0xf]
  %v1839 = vld [vmem:[#allocation2 + $0xc0] sm:$0xf]
  %v1840 = vld [vmem:[#allocation2 + $0xc4] sm:$0xf]
  %v1841 = vld [vmem:[#allocation2 + $0xc8] sm:$0xf]
  %v1842 = vld [vmem:[#allocation2 + $0xcc] sm:$0xf]
  %v1843 = vld [vmem:[#allocation2 + $0xd0] sm:$0xf]
  %v1844 = vld [vmem:[#allocation2 + $0xd4] sm:$0xf]
  %v1845 = vld [vmem:[#allocation2 + $0xd8] sm:$0xf]
  %v1846 = vld [vmem:[#allocation2 + $0xdc] sm:$0xf]
  %v1847 = vld [vmem:[#allocation2 + $0xe0] sm:$0xf]
  %v1848 = vld [vmem:[#allocation2 + $0xe4] sm:$0xf]
  %v1849 = vld [vmem:[#allocation2 + $0xe8] sm:$0xf]
  %v1850 = vld [vmem:[#allocation2 + $0xec] sm:$0xf]
  %v1851 = vld [vmem:[#allocation2 + $0xf0] sm:$0xf]
  %v1852 = vld [vmem:[#allocation2 + $0xf4] sm:$0xf]
  %v1853 = vld [vmem:[#allocation2 + $0xf8] sm:$0xf]
  %v1854 = vld [vmem:[#allocation2 + $0xfc] sm:$0xf]
  %v1855 = vld [vmem:[#allocation2 + $0x100] sm:$0x1]
  %v1856 = vld [vmem:[#allocation2 + $0x100] sm:$0xf]
  %v1857 = vld [vmem:[#allocation2 + $0x104] sm:$0xf]
  %v1923 = vunpack.c.l.b16 %v1791
  %v1924 = vunpack.c.l.b16 %v1792
  %v1925 = vunpack.c.l.b16 %v1793
  %v1926 = vunpack.c.l.b16 %v1794
  %v1927 = vunpack.c.l.b16 %v1795
  %v1928 = vunpack.c.l.b16 %v1796
  %v1929 = vunpack.c.l.b16 %v1797
  %v1930 = vunpack.c.l.b16 %v1798
  %v1931 = vunpack.c.l.b16 %v1799
  %v1932 = vunpack.c.l.b16 %v1800
  %v1933 = vunpack.c.l.b16 %v1801
  %v1934 = vunpack.c.l.b16 %v1802
  %v1935 = vunpack.c.l.b16 %v1803
  %v1936 = vunpack.c.l.b16 %v1804
  %v1937 = vunpack.c.l.b16 %v1805
  %v1938 = vunpack.c.l.b16 %v1806
  %v1939 = vunpack.c.l.b16 %v1807
  %v1940 = vunpack.c.l.b16 %v1808
  %v1941 = vunpack.c.l.b16 %v1809
  %v1942 = vunpack.c.l.b16 %v1810
  %v1943 = vunpack.c.l.b16 %v1811
  %v1944 = vunpack.c.l.b16 %v1812
  %v1945 = vunpack.c.l.b16 %v1813
  %v1946 = vunpack.c.l.b16 %v1814
  %v1947 = vunpack.c.l.b16 %v1815
  %v1948 = vunpack.c.l.b16 %v1816
  %v1949 = vunpack.c.l.b16 %v1817
  %v1950 = vunpack.c.l.b16 %v1818
  %v1951 = vunpack.c.l.b16 %v1819
  %v1952 = vunpack.c.l.b16 %v1820
  %v1953 = vunpack.c.l.b16 %v1821
  %v1954 = vunpack.c.l.b16 %v1822
  %v1955 = vunpack.c.l.b16 %v1823
  %v1956 = vunpack.c.l.b16 %v1824
  %v1957 = vunpack.c.l.b16 %v1825
  %v1958 = vunpack.c.l.b16 %v1826
  %v1959 = vunpack.c.l.b16 %v1827
  %v1960 = vunpack.c.l.b16 %v1828
  %v1961 = vunpack.c.l.b16 %v1829
  %v1962 = vunpack.c.l.b16 %v1830
  %v1963 = vunpack.c.l.b16 %v1831
  %v1964 = vunpack.c.l.b16 %v1832
  %v1965 = vunpack.c.l.b16 %v1833
  %v1966 = vunpack.c.l.b16 %v1834
  %v1967 = vunpack.c.l.b16 %v1835
  %v1968 = vunpack.c.l.b16 %v1836
  %v1969 = vunpack.c.l.b16 %v1837
  %v1970 = vunpack.c.l.b16 %v1838
  %v1971 = vunpack.c.l.b16 %v1839
  %v1972 = vunpack.c.l.b16 %v1840
  %v1973 = vunpack.c.l.b16 %v1841
  %v1974 = vunpack.c.l.b16 %v1842
  %v1975 = vunpack.c.l.b16 %v1843
  %v1976 = vunpack.c.l.b16 %v1844
  %v1977 = vunpack.c.l.b16 %v1845
  %v1978 = vunpack.c.l.b16 %v1846
  %v1979 = vunpack.c.l.b16 %v1847
  %v1980 = vunpack.c.l.b16 %v1848
  %v1981 = vunpack.c.l.b16 %v1849
  %v1982 = vunpack.c.l.b16 %v1850
  %v1983 = vunpack.c.l.b16 %v1851
  %v1984 = vunpack.c.l.b16 %v1852
  %v1985 = vunpack.c.l.b16 %v1853
  %v1986 = vunpack.c.l.b16 %v1854
  %v1987 = vunpack.c.l.b16 %v1855
  %v1988 = vpack.c.b16 %v1924, %v1923
  %v1989 = vpack.c.b16 %v1926, %v1925
  %v1990 = vpack.c.b16 %v1928, %v1927
  %v1991 = vpack.c.b16 %v1930, %v1929
  %v1992 = vpack.c.b16 %v1932, %v1931
  %v1993 = vpack.c.b16 %v1934, %v1933
  %v1994 = vpack.c.b16 %v1936, %v1935
  %v1995 = vpack.c.b16 %v1938, %v1937
  %v1996 = vpack.c.b16 %v1940, %v1939
  %v1997 = vpack.c.b16 %v1942, %v1941
  %v1998 = vpack.c.b16 %v1944, %v1943
  %v1999 = vpack.c.b16 %v1946, %v1945
  %v2000 = vpack.c.b16 %v1948, %v1947
  %v2001 = vpack.c.b16 %v1950, %v1949
  %v2002 = vpack.c.b16 %v1952, %v1951
  %v2003 = vpack.c.b16 %v1954, %v1953
  %v2004 = vpack.c.b16 %v1956, %v1955
  %v2005 = vpack.c.b16 %v1958, %v1957
  %v2006 = vpack.c.b16 %v1960, %v1959
  %v2007 = vpack.c.b16 %v1962, %v1961
  %v2008 = vpack.c.b16 %v1964, %v1963
  %v2009 = vpack.c.b16 %v1966, %v1965
  %v2010 = vpack.c.b16 %v1968, %v1967
  %v2011 = vpack.c.b16 %v1970, %v1969
  %v2012 = vpack.c.b16 %v1972, %v1971
  %v2013 = vpack.c.b16 %v1974, %v1973
  %v2014 = vpack.c.b16 %v1976, %v1975
  %v2015 = vpack.c.b16 %v1978, %v1977
  %v2016 = vpack.c.b16 %v1980, %v1979
  %v2017 = vpack.c.b16 %v1982, %v1981
  %v2018 = vpack.c.b16 %v1984, %v1983
  %v2019 = vpack.c.b16 %v1986, %v1985
  %v2020 = vpack.c.b16 %v1987, %v1987
  %v2023 = vunpack.c.l.b16 %v1856
  %v2024 = vunpack.c.l.b16 %v1857
  %v2025 = vpack.c.b16 %v2024, %v2023
  %vm2026 = vcmask 1040384
  %v2027 = vrot.slane %v1989, 7
  %v2028 = vrot.slane %v1990, 7
  %v2029 = vsel %vm2026, %v2027, %v2028
  %v2030 = vrot.slane %v1991, 7
  %v2031 = vsel %vm2026, %v2028, %v2030
  %v2032 = vrot.slane %v1992, 7
  %v2033 = vsel %vm2026, %v2030, %v2032
  %v2034 = vrot.slane %v1993, 7
  %v2035 = vsel %vm2026, %v2032, %v2034
  %v2036 = vrot.slane %v1994, 7
  %v2037 = vsel %vm2026, %v2034, %v2036
  %v2038 = vrot.slane %v1995, 7
  %v2039 = vsel %vm2026, %v2036, %v2038
  %v2040 = vrot.slane %v1996, 7
  %v2041 = vsel %vm2026, %v2038, %v2040
  %v2042 = vrot.slane %v1997, 7
  %v2043 = vsel %vm2026, %v2040, %v2042
  %v2044 = vrot.slane %v1998, 7
  %v2045 = vsel %vm2026, %v2042, %v2044
  %v2046 = vrot.slane %v1999, 7
  %v2047 = vsel %vm2026, %v2044, %v2046
  %v2048 = vrot.slane %v2000, 7
  %v2049 = vsel %vm2026, %v2046, %v2048
  %v2050 = vrot.slane %v2001, 7
  %v2051 = vsel %vm2026, %v2048, %v2050
  %v2052 = vrot.slane %v2002, 7
  %v2053 = vsel %vm2026, %v2050, %v2052
  %v2054 = vrot.slane %v2003, 7
  %v2055 = vsel %vm2026, %v2052, %v2054
  %v2056 = vrot.slane %v2004, 7
  %v2057 = vsel %vm2026, %v2054, %v2056
  %v2058 = vrot.slane %v2005, 7
  %v2059 = vsel %vm2026, %v2056, %v2058
  %v2060 = vrot.slane %v2006, 7
  %v2061 = vsel %vm2026, %v2058, %v2060
  %v2062 = vrot.slane %v2007, 7
  %v2063 = vsel %vm2026, %v2060, %v2062
  %v2064 = vrot.slane %v2008, 7
  %v2065 = vsel %vm2026, %v2062, %v2064
  %v2066 = vrot.slane %v2009, 7
  %v2067 = vsel %vm2026, %v2064, %v2066
  %v2068 = vrot.slane %v2010, 7
  %v2069 = vsel %vm2026, %v2066, %v2068
  %v2070 = vrot.slane %v2011, 7
  %v2071 = vsel %vm2026, %v2068, %v2070
  %v2072 = vrot.slane %v2012, 7
  %v2073 = vsel %vm2026, %v2070, %v2072
  %v2074 = vrot.slane %v2013, 7
  %v2075 = vsel %vm2026, %v2072, %v2074
  %v2076 = vrot.slane %v2014, 7
  %v2077 = vsel %vm2026, %v2074, %v2076
  %v2078 = vrot.slane %v2015, 7
  %v2079 = vsel %vm2026, %v2076, %v2078
  %v2080 = vrot.slane %v2016, 7
  %v2081 = vsel %vm2026, %v2078, %v2080
  %v2082 = vrot.slane %v2017, 7
  %v2083 = vsel %vm2026, %v2080, %v2082
  %v2084 = vrot.slane %v2018, 7
  %v2085 = vsel %vm2026, %v2082, %v2084
  %v2086 = vrot.slane %v2019, 7
  %v2087 = vsel %vm2026, %v2084, %v2086
  %v2088 = vrot.slane %v2025, 7
  %v2089 = vsel %vm2026, %v2086, %v2088
  %2090 = vrot.lane.b32.xlu0 %v2027, 64
  %v2091 = vpop.permute.xlu0 %2090
  %2092 = vrot.lane.b32.xlu0 %v2029, 64
  %v2093 = vpop.permute.xlu0 %2092
  %2094 = vrot.lane.b32.xlu0 %v2031, 64
  %v2095 = vpop.permute.xlu0 %2094
  %2096 = vrot.lane.b32.xlu0 %v2033, 64
  %v2097 = vpop.permute.xlu0 %2096
  %2098 = vrot.lane.b32.xlu0 %v2035, 64
  %v2099 = vpop.permute.xlu0 %2098
  %2100 = vrot.lane.b32.xlu0 %v2037, 64
  %v2101 = vpop.permute.xlu0 %2100
  %2102 = vrot.lane.b32.xlu0 %v2039, 64
  %v2103 = vpop.permute.xlu0 %2102
  %2104 = vrot.lane.b32.xlu0 %v2041, 64
  %v2105 = vpop.permute.xlu0 %2104
  %2106 = vrot.lane.b32.xlu0 %v2043, 64
  %v2107 = vpop.permute.xlu0 %2106
  %2108 = vrot.lane.b32.xlu0 %v2045, 64
  %v2109 = vpop.permute.xlu0 %2108
  %2110 = vrot.lane.b32.xlu0 %v2047, 64
  %v2111 = vpop.permute.xlu0 %2110
  %2112 = vrot.lane.b32.xlu0 %v2049, 64
  %v2113 = vpop.permute.xlu0 %2112
  %2114 = vrot.lane.b32.xlu0 %v2051, 64
  %v2115 = vpop.permute.xlu0 %2114
  %2116 = vrot.lane.b32.xlu0 %v2053, 64
  %v2117 = vpop.permute.xlu0 %2116
  %2118 = vrot.lane.b32.xlu0 %v2055, 64
  %v2119 = vpop.permute.xlu0 %2118
  %2120 = vrot.lane.b32.xlu0 %v2057, 64
  %v2121 = vpop.permute.xlu0 %2120
  %2122 = vrot.lane.b32.xlu0 %v2059, 64
  %v2123 = vpop.permute.xlu0 %2122
  %2124 = vrot.lane.b32.xlu0 %v2061, 64
  %v2125 = vpop.permute.xlu0 %2124
  %2126 = vrot.lane.b32.xlu0 %v2063, 64
  %v2127 = vpop.permute.xlu0 %2126
  %2128 = vrot.lane.b32.xlu0 %v2065, 64
  %v2129 = vpop.permute.xlu0 %2128
  %2130 = vrot.lane.b32.xlu0 %v2067, 64
  %v2131 = vpop.permute.xlu0 %2130
  %2132 = vrot.lane.b32.xlu0 %v2069, 64
  %v2133 = vpop.permute.xlu0 %2132
  %2134 = vrot.lane.b32.xlu0 %v2071, 64
  %v2135 = vpop.permute.xlu0 %2134
  %2136 = vrot.lane.b32.xlu0 %v2073, 64
  %v2137 = vpop.permute.xlu0 %2136
  %2138 = vrot.lane.b32.xlu0 %v2075, 64
  %v2139 = vpop.permute.xlu0 %2138
  %2140 = vrot.lane.b32.xlu0 %v2077, 64
  %v2141 = vpop.permute.xlu0 %2140
  %2142 = vrot.lane.b32.xlu0 %v2079, 64
  %v2143 = vpop.permute.xlu0 %2142
  %2144 = vrot.lane.b32.xlu0 %v2081, 64
  %v2145 = vpop.permute.xlu0 %2144
  %2146 = vrot.lane.b32.xlu0 %v2083, 64
  %v2147 = vpop.permute.xlu0 %2146
  %2148 = vrot.lane.b32.xlu0 %v2085, 64
  %v2149 = vpop.permute.xlu0 %2148
  %2150 = vrot.lane.b32.xlu0 %v2087, 64
  %v2151 = vpop.permute.xlu0 %2150
  %2152 = vrot.lane.b32.xlu0 %v2089, 64
  %v2153 = vpop.permute.xlu0 %2152
  %2154 = vrot.lane.b32.xlu0 %v2088, 64
  %v2155 = vpop.permute.xlu0 %2154
  %v2158 = vsel %vm1662, %v1988, %v2091
  %v2161 = vsel %vm1662, %v1989, %v2093
  %v2164 = vsel %vm1662, %v1990, %v2095
  %v2167 = vsel %vm1662, %v1991, %v2097
  %v2170 = vsel %vm1662, %v1992, %v2099
  %v2173 = vsel %vm1662, %v1993, %v2101
  %v2176 = vsel %vm1662, %v1994, %v2103
  %v2179 = vsel %vm1662, %v1995, %v2105
  %v2182 = vsel %vm1662, %v1996, %v2107
  %v2185 = vsel %vm1662, %v1997, %v2109
  %v2188 = vsel %vm1662, %v1998, %v2111
  %v2191 = vsel %vm1662, %v1999, %v2113
  %v2194 = vsel %vm1662, %v2000, %v2115
  %v2197 = vsel %vm1662, %v2001, %v2117
  %v2200 = vsel %vm1662, %v2002, %v2119
  %v2203 = vsel %vm1662, %v2003, %v2121
  %v2206 = vsel %vm1662, %v2004, %v2123
  %v2209 = vsel %vm1662, %v2005, %v2125
  %v2212 = vsel %vm1662, %v2006, %v2127
  %v2215 = vsel %vm1662, %v2007, %v2129
  %v2218 = vsel %vm1662, %v2008, %v2131
  %v2221 = vsel %vm1662, %v2009, %v2133
  %v2224 = vsel %vm1662, %v2010, %v2135
  %v2227 = vsel %vm1662, %v2011, %v2137
  %v2230 = vsel %vm1662, %v2012, %v2139
  %v2233 = vsel %vm1662, %v2013, %v2141
  %v2236 = vsel %vm1662, %v2014, %v2143
  %v2239 = vsel %vm1662, %v2015, %v2145
  %v2242 = vsel %vm1662, %v2016, %v2147
  %v2245 = vsel %vm1662, %v2017, %v2149
  %v2248 = vsel %vm1662, %v2018, %v2151
  %v2251 = vsel %vm1662, %v2019, %v2153
  %v2254 = vsel %vm1662, %v2020, %v2155
  %vm2288 = vcmask 1046528
  %v2289 = vrot.slane %v2158, 1
  %v2290 = vrot.slane %v2161, 1
  %v2291 = vsel %vm2288, %v2289, %v2290
  %v2292 = vrot.slane %v2164, 1
  %v2293 = vsel %vm2288, %v2290, %v2292
  %v2294 = vrot.slane %v2167, 1
  %v2295 = vsel %vm2288, %v2292, %v2294
  %v2296 = vrot.slane %v2170, 1
  %v2297 = vsel %vm2288, %v2294, %v2296
  %v2298 = vrot.slane %v2173, 1
  %v2299 = vsel %vm2288, %v2296, %v2298
  %v2300 = vrot.slane %v2176, 1
  %v2301 = vsel %vm2288, %v2298, %v2300
  %v2302 = vrot.slane %v2179, 1
  %v2303 = vsel %vm2288, %v2300, %v2302
  %v2304 = vrot.slane %v2182, 1
  %v2305 = vsel %vm2288, %v2302, %v2304
  %v2306 = vrot.slane %v2185, 1
  %v2307 = vsel %vm2288, %v2304, %v2306
  %v2308 = vrot.slane %v2188, 1
  %v2309 = vsel %vm2288, %v2306, %v2308
  %v2310 = vrot.slane %v2191, 1
  %v2311 = vsel %vm2288, %v2308, %v2310
  %v2312 = vrot.slane %v2194, 1
  %v2313 = vsel %vm2288, %v2310, %v2312
  %v2314 = vrot.slane %v2197, 1
  %v2315 = vsel %vm2288, %v2312, %v2314
  %v2316 = vrot.slane %v2200, 1
  %v2317 = vsel %vm2288, %v2314, %v2316
  %v2318 = vrot.slane %v2203, 1
  %v2319 = vsel %vm2288, %v2316, %v2318
  %v2320 = vrot.slane %v2206, 1
  %v2321 = vsel %vm2288, %v2318, %v2320
  %v2322 = vrot.slane %v2209, 1
  %v2323 = vsel %vm2288, %v2320, %v2322
  %v2324 = vrot.slane %v2212, 1
  %v2325 = vsel %vm2288, %v2322, %v2324
  %v2326 = vrot.slane %v2215, 1
  %v2327 = vsel %vm2288, %v2324, %v2326
  %v2328 = vrot.slane %v2218, 1
  %v2329 = vsel %vm2288, %v2326, %v2328
  %v2330 = vrot.slane %v2221, 1
  %v2331 = vsel %vm2288, %v2328, %v2330
  %v2332 = vrot.slane %v2224, 1
  %v2333 = vsel %vm2288, %v2330, %v2332
  %v2334 = vrot.slane %v2227, 1
  %v2335 = vsel %vm2288, %v2332, %v2334
  %v2336 = vrot.slane %v2230, 1
  %v2337 = vsel %vm2288, %v2334, %v2336
  %v2338 = vrot.slane %v2233, 1
  %v2339 = vsel %vm2288, %v2336, %v2338
  %v2340 = vrot.slane %v2236, 1
  %v2341 = vsel %vm2288, %v2338, %v2340
  %v2342 = vrot.slane %v2239, 1
  %v2343 = vsel %vm2288, %v2340, %v2342
  %v2344 = vrot.slane %v2242, 1
  %v2345 = vsel %vm2288, %v2342, %v2344
  %v2346 = vrot.slane %v2245, 1
  %v2347 = vsel %vm2288, %v2344, %v2346
  %v2348 = vrot.slane %v2248, 1
  %v2349 = vsel %vm2288, %v2346, %v2348
  %v2350 = vrot.slane %v2251, 1
  %v2351 = vsel %vm2288, %v2348, %v2350
  %v2352 = vrot.slane %v2254, 1
  %v2353 = vsel %vm2288, %v2350, %v2352
  %2386 = vst [vmem:[#allocation3 + $0x8] sm:$0xff] %v2291
  %2387 = vst [vmem:[#allocation3 + $0x30] sm:$0xff] %v2293
  %2388 = vst [vmem:[#allocation3 + $0x58] sm:$0xff] %v2295
  %2389 = vst [vmem:[#allocation3 + $0x80] sm:$0xff] %v2297
  %2390 = vst [vmem:[#allocation3 + $0xa8] sm:$0xff] %v2299
  %2391 = vst [vmem:[#allocation3 + $0xd0] sm:$0xff] %v2301
  %2392 = vst [vmem:[#allocation3 + $0xf8] sm:$0xff] %v2303
  %2393 = vst [vmem:[#allocation3 + $0x120] sm:$0xff] %v2305
  %2394 = vst [vmem:[#allocation3 + $0x148] sm:$0xff] %v2307
  %2395 = vst [vmem:[#allocation3 + $0x170] sm:$0xff] %v2309
  %2396 = vst [vmem:[#allocation3 + $0x198] sm:$0xff] %v2311
  %2397 = vst [vmem:[#allocation3 + $0x1c0] sm:$0xff] %v2313
  %2398 = vst [vmem:[#allocation3 + $0x1e8] sm:$0xff] %v2315
  %2399 = vst [vmem:[#allocation3 + $0x210] sm:$0xff] %v2317
  %2400 = vst [vmem:[#allocation3 + $0x238] sm:$0xff] %v2319
  %2401 = vst [vmem:[#allocation3 + $0x260] sm:$0xff] %v2321
  %2402 = vst [vmem:[#allocation3 + $0x288] sm:$0xff] %v2323
  %2403 = vst [vmem:[#allocation3 + $0x2b0] sm:$0xff] %v2325
  %2404 = vst [vmem:[#allocation3 + $0x2d8] sm:$0xff] %v2327
  %2405 = vst [vmem:[#allocation3 + $0x300] sm:$0xff] %v2329
  %2406 = vst [vmem:[#allocation3 + $0x328] sm:$0xff] %v2331
  %2407 = vst [vmem:[#allocation3 + $0x350] sm:$0xff] %v2333
  %2408 = vst [vmem:[#allocation3 + $0x378] sm:$0xff] %v2335
  %2409 = vst [vmem:[#allocation3 + $0x3a0] sm:$0xff] %v2337
  %2410 = vst [vmem:[#allocation3 + $0x3c8] sm:$0xff] %v2339
  %2411 = vst [vmem:[#allocation3 + $0x3f0] sm:$0xff] %v2341
  %2412 = vst [vmem:[#allocation3 + $0x418] sm:$0xff] %v2343
  %2413 = vst [vmem:[#allocation3 + $0x440] sm:$0xff] %v2345
  %2414 = vst [vmem:[#allocation3 + $0x468] sm:$0xff] %v2347
  %2415 = vst [vmem:[#allocation3 + $0x490] sm:$0xff] %v2349
  %2416 = vst [vmem:[#allocation3 + $0x4b8] sm:$0xff] %v2351
  %2417 = vst [vmem:[#allocation3 + $0x4e0] sm:$0xff] %v2353
  %v2418 = vld [vmem:[#allocation2 + $0x8] sm:$0xf]
  %v2419 = vld [vmem:[#allocation2 + $0xc] sm:$0xf]
  %v2420 = vld [vmem:[#allocation2 + $0x10] sm:$0xf]
  %v2421 = vld [vmem:[#allocation2 + $0x14] sm:$0xf]
  %v2422 = vld [vmem:[#allocation2 + $0x18] sm:$0xf]
  %v2423 = vld [vmem:[#allocation2 + $0x1c] sm:$0xf]
  %v2424 = vld [vmem:[#allocation2 + $0x20] sm:$0xf]
  %v2425 = vld [vmem:[#allocation2 + $0x24] sm:$0xf]
  %v2426 = vld [vmem:[#allocation2 + $0x28] sm:$0xf]
  %v2427 = vld [vmem:[#allocation2 + $0x2c] sm:$0xf]
  %v2428 = vld [vmem:[#allocation2 + $0x30] sm:$0xf]
  %v2429 = vld [vmem:[#allocation2 + $0x34] sm:$0xf]
  %v2430 = vld [vmem:[#allocation2 + $0x38] sm:$0xf]
  %v2431 = vld [vmem:[#allocation2 + $0x3c] sm:$0xf]
  %v2432 = vld [vmem:[#allocation2 + $0x40] sm:$0xf]
  %v2433 = vld [vmem:[#allocation2 + $0x44] sm:$0xf]
  %v2434 = vld [vmem:[#allocation2 + $0x48] sm:$0xf]
  %v2435 = vld [vmem:[#allocation2 + $0x4c] sm:$0xf]
  %v2436 = vld [vmem:[#allocation2 + $0x50] sm:$0xf]
  %v2437 = vld [vmem:[#allocation2 + $0x54] sm:$0xf]
  %v2438 = vld [vmem:[#allocation2 + $0x58] sm:$0xf]
  %v2439 = vld [vmem:[#allocation2 + $0x5c] sm:$0xf]
  %v2440 = vld [vmem:[#allocation2 + $0x60] sm:$0xf]
  %v2441 = vld [vmem:[#allocation2 + $0x64] sm:$0xf]
  %v2442 = vld [vmem:[#allocation2 + $0x68] sm:$0xf]
  %v2443 = vld [vmem:[#allocation2 + $0x6c] sm:$0xf]
  %v2444 = vld [vmem:[#allocation2 + $0x70] sm:$0xf]
  %v2445 = vld [vmem:[#allocation2 + $0x74] sm:$0xf]
  %v2446 = vld [vmem:[#allocation2 + $0x78] sm:$0xf]
  %v2447 = vld [vmem:[#allocation2 + $0x7c] sm:$0xf]
  %v2448 = vld [vmem:[#allocation2 + $0x80] sm:$0xf]
  %v2449 = vld [vmem:[#allocation2 + $0x84] sm:$0xf]
  %v2450 = vld [vmem:[#allocation2 + $0x88] sm:$0xf]
  %v2451 = vld [vmem:[#allocation2 + $0x8c] sm:$0xf]
  %v2452 = vld [vmem:[#allocation2 + $0x90] sm:$0xf]
  %v2453 = vld [vmem:[#allocation2 + $0x94] sm:$0xf]
  %v2454 = vld [vmem:[#allocation2 + $0x98] sm:$0xf]
  %v2455 = vld [vmem:[#allocation2 + $0x9c] sm:$0xf]
  %v2456 = vld [vmem:[#allocation2 + $0xa0] sm:$0xf]
  %v2457 = vld [vmem:[#allocation2 + $0xa4] sm:$0xf]
  %v2458 = vld [vmem:[#allocation2 + $0xa8] sm:$0xf]
  %v2459 = vld [vmem:[#allocation2 + $0xac] sm:$0xf]
  %v2460 = vld [vmem:[#allocation2 + $0xb0] sm:$0xf]
  %v2461 = vld [vmem:[#allocation2 + $0xb4] sm:$0xf]
  %v2462 = vld [vmem:[#allocation2 + $0xb8] sm:$0xf]
  %v2463 = vld [vmem:[#allocation2 + $0xbc] sm:$0xf]
  %v2464 = vld [vmem:[#allocation2 + $0xc0] sm:$0xf]
  %v2465 = vld [vmem:[#allocation2 + $0xc4] sm:$0xf]
  %v2466 = vld [vmem:[#allocation2 + $0xc8] sm:$0xf]
  %v2467 = vld [vmem:[#allocation2 + $0xcc] sm:$0xf]
  %v2468 = vld [vmem:[#allocation2 + $0xd0] sm:$0xf]
  %v2469 = vld [vmem:[#allocation2 + $0xd4] sm:$0xf]
  %v2470 = vld [vmem:[#allocation2 + $0xd8] sm:$0xf]
  %v2471 = vld [vmem:[#allocation2 + $0xdc] sm:$0xf]
  %v2472 = vld [vmem:[#allocation2 + $0xe0] sm:$0xf]
  %v2473 = vld [vmem:[#allocation2 + $0xe4] sm:$0xf]
  %v2474 = vld [vmem:[#allocation2 + $0xe8] sm:$0xf]
  %v2475 = vld [vmem:[#allocation2 + $0xec] sm:$0xf]
  %v2476 = vld [vmem:[#allocation2 + $0xf0] sm:$0xf]
  %v2477 = vld [vmem:[#allocation2 + $0xf4] sm:$0xf]
  %v2478 = vld [vmem:[#allocation2 + $0xf8] sm:$0xf]
  %v2479 = vld [vmem:[#allocation2 + $0xfc] sm:$0xf]
  %v2480 = vld [vmem:[#allocation2 + $0x100] sm:$0xf]
  %v2481 = vld [vmem:[#allocation2 + $0x104] sm:$0xf]
  %v2482 = vld [vmem:[#allocation2 + $0x108] sm:$0x1]
  %v2483 = vld [vmem:[#allocation2 + $0x8] sm:$0xe]
  %v2549 = vunpack.c.l.b16 %v2418
  %v2550 = vunpack.c.l.b16 %v2419
  %v2551 = vunpack.c.l.b16 %v2420
  %v2552 = vunpack.c.l.b16 %v2421
  %v2553 = vunpack.c.l.b16 %v2422
  %v2554 = vunpack.c.l.b16 %v2423
  %v2555 = vunpack.c.l.b16 %v2424
  %v2556 = vunpack.c.l.b16 %v2425
  %v2557 = vunpack.c.l.b16 %v2426
  %v2558 = vunpack.c.l.b16 %v2427
  %v2559 = vunpack.c.l.b16 %v2428
  %v2560 = vunpack.c.l.b16 %v2429
  %v2561 = vunpack.c.l.b16 %v2430
  %v2562 = vunpack.c.l.b16 %v2431
  %v2563 = vunpack.c.l.b16 %v2432
  %v2564 = vunpack.c.l.b16 %v2433
  %v2565 = vunpack.c.l.b16 %v2434
  %v2566 = vunpack.c.l.b16 %v2435
  %v2567 = vunpack.c.l.b16 %v2436
  %v2568 = vunpack.c.l.b16 %v2437
  %v2569 = vunpack.c.l.b16 %v2438
  %v2570 = vunpack.c.l.b16 %v2439
  %v2571 = vunpack.c.l.b16 %v2440
  %v2572 = vunpack.c.l.b16 %v2441
  %v2573 = vunpack.c.l.b16 %v2442
  %v2574 = vunpack.c.l.b16 %v2443
  %v2575 = vunpack.c.l.b16 %v2444
  %v2576 = vunpack.c.l.b16 %v2445
  %v2577 = vunpack.c.l.b16 %v2446
  %v2578 = vunpack.c.l.b16 %v2447
  %v2579 = vunpack.c.l.b16 %v2448
  %v2580 = vunpack.c.l.b16 %v2449
  %v2581 = vunpack.c.l.b16 %v2450
  %v2582 = vunpack.c.l.b16 %v2451
  %v2583 = vunpack.c.l.b16 %v2452
  %v2584 = vunpack.c.l.b16 %v2453
  %v2585 = vunpack.c.l.b16 %v2454
  %v2586 = vunpack.c.l.b16 %v2455
  %v2587 = vunpack.c.l.b16 %v2456
  %v2588 = vunpack.c.l.b16 %v2457
  %v2589 = vunpack.c.l.b16 %v2458
  %v2590 = vunpack.c.l.b16 %v2459
  %v2591 = vunpack.c.l.b16 %v2460
  %v2592 = vunpack.c.l.b16 %v2461
  %v2593 = vunpack.c.l.b16 %v2462
  %v2594 = vunpack.c.l.b16 %v2463
  %v2595 = vunpack.c.l.b16 %v2464
  %v2596 = vunpack.c.l.b16 %v2465
  %v2597 = vunpack.c.l.b16 %v2466
  %v2598 = vunpack.c.l.b16 %v2467
  %v2599 = vunpack.c.l.b16 %v2468
  %v2600 = vunpack.c.l.b16 %v2469
  %v2601 = vunpack.c.l.b16 %v2470
  %v2602 = vunpack.c.l.b16 %v2471
  %v2603 = vunpack.c.l.b16 %v2472
  %v2604 = vunpack.c.l.b16 %v2473
  %v2605 = vunpack.c.l.b16 %v2474
  %v2606 = vunpack.c.l.b16 %v2475
  %v2607 = vunpack.c.l.b16 %v2476
  %v2608 = vunpack.c.l.b16 %v2477
  %v2609 = vunpack.c.l.b16 %v2478
  %v2610 = vunpack.c.l.b16 %v2479
  %v2611 = vunpack.c.l.b16 %v2480
  %v2612 = vunpack.c.l.b16 %v2481
  %v2613 = vunpack.c.l.b16 %v2482
  %v2614 = vpack.c.b16 %v2550, %v2549
  %v2615 = vpack.c.b16 %v2552, %v2551
  %v2616 = vpack.c.b16 %v2554, %v2553
  %v2617 = vpack.c.b16 %v2556, %v2555
  %v2618 = vpack.c.b16 %v2558, %v2557
  %v2619 = vpack.c.b16 %v2560, %v2559
  %v2620 = vpack.c.b16 %v2562, %v2561
  %v2621 = vpack.c.b16 %v2564, %v2563
  %v2622 = vpack.c.b16 %v2566, %v2565
  %v2623 = vpack.c.b16 %v2568, %v2567
  %v2624 = vpack.c.b16 %v2570, %v2569
  %v2625 = vpack.c.b16 %v2572, %v2571
  %v2626 = vpack.c.b16 %v2574, %v2573
  %v2627 = vpack.c.b16 %v2576, %v2575
  %v2628 = vpack.c.b16 %v2578, %v2577
  %v2629 = vpack.c.b16 %v2580, %v2579
  %v2630 = vpack.c.b16 %v2582, %v2581
  %v2631 = vpack.c.b16 %v2584, %v2583
  %v2632 = vpack.c.b16 %v2586, %v2585
  %v2633 = vpack.c.b16 %v2588, %v2587
  %v2634 = vpack.c.b16 %v2590, %v2589
  %v2635 = vpack.c.b16 %v2592, %v2591
  %v2636 = vpack.c.b16 %v2594, %v2593
  %v2637 = vpack.c.b16 %v2596, %v2595
  %v2638 = vpack.c.b16 %v2598, %v2597
  %v2639 = vpack.c.b16 %v2600, %v2599
  %v2640 = vpack.c.b16 %v2602, %v2601
  %v2641 = vpack.c.b16 %v2604, %v2603
  %v2642 = vpack.c.b16 %v2606, %v2605
  %v2643 = vpack.c.b16 %v2608, %v2607
  %v2644 = vpack.c.b16 %v2610, %v2609
  %v2645 = vpack.c.b16 %v2612, %v2611
  %v2646 = vpack.c.b16 %v2613, %v2613
  %v2648 = vunpack.c.l.b16 %v2483
  %v2649 = vpack.c.b16 %v2550, %v2648
  %v2651 = vshrl.u32 %v2649, 16
  %v2653 = vshll.u32 %v2649, 16
  %v2655 = vrot.slane %v2653, 1
  %v2656 = vor.u32 %v2651, %v2655
  %v2658 = vshll.u32 %v2615, 16
  %v2660 = vrot.slane %v2658, 1
  %v2661 = vsel %vm1337, %v2656, %v2660
  %v2662 = vshrl.u32 %v2615, 16
  %v2664 = vor.u32 %v2662, %v2660
  %v2666 = vshll.u32 %v2616, 16
  %v2668 = vrot.slane %v2666, 1
  %v2669 = vsel %vm1337, %v2664, %v2668
  %v2670 = vshrl.u32 %v2616, 16
  %v2672 = vor.u32 %v2670, %v2668
  %v2674 = vshll.u32 %v2617, 16
  %v2676 = vrot.slane %v2674, 1
  %v2677 = vsel %vm1337, %v2672, %v2676
  %v2678 = vshrl.u32 %v2617, 16
  %v2680 = vor.u32 %v2678, %v2676
  %v2682 = vshll.u32 %v2618, 16
  %v2684 = vrot.slane %v2682, 1
  %v2685 = vsel %vm1337, %v2680, %v2684
  %v2686 = vshrl.u32 %v2618, 16
  %v2688 = vor.u32 %v2686, %v2684
  %v2690 = vshll.u32 %v2619, 16
  %v2692 = vrot.slane %v2690, 1
  %v2693 = vsel %vm1337, %v2688, %v2692
  %v2694 = vshrl.u32 %v2619, 16
  %v2696 = vor.u32 %v2694, %v2692
  %v2698 = vshll.u32 %v2620, 16
  %v2700 = vrot.slane %v2698, 1
  %v2701 = vsel %vm1337, %v2696, %v2700
  %v2702 = vshrl.u32 %v2620, 16
  %v2704 = vor.u32 %v2702, %v2700
  %v2706 = vshll.u32 %v2621, 16
  %v2708 = vrot.slane %v2706, 1
  %v2709 = vsel %vm1337, %v2704, %v2708
  %v2710 = vshrl.u32 %v2621, 16
  %v2712 = vor.u32 %v2710, %v2708
  %v2714 = vshll.u32 %v2622, 16
  %v2716 = vrot.slane %v2714, 1
  %v2717 = vsel %vm1337, %v2712, %v2716
  %v2718 = vshrl.u32 %v2622, 16
  %v2720 = vor.u32 %v2718, %v2716
  %v2722 = vshll.u32 %v2623, 16
  %v2724 = vrot.slane %v2722, 1
  %v2725 = vsel %vm1337, %v2720, %v2724
  %v2726 = vshrl.u32 %v2623, 16
  %v2728 = vor.u32 %v2726, %v2724
  %v2730 = vshll.u32 %v2624, 16
  %v2732 = vrot.slane %v2730, 1
  %v2733 = vsel %vm1337, %v2728, %v2732
  %v2734 = vshrl.u32 %v2624, 16
  %v2736 = vor.u32 %v2734, %v2732
  %v2738 = vshll.u32 %v2625, 16
  %v2740 = vrot.slane %v2738, 1
  %v2741 = vsel %vm1337, %v2736, %v2740
  %v2742 = vshrl.u32 %v2625, 16
  %v2744 = vor.u32 %v2742, %v2740
  %v2746 = vshll.u32 %v2626, 16
  %v2748 = vrot.slane %v2746, 1
  %v2749 = vsel %vm1337, %v2744, %v2748
  %v2750 = vshrl.u32 %v2626, 16
  %v2752 = vor.u32 %v2750, %v2748
  %v2754 = vshll.u32 %v2627, 16
  %v2756 = vrot.slane %v2754, 1
  %v2757 = vsel %vm1337, %v2752, %v2756
  %v2758 = vshrl.u32 %v2627, 16
  %v2760 = vor.u32 %v2758, %v2756
  %v2762 = vshll.u32 %v2628, 16
  %v2764 = vrot.slane %v2762, 1
  %v2765 = vsel %vm1337, %v2760, %v2764
  %v2766 = vshrl.u32 %v2628, 16
  %v2768 = vor.u32 %v2766, %v2764
  %v2770 = vshll.u32 %v2629, 16
  %v2772 = vrot.slane %v2770, 1
  %v2773 = vsel %vm1337, %v2768, %v2772
  %v2774 = vshrl.u32 %v2629, 16
  %v2776 = vor.u32 %v2774, %v2772
  %v2778 = vshll.u32 %v2630, 16
  %v2780 = vrot.slane %v2778, 1
  %v2781 = vsel %vm1337, %v2776, %v2780
  %v2782 = vshrl.u32 %v2630, 16
  %v2784 = vor.u32 %v2782, %v2780
  %v2786 = vshll.u32 %v2631, 16
  %v2788 = vrot.slane %v2786, 1
  %v2789 = vsel %vm1337, %v2784, %v2788
  %v2790 = vshrl.u32 %v2631, 16
  %v2792 = vor.u32 %v2790, %v2788
  %v2794 = vshll.u32 %v2632, 16
  %v2796 = vrot.slane %v2794, 1
  %v2797 = vsel %vm1337, %v2792, %v2796
  %v2798 = vshrl.u32 %v2632, 16
  %v2800 = vor.u32 %v2798, %v2796
  %v2802 = vshll.u32 %v2633, 16
  %v2804 = vrot.slane %v2802, 1
  %v2805 = vsel %vm1337, %v2800, %v2804
  %v2806 = vshrl.u32 %v2633, 16
  %v2808 = vor.u32 %v2806, %v2804
  %v2810 = vshll.u32 %v2634, 16
  %v2812 = vrot.slane %v2810, 1
  %v2813 = vsel %vm1337, %v2808, %v2812
  %v2814 = vshrl.u32 %v2634, 16
  %v2816 = vor.u32 %v2814, %v2812
  %v2818 = vshll.u32 %v2635, 16
  %v2820 = vrot.slane %v2818, 1
  %v2821 = vsel %vm1337, %v2816, %v2820
  %v2822 = vshrl.u32 %v2635, 16
  %v2824 = vor.u32 %v2822, %v2820
  %v2826 = vshll.u32 %v2636, 16
  %v2828 = vrot.slane %v2826, 1
  %v2829 = vsel %vm1337, %v2824, %v2828
  %v2830 = vshrl.u32 %v2636, 16
  %v2832 = vor.u32 %v2830, %v2828
  %v2834 = vshll.u32 %v2637, 16
  %v2836 = vrot.slane %v2834, 1
  %v2837 = vsel %vm1337, %v2832, %v2836
  %v2838 = vshrl.u32 %v2637, 16
  %v2840 = vor.u32 %v2838, %v2836
  %v2842 = vshll.u32 %v2638, 16
  %v2844 = vrot.slane %v2842, 1
  %v2845 = vsel %vm1337, %v2840, %v2844
  %v2846 = vshrl.u32 %v2638, 16
  %v2848 = vor.u32 %v2846, %v2844
  %v2850 = vshll.u32 %v2639, 16
  %v2852 = vrot.slane %v2850, 1
  %v2853 = vsel %vm1337, %v2848, %v2852
  %v2854 = vshrl.u32 %v2639, 16
  %v2856 = vor.u32 %v2854, %v2852
  %v2858 = vshll.u32 %v2640, 16
  %v2860 = vrot.slane %v2858, 1
  %v2861 = vsel %vm1337, %v2856, %v2860
  %v2862 = vshrl.u32 %v2640, 16
  %v2864 = vor.u32 %v2862, %v2860
  %v2866 = vshll.u32 %v2641, 16
  %v2868 = vrot.slane %v2866, 1
  %v2869 = vsel %vm1337, %v2864, %v2868
  %v2870 = vshrl.u32 %v2641, 16
  %v2872 = vor.u32 %v2870, %v2868
  %v2874 = vshll.u32 %v2642, 16
  %v2876 = vrot.slane %v2874, 1
  %v2877 = vsel %vm1337, %v2872, %v2876
  %v2878 = vshrl.u32 %v2642, 16
  %v2880 = vor.u32 %v2878, %v2876
  %v2882 = vshll.u32 %v2643, 16
  %v2884 = vrot.slane %v2882, 1
  %v2885 = vsel %vm1337, %v2880, %v2884
  %v2886 = vshrl.u32 %v2643, 16
  %v2888 = vor.u32 %v2886, %v2884
  %v2890 = vshll.u32 %v2644, 16
  %v2892 = vrot.slane %v2890, 1
  %v2893 = vsel %vm1337, %v2888, %v2892
  %v2894 = vshrl.u32 %v2644, 16
  %v2896 = vor.u32 %v2894, %v2892
  %v2898 = vshll.u32 %v2645, 16
  %v2900 = vrot.slane %v2898, 1
  %v2901 = vsel %vm1337, %v2896, %v2900
  %v2902 = vshrl.u32 %v2645, 16
  %v2904 = vor.u32 %v2902, %v2900
  %v2906 = vshll.u32 %v2646, 16
  %v2908 = vrot.slane %v2906, 1
  %v2909 = vsel %vm1337, %v2904, %v2908
  %v2910 = vshrl.u32 %v2646, 16
  %2912 = vrot.lane.b32.xlu0 %v2661, 64
  %v2913 = vpop.permute.xlu0 %2912
  %2914 = vrot.lane.b32.xlu0 %v2669, 64
  %v2915 = vpop.permute.xlu0 %2914
  %2916 = vrot.lane.b32.xlu0 %v2677, 64
  %v2917 = vpop.permute.xlu0 %2916
  %2918 = vrot.lane.b32.xlu0 %v2685, 64
  %v2919 = vpop.permute.xlu0 %2918
  %2920 = vrot.lane.b32.xlu0 %v2693, 64
  %v2921 = vpop.permute.xlu0 %2920
  %2922 = vrot.lane.b32.xlu0 %v2701, 64
  %v2923 = vpop.permute.xlu0 %2922
  %2924 = vrot.lane.b32.xlu0 %v2709, 64
  %v2925 = vpop.permute.xlu0 %2924
  %2926 = vrot.lane.b32.xlu0 %v2717, 64
  %v2927 = vpop.permute.xlu0 %2926
  %2928 = vrot.lane.b32.xlu0 %v2725, 64
  %v2929 = vpop.permute.xlu0 %2928
  %2930 = vrot.lane.b32.xlu0 %v2733, 64
  %v2931 = vpop.permute.xlu0 %2930
  %2932 = vrot.lane.b32.xlu0 %v2741, 64
  %v2933 = vpop.permute.xlu0 %2932
  %2934 = vrot.lane.b32.xlu0 %v2749, 64
  %v2935 = vpop.permute.xlu0 %2934
  %2936 = vrot.lane.b32.xlu0 %v2757, 64
  %v2937 = vpop.permute.xlu0 %2936
  %2938 = vrot.lane.b32.xlu0 %v2765, 64
  %v2939 = vpop.permute.xlu0 %2938
  %2940 = vrot.lane.b32.xlu0 %v2773, 64
  %v2941 = vpop.permute.xlu0 %2940
  %2942 = vrot.lane.b32.xlu0 %v2781, 64
  %v2943 = vpop.permute.xlu0 %2942
  %2944 = vrot.lane.b32.xlu0 %v2789, 64
  %v2945 = vpop.permute.xlu0 %2944
  %2946 = vrot.lane.b32.xlu0 %v2797, 64
  %v2947 = vpop.permute.xlu0 %2946
  %2948 = vrot.lane.b32.xlu0 %v2805, 64
  %v2949 = vpop.permute.xlu0 %2948
  %2950 = vrot.lane.b32.xlu0 %v2813, 64
  %v2951 = vpop.permute.xlu0 %2950
  %2952 = vrot.lane.b32.xlu0 %v2821, 64
  %v2953 = vpop.permute.xlu0 %2952
  %2954 = vrot.lane.b32.xlu0 %v2829, 64
  %v2955 = vpop.permute.xlu0 %2954
  %2956 = vrot.lane.b32.xlu0 %v2837, 64
  %v2957 = vpop.permute.xlu0 %2956
  %2958 = vrot.lane.b32.xlu0 %v2845, 64
  %v2959 = vpop.permute.xlu0 %2958
  %2960 = vrot.lane.b32.xlu0 %v2853, 64
  %v2961 = vpop.permute.xlu0 %2960
  %2962 = vrot.lane.b32.xlu0 %v2861, 64
  %v2963 = vpop.permute.xlu0 %2962
  %2964 = vrot.lane.b32.xlu0 %v2869, 64
  %v2965 = vpop.permute.xlu0 %2964
  %2966 = vrot.lane.b32.xlu0 %v2877, 64
  %v2967 = vpop.permute.xlu0 %2966
  %2968 = vrot.lane.b32.xlu0 %v2885, 64
  %v2969 = vpop.permute.xlu0 %2968
  %2970 = vrot.lane.b32.xlu0 %v2893, 64
  %v2971 = vpop.permute.xlu0 %2970
  %2972 = vrot.lane.b32.xlu0 %v2901, 64
  %v2973 = vpop.permute.xlu0 %2972
  %2974 = vrot.lane.b32.xlu0 %v2909, 64
  %v2975 = vpop.permute.xlu0 %2974
  %2976 = vrot.lane.b32.xlu0 %v2910, 64
  %v2977 = vpop.permute.xlu0 %2976
  %v2980 = vsel %vm1662, %v2614, %v2913
  %v2982 = vsel %vm1662, %v2615, %v2915
  %v2984 = vsel %vm1662, %v2616, %v2917
  %v2986 = vsel %vm1662, %v2617, %v2919
  %v2988 = vsel %vm1662, %v2618, %v2921
  %v2990 = vsel %vm1662, %v2619, %v2923
  %v2992 = vsel %vm1662, %v2620, %v2925
  %v2994 = vsel %vm1662, %v2621, %v2927
  %v2996 = vsel %vm1662, %v2622, %v2929
  %v2998 = vsel %vm1662, %v2623, %v2931
  %v3000 = vsel %vm1662, %v2624, %v2933
  %v3002 = vsel %vm1662, %v2625, %v2935
  %v3004 = vsel %vm1662, %v2626, %v2937
  %v3006 = vsel %vm1662, %v2627, %v2939
  %v3008 = vsel %vm1662, %v2628, %v2941
  %v3010 = vsel %vm1662, %v2629, %v2943
  %v3012 = vsel %vm1662, %v2630, %v2945
  %v3014 = vsel %vm1662, %v2631, %v2947
  %v3016 = vsel %vm1662, %v2632, %v2949
  %v3018 = vsel %vm1662, %v2633, %v2951
  %v3020 = vsel %vm1662, %v2634, %v2953
  %v3022 = vsel %vm1662, %v2635, %v2955
  %v3024 = vsel %vm1662, %v2636, %v2957
  %v3026 = vsel %vm1662, %v2637, %v2959
  %v3028 = vsel %vm1662, %v2638, %v2961
  %v3030 = vsel %vm1662, %v2639, %v2963
  %v3032 = vsel %vm1662, %v2640, %v2965
  %v3034 = vsel %vm1662, %v2641, %v2967
  %v3036 = vsel %vm1662, %v2642, %v2969
  %v3038 = vsel %vm1662, %v2643, %v2971
  %v3040 = vsel %vm1662, %v2644, %v2973
  %v3042 = vsel %vm1662, %v2645, %v2975
  %v3044 = vsel %vm1662, %v2646, %v2977
  %v3045 = vshrl.u32 %v2980, 16
  %v3047 = vshll.u32 %v2980, 16
  %v3049 = vrot.slane %v3047, 1
  %v3050 = vor.u32 %v3045, %v3049
  %v3051 = vshll.u32 %v2982, 16
  %v3053 = vrot.slane %v3051, 1
  %v3054 = vsel %vm1337, %v3050, %v3053
  %v3055 = vshrl.u32 %v2982, 16
  %v3057 = vor.u32 %v3055, %v3053
  %v3058 = vshll.u32 %v2984, 16
  %v3060 = vrot.slane %v3058, 1
  %v3061 = vsel %vm1337, %v3057, %v3060
  %v3062 = vshrl.u32 %v2984, 16
  %v3064 = vor.u32 %v3062, %v3060
  %v3065 = vshll.u32 %v2986, 16
  %v3067 = vrot.slane %v3065, 1
  %v3068 = vsel %vm1337, %v3064, %v3067
  %v3069 = vshrl.u32 %v2986, 16
  %v3071 = vor.u32 %v3069, %v3067
  %v3072 = vshll.u32 %v2988, 16
  %v3074 = vrot.slane %v3072, 1
  %v3075 = vsel %vm1337, %v3071, %v3074
  %v3076 = vshrl.u32 %v2988, 16
  %v3078 = vor.u32 %v3076, %v3074
  %v3079 = vshll.u32 %v2990, 16
  %v3081 = vrot.slane %v3079, 1
  %v3082 = vsel %vm1337, %v3078, %v3081
  %v3083 = vshrl.u32 %v2990, 16
  %v3085 = vor.u32 %v3083, %v3081
  %v3086 = vshll.u32 %v2992, 16
  %v3088 = vrot.slane %v3086, 1
  %v3089 = vsel %vm1337, %v3085, %v3088
  %v3090 = vshrl.u32 %v2992, 16
  %v3092 = vor.u32 %v3090, %v3088
  %v3093 = vshll.u32 %v2994, 16
  %v3095 = vrot.slane %v3093, 1
  %v3096 = vsel %vm1337, %v3092, %v3095
  %v3097 = vshrl.u32 %v2994, 16
  %v3099 = vor.u32 %v3097, %v3095
  %v3100 = vshll.u32 %v2996, 16
  %v3102 = vrot.slane %v3100, 1
  %v3103 = vsel %vm1337, %v3099, %v3102
  %v3104 = vshrl.u32 %v2996, 16
  %v3106 = vor.u32 %v3104, %v3102
  %v3107 = vshll.u32 %v2998, 16
  %v3109 = vrot.slane %v3107, 1
  %v3110 = vsel %vm1337, %v3106, %v3109
  %v3111 = vshrl.u32 %v2998, 16
  %v3113 = vor.u32 %v3111, %v3109
  %v3114 = vshll.u32 %v3000, 16
  %v3116 = vrot.slane %v3114, 1
  %v3117 = vsel %vm1337, %v3113, %v3116
  %v3118 = vshrl.u32 %v3000, 16
  %v3120 = vor.u32 %v3118, %v3116
  %v3121 = vshll.u32 %v3002, 16
  %v3123 = vrot.slane %v3121, 1
  %v3124 = vsel %vm1337, %v3120, %v3123
  %v3125 = vshrl.u32 %v3002, 16
  %v3127 = vor.u32 %v3125, %v3123
  %v3128 = vshll.u32 %v3004, 16
  %v3130 = vrot.slane %v3128, 1
  %v3131 = vsel %vm1337, %v3127, %v3130
  %v3132 = vshrl.u32 %v3004, 16
  %v3134 = vor.u32 %v3132, %v3130
  %v3135 = vshll.u32 %v3006, 16
  %v3137 = vrot.slane %v3135, 1
  %v3138 = vsel %vm1337, %v3134, %v3137
  %v3139 = vshrl.u32 %v3006, 16
  %v3141 = vor.u32 %v3139, %v3137
  %v3142 = vshll.u32 %v3008, 16
  %v3144 = vrot.slane %v3142, 1
  %v3145 = vsel %vm1337, %v3141, %v3144
  %v3146 = vshrl.u32 %v3008, 16
  %v3148 = vor.u32 %v3146, %v3144
  %v3149 = vshll.u32 %v3010, 16
  %v3151 = vrot.slane %v3149, 1
  %v3152 = vsel %vm1337, %v3148, %v3151
  %v3153 = vshrl.u32 %v3010, 16
  %v3155 = vor.u32 %v3153, %v3151
  %v3156 = vshll.u32 %v3012, 16
  %v3158 = vrot.slane %v3156, 1
  %v3159 = vsel %vm1337, %v3155, %v3158
  %v3160 = vshrl.u32 %v3012, 16
  %v3162 = vor.u32 %v3160, %v3158
  %v3163 = vshll.u32 %v3014, 16
  %v3165 = vrot.slane %v3163, 1
  %v3166 = vsel %vm1337, %v3162, %v3165
  %v3167 = vshrl.u32 %v3014, 16
  %v3169 = vor.u32 %v3167, %v3165
  %v3170 = vshll.u32 %v3016, 16
  %v3172 = vrot.slane %v3170, 1
  %v3173 = vsel %vm1337, %v3169, %v3172
  %v3174 = vshrl.u32 %v3016, 16
  %v3176 = vor.u32 %v3174, %v3172
  %v3177 = vshll.u32 %v3018, 16
  %v3179 = vrot.slane %v3177, 1
  %v3180 = vsel %vm1337, %v3176, %v3179
  %v3181 = vshrl.u32 %v3018, 16
  %v3183 = vor.u32 %v3181, %v3179
  %v3184 = vshll.u32 %v3020, 16
  %v3186 = vrot.slane %v3184, 1
  %v3187 = vsel %vm1337, %v3183, %v3186
  %v3188 = vshrl.u32 %v3020, 16
  %v3190 = vor.u32 %v3188, %v3186
  %v3191 = vshll.u32 %v3022, 16
  %v3193 = vrot.slane %v3191, 1
  %v3194 = vsel %vm1337, %v3190, %v3193
  %v3195 = vshrl.u32 %v3022, 16
  %v3197 = vor.u32 %v3195, %v3193
  %v3198 = vshll.u32 %v3024, 16
  %v3200 = vrot.slane %v3198, 1
  %v3201 = vsel %vm1337, %v3197, %v3200
  %v3202 = vshrl.u32 %v3024, 16
  %v3204 = vor.u32 %v3202, %v3200
  %v3205 = vshll.u32 %v3026, 16
  %v3207 = vrot.slane %v3205, 1
  %v3208 = vsel %vm1337, %v3204, %v3207
  %v3209 = vshrl.u32 %v3026, 16
  %v3211 = vor.u32 %v3209, %v3207
  %v3212 = vshll.u32 %v3028, 16
  %v3214 = vrot.slane %v3212, 1
  %v3215 = vsel %vm1337, %v3211, %v3214
  %v3216 = vshrl.u32 %v3028, 16
  %v3218 = vor.u32 %v3216, %v3214
  %v3219 = vshll.u32 %v3030, 16
  %v3221 = vrot.slane %v3219, 1
  %v3222 = vsel %vm1337, %v3218, %v3221
  %v3223 = vshrl.u32 %v3030, 16
  %v3225 = vor.u32 %v3223, %v3221
  %v3226 = vshll.u32 %v3032, 16
  %v3228 = vrot.slane %v3226, 1
  %v3229 = vsel %vm1337, %v3225, %v3228
  %v3230 = vshrl.u32 %v3032, 16
  %v3232 = vor.u32 %v3230, %v3228
  %v3233 = vshll.u32 %v3034, 16
  %v3235 = vrot.slane %v3233, 1
  %v3236 = vsel %vm1337, %v3232, %v3235
  %v3237 = vshrl.u32 %v3034, 16
  %v3239 = vor.u32 %v3237, %v3235
  %v3240 = vshll.u32 %v3036, 16
  %v3242 = vrot.slane %v3240, 1
  %v3243 = vsel %vm1337, %v3239, %v3242
  %v3244 = vshrl.u32 %v3036, 16
  %v3246 = vor.u32 %v3244, %v3242
  %v3247 = vshll.u32 %v3038, 16
  %v3249 = vrot.slane %v3247, 1
  %v3250 = vsel %vm1337, %v3246, %v3249
  %v3251 = vshrl.u32 %v3038, 16
  %v3253 = vor.u32 %v3251, %v3249
  %v3254 = vshll.u32 %v3040, 16
  %v3256 = vrot.slane %v3254, 1
  %v3257 = vsel %vm1337, %v3253, %v3256
  %v3258 = vshrl.u32 %v3040, 16
  %v3260 = vor.u32 %v3258, %v3256
  %v3261 = vshll.u32 %v3042, 16
  %v3263 = vrot.slane %v3261, 1
  %v3264 = vsel %vm1337, %v3260, %v3263
  %v3265 = vshrl.u32 %v3042, 16
  %v3267 = vor.u32 %v3265, %v3263
  %v3268 = vshll.u32 %v3044, 16
  %v3270 = vrot.slane %v3268, 1
  %v3271 = vsel %vm1337, %v3267, %v3270
  %3304 = vst [vmem:[#allocation3 + $0x10] sm:$0xff] %v3054
  %3305 = vst [vmem:[#allocation3 + $0x38] sm:$0xff] %v3061
  %3306 = vst [vmem:[#allocation3 + $0x60] sm:$0xff] %v3068
  %3307 = vst [vmem:[#allocation3 + $0x88] sm:$0xff] %v3075
  %3308 = vst [vmem:[#allocation3 + $0xb0] sm:$0xff] %v3082
  %3309 = vst [vmem:[#allocation3 + $0xd8] sm:$0xff] %v3089
  %3310 = vst [vmem:[#allocation3 + $0x100] sm:$0xff] %v3096
  %3311 = vst [vmem:[#allocation3 + $0x128] sm:$0xff] %v3103
  %3312 = vst [vmem:[#allocation3 + $0x150] sm:$0xff] %v3110
  %3313 = vst [vmem:[#allocation3 + $0x178] sm:$0xff] %v3117
  %3314 = vst [vmem:[#allocation3 + $0x1a0] sm:$0xff] %v3124
  %3315 = vst [vmem:[#allocation3 + $0x1c8] sm:$0xff] %v3131
  %3316 = vst [vmem:[#allocation3 + $0x1f0] sm:$0xff] %v3138
  %3317 = vst [vmem:[#allocation3 + $0x218] sm:$0xff] %v3145
  %3318 = vst [vmem:[#allocation3 + $0x240] sm:$0xff] %v3152
  %3319 = vst [vmem:[#allocation3 + $0x268] sm:$0xff] %v3159
  %3320 = vst [vmem:[#allocation3 + $0x290] sm:$0xff] %v3166
  %3321 = vst [vmem:[#allocation3 + $0x2b8] sm:$0xff] %v3173
  %3322 = vst [vmem:[#allocation3 + $0x2e0] sm:$0xff] %v3180
  %3323 = vst [vmem:[#allocation3 + $0x308] sm:$0xff] %v3187
  %3324 = vst [vmem:[#allocation3 + $0x330] sm:$0xff] %v3194
  %3325 = vst [vmem:[#allocation3 + $0x358] sm:$0xff] %v3201
  %3326 = vst [vmem:[#allocation3 + $0x380] sm:$0xff] %v3208
  %3327 = vst [vmem:[#allocation3 + $0x3a8] sm:$0xff] %v3215
  %3328 = vst [vmem:[#allocation3 + $0x3d0] sm:$0xff] %v3222
  %3329 = vst [vmem:[#allocation3 + $0x3f8] sm:$0xff] %v3229
  %3330 = vst [vmem:[#allocation3 + $0x420] sm:$0xff] %v3236
  %3331 = vst [vmem:[#allocation3 + $0x448] sm:$0xff] %v3243
  %3332 = vst [vmem:[#allocation3 + $0x470] sm:$0xff] %v3250
  %3333 = vst [vmem:[#allocation3 + $0x498] sm:$0xff] %v3257
  %3334 = vst [vmem:[#allocation3 + $0x4c0] sm:$0xff] %v3264
  %3335 = vst [vmem:[#allocation3 + $0x4e8] sm:$0xff] %v3271
  %v3336 = vld [vmem:[#allocation2 + $0x10] sm:$0xf]
  %v3337 = vld [vmem:[#allocation2 + $0x14] sm:$0xf]
  %v3338 = vld [vmem:[#allocation2 + $0x18] sm:$0xf]
  %v3339 = vld [vmem:[#allocation2 + $0x1c] sm:$0xf]
  %v3340 = vld [vmem:[#allocation2 + $0x20] sm:$0xf]
  %v3341 = vld [vmem:[#allocation2 + $0x24] sm:$0xf]
  %v3342 = vld [vmem:[#allocation2 + $0x28] sm:$0xf]
  %v3343 = vld [vmem:[#allocation2 + $0x2c] sm:$0xf]
  %v3344 = vld [vmem:[#allocation2 + $0x30] sm:$0xf]
  %v3345 = vld [vmem:[#allocation2 + $0x34] sm:$0xf]
  %v3346 = vld [vmem:[#allocation2 + $0x38] sm:$0xf]
  %v3347 = vld [vmem:[#allocation2 + $0x3c] sm:$0xf]
  %v3348 = vld [vmem:[#allocation2 + $0x40] sm:$0xf]
  %v3349 = vld [vmem:[#allocation2 + $0x44] sm:$0xf]
  %v3350 = vld [vmem:[#allocation2 + $0x48] sm:$0xf]
  %v3351 = vld [vmem:[#allocation2 + $0x4c] sm:$0xf]
  %v3352 = vld [vmem:[#allocation2 + $0x50] sm:$0xf]
  %v3353 = vld [vmem:[#allocation2 + $0x54] sm:$0xf]
  %v3354 = vld [vmem:[#allocation2 + $0x58] sm:$0xf]
  %v3355 = vld [vmem:[#allocation2 + $0x5c] sm:$0xf]
  %v3356 = vld [vmem:[#allocation2 + $0x60] sm:$0xf]
  %v3357 = vld [vmem:[#allocation2 + $0x64] sm:$0xf]
  %v3358 = vld [vmem:[#allocation2 + $0x68] sm:$0xf]
  %v3359 = vld [vmem:[#allocation2 + $0x6c] sm:$0xf]
  %v3360 = vld [vmem:[#allocation2 + $0x70] sm:$0xf]
  %v3361 = vld [vmem:[#allocation2 + $0x74] sm:$0xf]
  %v3362 = vld [vmem:[#allocation2 + $0x78] sm:$0xf]
  %v3363 = vld [vmem:[#allocation2 + $0x7c] sm:$0xf]
  %v3364 = vld [vmem:[#allocation2 + $0x80] sm:$0xf]
  %v3365 = vld [vmem:[#allocation2 + $0x84] sm:$0xf]
  %v3366 = vld [vmem:[#allocation2 + $0x88] sm:$0xf]
  %v3367 = vld [vmem:[#allocation2 + $0x8c] sm:$0xf]
  %v3368 = vld [vmem:[#allocation2 + $0x90] sm:$0xf]
  %v3369 = vld [vmem:[#allocation2 + $0x94] sm:$0xf]
  %v3370 = vld [vmem:[#allocation2 + $0x98] sm:$0xf]
  %v3371 = vld [vmem:[#allocation2 + $0x9c] sm:$0xf]
  %v3372 = vld [vmem:[#allocation2 + $0xa0] sm:$0xf]
  %v3373 = vld [vmem:[#allocation2 + $0xa4] sm:$0xf]
  %v3374 = vld [vmem:[#allocation2 + $0xa8] sm:$0xf]
  %v3375 = vld [vmem:[#allocation2 + $0xac] sm:$0xf]
  %v3376 = vld [vmem:[#allocation2 + $0xb0] sm:$0xf]
  %v3377 = vld [vmem:[#allocation2 + $0xb4] sm:$0xf]
  %v3378 = vld [vmem:[#allocation2 + $0xb8] sm:$0xf]
  %v3379 = vld [vmem:[#allocation2 + $0xbc] sm:$0xf]
  %v3380 = vld [vmem:[#allocation2 + $0xc0] sm:$0xf]
  %v3381 = vld [vmem:[#allocation2 + $0xc4] sm:$0xf]
  %v3382 = vld [vmem:[#allocation2 + $0xc8] sm:$0xf]
  %v3383 = vld [vmem:[#allocation2 + $0xcc] sm:$0xf]
  %v3384 = vld [vmem:[#allocation2 + $0xd0] sm:$0xf]
  %v3385 = vld [vmem:[#allocation2 + $0xd4] sm:$0xf]
  %v3386 = vld [vmem:[#allocation2 + $0xd8] sm:$0xf]
  %v3387 = vld [vmem:[#allocation2 + $0xdc] sm:$0xf]
  %v3388 = vld [vmem:[#allocation2 + $0xe0] sm:$0xf]
  %v3389 = vld [vmem:[#allocation2 + $0xe4] sm:$0xf]
  %v3390 = vld [vmem:[#allocation2 + $0xe8] sm:$0xf]
  %v3391 = vld [vmem:[#allocation2 + $0xec] sm:$0xf]
  %v3392 = vld [vmem:[#allocation2 + $0xf0] sm:$0xf]
  %v3393 = vld [vmem:[#allocation2 + $0xf4] sm:$0xf]
  %v3394 = vld [vmem:[#allocation2 + $0xf8] sm:$0xf]
  %v3395 = vld [vmem:[#allocation2 + $0xfc] sm:$0xf]
  %v3396 = vld [vmem:[#allocation2 + $0x100] sm:$0xf]
  %v3397 = vld [vmem:[#allocation2 + $0x104] sm:$0xf]
  %v3398 = vld [vmem:[#allocation2 + $0x108] sm:$0xf]
  %v3399 = vld [vmem:[#allocation2 + $0x10c] sm:$0xf]
  %v3400 = vld [vmem:[#allocation2 + $0x110] sm:$0x1]
  %v3465 = vunpack.c.l.b16 %v3336
  %v3466 = vunpack.c.l.b16 %v3337
  %v3467 = vunpack.c.l.b16 %v3338
  %v3468 = vunpack.c.l.b16 %v3339
  %v3469 = vunpack.c.l.b16 %v3340
  %v3470 = vunpack.c.l.b16 %v3341
  %v3471 = vunpack.c.l.b16 %v3342
  %v3472 = vunpack.c.l.b16 %v3343
  %v3473 = vunpack.c.l.b16 %v3344
  %v3474 = vunpack.c.l.b16 %v3345
  %v3475 = vunpack.c.l.b16 %v3346
  %v3476 = vunpack.c.l.b16 %v3347
  %v3477 = vunpack.c.l.b16 %v3348
  %v3478 = vunpack.c.l.b16 %v3349
  %v3479 = vunpack.c.l.b16 %v3350
  %v3480 = vunpack.c.l.b16 %v3351
  %v3481 = vunpack.c.l.b16 %v3352
  %v3482 = vunpack.c.l.b16 %v3353
  %v3483 = vunpack.c.l.b16 %v3354
  %v3484 = vunpack.c.l.b16 %v3355
  %v3485 = vunpack.c.l.b16 %v3356
  %v3486 = vunpack.c.l.b16 %v3357
  %v3487 = vunpack.c.l.b16 %v3358
  %v3488 = vunpack.c.l.b16 %v3359
  %v3489 = vunpack.c.l.b16 %v3360
  %v3490 = vunpack.c.l.b16 %v3361
  %v3491 = vunpack.c.l.b16 %v3362
  %v3492 = vunpack.c.l.b16 %v3363
  %v3493 = vunpack.c.l.b16 %v3364
  %v3494 = vunpack.c.l.b16 %v3365
  %v3495 = vunpack.c.l.b16 %v3366
  %v3496 = vunpack.c.l.b16 %v3367
  %v3497 = vunpack.c.l.b16 %v3368
  %v3498 = vunpack.c.l.b16 %v3369
  %v3499 = vunpack.c.l.b16 %v3370
  %v3500 = vunpack.c.l.b16 %v3371
  %v3501 = vunpack.c.l.b16 %v3372
  %v3502 = vunpack.c.l.b16 %v3373
  %v3503 = vunpack.c.l.b16 %v3374
  %v3504 = vunpack.c.l.b16 %v3375
  %v3505 = vunpack.c.l.b16 %v3376
  %v3506 = vunpack.c.l.b16 %v3377
  %v3507 = vunpack.c.l.b16 %v3378
  %v3508 = vunpack.c.l.b16 %v3379
  %v3509 = vunpack.c.l.b16 %v3380
  %v3510 = vunpack.c.l.b16 %v3381
  %v3511 = vunpack.c.l.b16 %v3382
  %v3512 = vunpack.c.l.b16 %v3383
  %v3513 = vunpack.c.l.b16 %v3384
  %v3514 = vunpack.c.l.b16 %v3385
  %v3515 = vunpack.c.l.b16 %v3386
  %v3516 = vunpack.c.l.b16 %v3387
  %v3517 = vunpack.c.l.b16 %v3388
  %v3518 = vunpack.c.l.b16 %v3389
  %v3519 = vunpack.c.l.b16 %v3390
  %v3520 = vunpack.c.l.b16 %v3391
  %v3521 = vunpack.c.l.b16 %v3392
  %v3522 = vunpack.c.l.b16 %v3393
  %v3523 = vunpack.c.l.b16 %v3394
  %v3524 = vunpack.c.l.b16 %v3395
  %v3525 = vunpack.c.l.b16 %v3396
  %v3526 = vunpack.c.l.b16 %v3397
  %v3527 = vunpack.c.l.b16 %v3398
  %v3528 = vunpack.c.l.b16 %v3399
  %v3529 = vpack.c.b16 %v3466, %v3465
  %v3530 = vpack.c.b16 %v3468, %v3467
  %v3531 = vpack.c.b16 %v3470, %v3469
  %v3532 = vpack.c.b16 %v3472, %v3471
  %v3533 = vpack.c.b16 %v3474, %v3473
  %v3534 = vpack.c.b16 %v3476, %v3475
  %v3535 = vpack.c.b16 %v3478, %v3477
  %v3536 = vpack.c.b16 %v3480, %v3479
  %v3537 = vpack.c.b16 %v3482, %v3481
  %v3538 = vpack.c.b16 %v3484, %v3483
  %v3539 = vpack.c.b16 %v3486, %v3485
  %v3540 = vpack.c.b16 %v3488, %v3487
  %v3541 = vpack.c.b16 %v3490, %v3489
  %v3542 = vpack.c.b16 %v3492, %v3491
  %v3543 = vpack.c.b16 %v3494, %v3493
  %v3544 = vpack.c.b16 %v3496, %v3495
  %v3545 = vpack.c.b16 %v3498, %v3497
  %v3546 = vpack.c.b16 %v3500, %v3499
  %v3547 = vpack.c.b16 %v3502, %v3501
  %v3548 = vpack.c.b16 %v3504, %v3503
  %v3549 = vpack.c.b16 %v3506, %v3505
  %v3550 = vpack.c.b16 %v3508, %v3507
  %v3551 = vpack.c.b16 %v3510, %v3509
  %v3552 = vpack.c.b16 %v3512, %v3511
  %v3553 = vpack.c.b16 %v3514, %v3513
  %v3554 = vpack.c.b16 %v3516, %v3515
  %v3555 = vpack.c.b16 %v3518, %v3517
  %v3556 = vpack.c.b16 %v3520, %v3519
  %v3557 = vpack.c.b16 %v3522, %v3521
  %v3558 = vpack.c.b16 %v3524, %v3523
  %v3559 = vpack.c.b16 %v3526, %v3525
  %v3560 = vpack.c.b16 %v3528, %v3527
  %v3562 = vunpack.c.l.b16 %v3400
  %v3563 = vpack.c.b16 %v3562, %v3562
  %v3565 = vshrl.u32 %v3529, 16
  %v3567 = vshll.u32 %v3529, 16
  %v3569 = vrot.slane %v3567, 1
  %v3570 = vor.u32 %v3565, %v3569
  %v3572 = vshll.u32 %v3530, 16
  %v3574 = vrot.slane %v3572, 1
  %v3575 = vsel %vm1337, %v3570, %v3574
  %v3576 = vshrl.u32 %v3530, 16
  %v3578 = vor.u32 %v3576, %v3574
  %v3580 = vshll.u32 %v3531, 16
  %v3582 = vrot.slane %v3580, 1
  %v3583 = vsel %vm1337, %v3578, %v3582
  %v3584 = vshrl.u32 %v3531, 16
  %v3586 = vor.u32 %v3584, %v3582
  %v3588 = vshll.u32 %v3532, 16
  %v3590 = vrot.slane %v3588, 1
  %v3591 = vsel %vm1337, %v3586, %v3590
  %v3592 = vshrl.u32 %v3532, 16
  %v3594 = vor.u32 %v3592, %v3590
  %v3596 = vshll.u32 %v3533, 16
  %v3598 = vrot.slane %v3596, 1
  %v3599 = vsel %vm1337, %v3594, %v3598
  %v3600 = vshrl.u32 %v3533, 16
  %v3602 = vor.u32 %v3600, %v3598
  %v3604 = vshll.u32 %v3534, 16
  %v3606 = vrot.slane %v3604, 1
  %v3607 = vsel %vm1337, %v3602, %v3606
  %v3608 = vshrl.u32 %v3534, 16
  %v3610 = vor.u32 %v3608, %v3606
  %v3612 = vshll.u32 %v3535, 16
  %v3614 = vrot.slane %v3612, 1
  %v3615 = vsel %vm1337, %v3610, %v3614
  %v3616 = vshrl.u32 %v3535, 16
  %v3618 = vor.u32 %v3616, %v3614
  %v3620 = vshll.u32 %v3536, 16
  %v3622 = vrot.slane %v3620, 1
  %v3623 = vsel %vm1337, %v3618, %v3622
  %v3624 = vshrl.u32 %v3536, 16
  %v3626 = vor.u32 %v3624, %v3622
  %v3628 = vshll.u32 %v3537, 16
  %v3630 = vrot.slane %v3628, 1
  %v3631 = vsel %vm1337, %v3626, %v3630
  %v3632 = vshrl.u32 %v3537, 16
  %v3634 = vor.u32 %v3632, %v3630
  %v3636 = vshll.u32 %v3538, 16
  %v3638 = vrot.slane %v3636, 1
  %v3639 = vsel %vm1337, %v3634, %v3638
  %v3640 = vshrl.u32 %v3538, 16
  %v3642 = vor.u32 %v3640, %v3638
  %v3644 = vshll.u32 %v3539, 16
  %v3646 = vrot.slane %v3644, 1
  %v3647 = vsel %vm1337, %v3642, %v3646
  %v3648 = vshrl.u32 %v3539, 16
  %v3650 = vor.u32 %v3648, %v3646
  %v3652 = vshll.u32 %v3540, 16
  %v3654 = vrot.slane %v3652, 1
  %v3655 = vsel %vm1337, %v3650, %v3654
  %v3656 = vshrl.u32 %v3540, 16
  %v3658 = vor.u32 %v3656, %v3654
  %v3660 = vshll.u32 %v3541, 16
  %v3662 = vrot.slane %v3660, 1
  %v3663 = vsel %vm1337, %v3658, %v3662
  %v3664 = vshrl.u32 %v3541, 16
  %v3666 = vor.u32 %v3664, %v3662
  %v3668 = vshll.u32 %v3542, 16
  %v3670 = vrot.slane %v3668, 1
  %v3671 = vsel %vm1337, %v3666, %v3670
  %v3672 = vshrl.u32 %v3542, 16
  %v3674 = vor.u32 %v3672, %v3670
  %v3676 = vshll.u32 %v3543, 16
  %v3678 = vrot.slane %v3676, 1
  %v3679 = vsel %vm1337, %v3674, %v3678
  %v3680 = vshrl.u32 %v3543, 16
  %v3682 = vor.u32 %v3680, %v3678
  %v3684 = vshll.u32 %v3544, 16
  %v3686 = vrot.slane %v3684, 1
  %v3687 = vsel %vm1337, %v3682, %v3686
  %v3688 = vshrl.u32 %v3544, 16
  %v3690 = vor.u32 %v3688, %v3686
  %v3692 = vshll.u32 %v3545, 16
  %v3694 = vrot.slane %v3692, 1
  %v3695 = vsel %vm1337, %v3690, %v3694
  %v3696 = vshrl.u32 %v3545, 16
  %v3698 = vor.u32 %v3696, %v3694
  %v3700 = vshll.u32 %v3546, 16
  %v3702 = vrot.slane %v3700, 1
  %v3703 = vsel %vm1337, %v3698, %v3702
  %v3704 = vshrl.u32 %v3546, 16
  %v3706 = vor.u32 %v3704, %v3702
  %v3708 = vshll.u32 %v3547, 16
  %v3710 = vrot.slane %v3708, 1
  %v3711 = vsel %vm1337, %v3706, %v3710
  %v3712 = vshrl.u32 %v3547, 16
  %v3714 = vor.u32 %v3712, %v3710
  %v3716 = vshll.u32 %v3548, 16
  %v3718 = vrot.slane %v3716, 1
  %v3719 = vsel %vm1337, %v3714, %v3718
  %v3720 = vshrl.u32 %v3548, 16
  %v3722 = vor.u32 %v3720, %v3718
  %v3724 = vshll.u32 %v3549, 16
  %v3726 = vrot.slane %v3724, 1
  %v3727 = vsel %vm1337, %v3722, %v3726
  %v3728 = vshrl.u32 %v3549, 16
  %v3730 = vor.u32 %v3728, %v3726
  %v3732 = vshll.u32 %v3550, 16
  %v3734 = vrot.slane %v3732, 1
  %v3735 = vsel %vm1337, %v3730, %v3734
  %v3736 = vshrl.u32 %v3550, 16
  %v3738 = vor.u32 %v3736, %v3734
  %v3740 = vshll.u32 %v3551, 16
  %v3742 = vrot.slane %v3740, 1
  %v3743 = vsel %vm1337, %v3738, %v3742
  %v3744 = vshrl.u32 %v3551, 16
  %v3746 = vor.u32 %v3744, %v3742
  %v3748 = vshll.u32 %v3552, 16
  %v3750 = vrot.slane %v3748, 1
  %v3751 = vsel %vm1337, %v3746, %v3750
  %v3752 = vshrl.u32 %v3552, 16
  %v3754 = vor.u32 %v3752, %v3750
  %v3756 = vshll.u32 %v3553, 16
  %v3758 = vrot.slane %v3756, 1
  %v3759 = vsel %vm1337, %v3754, %v3758
  %v3760 = vshrl.u32 %v3553, 16
  %v3762 = vor.u32 %v3760, %v3758
  %v3764 = vshll.u32 %v3554, 16
  %v3766 = vrot.slane %v3764, 1
  %v3767 = vsel %vm1337, %v3762, %v3766
  %v3768 = vshrl.u32 %v3554, 16
  %v3770 = vor.u32 %v3768, %v3766
  %v3772 = vshll.u32 %v3555, 16
  %v3774 = vrot.slane %v3772, 1
  %v3775 = vsel %vm1337, %v3770, %v3774
  %v3776 = vshrl.u32 %v3555, 16
  %v3778 = vor.u32 %v3776, %v3774
  %v3780 = vshll.u32 %v3556, 16
  %v3782 = vrot.slane %v3780, 1
  %v3783 = vsel %vm1337, %v3778, %v3782
  %v3784 = vshrl.u32 %v3556, 16
  %v3786 = vor.u32 %v3784, %v3782
  %v3788 = vshll.u32 %v3557, 16
  %v3790 = vrot.slane %v3788, 1
  %v3791 = vsel %vm1337, %v3786, %v3790
  %v3792 = vshrl.u32 %v3557, 16
  %v3794 = vor.u32 %v3792, %v3790
  %v3796 = vshll.u32 %v3558, 16
  %v3798 = vrot.slane %v3796, 1
  %v3799 = vsel %vm1337, %v3794, %v3798
  %v3800 = vshrl.u32 %v3558, 16
  %v3802 = vor.u32 %v3800, %v3798
  %v3804 = vshll.u32 %v3559, 16
  %v3806 = vrot.slane %v3804, 1
  %v3807 = vsel %vm1337, %v3802, %v3806
  %v3808 = vshrl.u32 %v3559, 16
  %v3810 = vor.u32 %v3808, %v3806
  %v3812 = vshll.u32 %v3560, 16
  %v3814 = vrot.slane %v3812, 1
  %v3815 = vsel %vm1337, %v3810, %v3814
  %v3816 = vshrl.u32 %v3560, 16
  %v3818 = vor.u32 %v3816, %v3814
  %v3820 = vshll.u32 %v3563, 16
  %v3822 = vrot.slane %v3820, 1
  %v3823 = vsel %vm1337, %v3818, %v3822
  %3824 = vrot.lane.b32.xlu0 %v3575, 64
  %v3825 = vpop.permute.xlu0 %3824
  %3826 = vrot.lane.b32.xlu0 %v3583, 64
  %v3827 = vpop.permute.xlu0 %3826
  %3828 = vrot.lane.b32.xlu0 %v3591, 64
  %v3829 = vpop.permute.xlu0 %3828
  %3830 = vrot.lane.b32.xlu0 %v3599, 64
  %v3831 = vpop.permute.xlu0 %3830
  %3832 = vrot.lane.b32.xlu0 %v3607, 64
  %v3833 = vpop.permute.xlu0 %3832
  %3834 = vrot.lane.b32.xlu0 %v3615, 64
  %v3835 = vpop.permute.xlu0 %3834
  %3836 = vrot.lane.b32.xlu0 %v3623, 64
  %v3837 = vpop.permute.xlu0 %3836
  %3838 = vrot.lane.b32.xlu0 %v3631, 64
  %v3839 = vpop.permute.xlu0 %3838
  %3840 = vrot.lane.b32.xlu0 %v3639, 64
  %v3841 = vpop.permute.xlu0 %3840
  %3842 = vrot.lane.b32.xlu0 %v3647, 64
  %v3843 = vpop.permute.xlu0 %3842
  %3844 = vrot.lane.b32.xlu0 %v3655, 64
  %v3845 = vpop.permute.xlu0 %3844
  %3846 = vrot.lane.b32.xlu0 %v3663, 64
  %v3847 = vpop.permute.xlu0 %3846
  %3848 = vrot.lane.b32.xlu0 %v3671, 64
  %v3849 = vpop.permute.xlu0 %3848
  %3850 = vrot.lane.b32.xlu0 %v3679, 64
  %v3851 = vpop.permute.xlu0 %3850
  %3852 = vrot.lane.b32.xlu0 %v3687, 64
  %v3853 = vpop.permute.xlu0 %3852
  %3854 = vrot.lane.b32.xlu0 %v3695, 64
  %v3855 = vpop.permute.xlu0 %3854
  %3856 = vrot.lane.b32.xlu0 %v3703, 64
  %v3857 = vpop.permute.xlu0 %3856
  %3858 = vrot.lane.b32.xlu0 %v3711, 64
  %v3859 = vpop.permute.xlu0 %3858
  %3860 = vrot.lane.b32.xlu0 %v3719, 64
  %v3861 = vpop.permute.xlu0 %3860
  %3862 = vrot.lane.b32.xlu0 %v3727, 64
  %v3863 = vpop.permute.xlu0 %3862
  %3864 = vrot.lane.b32.xlu0 %v3735, 64
  %v3865 = vpop.permute.xlu0 %3864
  %3866 = vrot.lane.b32.xlu0 %v3743, 64
  %v3867 = vpop.permute.xlu0 %3866
  %3868 = vrot.lane.b32.xlu0 %v3751, 64
  %v3869 = vpop.permute.xlu0 %3868
  %3870 = vrot.lane.b32.xlu0 %v3759, 64
  %v3871 = vpop.permute.xlu0 %3870
  %3872 = vrot.lane.b32.xlu0 %v3767, 64
  %v3873 = vpop.permute.xlu0 %3872
  %3874 = vrot.lane.b32.xlu0 %v3775, 64
  %v3875 = vpop.permute.xlu0 %3874
  %3876 = vrot.lane.b32.xlu0 %v3783, 64
  %v3877 = vpop.permute.xlu0 %3876
  %3878 = vrot.lane.b32.xlu0 %v3791, 64
  %v3879 = vpop.permute.xlu0 %3878
  %3880 = vrot.lane.b32.xlu0 %v3799, 64
  %v3881 = vpop.permute.xlu0 %3880
  %3882 = vrot.lane.b32.xlu0 %v3807, 64
  %v3883 = vpop.permute.xlu0 %3882
  %3884 = vrot.lane.b32.xlu0 %v3815, 64
  %v3885 = vpop.permute.xlu0 %3884
  %3886 = vrot.lane.b32.xlu0 %v3823, 64
  %v3887 = vpop.permute.xlu0 %3886
  %v3889 = vsel %vm1662, %v3529, %v3825
  %v3892 = vsel %vm1662, %v3530, %v3827
  %v3895 = vsel %vm1662, %v3531, %v3829
  %v3898 = vsel %vm1662, %v3532, %v3831
  %v3901 = vsel %vm1662, %v3533, %v3833
  %v3904 = vsel %vm1662, %v3534, %v3835
  %v3907 = vsel %vm1662, %v3535, %v3837
  %v3910 = vsel %vm1662, %v3536, %v3839
  %v3913 = vsel %vm1662, %v3537, %v3841
  %v3916 = vsel %vm1662, %v3538, %v3843
  %v3919 = vsel %vm1662, %v3539, %v3845
  %v3922 = vsel %vm1662, %v3540, %v3847
  %v3925 = vsel %vm1662, %v3541, %v3849
  %v3928 = vsel %vm1662, %v3542, %v3851
  %v3931 = vsel %vm1662, %v3543, %v3853
  %v3934 = vsel %vm1662, %v3544, %v3855
  %v3937 = vsel %vm1662, %v3545, %v3857
  %v3940 = vsel %vm1662, %v3546, %v3859
  %v3943 = vsel %vm1662, %v3547, %v3861
  %v3946 = vsel %vm1662, %v3548, %v3863
  %v3949 = vsel %vm1662, %v3549, %v3865
  %v3952 = vsel %vm1662, %v3550, %v3867
  %v3955 = vsel %vm1662, %v3551, %v3869
  %v3958 = vsel %vm1662, %v3552, %v3871
  %v3961 = vsel %vm1662, %v3553, %v3873
  %v3964 = vsel %vm1662, %v3554, %v3875
  %v3967 = vsel %vm1662, %v3555, %v3877
  %v3970 = vsel %vm1662, %v3556, %v3879
  %v3973 = vsel %vm1662, %v3557, %v3881
  %v3976 = vsel %vm1662, %v3558, %v3883
  %v3979 = vsel %vm1662, %v3559, %v3885
  %v3982 = vsel %vm1662, %v3560, %v3887
  %3984 = vst [vmem:[#allocation3 + $0x18] sm:$0xff] %v3889
  %3985 = vst [vmem:[#allocation3 + $0x40] sm:$0xff] %v3892
  %3986 = vst [vmem:[#allocation3 + $0x68] sm:$0xff] %v3895
  %3987 = vst [vmem:[#allocation3 + $0x90] sm:$0xff] %v3898
  %3988 = vst [vmem:[#allocation3 + $0xb8] sm:$0xff] %v3901
  %3989 = vst [vmem:[#allocation3 + $0xe0] sm:$0xff] %v3904
  %3990 = vst [vmem:[#allocation3 + $0x108] sm:$0xff] %v3907
  %3991 = vst [vmem:[#allocation3 + $0x130] sm:$0xff] %v3910
  %3992 = vst [vmem:[#allocation3 + $0x158] sm:$0xff] %v3913
  %3993 = vst [vmem:[#allocation3 + $0x180] sm:$0xff] %v3916
  %3994 = vst [vmem:[#allocation3 + $0x1a8] sm:$0xff] %v3919
  %3995 = vst [vmem:[#allocation3 + $0x1d0] sm:$0xff] %v3922
  %3996 = vst [vmem:[#allocation3 + $0x1f8] sm:$0xff] %v3925
  %3997 = vst [vmem:[#allocation3 + $0x220] sm:$0xff] %v3928
  %3998 = vst [vmem:[#allocation3 + $0x248] sm:$0xff] %v3931
  %3999 = vst [vmem:[#allocation3 + $0x270] sm:$0xff] %v3934
  %4000 = vst [vmem:[#allocation3 + $0x298] sm:$0xff] %v3937
  %4001 = vst [vmem:[#allocation3 + $0x2c0] sm:$0xff] %v3940
  %4002 = vst [vmem:[#allocation3 + $0x2e8] sm:$0xff] %v3943
  %4003 = vst [vmem:[#allocation3 + $0x310] sm:$0xff] %v3946
  %4004 = vst [vmem:[#allocation3 + $0x338] sm:$0xff] %v3949
  %4005 = vst [vmem:[#allocation3 + $0x360] sm:$0xff] %v3952
  %4006 = vst [vmem:[#allocation3 + $0x388] sm:$0xff] %v3955
  %4007 = vst [vmem:[#allocation3 + $0x3b0] sm:$0xff] %v3958
  %4008 = vst [vmem:[#allocation3 + $0x3d8] sm:$0xff] %v3961
  %4009 = vst [vmem:[#allocation3 + $0x400] sm:$0xff] %v3964
  %4010 = vst [vmem:[#allocation3 + $0x428] sm:$0xff] %v3967
  %4011 = vst [vmem:[#allocation3 + $0x450] sm:$0xff] %v3970
  %4012 = vst [vmem:[#allocation3 + $0x478] sm:$0xff] %v3973
  %4013 = vst [vmem:[#allocation3 + $0x4a0] sm:$0xff] %v3976
  %4014 = vst [vmem:[#allocation3 + $0x4c8] sm:$0xff] %v3979
  %4015 = vst [vmem:[#allocation3 + $0x4f0] sm:$0xff] %v3982
  %v4016 = vld [vmem:[#allocation2 + $0x10] sm:$0xe]
  %v4017 = vld [vmem:[#allocation2 + $0x14] sm:$0xf]
  %v4018 = vld [vmem:[#allocation2 + $0x18] sm:$0xf]
  %v4019 = vld [vmem:[#allocation2 + $0x1c] sm:$0xf]
  %v4020 = vld [vmem:[#allocation2 + $0x20] sm:$0xf]
  %v4021 = vld [vmem:[#allocation2 + $0x24] sm:$0xf]
  %v4022 = vld [vmem:[#allocation2 + $0x28] sm:$0xf]
  %v4023 = vld [vmem:[#allocation2 + $0x2c] sm:$0xf]
  %v4024 = vld [vmem:[#allocation2 + $0x30] sm:$0xf]
  %v4025 = vld [vmem:[#allocation2 + $0x34] sm:$0xf]
  %v4026 = vld [vmem:[#allocation2 + $0x38] sm:$0xf]
  %v4027 = vld [vmem:[#allocation2 + $0x3c] sm:$0xf]
  %v4028 = vld [vmem:[#allocation2 + $0x40] sm:$0xf]
  %v4029 = vld [vmem:[#allocation2 + $0x44] sm:$0xf]
  %v4030 = vld [vmem:[#allocation2 + $0x48] sm:$0xf]
  %v4031 = vld [vmem:[#allocation2 + $0x4c] sm:$0xf]
  %v4032 = vld [vmem:[#allocation2 + $0x50] sm:$0xf]
  %v4033 = vld [vmem:[#allocation2 + $0x54] sm:$0xf]
  %v4034 = vld [vmem:[#allocation2 + $0x58] sm:$0xf]
  %v4035 = vld [vmem:[#allocation2 + $0x5c] sm:$0xf]
  %v4036 = vld [vmem:[#allocation2 + $0x60] sm:$0xf]
  %v4037 = vld [vmem:[#allocation2 + $0x64] sm:$0xf]
  %v4038 = vld [vmem:[#allocation2 + $0x68] sm:$0xf]
  %v4039 = vld [vmem:[#allocation2 + $0x6c] sm:$0xf]
  %v4040 = vld [vmem:[#allocation2 + $0x70] sm:$0xf]
  %v4041 = vld [vmem:[#allocation2 + $0x74] sm:$0xf]
  %v4042 = vld [vmem:[#allocation2 + $0x78] sm:$0xf]
  %v4043 = vld [vmem:[#allocation2 + $0x7c] sm:$0xf]
  %v4044 = vld [vmem:[#allocation2 + $0x80] sm:$0xf]
  %v4045 = vld [vmem:[#allocation2 + $0x84] sm:$0xf]
  %v4046 = vld [vmem:[#allocation2 + $0x88] sm:$0xf]
  %v4047 = vld [vmem:[#allocation2 + $0x8c] sm:$0xf]
  %v4048 = vld [vmem:[#allocation2 + $0x90] sm:$0xf]
  %v4049 = vld [vmem:[#allocation2 + $0x94] sm:$0xf]
  %v4050 = vld [vmem:[#allocation2 + $0x98] sm:$0xf]
  %v4051 = vld [vmem:[#allocation2 + $0x9c] sm:$0xf]
  %v4052 = vld [vmem:[#allocation2 + $0xa0] sm:$0xf]
  %v4053 = vld [vmem:[#allocation2 + $0xa4] sm:$0xf]
  %v4054 = vld [vmem:[#allocation2 + $0xa8] sm:$0xf]
  %v4055 = vld [vmem:[#allocation2 + $0xac] sm:$0xf]
  %v4056 = vld [vmem:[#allocation2 + $0xb0] sm:$0xf]
  %v4057 = vld [vmem:[#allocation2 + $0xb4] sm:$0xf]
  %v4058 = vld [vmem:[#allocation2 + $0xb8] sm:$0xf]
  %v4059 = vld [vmem:[#allocation2 + $0xbc] sm:$0xf]
  %v4060 = vld [vmem:[#allocation2 + $0xc0] sm:$0xf]
  %v4061 = vld [vmem:[#allocation2 + $0xc4] sm:$0xf]
  %v4062 = vld [vmem:[#allocation2 + $0xc8] sm:$0xf]
  %v4063 = vld [vmem:[#allocation2 + $0xcc] sm:$0xf]
  %v4064 = vld [vmem:[#allocation2 + $0xd0] sm:$0xf]
  %v4065 = vld [vmem:[#allocation2 + $0xd4] sm:$0xf]
  %v4066 = vld [vmem:[#allocation2 + $0xd8] sm:$0xf]
  %v4067 = vld [vmem:[#allocation2 + $0xdc] sm:$0xf]
  %v4068 = vld [vmem:[#allocation2 + $0xe0] sm:$0xf]
  %v4069 = vld [vmem:[#allocation2 + $0xe4] sm:$0xf]
  %v4070 = vld [vmem:[#allocation2 + $0xe8] sm:$0xf]
  %v4071 = vld [vmem:[#allocation2 + $0xec] sm:$0xf]
  %v4072 = vld [vmem:[#allocation2 + $0xf0] sm:$0xf]
  %v4073 = vld [vmem:[#allocation2 + $0xf4] sm:$0xf]
  %v4074 = vld [vmem:[#allocation2 + $0xf8] sm:$0xf]
  %v4075 = vld [vmem:[#allocation2 + $0xfc] sm:$0xf]
  %v4076 = vld [vmem:[#allocation2 + $0x100] sm:$0xf]
  %v4077 = vld [vmem:[#allocation2 + $0x104] sm:$0xf]
  %v4078 = vld [vmem:[#allocation2 + $0x108] sm:$0xf]
  %v4079 = vld [vmem:[#allocation2 + $0x10c] sm:$0xf]
  %v4080 = vld [vmem:[#allocation2 + $0x110] sm:$0x1]
  %v4146 = vunpack.c.l.b16 %v4016
  %v4147 = vunpack.c.l.b16 %v4017
  %v4148 = vunpack.c.l.b16 %v4018
  %v4149 = vunpack.c.l.b16 %v4019
  %v4150 = vunpack.c.l.b16 %v4020
  %v4151 = vunpack.c.l.b16 %v4021
  %v4152 = vunpack.c.l.b16 %v4022
  %v4153 = vunpack.c.l.b16 %v4023
  %v4154 = vunpack.c.l.b16 %v4024
  %v4155 = vunpack.c.l.b16 %v4025
  %v4156 = vunpack.c.l.b16 %v4026
  %v4157 = vunpack.c.l.b16 %v4027
  %v4158 = vunpack.c.l.b16 %v4028
  %v4159 = vunpack.c.l.b16 %v4029
  %v4160 = vunpack.c.l.b16 %v4030
  %v4161 = vunpack.c.l.b16 %v4031
  %v4162 = vunpack.c.l.b16 %v4032
  %v4163 = vunpack.c.l.b16 %v4033
  %v4164 = vunpack.c.l.b16 %v4034
  %v4165 = vunpack.c.l.b16 %v4035
  %v4166 = vunpack.c.l.b16 %v4036
  %v4167 = vunpack.c.l.b16 %v4037
  %v4168 = vunpack.c.l.b16 %v4038
  %v4169 = vunpack.c.l.b16 %v4039
  %v4170 = vunpack.c.l.b16 %v4040
  %v4171 = vunpack.c.l.b16 %v4041
  %v4172 = vunpack.c.l.b16 %v4042
  %v4173 = vunpack.c.l.b16 %v4043
  %v4174 = vunpack.c.l.b16 %v4044
  %v4175 = vunpack.c.l.b16 %v4045
  %v4176 = vunpack.c.l.b16 %v4046
  %v4177 = vunpack.c.l.b16 %v4047
  %v4178 = vunpack.c.l.b16 %v4048
  %v4179 = vunpack.c.l.b16 %v4049
  %v4180 = vunpack.c.l.b16 %v4050
  %v4181 = vunpack.c.l.b16 %v4051
  %v4182 = vunpack.c.l.b16 %v4052
  %v4183 = vunpack.c.l.b16 %v4053
  %v4184 = vunpack.c.l.b16 %v4054
  %v4185 = vunpack.c.l.b16 %v4055
  %v4186 = vunpack.c.l.b16 %v4056
  %v4187 = vunpack.c.l.b16 %v4057
  %v4188 = vunpack.c.l.b16 %v4058
  %v4189 = vunpack.c.l.b16 %v4059
  %v4190 = vunpack.c.l.b16 %v4060
  %v4191 = vunpack.c.l.b16 %v4061
  %v4192 = vunpack.c.l.b16 %v4062
  %v4193 = vunpack.c.l.b16 %v4063
  %v4194 = vunpack.c.l.b16 %v4064
  %v4195 = vunpack.c.l.b16 %v4065
  %v4196 = vunpack.c.l.b16 %v4066
  %v4197 = vunpack.c.l.b16 %v4067
  %v4198 = vunpack.c.l.b16 %v4068
  %v4199 = vunpack.c.l.b16 %v4069
  %v4200 = vunpack.c.l.b16 %v4070
  %v4201 = vunpack.c.l.b16 %v4071
  %v4202 = vunpack.c.l.b16 %v4072
  %v4203 = vunpack.c.l.b16 %v4073
  %v4204 = vunpack.c.l.b16 %v4074
  %v4205 = vunpack.c.l.b16 %v4075
  %v4206 = vunpack.c.l.b16 %v4076
  %v4207 = vunpack.c.l.b16 %v4077
  %v4208 = vunpack.c.l.b16 %v4078
  %v4209 = vunpack.c.l.b16 %v4079
  %v4210 = vunpack.c.l.b16 %v4080
  %v4211 = vpack.c.b16 %v4147, %v4146
  %v4212 = vpack.c.b16 %v4149, %v4148
  %v4213 = vpack.c.b16 %v4151, %v4150
  %v4214 = vpack.c.b16 %v4153, %v4152
  %v4215 = vpack.c.b16 %v4155, %v4154
  %v4216 = vpack.c.b16 %v4157, %v4156
  %v4217 = vpack.c.b16 %v4159, %v4158
  %v4218 = vpack.c.b16 %v4161, %v4160
  %v4219 = vpack.c.b16 %v4163, %v4162
  %v4220 = vpack.c.b16 %v4165, %v4164
  %v4221 = vpack.c.b16 %v4167, %v4166
  %v4222 = vpack.c.b16 %v4169, %v4168
  %v4223 = vpack.c.b16 %v4171, %v4170
  %v4224 = vpack.c.b16 %v4173, %v4172
  %v4225 = vpack.c.b16 %v4175, %v4174
  %v4226 = vpack.c.b16 %v4177, %v4176
  %v4227 = vpack.c.b16 %v4179, %v4178
  %v4228 = vpack.c.b16 %v4181, %v4180
  %v4229 = vpack.c.b16 %v4183, %v4182
  %v4230 = vpack.c.b16 %v4185, %v4184
  %v4231 = vpack.c.b16 %v4187, %v4186
  %v4232 = vpack.c.b16 %v4189, %v4188
  %v4233 = vpack.c.b16 %v4191, %v4190
  %v4234 = vpack.c.b16 %v4193, %v4192
  %v4235 = vpack.c.b16 %v4195, %v4194
  %v4236 = vpack.c.b16 %v4197, %v4196
  %v4237 = vpack.c.b16 %v4199, %v4198
  %v4238 = vpack.c.b16 %v4201, %v4200
  %v4239 = vpack.c.b16 %v4203, %v4202
  %v4240 = vpack.c.b16 %v4205, %v4204
  %v4241 = vpack.c.b16 %v4207, %v4206
  %v4242 = vpack.c.b16 %v4209, %v4208
  %v4243 = vpack.c.b16 %v4210, %v4210
  %v4244 = vrot.slane %v4211, 1
  %v4245 = vrot.slane %v4212, 1
  %v4246 = vsel %vm2288, %v4244, %v4245
  %v4247 = vrot.slane %v4213, 1
  %v4248 = vsel %vm2288, %v4245, %v4247
  %v4249 = vrot.slane %v4214, 1
  %v4250 = vsel %vm2288, %v4247, %v4249
  %v4251 = vrot.slane %v4215, 1
  %v4252 = vsel %vm2288, %v4249, %v4251
  %v4253 = vrot.slane %v4216, 1
  %v4254 = vsel %vm2288, %v4251, %v4253
  %v4255 = vrot.slane %v4217, 1
  %v4256 = vsel %vm2288, %v4253, %v4255
  %v4257 = vrot.slane %v4218, 1
  %v4258 = vsel %vm2288, %v4255, %v4257
  %v4259 = vrot.slane %v4219, 1
  %v4260 = vsel %vm2288, %v4257, %v4259
  %v4261 = vrot.slane %v4220, 1
  %v4262 = vsel %vm2288, %v4259, %v4261
  %v4263 = vrot.slane %v4221, 1
  %v4264 = vsel %vm2288, %v4261, %v4263
  %v4265 = vrot.slane %v4222, 1
  %v4266 = vsel %vm2288, %v4263, %v4265
  %v4267 = vrot.slane %v4223, 1
  %v4268 = vsel %vm2288, %v4265, %v4267
  %v4269 = vrot.slane %v4224, 1
  %v4270 = vsel %vm2288, %v4267, %v4269
  %v4271 = vrot.slane %v4225, 1
  %v4272 = vsel %vm2288, %v4269, %v4271
  %v4273 = vrot.slane %v4226, 1
  %v4274 = vsel %vm2288, %v4271, %v4273
  %v4275 = vrot.slane %v4227, 1
  %v4276 = vsel %vm2288, %v4273, %v4275
  %v4277 = vrot.slane %v4228, 1
  %v4278 = vsel %vm2288, %v4275, %v4277
  %v4279 = vrot.slane %v4229, 1
  %v4280 = vsel %vm2288, %v4277, %v4279
  %v4281 = vrot.slane %v4230, 1
  %v4282 = vsel %vm2288, %v4279, %v4281
  %v4283 = vrot.slane %v4231, 1
  %v4284 = vsel %vm2288, %v4281, %v4283
  %v4285 = vrot.slane %v4232, 1
  %v4286 = vsel %vm2288, %v4283, %v4285
  %v4287 = vrot.slane %v4233, 1
  %v4288 = vsel %vm2288, %v4285, %v4287
  %v4289 = vrot.slane %v4234, 1
  %v4290 = vsel %vm2288, %v4287, %v4289
  %v4291 = vrot.slane %v4235, 1
  %v4292 = vsel %vm2288, %v4289, %v4291
  %v4293 = vrot.slane %v4236, 1
  %v4294 = vsel %vm2288, %v4291, %v4293
  %v4295 = vrot.slane %v4237, 1
  %v4296 = vsel %vm2288, %v4293, %v4295
  %v4297 = vrot.slane %v4238, 1
  %v4298 = vsel %vm2288, %v4295, %v4297
  %v4299 = vrot.slane %v4239, 1
  %v4300 = vsel %vm2288, %v4297, %v4299
  %v4301 = vrot.slane %v4240, 1
  %v4302 = vsel %vm2288, %v4299, %v4301
  %v4303 = vrot.slane %v4241, 1
  %v4304 = vsel %vm2288, %v4301, %v4303
  %v4305 = vrot.slane %v4242, 1
  %v4306 = vsel %vm2288, %v4303, %v4305
  %v4307 = vrot.slane %v4243, 1
  %v4308 = vsel %vm2288, %v4305, %v4307
  %4341 = vst.msk [vmem:[#allocation3 + $0x20] sm:$0xff] %vm1662, %v4246
  %4342 = vst.msk [vmem:[#allocation3 + $0x48] sm:$0xff] %vm1662, %v4248
  %4343 = vst.msk [vmem:[#allocation3 + $0x70] sm:$0xff] %vm1662, %v4250
  %4344 = vst.msk [vmem:[#allocation3 + $0x98] sm:$0xff] %vm1662, %v4252
  %4345 = vst.msk [vmem:[#allocation3 + $0xc0] sm:$0xff] %vm1662, %v4254
  %4346 = vst.msk [vmem:[#allocation3 + $0xe8] sm:$0xff] %vm1662, %v4256
  %4347 = vst.msk [vmem:[#allocation3 + $0x110] sm:$0xff] %vm1662, %v4258
  %4348 = vst.msk [vmem:[#allocation3 + $0x138] sm:$0xff] %vm1662, %v4260
  %4349 = vst.msk [vmem:[#allocation3 + $0x160] sm:$0xff] %vm1662, %v4262
  %4350 = vst.msk [vmem:[#allocation3 + $0x188] sm:$0xff] %vm1662, %v4264
  %4351 = vst.msk [vmem:[#allocation3 + $0x1b0] sm:$0xff] %vm1662, %v4266
  %4352 = vst.msk [vmem:[#allocation3 + $0x1d8] sm:$0xff] %vm1662, %v4268
  %4353 = vst.msk [vmem:[#allocation3 + $0x200] sm:$0xff] %vm1662, %v4270
  %4354 = vst.msk [vmem:[#allocation3 + $0x228] sm:$0xff] %vm1662, %v4272
  %4355 = vst.msk [vmem:[#allocation3 + $0x250] sm:$0xff] %vm1662, %v4274
  %4356 = vst.msk [vmem:[#allocation3 + $0x278] sm:$0xff] %vm1662, %v4276
  %4357 = vst.msk [vmem:[#allocation3 + $0x2a0] sm:$0xff] %vm1662, %v4278
  %4358 = vst.msk [vmem:[#allocation3 + $0x2c8] sm:$0xff] %vm1662, %v4280
  %4359 = vst.msk [vmem:[#allocation3 + $0x2f0] sm:$0xff] %vm1662, %v4282
  %4360 = vst.msk [vmem:[#allocation3 + $0x318] sm:$0xff] %vm1662, %v4284
  %4361 = vst.msk [vmem:[#allocation3 + $0x340] sm:$0xff] %vm1662, %v4286
  %4362 = vst.msk [vmem:[#allocation3 + $0x368] sm:$0xff] %vm1662, %v4288
  %4363 = vst.msk [vmem:[#allocation3 + $0x390] sm:$0xff] %vm1662, %v4290
  %4364 = vst.msk [vmem:[#allocation3 + $0x3b8] sm:$0xff] %vm1662, %v4292
  %4365 = vst.msk [vmem:[#allocation3 + $0x3e0] sm:$0xff] %vm1662, %v4294
  %4366 = vst.msk [vmem:[#allocation3 + $0x408] sm:$0xff] %vm1662, %v4296
  %4367 = vst.msk [vmem:[#allocation3 + $0x430] sm:$0xff] %vm1662, %v4298
  %4368 = vst.msk [vmem:[#allocation3 + $0x458] sm:$0xff] %vm1662, %v4300
  %4369 = vst.msk [vmem:[#allocation3 + $0x480] sm:$0xff] %vm1662, %v4302
  %4370 = vst.msk [vmem:[#allocation3 + $0x4a8] sm:$0xff] %vm1662, %v4304
  %4371 = vst.msk [vmem:[#allocation3 + $0x4d0] sm:$0xff] %vm1662, %v4306
  %4372 = vst.msk [vmem:[#allocation3 + $0x4f8] sm:$0xff] %vm1662, %v4308
  %v4373 = vld [vmem:[#allocation3] sm:$0xff]
  %v4374 = vld [vmem:[#allocation3 + $0x8] sm:$0xff]
  %v4375 = vld [vmem:[#allocation3 + $0x10] sm:$0xff]
  %v4376 = vld [vmem:[#allocation3 + $0x18] sm:$0xff]
  %v4377 = vld [vmem:[#allocation3 + $0x20] sm:$0xff]
  %v4378 = vld [vmem:[#allocation3 + $0x28] sm:$0xff]
  %v4379 = vld [vmem:[#allocation3 + $0x30] sm:$0xff]
  %v4380 = vld [vmem:[#allocation3 + $0x38] sm:$0xff]
  %v4381 = vld [vmem:[#allocation3 + $0x40] sm:$0xff]
  %v4382 = vld [vmem:[#allocation3 + $0x48] sm:$0xff]
  %v4383 = vld [vmem:[#allocation3 + $0x50] sm:$0xff]
  %v4384 = vld [vmem:[#allocation3 + $0x58] sm:$0xff]
  %v4385 = vld [vmem:[#allocation3 + $0x60] sm:$0xff]
  %v4386 = vld [vmem:[#allocation3 + $0x68] sm:$0xff]
  %v4387 = vld [vmem:[#allocation3 + $0x70] sm:$0xff]
  %v4388 = vld [vmem:[#allocation3 + $0x78] sm:$0xff]
  %v4389 = vld [vmem:[#allocation3 + $0x80] sm:$0xff]
  %v4390 = vld [vmem:[#allocation3 + $0x88] sm:$0xff]
  %v4391 = vld [vmem:[#allocation3 + $0x90] sm:$0xff]
  %v4392 = vld [vmem:[#allocation3 + $0x98] sm:$0xff]
  %v4393 = vld [vmem:[#allocation3 + $0xa0] sm:$0xff]
  %v4394 = vld [vmem:[#allocation3 + $0xa8] sm:$0xff]
  %v4395 = vld [vmem:[#allocation3 + $0xb0] sm:$0xff]
  %v4396 = vld [vmem:[#allocation3 + $0xb8] sm:$0xff]
  %v4397 = vld [vmem:[#allocation3 + $0xc0] sm:$0xff]
  %v4398 = vld [vmem:[#allocation3 + $0xc8] sm:$0xff]
  %v4399 = vld [vmem:[#allocation3 + $0xd0] sm:$0xff]
  %v4400 = vld [vmem:[#allocation3 + $0xd8] sm:$0xff]
  %v4401 = vld [vmem:[#allocation3 + $0xe0] sm:$0xff]
  %v4402 = vld [vmem:[#allocation3 + $0xe8] sm:$0xff]
  %v4403 = vld [vmem:[#allocation3 + $0xf0] sm:$0xff]
  %v4404 = vld [vmem:[#allocation3 + $0xf8] sm:$0xff]
  %v4405 = vld [vmem:[#allocation3 + $0x100] sm:$0xff]
  %v4406 = vld [vmem:[#allocation3 + $0x108] sm:$0xff]
  %v4407 = vld [vmem:[#allocation3 + $0x110] sm:$0xff]
  %v4408 = vld [vmem:[#allocation3 + $0x118] sm:$0xff]
  %v4409 = vld [vmem:[#allocation3 + $0x120] sm:$0xff]
  %v4410 = vld [vmem:[#allocation3 + $0x128] sm:$0xff]
  %v4411 = vld [vmem:[#allocation3 + $0x130] sm:$0xff]
  %v4412 = vld [vmem:[#allocation3 + $0x138] sm:$0xff]
  %v4413 = vld [vmem:[#allocation3 + $0x140] sm:$0xff]
  %v4414 = vld [vmem:[#allocation3 + $0x148] sm:$0xff]
  %v4415 = vld [vmem:[#allocation3 + $0x150] sm:$0xff]
  %v4416 = vld [vmem:[#allocation3 + $0x158] sm:$0xff]
  %v4417 = vld [vmem:[#allocation3 + $0x160] sm:$0xff]
  %v4418 = vld [vmem:[#allocation3 + $0x168] sm:$0xff]
  %v4419 = vld [vmem:[#allocation3 + $0x170] sm:$0xff]
  %v4420 = vld [vmem:[#allocation3 + $0x178] sm:$0xff]
  %v4421 = vld [vmem:[#allocation3 + $0x180] sm:$0xff]
  %v4422 = vld [vmem:[#allocation3 + $0x188] sm:$0xff]
  %v4423 = vld [vmem:[#allocation3 + $0x190] sm:$0xff]
  %v4424 = vld [vmem:[#allocation3 + $0x198] sm:$0xff]
  %v4425 = vld [vmem:[#allocation3 + $0x1a0] sm:$0xff]
  %v4426 = vld [vmem:[#allocation3 + $0x1a8] sm:$0xff]
  %v4427 = vld [vmem:[#allocation3 + $0x1b0] sm:$0xff]
  %v4428 = vld [vmem:[#allocation3 + $0x1b8] sm:$0xff]
  %v4429 = vld [vmem:[#allocation3 + $0x1c0] sm:$0xff]
  %v4430 = vld [vmem:[#allocation3 + $0x1c8] sm:$0xff]
  %v4431 = vld [vmem:[#allocation3 + $0x1d0] sm:$0xff]
  %v4432 = vld [vmem:[#allocation3 + $0x1d8] sm:$0xff]
  %v4433 = vld [vmem:[#allocation3 + $0x1e0] sm:$0xff]
  %v4434 = vld [vmem:[#allocation3 + $0x1e8] sm:$0xff]
  %v4435 = vld [vmem:[#allocation3 + $0x1f0] sm:$0xff]
  %v4436 = vld [vmem:[#allocation3 + $0x1f8] sm:$0xff]
  %v4437 = vld [vmem:[#allocation3 + $0x200] sm:$0xff]
  %v4438 = vld [vmem:[#allocation3 + $0x208] sm:$0xff]
  %v4439 = vld [vmem:[#allocation3 + $0x210] sm:$0xff]
  %v4440 = vld [vmem:[#allocation3 + $0x218] sm:$0xff]
  %v4441 = vld [vmem:[#allocation3 + $0x220] sm:$0xff]
  %v4442 = vld [vmem:[#allocation3 + $0x228] sm:$0xff]
  %v4443 = vld [vmem:[#allocation3 + $0x230] sm:$0xff]
  %v4444 = vld [vmem:[#allocation3 + $0x238] sm:$0xff]
  %v4445 = vld [vmem:[#allocation3 + $0x240] sm:$0xff]
  %v4446 = vld [vmem:[#allocation3 + $0x248] sm:$0xff]
  %v4447 = vld [vmem:[#allocation3 + $0x250] sm:$0xff]
  %v4448 = vld [vmem:[#allocation3 + $0x258] sm:$0xff]
  %v4449 = vld [vmem:[#allocation3 + $0x260] sm:$0xff]
  %v4450 = vld [vmem:[#allocation3 + $0x268] sm:$0xff]
  %v4451 = vld [vmem:[#allocation3 + $0x270] sm:$0xff]
  %v4452 = vld [vmem:[#allocation3 + $0x278] sm:$0xff]
  %v4453 = vld [vmem:[#allocation3 + $0x280] sm:$0xff]
  %v4454 = vld [vmem:[#allocation3 + $0x288] sm:$0xff]
  %v4455 = vld [vmem:[#allocation3 + $0x290] sm:$0xff]
  %v4456 = vld [vmem:[#allocation3 + $0x298] sm:$0xff]
  %v4457 = vld [vmem:[#allocation3 + $0x2a0] sm:$0xff]
  %v4458 = vld [vmem:[#allocation3 + $0x2a8] sm:$0xff]
  %v4459 = vld [vmem:[#allocation3 + $0x2b0] sm:$0xff]
  %v4460 = vld [vmem:[#allocation3 + $0x2b8] sm:$0xff]
  %v4461 = vld [vmem:[#allocation3 + $0x2c0] sm:$0xff]
  %v4462 = vld [vmem:[#allocation3 + $0x2c8] sm:$0xff]
  %v4463 = vld [vmem:[#allocation3 + $0x2d0] sm:$0xff]
  %v4464 = vld [vmem:[#allocation3 + $0x2d8] sm:$0xff]
  %v4465 = vld [vmem:[#allocation3 + $0x2e0] sm:$0xff]
  %v4466 = vld [vmem:[#allocation3 + $0x2e8] sm:$0xff]
  %v4467 = vld [vmem:[#allocation3 + $0x2f0] sm:$0xff]
  %v4468 = vld [vmem:[#allocation3 + $0x2f8] sm:$0xff]
  %v4469 = vld [vmem:[#allocation3 + $0x300] sm:$0xff]
  %v4470 = vld [vmem:[#allocation3 + $0x308] sm:$0xff]
  %v4471 = vld [vmem:[#allocation3 + $0x310] sm:$0xff]
  %v4472 = vld [vmem:[#allocation3 + $0x318] sm:$0xff]
  %v4473 = vld [vmem:[#allocation3 + $0x320] sm:$0xff]
  %v4474 = vld [vmem:[#allocation3 + $0x328] sm:$0xff]
  %v4475 = vld [vmem:[#allocation3 + $0x330] sm:$0xff]
  %v4476 = vld [vmem:[#allocation3 + $0x338] sm:$0xff]
  %v4477 = vld [vmem:[#allocation3 + $0x340] sm:$0xff]
  %v4478 = vld [vmem:[#allocation3 + $0x348] sm:$0xff]
  %v4479 = vld [vmem:[#allocation3 + $0x350] sm:$0xff]
  %v4480 = vld [vmem:[#allocation3 + $0x358] sm:$0xff]
  %v4481 = vld [vmem:[#allocation3 + $0x360] sm:$0xff]
  %v4482 = vld [vmem:[#allocation3 + $0x368] sm:$0xff]
  %v4483 = vld [vmem:[#allocation3 + $0x370] sm:$0xff]
  %v4484 = vld [vmem:[#allocation3 + $0x378] sm:$0xff]
  %v4485 = vld [vmem:[#allocation3 + $0x380] sm:$0xff]
  %v4486 = vld [vmem:[#allocation3 + $0x388] sm:$0xff]
  %v4487 = vld [vmem:[#allocation3 + $0x390] sm:$0xff]
  %v4488 = vld [vmem:[#allocation3 + $0x398] sm:$0xff]
  %v4489 = vld [vmem:[#allocation3 + $0x3a0] sm:$0xff]
  %v4490 = vld [vmem:[#allocation3 + $0x3a8] sm:$0xff]
  %v4491 = vld [vmem:[#allocation3 + $0x3b0] sm:$0xff]
  %v4492 = vld [vmem:[#allocation3 + $0x3b8] sm:$0xff]
  %v4493 = vld [vmem:[#allocation3 + $0x3c0] sm:$0xff]
  %v4494 = vld [vmem:[#allocation3 + $0x3c8] sm:$0xff]
  %v4495 = vld [vmem:[#allocation3 + $0x3d0] sm:$0xff]
  %v4496 = vld [vmem:[#allocation3 + $0x3d8] sm:$0xff]
  %v4497 = vld [vmem:[#allocation3 + $0x3e0] sm:$0xff]
  %v4498 = vld [vmem:[#allocation3 + $0x3e8] sm:$0xff]
  %v4499 = vld [vmem:[#allocation3 + $0x3f0] sm:$0xff]
  %v4500 = vld [vmem:[#allocation3 + $0x3f8] sm:$0xff]
  %v4501 = vld [vmem:[#allocation3 + $0x400] sm:$0xff]
  %v4502 = vld [vmem:[#allocation3 + $0x408] sm:$0xff]
  %v4503 = vld [vmem:[#allocation3 + $0x410] sm:$0xff]
  %v4504 = vld [vmem:[#allocation3 + $0x418] sm:$0xff]
  %v4505 = vld [vmem:[#allocation3 + $0x420] sm:$0xff]
  %v4506 = vld [vmem:[#allocation3 + $0x428] sm:$0xff]
  %v4507 = vld [vmem:[#allocation3 + $0x430] sm:$0xff]
  %v4508 = vld [vmem:[#allocation3 + $0x438] sm:$0xff]
  %v4509 = vld [vmem:[#allocation3 + $0x440] sm:$0xff]
  %v4510 = vld [vmem:[#allocation3 + $0x448] sm:$0xff]
  %v4511 = vld [vmem:[#allocation3 + $0x450] sm:$0xff]
  %v4512 = vld [vmem:[#allocation3 + $0x458] sm:$0xff]
  %v4513 = vld [vmem:[#allocation3 + $0x460] sm:$0xff]
  %v4514 = vld [vmem:[#allocation3 + $0x468] sm:$0xff]
  %v4515 = vld [vmem:[#allocation3 + $0x470] sm:$0xff]
  %v4516 = vld [vmem:[#allocation3 + $0x478] sm:$0xff]
  %v4517 = vld [vmem:[#allocation3 + $0x480] sm:$0xff]
  %v4518 = vld [vmem:[#allocation3 + $0x488] sm:$0xff]
  %v4519 = vld [vmem:[#allocation3 + $0x490] sm:$0xff]
  %v4520 = vld [vmem:[#allocation3 + $0x498] sm:$0xff]
  %v4521 = vld [vmem:[#allocation3 + $0x4a0] sm:$0xff]
  %v4522 = vld [vmem:[#allocation3 + $0x4a8] sm:$0xff]
  %v4523 = vld [vmem:[#allocation3 + $0x4b0] sm:$0xff]
  %v4524 = vld [vmem:[#allocation3 + $0x4b8] sm:$0xff]
  %v4525 = vld [vmem:[#allocation3 + $0x4c0] sm:$0xff]
  %v4526 = vld [vmem:[#allocation3 + $0x4c8] sm:$0xff]
  %v4527 = vld [vmem:[#allocation3 + $0x4d0] sm:$0xff]
  %v4528 = vld [vmem:[#allocation3 + $0x4d8] sm:$0xff]
  %v4529 = vld [vmem:[#allocation3 + $0x4e0] sm:$0xff]
  %v4530 = vld [vmem:[#allocation3 + $0x4e8] sm:$0xff]
  %v4531 = vld [vmem:[#allocation3 + $0x4f0] sm:$0xff]
  %v4532 = vld [vmem:[#allocation3 + $0x4f8] sm:$0xff]
  %v4533 = vld [vmem:[%s3] sm:$0xf]
  %v4534 = vld [vmem:[%s3 + $0x4] sm:$0xf]
  %v4535 = vld [vmem:[%s3 + $0x8] sm:$0xf]
  %v4536 = vld [vmem:[%s3 + $0xc] sm:$0xf]
  %v4537 = vld [vmem:[%s3 + $0x10] sm:$0xf]
  %v4538 = vld [vmem:[%s3 + $0x14] sm:$0xf]
  %v4539 = vld [vmem:[%s3 + $0x18] sm:$0xf]
  %v4540 = vld [vmem:[%s3 + $0x1c] sm:$0xf]
  %v4541 = vld [vmem:[%s3 + $0x20] sm:$0xf]
  %v4542 = vld [vmem:[%s3 + $0x24] sm:$0xf]
  %v4543 = vld [vmem:[%s3 + $0x28] sm:$0xf]
  %v4544 = vld [vmem:[%s3 + $0x2c] sm:$0xf]
  %v4545 = vld [vmem:[%s3 + $0x30] sm:$0xf]
  %v4546 = vld [vmem:[%s3 + $0x34] sm:$0xf]
  %v4547 = vld [vmem:[%s3 + $0x38] sm:$0xf]
  %v4548 = vld [vmem:[%s3 + $0x3c] sm:$0xf]
  %v4549 = vld [vmem:[%s3 + $0x40] sm:$0xf]
  %v4550 = vld [vmem:[%s3 + $0x44] sm:$0xf]
  %v4551 = vld [vmem:[%s3 + $0x48] sm:$0xf]
  %v4552 = vld [vmem:[%s3 + $0x4c] sm:$0xf]
  %v4553 = vld [vmem:[%s3 + $0x50] sm:$0xf]
  %v4554 = vld [vmem:[%s3 + $0x54] sm:$0xf]
  %v4555 = vld [vmem:[%s3 + $0x58] sm:$0xf]
  %v4556 = vld [vmem:[%s3 + $0x5c] sm:$0xf]
  %v4557 = vld [vmem:[%s3 + $0x60] sm:$0xf]
  %v4558 = vld [vmem:[%s3 + $0x64] sm:$0xf]
  %v4559 = vld [vmem:[%s3 + $0x68] sm:$0xf]
  %v4560 = vld [vmem:[%s3 + $0x6c] sm:$0xf]
  %v4561 = vld [vmem:[%s3 + $0x70] sm:$0xf]
  %v4562 = vld [vmem:[%s3 + $0x74] sm:$0xf]
  %v4563 = vld [vmem:[%s3 + $0x78] sm:$0xf]
  %v4564 = vld [vmem:[%s3 + $0x7c] sm:$0xf]
  %v4565 = vld [vmem:[%s3 + $0x80] sm:$0xf]
  %v4566 = vld [vmem:[%s3 + $0x84] sm:$0xf]
  %v4567 = vld [vmem:[%s3 + $0x88] sm:$0xf]
  %v4568 = vld [vmem:[%s3 + $0x8c] sm:$0xf]
  %v4569 = vld [vmem:[%s3 + $0x90] sm:$0xf]
  %v4570 = vld [vmem:[%s3 + $0x94] sm:$0xf]
  %v4571 = vld [vmem:[%s3 + $0x98] sm:$0xf]
  %v4572 = vld [vmem:[%s3 + $0x9c] sm:$0xf]
  %v4573 = vld [vmem:[%s3 + $0xa0] sm:$0xf]
  %v4574 = vld [vmem:[%s3 + $0xa4] sm:$0xf]
  %v4575 = vld [vmem:[%s3 + $0xa8] sm:$0xf]
  %v4576 = vld [vmem:[%s3 + $0xac] sm:$0xf]
  %v4577 = vld [vmem:[%s3 + $0xb0] sm:$0xf]
  %v4578 = vld [vmem:[%s3 + $0xb4] sm:$0xf]
  %v4579 = vld [vmem:[%s3 + $0xb8] sm:$0xf]
  %v4580 = vld [vmem:[%s3 + $0xbc] sm:$0xf]
  %v4581 = vld [vmem:[%s3 + $0xc0] sm:$0xf]
  %v4582 = vld [vmem:[%s3 + $0xc4] sm:$0xf]
  %v4583 = vld [vmem:[%s3 + $0xc8] sm:$0xf]
  %v4584 = vld [vmem:[%s3 + $0xcc] sm:$0xf]
  %v4585 = vld [vmem:[%s3 + $0xd0] sm:$0xf]
  %v4586 = vld [vmem:[%s3 + $0xd4] sm:$0xf]
  %v4587 = vld [vmem:[%s3 + $0xd8] sm:$0xf]
  %v4588 = vld [vmem:[%s3 + $0xdc] sm:$0xf]
  %v4589 = vld [vmem:[%s3 + $0xe0] sm:$0xf]
  %v4590 = vld [vmem:[%s3 + $0xe4] sm:$0xf]
  %v4591 = vld [vmem:[%s3 + $0xe8] sm:$0xf]
  %v4592 = vld [vmem:[%s3 + $0xec] sm:$0xf]
  %v4593 = vld [vmem:[%s3 + $0xf0] sm:$0xf]
  %v4594 = vld [vmem:[%s3 + $0xf4] sm:$0xf]
  %v4595 = vld [vmem:[%s3 + $0xf8] sm:$0xf]
  %v4596 = vld [vmem:[%s3 + $0xfc] sm:$0xf]
  %v4597 = vld [vmem:[%s3 + $0x100] sm:$0xf]
  %v4598 = vld [vmem:[%s3 + $0x104] sm:$0xf]
  %v4599 = vld [vmem:[%s3 + $0x108] sm:$0xf]
  %v4600 = vld [vmem:[%s3 + $0x10c] sm:$0xf]
  %v4601 = vld [vmem:[%s3 + $0x110] sm:$0xf]
  %v4602 = vld [vmem:[%s3 + $0x114] sm:$0xf]
  %v4603 = vld [vmem:[%s3 + $0x118] sm:$0xf]
  %v4604 = vld [vmem:[%s3 + $0x11c] sm:$0xf]
  %v4605 = vld [vmem:[%s4] sm:$0x1]
  %v4607 = vlaneseq
  %v4608 = vshrl.u32 %v4607, 7
  %v4609 = vsub.s32 0, %v4608
  %v4610 = vrot.slane %v4605, %v4609
  %v4684 = vunpack.c.l.b16 %v4533
  %v4685 = vunpack.c.l.b16 %v4534
  %v4686 = vunpack.c.l.b16 %v4535
  %v4687 = vunpack.c.l.b16 %v4536
  %v4688 = vunpack.c.l.b16 %v4537
  %v4689 = vunpack.c.l.b16 %v4538
  %v4690 = vunpack.c.l.b16 %v4539
  %v4691 = vunpack.c.l.b16 %v4540
  %v4692 = vunpack.c.l.b16 %v4541
  %v4693 = vunpack.c.l.b16 %v4542
  %v4694 = vunpack.c.l.b16 %v4543
  %v4695 = vunpack.c.l.b16 %v4544
  %v4696 = vunpack.c.l.b16 %v4545
  %v4697 = vunpack.c.l.b16 %v4546
  %v4698 = vunpack.c.l.b16 %v4547
  %v4699 = vunpack.c.l.b16 %v4548
  %v4700 = vunpack.c.l.b16 %v4549
  %v4701 = vunpack.c.l.b16 %v4550
  %v4702 = vunpack.c.l.b16 %v4551
  %v4703 = vunpack.c.l.b16 %v4552
  %v4704 = vunpack.c.l.b16 %v4553
  %v4705 = vunpack.c.l.b16 %v4554
  %v4706 = vunpack.c.l.b16 %v4555
  %v4707 = vunpack.c.l.b16 %v4556
  %v4708 = vunpack.c.l.b16 %v4557
  %v4709 = vunpack.c.l.b16 %v4558
  %v4710 = vunpack.c.l.b16 %v4559
  %v4711 = vunpack.c.l.b16 %v4560
  %v4712 = vunpack.c.l.b16 %v4561
  %v4713 = vunpack.c.l.b16 %v4562
  %v4714 = vunpack.c.l.b16 %v4563
  %v4715 = vunpack.c.l.b16 %v4564
  %v4716 = vunpack.c.l.b16 %v4565
  %v4717 = vunpack.c.l.b16 %v4566
  %v4718 = vunpack.c.l.b16 %v4567
  %v4719 = vunpack.c.l.b16 %v4568
  %v4720 = vunpack.c.l.b16 %v4569
  %v4721 = vunpack.c.l.b16 %v4570
  %v4722 = vunpack.c.l.b16 %v4571
  %v4723 = vunpack.c.l.b16 %v4572
  %v4724 = vunpack.c.l.b16 %v4573
  %v4725 = vunpack.c.l.b16 %v4574
  %v4726 = vunpack.c.l.b16 %v4575
  %v4727 = vunpack.c.l.b16 %v4576
  %v4728 = vunpack.c.l.b16 %v4577
  %v4729 = vunpack.c.l.b16 %v4578
  %v4730 = vunpack.c.l.b16 %v4579
  %v4731 = vunpack.c.l.b16 %v4580
  %v4732 = vunpack.c.l.b16 %v4581
  %v4733 = vunpack.c.l.b16 %v4582
  %v4734 = vunpack.c.l.b16 %v4583
  %v4735 = vunpack.c.l.b16 %v4584
  %v4736 = vunpack.c.l.b16 %v4585
  %v4737 = vunpack.c.l.b16 %v4586
  %v4738 = vunpack.c.l.b16 %v4587
  %v4739 = vunpack.c.l.b16 %v4588
  %v4740 = vunpack.c.l.b16 %v4589
  %v4741 = vunpack.c.l.b16 %v4590
  %v4742 = vunpack.c.l.b16 %v4591
  %v4743 = vunpack.c.l.b16 %v4592
  %v4744 = vunpack.c.l.b16 %v4593
  %v4745 = vunpack.c.l.b16 %v4594
  %v4746 = vunpack.c.l.b16 %v4595
  %v4747 = vunpack.c.l.b16 %v4596
  %v4748 = vunpack.c.l.b16 %v4597
  %v4749 = vunpack.c.l.b16 %v4598
  %v4750 = vunpack.c.l.b16 %v4599
  %v4751 = vunpack.c.l.b16 %v4600
  %v4752 = vunpack.c.l.b16 %v4601
  %v4753 = vunpack.c.l.b16 %v4602
  %v4754 = vunpack.c.l.b16 %v4603
  %v4755 = vunpack.c.l.b16 %v4604
  %v4756 = vpack.c.b16 %v4685, %v4684
  %v4757 = vpack.c.b16 %v4687, %v4686
  %v4758 = vpack.c.b16 %v4689, %v4688
  %v4759 = vpack.c.b16 %v4691, %v4690
  %v4760 = vpack.c.b16 %v4693, %v4692
  %v4761 = vpack.c.b16 %v4695, %v4694
  %v4762 = vpack.c.b16 %v4697, %v4696
  %v4763 = vpack.c.b16 %v4699, %v4698
  %v4764 = vpack.c.b16 %v4701, %v4700
  %v4765 = vpack.c.b16 %v4703, %v4702
  %v4766 = vpack.c.b16 %v4705, %v4704
  %v4767 = vpack.c.b16 %v4707, %v4706
  %v4768 = vpack.c.b16 %v4709, %v4708
  %v4769 = vpack.c.b16 %v4711, %v4710
  %v4770 = vpack.c.b16 %v4713, %v4712
  %v4771 = vpack.c.b16 %v4715, %v4714
  %v4772 = vpack.c.b16 %v4717, %v4716
  %v4773 = vpack.c.b16 %v4719, %v4718
  %v4774 = vpack.c.b16 %v4721, %v4720
  %v4775 = vpack.c.b16 %v4723, %v4722
  %v4776 = vpack.c.b16 %v4725, %v4724
  %v4777 = vpack.c.b16 %v4727, %v4726
  %v4778 = vpack.c.b16 %v4729, %v4728
  %v4779 = vpack.c.b16 %v4731, %v4730
  %v4780 = vpack.c.b16 %v4733, %v4732
  %v4781 = vpack.c.b16 %v4735, %v4734
  %v4782 = vpack.c.b16 %v4737, %v4736
  %v4783 = vpack.c.b16 %v4739, %v4738
  %v4784 = vpack.c.b16 %v4741, %v4740
  %v4785 = vpack.c.b16 %v4743, %v4742
  %v4786 = vpack.c.b16 %v4745, %v4744
  %v4787 = vpack.c.b16 %v4747, %v4746
  %v4788 = vpack.c.b16 %v4749, %v4748
  %v4789 = vpack.c.b16 %v4751, %v4750
  %v4790 = vpack.c.b16 %v4753, %v4752
  %v4791 = vpack.c.b16 %v4755, %v4754
  %v4829 = vsel %vm1662, %v4377, 0
  %v4832 = vsel %vm1662, %v4382, 0
  %v4835 = vsel %vm1662, %v4387, 0
  %v4838 = vsel %vm1662, %v4392, 0
  %v4841 = vsel %vm1662, %v4397, 0
  %v4844 = vsel %vm1662, %v4402, 0
  %v4847 = vsel %vm1662, %v4407, 0
  %v4850 = vsel %vm1662, %v4412, 0
  %v4853 = vsel %vm1662, %v4417, 0
  %v4856 = vsel %vm1662, %v4422, 0
  %v4859 = vsel %vm1662, %v4427, 0
  %v4862 = vsel %vm1662, %v4432, 0
  %v4865 = vsel %vm1662, %v4437, 0
  %v4868 = vsel %vm1662, %v4442, 0
  %v4871 = vsel %vm1662, %v4447, 0
  %v4874 = vsel %vm1662, %v4452, 0
  %v4877 = vsel %vm1662, %v4457, 0
  %v4880 = vsel %vm1662, %v4462, 0
  %v4883 = vsel %vm1662, %v4467, 0
  %v4886 = vsel %vm1662, %v4472, 0
  %v4889 = vsel %vm1662, %v4477, 0
  %v4892 = vsel %vm1662, %v4482, 0
  %v4895 = vsel %vm1662, %v4487, 0
  %v4898 = vsel %vm1662, %v4492, 0
  %v4901 = vsel %vm1662, %v4497, 0
  %v4904 = vsel %vm1662, %v4502, 0
  %v4907 = vsel %vm1662, %v4507, 0
  %v4910 = vsel %vm1662, %v4512, 0
  %v4913 = vsel %vm1662, %v4517, 0
  %v4916 = vsel %vm1662, %v4522, 0
  %v4919 = vsel %vm1662, %v4527, 0
  %v4922 = vsel %vm1662, %v4532, 0
  %4924 = vmatprep.subr.bf16.mxu0 0
  %4925 = vmatpush1.bf16.msra.mxu0 %v4756
  %4926 = vmatprep.subr.bf16.mxu0 0
  %4927 = vmatpush1.bf16.msra.mxu0 %v4757
  %4928 = vmatprep.subr.bf16.mxu0 0
  %4929 = vmatpush1.bf16.msra.mxu0 %v4758
  %4930 = vmatprep.subr.bf16.mxu0 0
  %4931 = vmatpush1.bf16.msra.mxu0 %v4759
  %4932 = vmatprep.subr.bf16.mxu0 0
  %4933 = vmatpush1.bf16.msra.mxu0 %v4760
  %4934 = vmatprep.subr.bf16.mxu0 0
  %4935 = vmatpush1.bf16.msra.mxu0 %v4761
  %4936 = vmatprep.subr.bf16.mxu0 0
  %4937 = vmatpush1.bf16.msra.mxu0 %v4762
  %4938 = vmatprep.subr.bf16.mxu0 0
  %4939 = vmatpush1.bf16.msra.mxu0 %v4763
  %4940 = vmatprep.subr.bf16.mxu0 0
  %4941 = vmatpush1.bf16.msra.mxu0 %v4764
  %4942 = vmatprep.subr.bf16.mxu0 0
  %4943 = vmatpush1.bf16.msra.mxu0 %v4765
  %4944 = vmatprep.subr.bf16.mxu0 0
  %4945 = vmatpush1.bf16.msra.mxu0 %v4766
  %4946 = vmatprep.subr.bf16.mxu0 0
  %4947 = vmatpush1.bf16.msra.mxu0 %v4767
  %4948 = vmatprep.subr.bf16.mxu0 0
  %4949 = vmatpush1.bf16.msra.mxu0 %v4768
  %4950 = vmatprep.subr.bf16.mxu0 0
  %4951 = vmatpush1.bf16.msra.mxu0 %v4769
  %4952 = vmatprep.subr.bf16.mxu0 0
  %4953 = vmatpush1.bf16.msra.mxu0 %v4770
  %4954 = vmatprep.subr.bf16.mxu0 0
  %4955 = vmatpush1.bf16.msra.mxu0 %v4771
  %4956 = vmatprep.mubr.bf16.mxu0 %v4374
  %4957 = vmatmul.mubr.bf16.gmra.mrb[0].mxu0 %v4373
  %v4958 = vpop.f32.mrb[0].mxu0
  %v4959 = vadd.f32 %v4610, %v4958
  %v4960 = vpop.f32.mrb[0].mxu0
  %v4961 = vpop.f32.mrb[0].mxu0
  %v4962 = vadd.f32 %v4610, %v4961
  %v4963 = vpop.f32.mrb[0].mxu0
  %4964 = vmatprep.mubr.bf16.mxu0 %v4379
  %4965 = vmatmul.mubr.bf16.gmra.mrb[0].mxu0 %v4378
  %v4966 = vpop.f32.mrb[0].mxu0
  %v4967 = vadd.f32 %v4610, %v4966
  %v4968 = vpop.f32.mrb[0].mxu0
  %v4969 = vpop.f32.mrb[0].mxu0
  %v4970 = vadd.f32 %v4610, %v4969
  %v4971 = vpop.f32.mrb[0].mxu0
  %4972 = vmatprep.mubr.bf16.mxu0 %v4384
  %4973 = vmatmul.mubr.bf16.gmra.mrb[0].mxu0 %v4383
  %v4974 = vpop.f32.mrb[0].mxu0
  %v4975 = vadd.f32 %v4610, %v4974
  %v4976 = vpop.f32.mrb[0].mxu0
  %v4977 = vpop.f32.mrb[0].mxu0
  %v4978 = vadd.f32 %v4610, %v4977
  %v4979 = vpop.f32.mrb[0].mxu0
  %4980 = vmatprep.mubr.bf16.mxu0 %v4389
  %4981 = vmatmul.mubr.bf16.gmra.mrb[0].mxu0 %v4388
  %v4982 = vpop.f32.mrb[0].mxu0
  %v4983 = vadd.f32 %v4610, %v4982
  %v4984 = vpop.f32.mrb[0].mxu0
  %v4985 = vpop.f32.mrb[0].mxu0
  %v4986 = vadd.f32 %v4610, %v4985
  %v4987 = vpop.f32.mrb[0].mxu0
  %4988 = vmatprep.mubr.bf16.mxu0 %v4394
  %4989 = vmatmul.mubr.bf16.gmra.mrb[0].mxu0 %v4393
  %v4990 = vpop.f32.mrb[0].mxu0
  %v4991 = vadd.f32 %v4610, %v4990
  %v4992 = vpop.f32.mrb[0].mxu0
  %v4993 = vpop.f32.mrb[0].mxu0
  %v4994 = vadd.f32 %v4610, %v4993
  %v4995 = vpop.f32.mrb[0].mxu0
  %4996 = vmatprep.mubr.bf16.mxu0 %v4399
  %4997 = vmatmul.mubr.bf16.gmra.mrb[0].mxu0 %v4398
  %v4998 = vpop.f32.mrb[0].mxu0
  %v4999 = vadd.f32 %v4610, %v4998
  %v5000 = vpop.f32.mrb[0].mxu0
  %v5001 = vpop.f32.mrb[0].mxu0
  %v5002 = vadd.f32 %v4610, %v5001
  %v5003 = vpop.f32.mrb[0].mxu0
  %5004 = vmatprep.mubr.bf16.mxu0 %v4404
  %5005 = vmatmul.mubr.bf16.gmra.mrb[0].mxu0 %v4403
  %v5006 = vpop.f32.mrb[0].mxu0
  %v5007 = vadd.f32 %v4610, %v5006
  %v5008 = vpop.f32.mrb[0].mxu0
  %v5009 = vpop.f32.mrb[0].mxu0
  %v5010 = vadd.f32 %v4610, %v5009
  %v5011 = vpop.f32.mrb[0].mxu0
  %5012 = vmatprep.mubr.bf16.mxu0 %v4409
  %5013 = vmatmul.mubr.bf16.gmra.mrb[0].mxu0 %v4408
  %v5014 = vpop.f32.mrb[0].mxu0
  %v5015 = vadd.f32 %v4610, %v5014
  %v5016 = vpop.f32.mrb[0].mxu0
  %v5017 = vpop.f32.mrb[0].mxu0
  %v5018 = vadd.f32 %v4610, %v5017
  %v5019 = vpop.f32.mrb[0].mxu0
  %5020 = vmatprep.mubr.bf16.mxu0 %v4414
  %5021 = vmatmul.mubr.bf16.gmra.mrb[0].mxu0 %v4413
  %v5022 = vpop.f32.mrb[0].mxu0
  %v5023 = vadd.f32 %v4610, %v5022
  %v5024 = vpop.f32.mrb[0].mxu0
  %v5025 = vpop.f32.mrb[0].mxu0
  %v5026 = vadd.f32 %v4610, %v5025
  %v5027 = vpop.f32.mrb[0].mxu0
  %5028 = vmatprep.mubr.bf16.mxu0 %v4419
  %5029 = vmatmul.mubr.bf16.gmra.mrb[0].mxu0 %v4418
  %v5030 = vpop.f32.mrb[0].mxu0
  %v5031 = vadd.f32 %v4610, %v5030
  %v5032 = vpop.f32.mrb[0].mxu0
  %v5033 = vpop.f32.mrb[0].mxu0
  %v5034 = vadd.f32 %v4610, %v5033
  %v5035 = vpop.f32.mrb[0].mxu0
  %5036 = vmatprep.mubr.bf16.mxu0 %v4424
  %5037 = vmatmul.mubr.bf16.gmra.mrb[0].mxu0 %v4423
  %v5038 = vpop.f32.mrb[0].mxu0
  %v5039 = vadd.f32 %v4610, %v5038
  %v5040 = vpop.f32.mrb[0].mxu0
  %v5041 = vpop.f32.mrb[0].mxu0
  %v5042 = vadd.f32 %v4610, %v5041
  %v5043 = vpop.f32.mrb[0].mxu0
  %5044 = vmatprep.mubr.bf16.mxu0 %v4429
  %5045 = vmatmul.mubr.bf16.gmra.mrb[0].mxu0 %v4428
  %v5046 = vpop.f32.mrb[0].mxu0
  %v5047 = vadd.f32 %v4610, %v5046
  %v5048 = vpop.f32.mrb[0].mxu0
  %v5049 = vpop.f32.mrb[0].mxu0
  %v5050 = vadd.f32 %v4610, %v5049
  %v5051 = vpop.f32.mrb[0].mxu0
  %5052 = vmatprep.mubr.bf16.mxu0 %v4434
  %5053 = vmatmul.mubr.bf16.gmra.mrb[0].mxu0 %v4433
  %v5054 = vpop.f32.mrb[0].mxu0
  %v5055 = vadd.f32 %v4610, %v5054
  %v5056 = vpop.f32.mrb[0].mxu0
  %v5057 = vpop.f32.mrb[0].mxu0
  %v5058 = vadd.f32 %v4610, %v5057
  %v5059 = vpop.f32.mrb[0].mxu0
  %5060 = vmatprep.mubr.bf16.mxu0 %v4439
  %5061 = vmatmul.mubr.bf16.gmra.mrb[0].mxu0 %v4438
  %v5062 = vpop.f32.mrb[0].mxu0
  %v5063 = vadd.f32 %v4610, %v5062
  %v5064 = vpop.f32.mrb[0].mxu0
  %v5065 = vpop.f32.mrb[0].mxu0
  %v5066 = vadd.f32 %v4610, %v5065
  %v5067 = vpop.f32.mrb[0].mxu0
  %5068 = vmatprep.mubr.bf16.mxu0 %v4444
  %5069 = vmatmul.mubr.bf16.gmra.mrb[0].mxu0 %v4443
  %v5070 = vpop.f32.mrb[0].mxu0
  %v5071 = vpop.f32.mrb[0].mxu0
  %v5072 = vpop.f32.mrb[0].mxu0
  %v5073 = vpop.f32.mrb[0].mxu0
  %5074 = vmatprep.mubr.bf16.mxu0 %v4449
  %5075 = vmatmul.mubr.bf16.gmra.mrb[0].mxu0 %v4448
  %v5076 = vpop.f32.mrb[0].mxu0
  %v5077 = vpop.f32.mrb[0].mxu0
  %v5078 = vpop.f32.mrb[0].mxu0
  %v5079 = vpop.f32.mrb[0].mxu0
  %5080 = vmatprep.mubr.bf16.mxu0 %v4454
  %5081 = vmatmul.mubr.bf16.gmra.mrb[0].mxu0 %v4453
  %v5082 = vpop.f32.mrb[0].mxu0
  %v5083 = vadd.f32 %v4610, %v5082
  %v5084 = vpop.f32.mrb[0].mxu0
  %v5085 = vpop.f32.mrb[0].mxu0
  %v5086 = vadd.f32 %v4610, %v5085
  %v5087 = vpop.f32.mrb[0].mxu0
  %5088 = vmatprep.mubr.bf16.mxu0 %v4459
  %5089 = vmatmul.mubr.bf16.gmra.mrb[0].mxu0 %v4458
  %v5090 = vpop.f32.mrb[0].mxu0
  %v5091 = vadd.f32 %v4610, %v5090
  %v5092 = vpop.f32.mrb[0].mxu0
  %v5093 = vpop.f32.mrb[0].mxu0
  %v5094 = vadd.f32 %v4610, %v5093
  %v5095 = vpop.f32.mrb[0].mxu0
  %5096 = vmatprep.mubr.bf16.mxu0 %v4464
  %5097 = vmatmul.mubr.bf16.gmra.mrb[0].mxu0 %v4463
  %v5098 = vpop.f32.mrb[0].mxu0
  %v5099 = vadd.f32 %v4610, %v5098
  %v5100 = vpop.f32.mrb[0].mxu0
  %v5101 = vpop.f32.mrb[0].mxu0
  %v5102 = vadd.f32 %v4610, %v5101
  %v5103 = vpop.f32.mrb[0].mxu0
  %5104 = vmatprep.mubr.bf16.mxu0 %v4469
  %5105 = vmatmul.mubr.bf16.gmra.mrb[0].mxu0 %v4468
  %v5106 = vpop.f32.mrb[0].mxu0
  %v5107 = vadd.f32 %v4610, %v5106
  %v5108 = vpop.f32.mrb[0].mxu0
  %v5109 = vpop.f32.mrb[0].mxu0
  %v5110 = vadd.f32 %v4610, %v5109
  %v5111 = vpop.f32.mrb[0].mxu0
  %5112 = vmatprep.mubr.bf16.mxu0 %v4474
  %5113 = vmatmul.mubr.bf16.gmra.mrb[0].mxu0 %v4473
  %v5114 = vpop.f32.mrb[0].mxu0
  %v5115 = vadd.f32 %v4610, %v5114
  %v5116 = vpop.f32.mrb[0].mxu0
  %v5117 = vpop.f32.mrb[0].mxu0
  %v5118 = vadd.f32 %v4610, %v5117
  %v5119 = vpop.f32.mrb[0].mxu0
  %5120 = vmatprep.mubr.bf16.mxu0 %v4479
  %5121 = vmatmul.mubr.bf16.gmra.mrb[0].mxu0 %v4478
  %v5122 = vpop.f32.mrb[0].mxu0
  %v5123 = vadd.f32 %v4610, %v5122
  %v5124 = vpop.f32.mrb[0].mxu0
  %v5125 = vpop.f32.mrb[0].mxu0
  %v5126 = vadd.f32 %v4610, %v5125
  %v5127 = vpop.f32.mrb[0].mxu0
  %5128 = vmatprep.mubr.bf16.mxu0 %v4484
  %5129 = vmatmul.mubr.bf16.gmra.mrb[0].mxu0 %v4483
  %v5130 = vpop.f32.mrb[0].mxu0
  %v5131 = vadd.f32 %v4610, %v5130
  %v5132 = vpop.f32.mrb[0].mxu0
  %v5133 = vpop.f32.mrb[0].mxu0
  %v5134 = vadd.f32 %v4610, %v5133
  %v5135 = vpop.f32.mrb[0].mxu0
  %5136 = vmatprep.mubr.bf16.mxu0 %v4489
  %5137 = vmatmul.mubr.bf16.gmra.mrb[0].mxu0 %v4488
  %v5138 = vpop.f32.mrb[0].mxu0
  %v5139 = vadd.f32 %v4610, %v5138
  %v5140 = vpop.f32.mrb[0].mxu0
  %v5141 = vpop.f32.mrb[0].mxu0
  %v5142 = vadd.f32 %v4610, %v5141
  %v5143 = vpop.f32.mrb[0].mxu0
  %5144 = vmatprep.mubr.bf16.mxu0 %v4494
  %5145 = vmatmul.mubr.bf16.gmra.mrb[0].mxu0 %v4493
  %v5146 = vpop.f32.mrb[0].mxu0
  %v5147 = vadd.f32 %v4610, %v5146
  %v5148 = vpop.f32.mrb[0].mxu0
  %v5149 = vpop.f32.mrb[0].mxu0
  %v5150 = vadd.f32 %v4610, %v5149
  %v5151 = vpop.f32.mrb[0].mxu0
  %5152 = vmatprep.mubr.bf16.mxu0 %v4499
  %5153 = vmatmul.mubr.bf16.gmra.mrb[0].mxu0 %v4498
  %v5154 = vpop.f32.mrb[0].mxu0
  %v5155 = vadd.f32 %v4610, %v5154
  %v5156 = vpop.f32.mrb[0].mxu0
  %v5157 = vpop.f32.mrb[0].mxu0
  %v5158 = vadd.f32 %v4610, %v5157
  %v5159 = vpop.f32.mrb[0].mxu0
  %5160 = vmatprep.mubr.bf16.mxu0 %v4504
  %5161 = vmatmul.mubr.bf16.gmra.mrb[0].mxu0 %v4503
  %v5162 = vpop.f32.mrb[0].mxu0
  %v5163 = vadd.f32 %v4610, %v5162
  %v5164 = vpop.f32.mrb[0].mxu0
  %v5165 = vpop.f32.mrb[0].mxu0
  %v5166 = vadd.f32 %v4610, %v5165
  %v5167 = vpop.f32.mrb[0].mxu0
  %5168 = vmatprep.mubr.bf16.mxu0 %v4509
  %5169 = vmatmul.mubr.bf16.gmra.mrb[0].mxu0 %v4508
  %v5170 = vpop.f32.mrb[0].mxu0
  %v5171 = vadd.f32 %v4610, %v5170
  %v5172 = vpop.f32.mrb[0].mxu0
  %v5173 = vpop.f32.mrb[0].mxu0
  %v5174 = vadd.f32 %v4610, %v5173
  %v5175 = vpop.f32.mrb[0].mxu0
  %5176 = vmatprep.mubr.bf16.mxu0 %v4514
  %5177 = vmatmul.mubr.bf16.gmra.mrb[0].mxu0 %v4513
  %v5178 = vpop.f32.mrb[0].mxu0
  %v5179 = vadd.f32 %v4610, %v5178
  %v5180 = vpop.f32.mrb[0].mxu0
  %v5181 = vpop.f32.mrb[0].mxu0
  %v5182 = vadd.f32 %v4610, %v5181
  %v5183 = vpop.f32.mrb[0].mxu0
  %5184 = vmatprep.mubr.bf16.mxu0 %v4519
  %5185 = vmatmul.mubr.bf16.gmra.mrb[0].mxu0 %v4518
  %v5186 = vpop.f32.mrb[0].mxu0
  %v5187 = vadd.f32 %v4610, %v5186
  %v5188 = vpop.f32.mrb[0].mxu0
  %v5189 = vpop.f32.mrb[0].mxu0
  %v5190 = vadd.f32 %v4610, %v5189
  %v5191 = vpop.f32.mrb[0].mxu0
  %5192 = vmatprep.mubr.bf16.mxu0 %v4524
  %5193 = vmatmul.mubr.bf16.gmra.mrb[0].mxu0 %v4523
  %v5194 = vpop.f32.mrb[0].mxu0
  %v5195 = vpop.f32.mrb[0].mxu0
  %v5196 = vpop.f32.mrb[0].mxu0
  %v5197 = vpop.f32.mrb[0].mxu0
  %5198 = vmatprep.mubr.bf16.mxu0 %v4529
  %5199 = vmatmul.mubr.bf16.gmra.mrb[0].mxu0 %v4528
  %v5200 = vpop.f32.mrb[0].mxu0
  %v5201 = vpop.f32.mrb[0].mxu0
  %v5202 = vpop.f32.mrb[0].mxu0
  %v5203 = vpop.f32.mrb[0].mxu0
  %5204 = vdwg.mxu0
  %5205 = vmatprep.subr.bf16.mxu0 0
  %5206 = vmatpush1.bf16.msra.mxu0 %v4772
  %5207 = vmatprep.subr.bf16.mxu0 0
  %5208 = vmatpush1.bf16.msra.mxu0 %v4773
  %5209 = vmatprep.subr.bf16.mxu0 0
  %5210 = vmatpush1.bf16.msra.mxu0 %v4774
  %5211 = vmatprep.subr.bf16.mxu0 0
  %5212 = vmatpush1.bf16.msra.mxu0 %v4775
  %5213 = vmatprep.subr.bf16.mxu0 0
  %5214 = vmatpush1.bf16.msra.mxu0 %v4776
  %5215 = vmatprep.subr.bf16.mxu0 0
  %5216 = vmatpush1.bf16.msra.mxu0 %v4777
  %5217 = vmatprep.subr.bf16.mxu0 0
  %5218 = vmatpush1.bf16.msra.mxu0 %v4778
  %5219 = vmatprep.subr.bf16.mxu0 0
  %5220 = vmatpush1.bf16.msra.mxu0 %v4779
  %5221 = vmatprep.subr.bf16.mxu0 0
  %5222 = vmatpush1.bf16.msra.mxu0 %v4780
  %5223 = vmatprep.subr.bf16.mxu0 0
  %5224 = vmatpush1.bf16.msra.mxu0 %v4781
  %5225 = vmatprep.subr.bf16.mxu0 0
  %5226 = vmatpush1.bf16.msra.mxu0 %v4782
  %5227 = vmatprep.subr.bf16.mxu0 0
  %5228 = vmatpush1.bf16.msra.mxu0 %v4783
  %5229 = vmatprep.subr.bf16.mxu0 0
  %5230 = vmatpush1.bf16.msra.mxu0 %v4784
  %5231 = vmatprep.subr.bf16.mxu0 0
  %5232 = vmatpush1.bf16.msra.mxu0 %v4785
  %5233 = vmatprep.subr.bf16.mxu0 0
  %5234 = vmatpush1.bf16.msra.mxu0 %v4786
  %5235 = vmatprep.subr.bf16.mxu0 0
  %5236 = vmatpush1.bf16.msra.mxu0 %v4787
  %5237 = vmatprep.mubr.bf16.mxu0 %v4376
  %5238 = vmatmul.mubr.bf16.gmra.mrb[0].mxu0 %v4375
  %v5239 = vpop.f32.mrb[0].mxu0
  %v5240 = vadd.f32 %v4959, %v5239
  %v5241 = vpop.f32.mrb[0].mxu0
  %v5242 = vpop.f32.mrb[0].mxu0
  %v5243 = vadd.f32 %v4962, %v5242
  %v5244 = vpop.f32.mrb[0].mxu0
  %5245 = vmatprep.mubr.bf16.mxu0 %v4381
  %5246 = vmatmul.mubr.bf16.gmra.mrb[0].mxu0 %v4380
  %v5247 = vpop.f32.mrb[0].mxu0
  %v5248 = vadd.f32 %v4967, %v5247
  %v5249 = vpop.f32.mrb[0].mxu0
  %v5250 = vpop.f32.mrb[0].mxu0
  %v5251 = vadd.f32 %v4970, %v5250
  %v5252 = vpop.f32.mrb[0].mxu0
  %5253 = vmatprep.mubr.bf16.mxu0 %v4386
  %5254 = vmatmul.mubr.bf16.gmra.mrb[0].mxu0 %v4385
  %v5255 = vpop.f32.mrb[0].mxu0
  %v5256 = vadd.f32 %v4975, %v5255
  %v5257 = vpop.f32.mrb[0].mxu0
  %v5258 = vpop.f32.mrb[0].mxu0
  %v5259 = vadd.f32 %v4978, %v5258
  %v5260 = vpop.f32.mrb[0].mxu0
  %5261 = vmatprep.mubr.bf16.mxu0 %v4391
  %5262 = vmatmul.mubr.bf16.gmra.mrb[0].mxu0 %v4390
  %v5263 = vpop.f32.mrb[0].mxu0
  %v5264 = vadd.f32 %v4983, %v5263
  %v5265 = vpop.f32.mrb[0].mxu0
  %v5266 = vpop.f32.mrb[0].mxu0
  %v5267 = vadd.f32 %v4986, %v5266
  %v5268 = vpop.f32.mrb[0].mxu0
  %5269 = vmatprep.mubr.bf16.mxu0 %v4396
  %5270 = vmatmul.mubr.bf16.gmra.mrb[0].mxu0 %v4395
  %v5271 = vpop.f32.mrb[0].mxu0
  %v5272 = vadd.f32 %v4991, %v5271
  %v5273 = vpop.f32.mrb[0].mxu0
  %v5274 = vpop.f32.mrb[0].mxu0
  %v5275 = vadd.f32 %v4994, %v5274
  %v5276 = vpop.f32.mrb[0].mxu0
  %5277 = vmatprep.mubr.bf16.mxu0 %v4401
  %5278 = vmatmul.mubr.bf16.gmra.mrb[0].mxu0 %v4400
  %v5279 = vpop.f32.mrb[0].mxu0
  %v5280 = vadd.f32 %v4999, %v5279
  %v5281 = vpop.f32.mrb[0].mxu0
  %v5282 = vpop.f32.mrb[0].mxu0
  %v5283 = vadd.f32 %v5002, %v5282
  %v5284 = vpop.f32.mrb[0].mxu0
  %5285 = vmatprep.mubr.bf16.mxu0 %v4406
  %5286 = vmatmul.mubr.bf16.gmra.mrb[0].mxu0 %v4405
  %v5287 = vpop.f32.mrb[0].mxu0
  %v5288 = vadd.f32 %v5007, %v5287
  %v5289 = vpop.f32.mrb[0].mxu0
  %v5290 = vpop.f32.mrb[0].mxu0
  %v5291 = vadd.f32 %v5010, %v5290
  %v5292 = vpop.f32.mrb[0].mxu0
  %5293 = vmatprep.mubr.bf16.mxu0 %v4411
  %5294 = vmatmul.mubr.bf16.gmra.mrb[0].mxu0 %v4410
  %v5295 = vpop.f32.mrb[0].mxu0
  %v5296 = vadd.f32 %v5015, %v5295
  %v5297 = vpop.f32.mrb[0].mxu0
  %v5298 = vpop.f32.mrb[0].mxu0
  %v5299 = vadd.f32 %v5018, %v5298
  %v5300 = vpop.f32.mrb[0].mxu0
  %5301 = vmatprep.mubr.bf16.mxu0 %v4416
  %5302 = vmatmul.mubr.bf16.gmra.mrb[0].mxu0 %v4415
  %v5303 = vpop.f32.mrb[0].mxu0
  %v5304 = vadd.f32 %v5023, %v5303
  %v5305 = vpop.f32.mrb[0].mxu0
  %v5306 = vpop.f32.mrb[0].mxu0
  %v5307 = vadd.f32 %v5026, %v5306
  %v5308 = vpop.f32.mrb[0].mxu0
  %5309 = vmatprep.mubr.bf16.mxu0 %v4421
  %5310 = vmatmul.mubr.bf16.gmra.mrb[0].mxu0 %v4420
  %v5311 = vpop.f32.mrb[0].mxu0
  %v5312 = vadd.f32 %v5031, %v5311
  %v5313 = vpop.f32.mrb[0].mxu0
  %v5314 = vpop.f32.mrb[0].mxu0
  %v5315 = vadd.f32 %v5034, %v5314
  %v5316 = vpop.f32.mrb[0].mxu0
  %5317 = vmatprep.mubr.bf16.mxu0 %v4426
  %5318 = vmatmul.mubr.bf16.gmra.mrb[0].mxu0 %v4425
  %v5319 = vpop.f32.mrb[0].mxu0
  %v5320 = vadd.f32 %v5039, %v5319
  %v5321 = vpop.f32.mrb[0].mxu0
  %v5322 = vpop.f32.mrb[0].mxu0
  %v5323 = vadd.f32 %v5042, %v5322
  %v5324 = vpop.f32.mrb[0].mxu0
  %5325 = vmatprep.mubr.bf16.mxu0 %v4431
  %5326 = vmatmul.mubr.bf16.gmra.mrb[0].mxu0 %v4430
  %v5327 = vpop.f32.mrb[0].mxu0
  %v5328 = vadd.f32 %v5047, %v5327
  %v5329 = vpop.f32.mrb[0].mxu0
  %v5330 = vpop.f32.mrb[0].mxu0
  %v5331 = vadd.f32 %v5050, %v5330
  %v5332 = vpop.f32.mrb[0].mxu0
  %5333 = vmatprep.mubr.bf16.mxu0 %v4436
  %5334 = vmatmul.mubr.bf16.gmra.mrb[0].mxu0 %v4435
  %v5335 = vpop.f32.mrb[0].mxu0
  %v5336 = vadd.f32 %v5055, %v5335
  %v5337 = vpop.f32.mrb[0].mxu0
  %v5338 = vpop.f32.mrb[0].mxu0
  %v5339 = vadd.f32 %v5058, %v5338
  %v5340 = vpop.f32.mrb[0].mxu0
  %5341 = vmatprep.mubr.bf16.mxu0 %v4441
  %5342 = vmatmul.mubr.bf16.gmra.mrb[0].mxu0 %v4440
  %v5343 = vpop.f32.mrb[0].mxu0
  %v5344 = vadd.f32 %v5063, %v5343
  %v5345 = vpop.f32.mrb[0].mxu0
  %v5346 = vpop.f32.mrb[0].mxu0
  %v5347 = vadd.f32 %v5066, %v5346
  %v5348 = vpop.f32.mrb[0].mxu0
  %5349 = vmatprep.mubr.bf16.mxu0 %v4446
  %5350 = vmatmul.mubr.bf16.gmra.mrb[0].mxu0 %v4445
  %v5351 = vpop.f32.mrb[0].mxu0
  %v5352 = vpop.f32.mrb[0].mxu0
  %v5353 = vpop.f32.mrb[0].mxu0
  %v5354 = vpop.f32.mrb[0].mxu0
  %5355 = vmatprep.mubr.bf16.mxu0 %v4451
  %5356 = vmatmul.mubr.bf16.gmra.mrb[0].mxu0 %v4450
  %v5357 = vpop.f32.mrb[0].mxu0
  %v5358 = vpop.f32.mrb[0].mxu0
  %v5359 = vpop.f32.mrb[0].mxu0
  %v5360 = vpop.f32.mrb[0].mxu0
  %5361 = vmatprep.mubr.bf16.mxu0 %v4456
  %5362 = vmatmul.mubr.bf16.gmra.mrb[0].mxu0 %v4455
  %v5363 = vpop.f32.mrb[0].mxu0
  %v5364 = vadd.f32 %v5083, %v5363
  %v5365 = vpop.f32.mrb[0].mxu0
  %v5366 = vpop.f32.mrb[0].mxu0
  %v5367 = vadd.f32 %v5086, %v5366
  %v5368 = vpop.f32.mrb[0].mxu0
  %5369 = vmatprep.mubr.bf16.mxu0 %v4461
  %5370 = vmatmul.mubr.bf16.gmra.mrb[0].mxu0 %v4460
  %v5371 = vpop.f32.mrb[0].mxu0
  %v5372 = vadd.f32 %v5091, %v5371
  %v5373 = vpop.f32.mrb[0].mxu0
  %v5374 = vpop.f32.mrb[0].mxu0
  %v5375 = vadd.f32 %v5094, %v5374
  %v5376 = vpop.f32.mrb[0].mxu0
  %5377 = vmatprep.mubr.bf16.mxu0 %v4466
  %5378 = vmatmul.mubr.bf16.gmra.mrb[0].mxu0 %v4465
  %v5379 = vpop.f32.mrb[0].mxu0
  %v5380 = vadd.f32 %v5099, %v5379
  %v5381 = vpop.f32.mrb[0].mxu0
  %v5382 = vpop.f32.mrb[0].mxu0
  %v5383 = vadd.f32 %v5102, %v5382
  %v5384 = vpop.f32.mrb[0].mxu0
  %5385 = vmatprep.mubr.bf16.mxu0 %v4471
  %5386 = vmatmul.mubr.bf16.gmra.mrb[0].mxu0 %v4470
  %v5387 = vpop.f32.mrb[0].mxu0
  %v5388 = vadd.f32 %v5107, %v5387
  %v5389 = vpop.f32.mrb[0].mxu0
  %v5390 = vpop.f32.mrb[0].mxu0
  %v5391 = vadd.f32 %v5110, %v5390
  %v5392 = vpop.f32.mrb[0].mxu0
  %5393 = vmatprep.mubr.bf16.mxu0 %v4476
  %5394 = vmatmul.mubr.bf16.gmra.mrb[0].mxu0 %v4475
  %v5395 = vpop.f32.mrb[0].mxu0
  %v5396 = vadd.f32 %v5115, %v5395
  %v5397 = vpop.f32.mrb[0].mxu0
  %v5398 = vpop.f32.mrb[0].mxu0
  %v5399 = vadd.f32 %v5118, %v5398
  %v5400 = vpop.f32.mrb[0].mxu0
  %5401 = vmatprep.mubr.bf16.mxu0 %v4481
  %5402 = vmatmul.mubr.bf16.gmra.mrb[0].mxu0 %v4480
  %v5403 = vpop.f32.mrb[0].mxu0
  %v5404 = vadd.f32 %v5123, %v5403
  %v5405 = vpop.f32.mrb[0].mxu0
  %v5406 = vpop.f32.mrb[0].mxu0
  %v5407 = vadd.f32 %v5126, %v5406
  %v5408 = vpop.f32.mrb[0].mxu0
  %5409 = vmatprep.mubr.bf16.mxu0 %v4486
  %5410 = vmatmul.mubr.bf16.gmra.mrb[0].mxu0 %v4485
  %v5411 = vpop.f32.mrb[0].mxu0
  %v5412 = vadd.f32 %v5131, %v5411
  %v5413 = vpop.f32.mrb[0].mxu0
  %v5414 = vpop.f32.mrb[0].mxu0
  %v5415 = vadd.f32 %v5134, %v5414
  %v5416 = vpop.f32.mrb[0].mxu0
  %5417 = vmatprep.mubr.bf16.mxu0 %v4491
  %5418 = vmatmul.mubr.bf16.gmra.mrb[0].mxu0 %v4490
  %v5419 = vpop.f32.mrb[0].mxu0
  %v5420 = vadd.f32 %v5139, %v5419
  %v5421 = vpop.f32.mrb[0].mxu0
  %v5422 = vpop.f32.mrb[0].mxu0
  %v5423 = vadd.f32 %v5142, %v5422
  %v5424 = vpop.f32.mrb[0].mxu0
  %5425 = vmatprep.mubr.bf16.mxu0 %v4496
  %5426 = vmatmul.mubr.bf16.gmra.mrb[0].mxu0 %v4495
  %v5427 = vpop.f32.mrb[0].mxu0
  %v5428 = vadd.f32 %v5147, %v5427
  %v5429 = vpop.f32.mrb[0].mxu0
  %v5430 = vpop.f32.mrb[0].mxu0
  %v5431 = vadd.f32 %v5150, %v5430
  %v5432 = vpop.f32.mrb[0].mxu0
  %5433 = vmatprep.mubr.bf16.mxu0 %v4501
  %5434 = vmatmul.mubr.bf16.gmra.mrb[0].mxu0 %v4500
  %v5435 = vpop.f32.mrb[0].mxu0
  %v5436 = vadd.f32 %v5155, %v5435
  %v5437 = vpop.f32.mrb[0].mxu0
  %v5438 = vpop.f32.mrb[0].mxu0
  %v5439 = vadd.f32 %v5158, %v5438
  %v5440 = vpop.f32.mrb[0].mxu0
  %5441 = vmatprep.mubr.bf16.mxu0 %v4506
  %5442 = vmatmul.mubr.bf16.gmra.mrb[0].mxu0 %v4505
  %v5443 = vpop.f32.mrb[0].mxu0
  %v5444 = vadd.f32 %v5163, %v5443
  %v5445 = vpop.f32.mrb[0].mxu0
  %v5446 = vpop.f32.mrb[0].mxu0
  %v5447 = vadd.f32 %v5166, %v5446
  %v5448 = vpop.f32.mrb[0].mxu0
  %5449 = vmatprep.mubr.bf16.mxu0 %v4511
  %5450 = vmatmul.mubr.bf16.gmra.mrb[0].mxu0 %v4510
  %v5451 = vpop.f32.mrb[0].mxu0
  %v5452 = vadd.f32 %v5171, %v5451
  %v5453 = vpop.f32.mrb[0].mxu0
  %v5454 = vpop.f32.mrb[0].mxu0
  %v5455 = vadd.f32 %v5174, %v5454
  %v5456 = vpop.f32.mrb[0].mxu0
  %5457 = vmatprep.mubr.bf16.mxu0 %v4516
  %5458 = vmatmul.mubr.bf16.gmra.mrb[0].mxu0 %v4515
  %v5459 = vpop.f32.mrb[0].mxu0
  %v5460 = vadd.f32 %v5179, %v5459
  %v5461 = vpop.f32.mrb[0].mxu0
  %v5462 = vpop.f32.mrb[0].mxu0
  %v5463 = vadd.f32 %v5182, %v5462
  %v5464 = vpop.f32.mrb[0].mxu0
  %5465 = vmatprep.mubr.bf16.mxu0 %v4521
  %5466 = vmatmul.mubr.bf16.gmra.mrb[0].mxu0 %v4520
  %v5467 = vpop.f32.mrb[0].mxu0
  %v5468 = vadd.f32 %v5187, %v5467
  %v5469 = vpop.f32.mrb[0].mxu0
  %v5470 = vpop.f32.mrb[0].mxu0
  %v5471 = vadd.f32 %v5190, %v5470
  %v5472 = vpop.f32.mrb[0].mxu0
  %5473 = vmatprep.mubr.bf16.mxu0 %v4526
  %5474 = vmatmul.mubr.bf16.gmra.mrb[0].mxu0 %v4525
  %v5475 = vpop.f32.mrb[0].mxu0
  %v5476 = vpop.f32.mrb[0].mxu0
  %v5477 = vpop.f32.mrb[0].mxu0
  %v5478 = vpop.f32.mrb[0].mxu0
  %5479 = vmatprep.mubr.bf16.mxu0 %v4531
  %5480 = vmatmul.mubr.bf16.gmra.mrb[0].mxu0 %v4530
  %v5481 = vpop.f32.mrb[0].mxu0
  %v5482 = vpop.f32.mrb[0].mxu0
  %v5483 = vpop.f32.mrb[0].mxu0
  %v5484 = vpop.f32.mrb[0].mxu0
  %5485 = vdwg.mxu0
  %5486 = vmatprep.subr.bf16.mxu0 0
  %5487 = vmatpush1.bf16.msra.mxu0 %v4788
  %5488 = vmatprep.subr.bf16.mxu0 0
  %5489 = vmatpush1.bf16.msra.mxu0 %v4789
  %5490 = vmatprep.subr.bf16.mxu0 0
  %5491 = vmatpush1.bf16.msra.mxu0 %v4790
  %5492 = vmatprep.subr.bf16.mxu0 0
  %5493 = vmatpush1.bf16.msra.mxu0 %v4791
  %5494 = vmatprep.subr.bf16.mxu0 0
  %5495 = vmatpush1.bf16.msra.mxu0 0
  %5496 = vmatprep.subr.bf16.mxu0 0
  %5497 = vmatpush1.bf16.msra.mxu0 0
  %5498 = vmatprep.subr.bf16.mxu0 0
  %5499 = vmatpush1.bf16.msra.mxu0 0
  %5500 = vmatprep.subr.bf16.mxu0 0
  %5501 = vmatpush1.bf16.msra.mxu0 0
  %5502 = vmatprep.subr.bf16.mxu0 0
  %5503 = vmatpush1.bf16.msra.mxu0 0
  %5504 = vmatprep.subr.bf16.mxu0 0
  %5505 = vmatpush1.bf16.msra.mxu0 0
  %5506 = vmatprep.subr.bf16.mxu0 0
  %5507 = vmatpush1.bf16.msra.mxu0 0
  %5508 = vmatprep.subr.bf16.mxu0 0
  %5509 = vmatpush1.bf16.msra.mxu0 0
  %5510 = vmatprep.subr.bf16.mxu0 0
  %5511 = vmatpush1.bf16.msra.mxu0 0
  %5512 = vmatprep.subr.bf16.mxu0 0
  %5513 = vmatpush1.bf16.msra.mxu0 0
  %5514 = vmatprep.subr.bf16.mxu0 0
  %5515 = vmatpush1.bf16.msra.mxu0 0
  %5516 = vmatprep.subr.bf16.mxu0 0
  %5517 = vmatpush1.bf16.msra.mxu0 0
  %5518 = vmatprep.mubr.bf16.mxu0 0
  %5519 = vmatmul.mubr.bf16.gmra.mrb[0].mxu0 %v4829
  %v5520 = vpop.f32.mrb[0].mxu0
  %v5521 = vadd.f32 %v5240, %v5520
  %v5522 = vpop.f32.mrb[0].mxu0
  %v5523 = vpop.f32.mrb[0].mxu0
  %v5524 = vadd.f32 %v5243, %v5523
  %v5525 = vpop.f32.mrb[0].mxu0
  %5526 = vmatprep.mubr.bf16.mxu0 0
  %5527 = vmatmul.mubr.bf16.gmra.mrb[0].mxu0 %v4832
  %v5528 = vpop.f32.mrb[0].mxu0
  %v5529 = vadd.f32 %v5248, %v5528
  %v5530 = vpop.f32.mrb[0].mxu0
  %v5531 = vpop.f32.mrb[0].mxu0
  %v5532 = vadd.f32 %v5251, %v5531
  %v5533 = vpop.f32.mrb[0].mxu0
  %5534 = vmatprep.mubr.bf16.mxu0 0
  %5535 = vmatmul.mubr.bf16.gmra.mrb[0].mxu0 %v4835
  %v5536 = vpop.f32.mrb[0].mxu0
  %v5537 = vadd.f32 %v5256, %v5536
  %v5538 = vpop.f32.mrb[0].mxu0
  %v5539 = vpop.f32.mrb[0].mxu0
  %v5540 = vadd.f32 %v5259, %v5539
  %v5541 = vpop.f32.mrb[0].mxu0
  %5542 = vmatprep.mubr.bf16.mxu0 0
  %5543 = vmatmul.mubr.bf16.gmra.mrb[0].mxu0 %v4838
  %v5544 = vpop.f32.mrb[0].mxu0
  %v5545 = vadd.f32 %v5264, %v5544
  %v5546 = vpop.f32.mrb[0].mxu0
  %v5547 = vpop.f32.mrb[0].mxu0
  %v5548 = vadd.f32 %v5267, %v5547
  %v5549 = vpop.f32.mrb[0].mxu0
  %5550 = vmatprep.mubr.bf16.mxu0 0
  %5551 = vmatmul.mubr.bf16.gmra.mrb[0].mxu0 %v4841
  %v5552 = vpop.f32.mrb[0].mxu0
  %v5553 = vadd.f32 %v5272, %v5552
  %v5554 = vpop.f32.mrb[0].mxu0
  %v5555 = vpop.f32.mrb[0].mxu0
  %v5556 = vadd.f32 %v5275, %v5555
  %v5557 = vpop.f32.mrb[0].mxu0
  %5558 = vmatprep.mubr.bf16.mxu0 0
  %5559 = vmatmul.mubr.bf16.gmra.mrb[0].mxu0 %v4844
  %v5560 = vpop.f32.mrb[0].mxu0
  %v5561 = vadd.f32 %v5280, %v5560
  %v5562 = vpop.f32.mrb[0].mxu0
  %v5563 = vpop.f32.mrb[0].mxu0
  %v5564 = vadd.f32 %v5283, %v5563
  %v5565 = vpop.f32.mrb[0].mxu0
  %5566 = vmatprep.mubr.bf16.mxu0 0
  %5567 = vmatmul.mubr.bf16.gmra.mrb[0].mxu0 %v4847
  %v5568 = vpop.f32.mrb[0].mxu0
  %v5569 = vadd.f32 %v5288, %v5568
  %v5570 = vpop.f32.mrb[0].mxu0
  %v5571 = vpop.f32.mrb[0].mxu0
  %v5572 = vadd.f32 %v5291, %v5571
  %v5573 = vpop.f32.mrb[0].mxu0
  %5574 = vmatprep.mubr.bf16.mxu0 0
  %5575 = vmatmul.mubr.bf16.gmra.mrb[0].mxu0 %v4850
  %v5576 = vpop.f32.mrb[0].mxu0
  %v5577 = vadd.f32 %v5296, %v5576
  %v5578 = vpop.f32.mrb[0].mxu0
  %v5579 = vpop.f32.mrb[0].mxu0
  %v5580 = vadd.f32 %v5299, %v5579
  %v5581 = vpop.f32.mrb[0].mxu0
  %5582 = vmatprep.mubr.bf16.mxu0 0
  %5583 = vmatmul.mubr.bf16.gmra.mrb[0].mxu0 %v4853
  %v5584 = vpop.f32.mrb[0].mxu0
  %v5585 = vadd.f32 %v5304, %v5584
  %v5586 = vpop.f32.mrb[0].mxu0
  %v5587 = vpop.f32.mrb[0].mxu0
  %v5588 = vadd.f32 %v5307, %v5587
  %v5589 = vpop.f32.mrb[0].mxu0
  %5590 = vmatprep.mubr.bf16.mxu0 0
  %5591 = vmatmul.mubr.bf16.gmra.mrb[0].mxu0 %v4856
  %v5592 = vpop.f32.mrb[0].mxu0
  %v5593 = vadd.f32 %v5312, %v5592
  %v5594 = vpop.f32.mrb[0].mxu0
  %v5595 = vpop.f32.mrb[0].mxu0
  %v5596 = vadd.f32 %v5315, %v5595
  %v5597 = vpop.f32.mrb[0].mxu0
  %5598 = vmatprep.mubr.bf16.mxu0 0
  %5599 = vmatmul.mubr.bf16.gmra.mrb[0].mxu0 %v4859
  %v5600 = vpop.f32.mrb[0].mxu0
  %v5601 = vadd.f32 %v5320, %v5600
  %v5602 = vpop.f32.mrb[0].mxu0
  %v5603 = vpop.f32.mrb[0].mxu0
  %v5604 = vadd.f32 %v5323, %v5603
  %v5605 = vpop.f32.mrb[0].mxu0
  %5606 = vmatprep.mubr.bf16.mxu0 0
  %5607 = vmatmul.mubr.bf16.gmra.mrb[0].mxu0 %v4862
  %v5608 = vpop.f32.mrb[0].mxu0
  %v5609 = vadd.f32 %v5328, %v5608
  %v5610 = vpop.f32.mrb[0].mxu0
  %v5611 = vpop.f32.mrb[0].mxu0
  %v5612 = vadd.f32 %v5331, %v5611
  %v5613 = vpop.f32.mrb[0].mxu0
  %5614 = vmatprep.mubr.bf16.mxu0 0
  %5615 = vmatmul.mubr.bf16.gmra.mrb[0].mxu0 %v4865
  %v5616 = vpop.f32.mrb[0].mxu0
  %v5617 = vadd.f32 %v5336, %v5616
  %v5618 = vpop.f32.mrb[0].mxu0
  %v5619 = vpop.f32.mrb[0].mxu0
  %v5620 = vadd.f32 %v5339, %v5619
  %v5621 = vpop.f32.mrb[0].mxu0
  %5622 = vmatprep.mubr.bf16.mxu0 0
  %5623 = vmatmul.mubr.bf16.gmra.mrb[0].mxu0 %v4868
  %v5624 = vpop.f32.mrb[0].mxu0
  %v5625 = vadd.f32 %v5344, %v5624
  %v5626 = vpop.f32.mrb[0].mxu0
  %v5627 = vpop.f32.mrb[0].mxu0
  %v5628 = vadd.f32 %v5347, %v5627
  %v5629 = vpop.f32.mrb[0].mxu0
  %5630 = vmatprep.mubr.bf16.mxu0 0
  %5631 = vmatmul.mubr.bf16.gmra.mrb[0].mxu0 %v4871
  %v5632 = vpop.f32.mrb[0].mxu0
  %v5633 = vpop.f32.mrb[0].mxu0
  %v5634 = vpop.f32.mrb[0].mxu0
  %v5635 = vpop.f32.mrb[0].mxu0
  %5636 = vmatprep.mubr.bf16.mxu0 0
  %5637 = vmatmul.mubr.bf16.gmra.mrb[0].mxu0 %v4874
  %v5638 = vpop.f32.mrb[0].mxu0
  %v5639 = vpop.f32.mrb[0].mxu0
  %v5640 = vpop.f32.mrb[0].mxu0
  %v5641 = vpop.f32.mrb[0].mxu0
  %5642 = vmatprep.mubr.bf16.mxu0 0
  %5643 = vmatmul.mubr.bf16.gmra.mrb[0].mxu0 %v4877
  %v5644 = vpop.f32.mrb[0].mxu0
  %v5645 = vadd.f32 %v5364, %v5644
  %v5646 = vpop.f32.mrb[0].mxu0
  %v5647 = vpop.f32.mrb[0].mxu0
  %v5648 = vadd.f32 %v5367, %v5647
  %v5649 = vpop.f32.mrb[0].mxu0
  %5650 = vmatprep.mubr.bf16.mxu0 0
  %5651 = vmatmul.mubr.bf16.gmra.mrb[0].mxu0 %v4880
  %v5652 = vpop.f32.mrb[0].mxu0
  %v5653 = vadd.f32 %v5372, %v5652
  %v5654 = vpop.f32.mrb[0].mxu0
  %v5655 = vpop.f32.mrb[0].mxu0
  %v5656 = vadd.f32 %v5375, %v5655
  %v5657 = vpop.f32.mrb[0].mxu0
  %5658 = vmatprep.mubr.bf16.mxu0 0
  %5659 = vmatmul.mubr.bf16.gmra.mrb[0].mxu0 %v4883
  %v5660 = vpop.f32.mrb[0].mxu0
  %v5661 = vadd.f32 %v5380, %v5660
  %v5662 = vpop.f32.mrb[0].mxu0
  %v5663 = vpop.f32.mrb[0].mxu0
  %v5664 = vadd.f32 %v5383, %v5663
  %v5665 = vpop.f32.mrb[0].mxu0
  %5666 = vmatprep.mubr.bf16.mxu0 0
  %5667 = vmatmul.mubr.bf16.gmra.mrb[0].mxu0 %v4886
  %v5668 = vpop.f32.mrb[0].mxu0
  %v5669 = vadd.f32 %v5388, %v5668
  %v5670 = vpop.f32.mrb[0].mxu0
  %v5671 = vpop.f32.mrb[0].mxu0
  %v5672 = vadd.f32 %v5391, %v5671
  %v5673 = vpop.f32.mrb[0].mxu0
  %5674 = vmatprep.mubr.bf16.mxu0 0
  %5675 = vmatmul.mubr.bf16.gmra.mrb[0].mxu0 %v4889
  %v5676 = vpop.f32.mrb[0].mxu0
  %v5677 = vadd.f32 %v5396, %v5676
  %v5678 = vpop.f32.mrb[0].mxu0
  %v5679 = vpop.f32.mrb[0].mxu0
  %v5680 = vadd.f32 %v5399, %v5679
  %v5681 = vpop.f32.mrb[0].mxu0
  %5682 = vmatprep.mubr.bf16.mxu0 0
  %5683 = vmatmul.mubr.bf16.gmra.mrb[0].mxu0 %v4892
  %v5684 = vpop.f32.mrb[0].mxu0
  %v5685 = vadd.f32 %v5404, %v5684
  %v5686 = vpop.f32.mrb[0].mxu0
  %v5687 = vpop.f32.mrb[0].mxu0
  %v5688 = vadd.f32 %v5407, %v5687
  %v5689 = vpop.f32.mrb[0].mxu0
  %5690 = vmatprep.mubr.bf16.mxu0 0
  %5691 = vmatmul.mubr.bf16.gmra.mrb[0].mxu0 %v4895
  %v5692 = vpop.f32.mrb[0].mxu0
  %v5693 = vadd.f32 %v5412, %v5692
  %v5694 = vpop.f32.mrb[0].mxu0
  %v5695 = vpop.f32.mrb[0].mxu0
  %v5696 = vadd.f32 %v5415, %v5695
  %v5697 = vpop.f32.mrb[0].mxu0
  %5698 = vmatprep.mubr.bf16.mxu0 0
  %5699 = vmatmul.mubr.bf16.gmra.mrb[0].mxu0 %v4898
  %v5700 = vpop.f32.mrb[0].mxu0
  %v5701 = vadd.f32 %v5420, %v5700
  %v5702 = vpop.f32.mrb[0].mxu0
  %v5703 = vpop.f32.mrb[0].mxu0
  %v5704 = vadd.f32 %v5423, %v5703
  %v5705 = vpop.f32.mrb[0].mxu0
  %5706 = vmatprep.mubr.bf16.mxu0 0
  %5707 = vmatmul.mubr.bf16.gmra.mrb[0].mxu0 %v4901
  %v5708 = vpop.f32.mrb[0].mxu0
  %v5709 = vadd.f32 %v5428, %v5708
  %v5710 = vpop.f32.mrb[0].mxu0
  %v5711 = vpop.f32.mrb[0].mxu0
  %v5712 = vadd.f32 %v5431, %v5711
  %v5713 = vpop.f32.mrb[0].mxu0
  %5714 = vmatprep.mubr.bf16.mxu0 0
  %5715 = vmatmul.mubr.bf16.gmra.mrb[0].mxu0 %v4904
  %v5716 = vpop.f32.mrb[0].mxu0
  %v5717 = vadd.f32 %v5436, %v5716
  %v5718 = vpop.f32.mrb[0].mxu0
  %v5719 = vpop.f32.mrb[0].mxu0
  %v5720 = vadd.f32 %v5439, %v5719
  %v5721 = vpop.f32.mrb[0].mxu0
  %5722 = vmatprep.mubr.bf16.mxu0 0
  %5723 = vmatmul.mubr.bf16.gmra.mrb[0].mxu0 %v4907
  %v5724 = vpop.f32.mrb[0].mxu0
  %v5725 = vadd.f32 %v5444, %v5724
  %v5726 = vpop.f32.mrb[0].mxu0
  %v5727 = vpop.f32.mrb[0].mxu0
  %v5728 = vadd.f32 %v5447, %v5727
  %v5729 = vpop.f32.mrb[0].mxu0
  %5730 = vmatprep.mubr.bf16.mxu0 0
  %5731 = vmatmul.mubr.bf16.gmra.mrb[0].mxu0 %v4910
  %v5732 = vpop.f32.mrb[0].mxu0
  %v5733 = vadd.f32 %v5452, %v5732
  %v5734 = vpop.f32.mrb[0].mxu0
  %v5735 = vpop.f32.mrb[0].mxu0
  %v5736 = vadd.f32 %v5455, %v5735
  %v5737 = vpop.f32.mrb[0].mxu0
  %5738 = vmatprep.mubr.bf16.mxu0 0
  %5739 = vmatmul.mubr.bf16.gmra.mrb[0].mxu0 %v4913
  %v5740 = vpop.f32.mrb[0].mxu0
  %v5741 = vadd.f32 %v5460, %v5740
  %v5742 = vpop.f32.mrb[0].mxu0
  %v5743 = vpop.f32.mrb[0].mxu0
  %v5744 = vadd.f32 %v5463, %v5743
  %v5745 = vpop.f32.mrb[0].mxu0
  %5746 = vmatprep.mubr.bf16.mxu0 0
  %5747 = vmatmul.mubr.bf16.gmra.mrb[0].mxu0 %v4916
  %v5748 = vpop.f32.mrb[0].mxu0
  %v5749 = vadd.f32 %v5468, %v5748
  %v5750 = vpop.f32.mrb[0].mxu0
  %v5751 = vpop.f32.mrb[0].mxu0
  %v5752 = vadd.f32 %v5471, %v5751
  %v5753 = vpop.f32.mrb[0].mxu0
  %5754 = vmatprep.mubr.bf16.mxu0 0
  %5755 = vmatmul.mubr.bf16.gmra.mrb[0].mxu0 %v4919
  %v5756 = vpop.f32.mrb[0].mxu0
  %v5757 = vpop.f32.mrb[0].mxu0
  %v5758 = vpop.f32.mrb[0].mxu0
  %v5759 = vpop.f32.mrb[0].mxu0
  %5760 = vmatprep.mubr.bf16.mxu0 0
  %5761 = vmatmul.mubr.bf16.gmra.mrb[0].mxu0 %v4922
  %v5762 = vpop.f32.mrb[0].mxu0
  %v5763 = vpop.f32.mrb[0].mxu0
  %v5764 = vpop.f32.mrb[0].mxu0
  %v5765 = vpop.f32.mrb[0].mxu0
  %5766 = vdwg.mxu0
  %v5767 = vmax.f32 %v5521, 0.0
  %v5768 = vmax.f32 %v5524, 0.0
  %v5769 = vmax.f32 %v5529, 0.0
  %v5770 = vmax.f32 %v5532, 0.0
  %v5771 = vmax.f32 %v5537, 0.0
  %v5772 = vmax.f32 %v5540, 0.0
  %v5773 = vmax.f32 %v5545, 0.0
  %v5774 = vmax.f32 %v5548, 0.0
  %v5775 = vmax.f32 %v5553, 0.0
  %v5776 = vmax.f32 %v5556, 0.0
  %v5777 = vmax.f32 %v5561, 0.0
  %v5778 = vmax.f32 %v5564, 0.0
  %v5779 = vmax.f32 %v5569, 0.0
  %v5780 = vmax.f32 %v5572, 0.0
  %v5781 = vmax.f32 %v5577, 0.0
  %v5782 = vmax.f32 %v5580, 0.0
  %v5783 = vmax.f32 %v5585, 0.0
  %v5784 = vmax.f32 %v5588, 0.0
  %v5785 = vmax.f32 %v5593, 0.0
  %v5786 = vmax.f32 %v5596, 0.0
  %v5787 = vmax.f32 %v5601, 0.0
  %v5788 = vmax.f32 %v5604, 0.0
  %v5789 = vmax.f32 %v5609, 0.0
  %v5790 = vmax.f32 %v5612, 0.0
  %v5791 = vmax.f32 %v5617, 0.0
  %v5792 = vmax.f32 %v5620, 0.0
  %v5793 = vmax.f32 %v5625, 0.0
  %v5794 = vmax.f32 %v5628, 0.0
  %v5795 = vmax.f32 %v5645, 0.0
  %v5796 = vmax.f32 %v5648, 0.0
  %v5797 = vmax.f32 %v5653, 0.0
  %v5798 = vmax.f32 %v5656, 0.0
  %v5799 = vmax.f32 %v5661, 0.0
  %v5800 = vmax.f32 %v5664, 0.0
  %v5801 = vmax.f32 %v5669, 0.0
  %v5802 = vmax.f32 %v5672, 0.0
  %v5803 = vmax.f32 %v5677, 0.0
  %v5804 = vmax.f32 %v5680, 0.0
  %v5805 = vmax.f32 %v5685, 0.0
  %v5806 = vmax.f32 %v5688, 0.0
  %v5807 = vmax.f32 %v5693, 0.0
  %v5808 = vmax.f32 %v5696, 0.0
  %v5809 = vmax.f32 %v5701, 0.0
  %v5810 = vmax.f32 %v5704, 0.0
  %v5811 = vmax.f32 %v5709, 0.0
  %v5812 = vmax.f32 %v5712, 0.0
  %v5813 = vmax.f32 %v5717, 0.0
  %v5814 = vmax.f32 %v5720, 0.0
  %v5815 = vmax.f32 %v5725, 0.0
  %v5816 = vmax.f32 %v5728, 0.0
  %v5817 = vmax.f32 %v5733, 0.0
  %v5818 = vmax.f32 %v5736, 0.0
  %v5819 = vmax.f32 %v5741, 0.0
  %v5820 = vmax.f32 %v5744, 0.0
  %v5821 = vmax.f32 %v5749, 0.0
  %v5822 = vmax.f32 %v5752, 0.0
  %v5879 = vcombine.high %v5767, %v5767
  %v5881 = vunpack.c.l.s4 1983009808
  %v5882 = vunpack.c.0.s8 %v5881
  %v5883 = vlaneseq
  %v5884 = vshrl.u32 %v5883, 7
  %v5885 = vsub.s32 %v5882, %v5884
  %v5886 = vrot.slane %v5767, %v5885
  %v5888 = vunpack.c.l.s4 1983009808
  %v5889 = vunpack.c.0.s8 %v5888
  %v5890 = vlaneseq
  %v5891 = vshrl.u32 %v5890, 7
  %v5892 = vsub.s32 %v5889, %v5891
  %v5893 = vrot.slane %v5879, %v5892
  %v5894 = vcombine.high %v5886, %v5886
  %v5895 = vcombine.high %v5893, %v5893
  %v5896 = vcombine.high %v5768, %v5768
  %v5898 = vunpack.c.l.s4 1983009808
  %v5899 = vunpack.c.0.s8 %v5898
  %v5900 = vlaneseq
  %v5901 = vshrl.u32 %v5900, 7
  %v5902 = vsub.s32 %v5899, %v5901
  %v5903 = vrot.slane %v5768, %v5902
  %v5905 = vunpack.c.l.s4 1983009808
  %v5906 = vunpack.c.0.s8 %v5905
  %v5907 = vlaneseq
  %v5908 = vshrl.u32 %v5907, 7
  %v5909 = vsub.s32 %v5906, %v5908
  %v5910 = vrot.slane %v5896, %v5909
  %v5911 = vcombine.high %v5903, %v5903
  %v5912 = vcombine.high %v5769, %v5769
  %v5914 = vunpack.c.l.s4 1983009808
  %v5915 = vunpack.c.0.s8 %v5914
  %v5916 = vlaneseq
  %v5917 = vshrl.u32 %v5916, 7
  %v5918 = vsub.s32 %v5915, %v5917
  %v5919 = vrot.slane %v5769, %v5918
  %v5921 = vunpack.c.l.s4 1983009808
  %v5922 = vunpack.c.0.s8 %v5921
  %v5923 = vlaneseq
  %v5924 = vshrl.u32 %v5923, 7
  %v5925 = vsub.s32 %v5922, %v5924
  %v5926 = vrot.slane %v5912, %v5925
  %v5927 = vcombine.high %v5919, %v5919
  %v5928 = vcombine.high %v5926, %v5926
  %v5929 = vcombine.high %v5770, %v5770
  %v5931 = vunpack.c.l.s4 1983009808
  %v5932 = vunpack.c.0.s8 %v5931
  %v5933 = vlaneseq
  %v5934 = vshrl.u32 %v5933, 7
  %v5935 = vsub.s32 %v5932, %v5934
  %v5936 = vrot.slane %v5770, %v5935
  %v5938 = vunpack.c.l.s4 1983009808
  %v5939 = vunpack.c.0.s8 %v5938
  %v5940 = vlaneseq
  %v5941 = vshrl.u32 %v5940, 7
  %v5942 = vsub.s32 %v5939, %v5941
  %v5943 = vrot.slane %v5929, %v5942
  %v5944 = vcombine.high %v5936, %v5936
  %v5945 = vcombine.high %v5771, %v5771
  %v5947 = vunpack.c.l.s4 1983009808
  %v5948 = vunpack.c.0.s8 %v5947
  %v5949 = vlaneseq
  %v5950 = vshrl.u32 %v5949, 7
  %v5951 = vsub.s32 %v5948, %v5950
  %v5952 = vrot.slane %v5771, %v5951
  %v5954 = vunpack.c.l.s4 1983009808
  %v5955 = vunpack.c.0.s8 %v5954
  %v5956 = vlaneseq
  %v5957 = vshrl.u32 %v5956, 7
  %v5958 = vsub.s32 %v5955, %v5957
  %v5959 = vrot.slane %v5945, %v5958
  %v5960 = vcombine.high %v5952, %v5952
  %v5961 = vcombine.high %v5959, %v5959
  %v5962 = vcombine.high %v5772, %v5772
  %v5964 = vunpack.c.l.s4 1983009808
  %v5965 = vunpack.c.0.s8 %v5964
  %v5966 = vlaneseq
  %v5967 = vshrl.u32 %v5966, 7
  %v5968 = vsub.s32 %v5965, %v5967
  %v5969 = vrot.slane %v5772, %v5968
  %v5971 = vunpack.c.l.s4 1983009808
  %v5972 = vunpack.c.0.s8 %v5971
  %v5973 = vlaneseq
  %v5974 = vshrl.u32 %v5973, 7
  %v5975 = vsub.s32 %v5972, %v5974
  %v5976 = vrot.slane %v5962, %v5975
  %v5977 = vcombine.high %v5969, %v5969
  %v5978 = vcombine.high %v5773, %v5773
  %v5980 = vunpack.c.l.s4 1983009808
  %v5981 = vunpack.c.0.s8 %v5980
  %v5982 = vlaneseq
  %v5983 = vshrl.u32 %v5982, 7
  %v5984 = vsub.s32 %v5981, %v5983
  %v5985 = vrot.slane %v5773, %v5984
  %v5987 = vunpack.c.l.s4 1983009808
  %v5988 = vunpack.c.0.s8 %v5987
  %v5989 = vlaneseq
  %v5990 = vshrl.u32 %v5989, 7
  %v5991 = vsub.s32 %v5988, %v5990
  %v5992 = vrot.slane %v5978, %v5991
  %v5993 = vcombine.high %v5985, %v5985
  %v5994 = vcombine.high %v5992, %v5992
  %v5995 = vcombine.high %v5774, %v5774
  %v5997 = vunpack.c.l.s4 1983009808
  %v5998 = vunpack.c.0.s8 %v5997
  %v5999 = vlaneseq
  %v6000 = vshrl.u32 %v5999, 7
  %v6001 = vsub.s32 %v5998, %v6000
  %v6002 = vrot.slane %v5774, %v6001
  %v6004 = vunpack.c.l.s4 1983009808
  %v6005 = vunpack.c.0.s8 %v6004
  %v6006 = vlaneseq
  %v6007 = vshrl.u32 %v6006, 7
  %v6008 = vsub.s32 %v6005, %v6007
  %v6009 = vrot.slane %v5995, %v6008
  %v6010 = vcombine.high %v6002, %v6002
  %v6011 = vcombine.high %v5775, %v5775
  %v6013 = vunpack.c.l.s4 1983009808
  %v6014 = vunpack.c.0.s8 %v6013
  %v6015 = vlaneseq
  %v6016 = vshrl.u32 %v6015, 7
  %v6017 = vsub.s32 %v6014, %v6016
  %v6018 = vrot.slane %v5775, %v6017
  %v6020 = vunpack.c.l.s4 1983009808
  %v6021 = vunpack.c.0.s8 %v6020
  %v6022 = vlaneseq
  %v6023 = vshrl.u32 %v6022, 7
  %v6024 = vsub.s32 %v6021, %v6023
  %v6025 = vrot.slane %v6011, %v6024
  %v6026 = vcombine.high %v6018, %v6018
  %v6027 = vcombine.high %v6025, %v6025
  %v6028 = vcombine.high %v5776, %v5776
  %v6030 = vunpack.c.l.s4 1983009808
  %v6031 = vunpack.c.0.s8 %v6030
  %v6032 = vlaneseq
  %v6033 = vshrl.u32 %v6032, 7
  %v6034 = vsub.s32 %v6031, %v6033
  %v6035 = vrot.slane %v5776, %v6034
  %v6037 = vunpack.c.l.s4 1983009808
  %v6038 = vunpack.c.0.s8 %v6037
  %v6039 = vlaneseq
  %v6040 = vshrl.u32 %v6039, 7
  %v6041 = vsub.s32 %v6038, %v6040
  %v6042 = vrot.slane %v6028, %v6041
  %v6043 = vcombine.high %v6035, %v6035
  %v6044 = vcombine.high %v5777, %v5777
  %v6046 = vunpack.c.l.s4 1983009808
  %v6047 = vunpack.c.0.s8 %v6046
  %v6048 = vlaneseq
  %v6049 = vshrl.u32 %v6048, 7
  %v6050 = vsub.s32 %v6047, %v6049
  %v6051 = vrot.slane %v5777, %v6050
  %v6053 = vunpack.c.l.s4 1983009808
  %v6054 = vunpack.c.0.s8 %v6053
  %v6055 = vlaneseq
  %v6056 = vshrl.u32 %v6055, 7
  %v6057 = vsub.s32 %v6054, %v6056
  %v6058 = vrot.slane %v6044, %v6057
  %v6059 = vcombine.high %v6051, %v6051
  %v6060 = vcombine.high %v6058, %v6058
  %v6061 = vcombine.high %v5778, %v5778
  %v6063 = vunpack.c.l.s4 1983009808
  %v6064 = vunpack.c.0.s8 %v6063
  %v6065 = vlaneseq
  %v6066 = vshrl.u32 %v6065, 7
  %v6067 = vsub.s32 %v6064, %v6066
  %v6068 = vrot.slane %v5778, %v6067
  %v6070 = vunpack.c.l.s4 1983009808
  %v6071 = vunpack.c.0.s8 %v6070
  %v6072 = vlaneseq
  %v6073 = vshrl.u32 %v6072, 7
  %v6074 = vsub.s32 %v6071, %v6073
  %v6075 = vrot.slane %v6061, %v6074
  %v6076 = vcombine.high %v6068, %v6068
  %v6077 = vcombine.high %v5779, %v5779
  %v6079 = vunpack.c.l.s4 1983009808
  %v6080 = vunpack.c.0.s8 %v6079
  %v6081 = vlaneseq
  %v6082 = vshrl.u32 %v6081, 7
  %v6083 = vsub.s32 %v6080, %v6082
  %v6084 = vrot.slane %v5779, %v6083
  %v6086 = vunpack.c.l.s4 1983009808
  %v6087 = vunpack.c.0.s8 %v6086
  %v6088 = vlaneseq
  %v6089 = vshrl.u32 %v6088, 7
  %v6090 = vsub.s32 %v6087, %v6089
  %v6091 = vrot.slane %v6077, %v6090
  %v6092 = vcombine.high %v6084, %v6084
  %v6093 = vcombine.high %v6091, %v6091
  %v6094 = vcombine.high %v5780, %v5780
  %v6096 = vunpack.c.l.s4 1983009808
  %v6097 = vunpack.c.0.s8 %v6096
  %v6098 = vlaneseq
  %v6099 = vshrl.u32 %v6098, 7
  %v6100 = vsub.s32 %v6097, %v6099
  %v6101 = vrot.slane %v5780, %v6100
  %v6103 = vunpack.c.l.s4 1983009808
  %v6104 = vunpack.c.0.s8 %v6103
  %v6105 = vlaneseq
  %v6106 = vshrl.u32 %v6105, 7
  %v6107 = vsub.s32 %v6104, %v6106
  %v6108 = vrot.slane %v6094, %v6107
  %v6109 = vcombine.high %v6101, %v6101
  %v6110 = vcombine.high %v5781, %v5781
  %v6112 = vunpack.c.l.s4 1983009808
  %v6113 = vunpack.c.0.s8 %v6112
  %v6114 = vlaneseq
  %v6115 = vshrl.u32 %v6114, 7
  %v6116 = vsub.s32 %v6113, %v6115
  %v6117 = vrot.slane %v5781, %v6116
  %v6119 = vunpack.c.l.s4 1983009808
  %v6120 = vunpack.c.0.s8 %v6119
  %v6121 = vlaneseq
  %v6122 = vshrl.u32 %v6121, 7
  %v6123 = vsub.s32 %v6120, %v6122
  %v6124 = vrot.slane %v6110, %v6123
  %v6125 = vcombine.high %v6117, %v6117
  %v6126 = vcombine.high %v6124, %v6124
  %v6127 = vcombine.high %v5782, %v5782
  %v6129 = vunpack.c.l.s4 1983009808
  %v6130 = vunpack.c.0.s8 %v6129
  %v6131 = vlaneseq
  %v6132 = vshrl.u32 %v6131, 7
  %v6133 = vsub.s32 %v6130, %v6132
  %v6134 = vrot.slane %v5782, %v6133
  %v6136 = vunpack.c.l.s4 1983009808
  %v6137 = vunpack.c.0.s8 %v6136
  %v6138 = vlaneseq
  %v6139 = vshrl.u32 %v6138, 7
  %v6140 = vsub.s32 %v6137, %v6139
  %v6141 = vrot.slane %v6127, %v6140
  %v6142 = vcombine.high %v6134, %v6134
  %v6143 = vcombine.high %v5783, %v5783
  %v6145 = vunpack.c.l.s4 1983009808
  %v6146 = vunpack.c.0.s8 %v6145
  %v6147 = vlaneseq
  %v6148 = vshrl.u32 %v6147, 7
  %v6149 = vsub.s32 %v6146, %v6148
  %v6150 = vrot.slane %v5783, %v6149
  %v6152 = vunpack.c.l.s4 1983009808
  %v6153 = vunpack.c.0.s8 %v6152
  %v6154 = vlaneseq
  %v6155 = vshrl.u32 %v6154, 7
  %v6156 = vsub.s32 %v6153, %v6155
  %v6157 = vrot.slane %v6143, %v6156
  %v6158 = vcombine.high %v6150, %v6150
  %v6159 = vcombine.high %v6157, %v6157
  %v6160 = vcombine.high %v5784, %v5784
  %v6162 = vunpack.c.l.s4 1983009808
  %v6163 = vunpack.c.0.s8 %v6162
  %v6164 = vlaneseq
  %v6165 = vshrl.u32 %v6164, 7
  %v6166 = vsub.s32 %v6163, %v6165
  %v6167 = vrot.slane %v5784, %v6166
  %v6169 = vunpack.c.l.s4 1983009808
  %v6170 = vunpack.c.0.s8 %v6169
  %v6171 = vlaneseq
  %v6172 = vshrl.u32 %v6171, 7
  %v6173 = vsub.s32 %v6170, %v6172
  %v6174 = vrot.slane %v6160, %v6173
  %v6175 = vcombine.high %v6167, %v6167
  %v6176 = vcombine.high %v5785, %v5785
  %v6178 = vunpack.c.l.s4 1983009808
  %v6179 = vunpack.c.0.s8 %v6178
  %v6180 = vlaneseq
  %v6181 = vshrl.u32 %v6180, 7
  %v6182 = vsub.s32 %v6179, %v6181
  %v6183 = vrot.slane %v5785, %v6182
  %v6185 = vunpack.c.l.s4 1983009808
  %v6186 = vunpack.c.0.s8 %v6185
  %v6187 = vlaneseq
  %v6188 = vshrl.u32 %v6187, 7
  %v6189 = vsub.s32 %v6186, %v6188
  %v6190 = vrot.slane %v6176, %v6189
  %v6191 = vcombine.high %v6183, %v6183
  %v6192 = vcombine.high %v6190, %v6190
  %v6193 = vcombine.high %v5786, %v5786
  %v6195 = vunpack.c.l.s4 1983009808
  %v6196 = vunpack.c.0.s8 %v6195
  %v6197 = vlaneseq
  %v6198 = vshrl.u32 %v6197, 7
  %v6199 = vsub.s32 %v6196, %v6198
  %v6200 = vrot.slane %v5786, %v6199
  %v6202 = vunpack.c.l.s4 1983009808
  %v6203 = vunpack.c.0.s8 %v6202
  %v6204 = vlaneseq
  %v6205 = vshrl.u32 %v6204, 7
  %v6206 = vsub.s32 %v6203, %v6205
  %v6207 = vrot.slane %v6193, %v6206
  %v6208 = vcombine.high %v6200, %v6200
  %v6209 = vcombine.high %v5787, %v5787
  %v6211 = vunpack.c.l.s4 1983009808
  %v6212 = vunpack.c.0.s8 %v6211
  %v6213 = vlaneseq
  %v6214 = vshrl.u32 %v6213, 7
  %v6215 = vsub.s32 %v6212, %v6214
  %v6216 = vrot.slane %v5787, %v6215
  %v6218 = vunpack.c.l.s4 1983009808
  %v6219 = vunpack.c.0.s8 %v6218
  %v6220 = vlaneseq
  %v6221 = vshrl.u32 %v6220, 7
  %v6222 = vsub.s32 %v6219, %v6221
  %v6223 = vrot.slane %v6209, %v6222
  %v6224 = vcombine.high %v6216, %v6216
  %v6225 = vcombine.high %v6223, %v6223
  %v6226 = vcombine.high %v5788, %v5788
  %v6228 = vunpack.c.l.s4 1983009808
  %v6229 = vunpack.c.0.s8 %v6228
  %v6230 = vlaneseq
  %v6231 = vshrl.u32 %v6230, 7
  %v6232 = vsub.s32 %v6229, %v6231
  %v6233 = vrot.slane %v5788, %v6232
  %v6235 = vunpack.c.l.s4 1983009808
  %v6236 = vunpack.c.0.s8 %v6235
  %v6237 = vlaneseq
  %v6238 = vshrl.u32 %v6237, 7
  %v6239 = vsub.s32 %v6236, %v6238
  %v6240 = vrot.slane %v6226, %v6239
  %v6241 = vcombine.high %v6233, %v6233
  %v6242 = vcombine.high %v5789, %v5789
  %v6244 = vunpack.c.l.s4 1983009808
  %v6245 = vunpack.c.0.s8 %v6244
  %v6246 = vlaneseq
  %v6247 = vshrl.u32 %v6246, 7
  %v6248 = vsub.s32 %v6245, %v6247
  %v6249 = vrot.slane %v5789, %v6248
  %v6251 = vunpack.c.l.s4 1983009808
  %v6252 = vunpack.c.0.s8 %v6251
  %v6253 = vlaneseq
  %v6254 = vshrl.u32 %v6253, 7
  %v6255 = vsub.s32 %v6252, %v6254
  %v6256 = vrot.slane %v6242, %v6255
  %v6257 = vcombine.high %v6249, %v6249
  %v6258 = vcombine.high %v6256, %v6256
  %v6259 = vcombine.high %v5790, %v5790
  %v6261 = vunpack.c.l.s4 1983009808
  %v6262 = vunpack.c.0.s8 %v6261
  %v6263 = vlaneseq
  %v6264 = vshrl.u32 %v6263, 7
  %v6265 = vsub.s32 %v6262, %v6264
  %v6266 = vrot.slane %v5790, %v6265
  %v6268 = vunpack.c.l.s4 1983009808
  %v6269 = vunpack.c.0.s8 %v6268
  %v6270 = vlaneseq
  %v6271 = vshrl.u32 %v6270, 7
  %v6272 = vsub.s32 %v6269, %v6271
  %v6273 = vrot.slane %v6259, %v6272
  %v6274 = vcombine.high %v6266, %v6266
  %v6275 = vcombine.high %v5791, %v5791
  %v6277 = vunpack.c.l.s4 1983009808
  %v6278 = vunpack.c.0.s8 %v6277
  %v6279 = vlaneseq
  %v6280 = vshrl.u32 %v6279, 7
  %v6281 = vsub.s32 %v6278, %v6280
  %v6282 = vrot.slane %v5791, %v6281
  %v6284 = vunpack.c.l.s4 1983009808
  %v6285 = vunpack.c.0.s8 %v6284
  %v6286 = vlaneseq
  %v6287 = vshrl.u32 %v6286, 7
  %v6288 = vsub.s32 %v6285, %v6287
  %v6289 = vrot.slane %v6275, %v6288
  %v6290 = vcombine.high %v6282, %v6282
  %v6291 = vcombine.high %v6289, %v6289
  %v6292 = vcombine.high %v5792, %v5792
  %v6294 = vunpack.c.l.s4 1983009808
  %v6295 = vunpack.c.0.s8 %v6294
  %v6296 = vlaneseq
  %v6297 = vshrl.u32 %v6296, 7
  %v6298 = vsub.s32 %v6295, %v6297
  %v6299 = vrot.slane %v5792, %v6298
  %v6301 = vunpack.c.l.s4 1983009808
  %v6302 = vunpack.c.0.s8 %v6301
  %v6303 = vlaneseq
  %v6304 = vshrl.u32 %v6303, 7
  %v6305 = vsub.s32 %v6302, %v6304
  %v6306 = vrot.slane %v6292, %v6305
  %v6307 = vcombine.high %v6299, %v6299
  %v6308 = vcombine.high %v5793, %v5793
  %v6310 = vunpack.c.l.s4 1983009808
  %v6311 = vunpack.c.0.s8 %v6310
  %v6312 = vlaneseq
  %v6313 = vshrl.u32 %v6312, 7
  %v6314 = vsub.s32 %v6311, %v6313
  %v6315 = vrot.slane %v5793, %v6314
  %v6317 = vunpack.c.l.s4 1983009808
  %v6318 = vunpack.c.0.s8 %v6317
  %v6319 = vlaneseq
  %v6320 = vshrl.u32 %v6319, 7
  %v6321 = vsub.s32 %v6318, %v6320
  %v6322 = vrot.slane %v6308, %v6321
  %v6323 = vcombine.high %v6315, %v6315
  %v6324 = vcombine.high %v6322, %v6322
  %v6325 = vcombine.high %v5794, %v5794
  %v6327 = vunpack.c.l.s4 1983009808
  %v6328 = vunpack.c.0.s8 %v6327
  %v6329 = vlaneseq
  %v6330 = vshrl.u32 %v6329, 7
  %v6331 = vsub.s32 %v6328, %v6330
  %v6332 = vrot.slane %v5794, %v6331
  %v6334 = vunpack.c.l.s4 1983009808
  %v6335 = vunpack.c.0.s8 %v6334
  %v6336 = vlaneseq
  %v6337 = vshrl.u32 %v6336, 7
  %v6338 = vsub.s32 %v6335, %v6337
  %v6339 = vrot.slane %v6325, %v6338
  %v6340 = vcombine.high %v6332, %v6332
  %v6341 = vcombine.high %v5795, %v5795
  %v6343 = vunpack.c.l.s4 1983009808
  %v6344 = vunpack.c.0.s8 %v6343
  %v6345 = vlaneseq
  %v6346 = vshrl.u32 %v6345, 7
  %v6347 = vsub.s32 %v6344, %v6346
  %v6348 = vrot.slane %v5795, %v6347
  %v6350 = vunpack.c.l.s4 1983009808
  %v6351 = vunpack.c.0.s8 %v6350
  %v6352 = vlaneseq
  %v6353 = vshrl.u32 %v6352, 7
  %v6354 = vsub.s32 %v6351, %v6353
  %v6355 = vrot.slane %v6341, %v6354
  %v6356 = vcombine.high %v6348, %v6348
  %v6357 = vcombine.high %v6355, %v6355
  %v6358 = vcombine.high %v5796, %v5796
  %v6360 = vunpack.c.l.s4 1983009808
  %v6361 = vunpack.c.0.s8 %v6360
  %v6362 = vlaneseq
  %v6363 = vshrl.u32 %v6362, 7
  %v6364 = vsub.s32 %v6361, %v6363
  %v6365 = vrot.slane %v5796, %v6364
  %v6367 = vunpack.c.l.s4 1983009808
  %v6368 = vunpack.c.0.s8 %v6367
  %v6369 = vlaneseq
  %v6370 = vshrl.u32 %v6369, 7
  %v6371 = vsub.s32 %v6368, %v6370
  %v6372 = vrot.slane %v6358, %v6371
  %v6373 = vcombine.high %v6365, %v6365
  %v6374 = vcombine.high %v5797, %v5797
  %v6376 = vunpack.c.l.s4 1983009808
  %v6377 = vunpack.c.0.s8 %v6376
  %v6378 = vlaneseq
  %v6379 = vshrl.u32 %v6378, 7
  %v6380 = vsub.s32 %v6377, %v6379
  %v6381 = vrot.slane %v5797, %v6380
  %v6383 = vunpack.c.l.s4 1983009808
  %v6384 = vunpack.c.0.s8 %v6383
  %v6385 = vlaneseq
  %v6386 = vshrl.u32 %v6385, 7
  %v6387 = vsub.s32 %v6384, %v6386
  %v6388 = vrot.slane %v6374, %v6387
  %v6389 = vcombine.high %v6381, %v6381
  %v6390 = vcombine.high %v6388, %v6388
  %v6391 = vcombine.high %v5798, %v5798
  %v6393 = vunpack.c.l.s4 1983009808
  %v6394 = vunpack.c.0.s8 %v6393
  %v6395 = vlaneseq
  %v6396 = vshrl.u32 %v6395, 7
  %v6397 = vsub.s32 %v6394, %v6396
  %v6398 = vrot.slane %v5798, %v6397
  %v6400 = vunpack.c.l.s4 1983009808
  %v6401 = vunpack.c.0.s8 %v6400
  %v6402 = vlaneseq
  %v6403 = vshrl.u32 %v6402, 7
  %v6404 = vsub.s32 %v6401, %v6403
  %v6405 = vrot.slane %v6391, %v6404
  %v6406 = vcombine.high %v6398, %v6398
  %v6407 = vcombine.high %v5799, %v5799
  %v6409 = vunpack.c.l.s4 1983009808
  %v6410 = vunpack.c.0.s8 %v6409
  %v6411 = vlaneseq
  %v6412 = vshrl.u32 %v6411, 7
  %v6413 = vsub.s32 %v6410, %v6412
  %v6414 = vrot.slane %v5799, %v6413
  %v6416 = vunpack.c.l.s4 1983009808
  %v6417 = vunpack.c.0.s8 %v6416
  %v6418 = vlaneseq
  %v6419 = vshrl.u32 %v6418, 7
  %v6420 = vsub.s32 %v6417, %v6419
  %v6421 = vrot.slane %v6407, %v6420
  %v6422 = vcombine.high %v6414, %v6414
  %v6423 = vcombine.high %v6421, %v6421
  %v6424 = vcombine.high %v5800, %v5800
  %v6426 = vunpack.c.l.s4 1983009808
  %v6427 = vunpack.c.0.s8 %v6426
  %v6428 = vlaneseq
  %v6429 = vshrl.u32 %v6428, 7
  %v6430 = vsub.s32 %v6427, %v6429
  %v6431 = vrot.slane %v5800, %v6430
  %v6433 = vunpack.c.l.s4 1983009808
  %v6434 = vunpack.c.0.s8 %v6433
  %v6435 = vlaneseq
  %v6436 = vshrl.u32 %v6435, 7
  %v6437 = vsub.s32 %v6434, %v6436
  %v6438 = vrot.slane %v6424, %v6437
  %v6439 = vcombine.high %v6431, %v6431
  %v6440 = vcombine.high %v5801, %v5801
  %v6442 = vunpack.c.l.s4 1983009808
  %v6443 = vunpack.c.0.s8 %v6442
  %v6444 = vlaneseq
  %v6445 = vshrl.u32 %v6444, 7
  %v6446 = vsub.s32 %v6443, %v6445
  %v6447 = vrot.slane %v5801, %v6446
  %v6449 = vunpack.c.l.s4 1983009808
  %v6450 = vunpack.c.0.s8 %v6449
  %v6451 = vlaneseq
  %v6452 = vshrl.u32 %v6451, 7
  %v6453 = vsub.s32 %v6450, %v6452
  %v6454 = vrot.slane %v6440, %v6453
  %v6455 = vcombine.high %v6447, %v6447
  %v6456 = vcombine.high %v6454, %v6454
  %v6457 = vcombine.high %v5802, %v5802
  %v6459 = vunpack.c.l.s4 1983009808
  %v6460 = vunpack.c.0.s8 %v6459
  %v6461 = vlaneseq
  %v6462 = vshrl.u32 %v6461, 7
  %v6463 = vsub.s32 %v6460, %v6462
  %v6464 = vrot.slane %v5802, %v6463
  %v6466 = vunpack.c.l.s4 1983009808
  %v6467 = vunpack.c.0.s8 %v6466
  %v6468 = vlaneseq
  %v6469 = vshrl.u32 %v6468, 7
  %v6470 = vsub.s32 %v6467, %v6469
  %v6471 = vrot.slane %v6457, %v6470
  %v6472 = vcombine.high %v6464, %v6464
  %v6473 = vcombine.high %v5803, %v5803
  %v6475 = vunpack.c.l.s4 1983009808
  %v6476 = vunpack.c.0.s8 %v6475
  %v6477 = vlaneseq
  %v6478 = vshrl.u32 %v6477, 7
  %v6479 = vsub.s32 %v6476, %v6478
  %v6480 = vrot.slane %v5803, %v6479
  %v6482 = vunpack.c.l.s4 1983009808
  %v6483 = vunpack.c.0.s8 %v6482
  %v6484 = vlaneseq
  %v6485 = vshrl.u32 %v6484, 7
  %v6486 = vsub.s32 %v6483, %v6485
  %v6487 = vrot.slane %v6473, %v6486
  %v6488 = vcombine.high %v6480, %v6480
  %v6489 = vcombine.high %v6487, %v6487
  %v6490 = vcombine.high %v5804, %v5804
  %v6492 = vunpack.c.l.s4 1983009808
  %v6493 = vunpack.c.0.s8 %v6492
  %v6494 = vlaneseq
  %v6495 = vshrl.u32 %v6494, 7
  %v6496 = vsub.s32 %v6493, %v6495
  %v6497 = vrot.slane %v5804, %v6496
  %v6499 = vunpack.c.l.s4 1983009808
  %v6500 = vunpack.c.0.s8 %v6499
  %v6501 = vlaneseq
  %v6502 = vshrl.u32 %v6501, 7
  %v6503 = vsub.s32 %v6500, %v6502
  %v6504 = vrot.slane %v6490, %v6503
  %v6505 = vcombine.high %v6497, %v6497
  %v6506 = vcombine.high %v5805, %v5805
  %v6508 = vunpack.c.l.s4 1983009808
  %v6509 = vunpack.c.0.s8 %v6508
  %v6510 = vlaneseq
  %v6511 = vshrl.u32 %v6510, 7
  %v6512 = vsub.s32 %v6509, %v6511
  %v6513 = vrot.slane %v5805, %v6512
  %v6515 = vunpack.c.l.s4 1983009808
  %v6516 = vunpack.c.0.s8 %v6515
  %v6517 = vlaneseq
  %v6518 = vshrl.u32 %v6517, 7
  %v6519 = vsub.s32 %v6516, %v6518
  %v6520 = vrot.slane %v6506, %v6519
  %v6521 = vcombine.high %v6513, %v6513
  %v6522 = vcombine.high %v6520, %v6520
  %v6523 = vcombine.high %v5806, %v5806
  %v6525 = vunpack.c.l.s4 1983009808
  %v6526 = vunpack.c.0.s8 %v6525
  %v6527 = vlaneseq
  %v6528 = vshrl.u32 %v6527, 7
  %v6529 = vsub.s32 %v6526, %v6528
  %v6530 = vrot.slane %v5806, %v6529
  %v6532 = vunpack.c.l.s4 1983009808
  %v6533 = vunpack.c.0.s8 %v6532
  %v6534 = vlaneseq
  %v6535 = vshrl.u32 %v6534, 7
  %v6536 = vsub.s32 %v6533, %v6535
  %v6537 = vrot.slane %v6523, %v6536
  %v6538 = vcombine.high %v6530, %v6530
  %v6539 = vcombine.high %v5807, %v5807
  %v6541 = vunpack.c.l.s4 1983009808
  %v6542 = vunpack.c.0.s8 %v6541
  %v6543 = vlaneseq
  %v6544 = vshrl.u32 %v6543, 7
  %v6545 = vsub.s32 %v6542, %v6544
  %v6546 = vrot.slane %v5807, %v6545
  %v6548 = vunpack.c.l.s4 1983009808
  %v6549 = vunpack.c.0.s8 %v6548
  %v6550 = vlaneseq
  %v6551 = vshrl.u32 %v6550, 7
  %v6552 = vsub.s32 %v6549, %v6551
  %v6553 = vrot.slane %v6539, %v6552
  %v6554 = vcombine.high %v6546, %v6546
  %v6555 = vcombine.high %v6553, %v6553
  %v6556 = vcombine.high %v5808, %v5808
  %v6558 = vunpack.c.l.s4 1983009808
  %v6559 = vunpack.c.0.s8 %v6558
  %v6560 = vlaneseq
  %v6561 = vshrl.u32 %v6560, 7
  %v6562 = vsub.s32 %v6559, %v6561
  %v6563 = vrot.slane %v5808, %v6562
  %v6565 = vunpack.c.l.s4 1983009808
  %v6566 = vunpack.c.0.s8 %v6565
  %v6567 = vlaneseq
  %v6568 = vshrl.u32 %v6567, 7
  %v6569 = vsub.s32 %v6566, %v6568
  %v6570 = vrot.slane %v6556, %v6569
  %v6571 = vcombine.high %v6563, %v6563
  %v6572 = vcombine.high %v5809, %v5809
  %v6574 = vunpack.c.l.s4 1983009808
  %v6575 = vunpack.c.0.s8 %v6574
  %v6576 = vlaneseq
  %v6577 = vshrl.u32 %v6576, 7
  %v6578 = vsub.s32 %v6575, %v6577
  %v6579 = vrot.slane %v5809, %v6578
  %v6581 = vunpack.c.l.s4 1983009808
  %v6582 = vunpack.c.0.s8 %v6581
  %v6583 = vlaneseq
  %v6584 = vshrl.u32 %v6583, 7
  %v6585 = vsub.s32 %v6582, %v6584
  %v6586 = vrot.slane %v6572, %v6585
  %v6587 = vcombine.high %v6579, %v6579
  %v6588 = vcombine.high %v6586, %v6586
  %v6589 = vcombine.high %v5810, %v5810
  %v6591 = vunpack.c.l.s4 1983009808
  %v6592 = vunpack.c.0.s8 %v6591
  %v6593 = vlaneseq
  %v6594 = vshrl.u32 %v6593, 7
  %v6595 = vsub.s32 %v6592, %v6594
  %v6596 = vrot.slane %v5810, %v6595
  %v6598 = vunpack.c.l.s4 1983009808
  %v6599 = vunpack.c.0.s8 %v6598
  %v6600 = vlaneseq
  %v6601 = vshrl.u32 %v6600, 7
  %v6602 = vsub.s32 %v6599, %v6601
  %v6603 = vrot.slane %v6589, %v6602
  %v6604 = vcombine.high %v6596, %v6596
  %v6605 = vcombine.high %v5811, %v5811
  %v6607 = vunpack.c.l.s4 1983009808
  %v6608 = vunpack.c.0.s8 %v6607
  %v6609 = vlaneseq
  %v6610 = vshrl.u32 %v6609, 7
  %v6611 = vsub.s32 %v6608, %v6610
  %v6612 = vrot.slane %v5811, %v6611
  %v6614 = vunpack.c.l.s4 1983009808
  %v6615 = vunpack.c.0.s8 %v6614
  %v6616 = vlaneseq
  %v6617 = vshrl.u32 %v6616, 7
  %v6618 = vsub.s32 %v6615, %v6617
  %v6619 = vrot.slane %v6605, %v6618
  %v6620 = vcombine.high %v6612, %v6612
  %v6621 = vcombine.high %v6619, %v6619
  %v6622 = vcombine.high %v5812, %v5812
  %v6624 = vunpack.c.l.s4 1983009808
  %v6625 = vunpack.c.0.s8 %v6624
  %v6626 = vlaneseq
  %v6627 = vshrl.u32 %v6626, 7
  %v6628 = vsub.s32 %v6625, %v6627
  %v6629 = vrot.slane %v5812, %v6628
  %v6631 = vunpack.c.l.s4 1983009808
  %v6632 = vunpack.c.0.s8 %v6631
  %v6633 = vlaneseq
  %v6634 = vshrl.u32 %v6633, 7
  %v6635 = vsub.s32 %v6632, %v6634
  %v6636 = vrot.slane %v6622, %v6635
  %v6637 = vcombine.high %v6629, %v6629
  %v6638 = vcombine.high %v5813, %v5813
  %v6640 = vunpack.c.l.s4 1983009808
  %v6641 = vunpack.c.0.s8 %v6640
  %v6642 = vlaneseq
  %v6643 = vshrl.u32 %v6642, 7
  %v6644 = vsub.s32 %v6641, %v6643
  %v6645 = vrot.slane %v5813, %v6644
  %v6647 = vunpack.c.l.s4 1983009808
  %v6648 = vunpack.c.0.s8 %v6647
  %v6649 = vlaneseq
  %v6650 = vshrl.u32 %v6649, 7
  %v6651 = vsub.s32 %v6648, %v6650
  %v6652 = vrot.slane %v6638, %v6651
  %v6653 = vcombine.high %v6645, %v6645
  %v6654 = vcombine.high %v6652, %v6652
  %v6655 = vcombine.high %v5814, %v5814
  %v6657 = vunpack.c.l.s4 1983009808
  %v6658 = vunpack.c.0.s8 %v6657
  %v6659 = vlaneseq
  %v6660 = vshrl.u32 %v6659, 7
  %v6661 = vsub.s32 %v6658, %v6660
  %v6662 = vrot.slane %v5814, %v6661
  %v6664 = vunpack.c.l.s4 1983009808
  %v6665 = vunpack.c.0.s8 %v6664
  %v6666 = vlaneseq
  %v6667 = vshrl.u32 %v6666, 7
  %v6668 = vsub.s32 %v6665, %v6667
  %v6669 = vrot.slane %v6655, %v6668
  %v6670 = vcombine.high %v6662, %v6662
  %v6671 = vcombine.high %v5815, %v5815
  %v6673 = vunpack.c.l.s4 1983009808
  %v6674 = vunpack.c.0.s8 %v6673
  %v6675 = vlaneseq
  %v6676 = vshrl.u32 %v6675, 7
  %v6677 = vsub.s32 %v6674, %v6676
  %v6678 = vrot.slane %v5815, %v6677
  %v6680 = vunpack.c.l.s4 1983009808
  %v6681 = vunpack.c.0.s8 %v6680
  %v6682 = vlaneseq
  %v6683 = vshrl.u32 %v6682, 7
  %v6684 = vsub.s32 %v6681, %v6683
  %v6685 = vrot.slane %v6671, %v6684
  %v6686 = vcombine.high %v6678, %v6678
  %v6687 = vcombine.high %v6685, %v6685
  %v6688 = vcombine.high %v5816, %v5816
  %v6690 = vunpack.c.l.s4 1983009808
  %v6691 = vunpack.c.0.s8 %v6690
  %v6692 = vlaneseq
  %v6693 = vshrl.u32 %v6692, 7
  %v6694 = vsub.s32 %v6691, %v6693
  %v6695 = vrot.slane %v5816, %v6694
  %v6697 = vunpack.c.l.s4 1983009808
  %v6698 = vunpack.c.0.s8 %v6697
  %v6699 = vlaneseq
  %v6700 = vshrl.u32 %v6699, 7
  %v6701 = vsub.s32 %v6698, %v6700
  %v6702 = vrot.slane %v6688, %v6701
  %v6703 = vcombine.high %v6695, %v6695
  %v6704 = vcombine.high %v5817, %v5817
  %v6706 = vunpack.c.l.s4 1983009808
  %v6707 = vunpack.c.0.s8 %v6706
  %v6708 = vlaneseq
  %v6709 = vshrl.u32 %v6708, 7
  %v6710 = vsub.s32 %v6707, %v6709
  %v6711 = vrot.slane %v5817, %v6710
  %v6713 = vunpack.c.l.s4 1983009808
  %v6714 = vunpack.c.0.s8 %v6713
  %v6715 = vlaneseq
  %v6716 = vshrl.u32 %v6715, 7
  %v6717 = vsub.s32 %v6714, %v6716
  %v6718 = vrot.slane %v6704, %v6717
  %v6719 = vcombine.high %v6711, %v6711
  %v6720 = vcombine.high %v6718, %v6718
  %v6721 = vcombine.high %v5818, %v5818
  %v6723 = vunpack.c.l.s4 1983009808
  %v6724 = vunpack.c.0.s8 %v6723
  %v6725 = vlaneseq
  %v6726 = vshrl.u32 %v6725, 7
  %v6727 = vsub.s32 %v6724, %v6726
  %v6728 = vrot.slane %v5818, %v6727
  %v6730 = vunpack.c.l.s4 1983009808
  %v6731 = vunpack.c.0.s8 %v6730
  %v6732 = vlaneseq
  %v6733 = vshrl.u32 %v6732, 7
  %v6734 = vsub.s32 %v6731, %v6733
  %v6735 = vrot.slane %v6721, %v6734
  %v6736 = vcombine.high %v6728, %v6728
  %v6737 = vcombine.high %v5819, %v5819
  %v6739 = vunpack.c.l.s4 1983009808
  %v6740 = vunpack.c.0.s8 %v6739
  %v6741 = vlaneseq
  %v6742 = vshrl.u32 %v6741, 7
  %v6743 = vsub.s32 %v6740, %v6742
  %v6744 = vrot.slane %v5819, %v6743
  %v6746 = vunpack.c.l.s4 1983009808
  %v6747 = vunpack.c.0.s8 %v6746
  %v6748 = vlaneseq
  %v6749 = vshrl.u32 %v6748, 7
  %v6750 = vsub.s32 %v6747, %v6749
  %v6751 = vrot.slane %v6737, %v6750
  %v6752 = vcombine.high %v6744, %v6744
  %v6753 = vcombine.high %v6751, %v6751
  %v6754 = vcombine.high %v5820, %v5820
  %v6756 = vunpack.c.l.s4 1983009808
  %v6757 = vunpack.c.0.s8 %v6756
  %v6758 = vlaneseq
  %v6759 = vshrl.u32 %v6758, 7
  %v6760 = vsub.s32 %v6757, %v6759
  %v6761 = vrot.slane %v5820, %v6760
  %v6763 = vunpack.c.l.s4 1983009808
  %v6764 = vunpack.c.0.s8 %v6763
  %v6765 = vlaneseq
  %v6766 = vshrl.u32 %v6765, 7
  %v6767 = vsub.s32 %v6764, %v6766
  %v6768 = vrot.slane %v6754, %v6767
  %v6769 = vcombine.high %v6761, %v6761
  %v6770 = vcombine.high %v5821, %v5821
  %v6772 = vunpack.c.l.s4 1983009808
  %v6773 = vunpack.c.0.s8 %v6772
  %v6774 = vlaneseq
  %v6775 = vshrl.u32 %v6774, 7
  %v6776 = vsub.s32 %v6773, %v6775
  %v6777 = vrot.slane %v5821, %v6776
  %v6779 = vunpack.c.l.s4 1983009808
  %v6780 = vunpack.c.0.s8 %v6779
  %v6781 = vlaneseq
  %v6782 = vshrl.u32 %v6781, 7
  %v6783 = vsub.s32 %v6780, %v6782
  %v6784 = vrot.slane %v6770, %v6783
  %v6785 = vcombine.high %v6777, %v6777
  %v6786 = vcombine.high %v6784, %v6784
  %v6787 = vcombine.high %v5822, %v5822
  %v6789 = vunpack.c.l.s4 1983009808
  %v6790 = vunpack.c.0.s8 %v6789
  %v6791 = vlaneseq
  %v6792 = vshrl.u32 %v6791, 7
  %v6793 = vsub.s32 %v6790, %v6792
  %v6794 = vrot.slane %v5822, %v6793
  %v6796 = vunpack.c.l.s4 1983009808
  %v6797 = vunpack.c.0.s8 %v6796
  %v6798 = vlaneseq
  %v6799 = vshrl.u32 %v6798, 7
  %v6800 = vsub.s32 %v6797, %v6799
  %v6801 = vrot.slane %v6787, %v6800
  %v6802 = vcombine.high %v6794, %v6794
  %v6999 = vrot.slane %v5886, 7
  %v7000 = vrot.slane %v6999, 2
  %v7001 = vrot.slane %v5894, 7
  %v7002 = vrot.slane %v7001, 2
  %v7003 = vrot.slane %v5893, 7
  %v7004 = vrot.slane %v7003, 2
  %v7005 = vrot.slane %v5895, 7
  %v7006 = vrot.slane %v7005, 2
  %v7007 = vrot.slane %v5903, 7
  %v7008 = vrot.slane %v7007, 2
  %v7009 = vrot.slane %v5911, 7
  %v7010 = vrot.slane %v7009, 2
  %v7011 = vrot.slane %v5910, 7
  %v7012 = vrot.slane %v7011, 2
  %v7013 = vrot.slane %v5919, 7
  %v7014 = vrot.slane %v7013, 2
  %v7015 = vrot.slane %v5927, 7
  %v7016 = vrot.slane %v7015, 2
  %v7017 = vrot.slane %v5926, 7
  %v7018 = vrot.slane %v7017, 2
  %v7019 = vrot.slane %v5928, 7
  %v7020 = vrot.slane %v7019, 2
  %v7021 = vrot.slane %v5936, 7
  %v7022 = vrot.slane %v7021, 2
  %v7023 = vrot.slane %v5944, 7
  %v7024 = vrot.slane %v7023, 2
  %v7025 = vrot.slane %v5943, 7
  %v7026 = vrot.slane %v7025, 2
  %v7027 = vrot.slane %v5952, 7
  %v7028 = vrot.slane %v7027, 2
  %v7029 = vrot.slane %v5960, 7
  %v7030 = vrot.slane %v7029, 2
  %v7031 = vrot.slane %v5959, 7
  %v7032 = vrot.slane %v7031, 2
  %v7033 = vrot.slane %v5961, 7
  %v7034 = vrot.slane %v7033, 2
  %v7035 = vrot.slane %v5969, 7
  %v7036 = vrot.slane %v7035, 2
  %v7037 = vrot.slane %v5977, 7
  %v7038 = vrot.slane %v7037, 2
  %v7039 = vrot.slane %v5976, 7
  %v7040 = vrot.slane %v7039, 2
  %v7041 = vrot.slane %v5985, 7
  %v7042 = vrot.slane %v7041, 2
  %v7043 = vrot.slane %v5993, 7
  %v7044 = vrot.slane %v7043, 2
  %v7045 = vrot.slane %v5992, 7
  %v7046 = vrot.slane %v7045, 2
  %v7047 = vrot.slane %v5994, 7
  %v7048 = vrot.slane %v7047, 2
  %v7049 = vrot.slane %v6002, 7
  %v7050 = vrot.slane %v7049, 2
  %v7051 = vrot.slane %v6010, 7
  %v7052 = vrot.slane %v7051, 2
  %v7053 = vrot.slane %v6009, 7
  %v7054 = vrot.slane %v7053, 2
  %v7055 = vrot.slane %v6018, 7
  %v7056 = vrot.slane %v7055, 2
  %v7057 = vrot.slane %v6026, 7
  %v7058 = vrot.slane %v7057, 2
  %v7059 = vrot.slane %v6025, 7
  %v7060 = vrot.slane %v7059, 2
  %v7061 = vrot.slane %v6027, 7
  %v7062 = vrot.slane %v7061, 2
  %v7063 = vrot.slane %v6035, 7
  %v7064 = vrot.slane %v7063, 2
  %v7065 = vrot.slane %v6043, 7
  %v7066 = vrot.slane %v7065, 2
  %v7067 = vrot.slane %v6042, 7
  %v7068 = vrot.slane %v7067, 2
  %v7069 = vrot.slane %v6051, 7
  %v7070 = vrot.slane %v7069, 2
  %v7071 = vrot.slane %v6059, 7
  %v7072 = vrot.slane %v7071, 2
  %v7073 = vrot.slane %v6058, 7
  %v7074 = vrot.slane %v7073, 2
  %v7075 = vrot.slane %v6060, 7
  %v7076 = vrot.slane %v7075, 2
  %v7077 = vrot.slane %v6068, 7
  %v7078 = vrot.slane %v7077, 2
  %v7079 = vrot.slane %v6076, 7
  %v7080 = vrot.slane %v7079, 2
  %v7081 = vrot.slane %v6075, 7
  %v7082 = vrot.slane %v7081, 2
  %v7083 = vrot.slane %v6084, 7
  %v7084 = vrot.slane %v7083, 2
  %v7085 = vrot.slane %v6092, 7
  %v7086 = vrot.slane %v7085, 2
  %v7087 = vrot.slane %v6091, 7
  %v7088 = vrot.slane %v7087, 2
  %v7089 = vrot.slane %v6093, 7
  %v7090 = vrot.slane %v7089, 2
  %v7091 = vrot.slane %v6101, 7
  %v7092 = vrot.slane %v7091, 2
  %v7093 = vrot.slane %v6109, 7
  %v7094 = vrot.slane %v7093, 2
  %v7095 = vrot.slane %v6108, 7
  %v7096 = vrot.slane %v7095, 2
  %v7097 = vrot.slane %v6117, 7
  %v7098 = vrot.slane %v7097, 2
  %v7099 = vrot.slane %v6125, 7
  %v7100 = vrot.slane %v7099, 2
  %v7101 = vrot.slane %v6124, 7
  %v7102 = vrot.slane %v7101, 2
  %v7103 = vrot.slane %v6126, 7
  %v7104 = vrot.slane %v7103, 2
  %v7105 = vrot.slane %v6134, 7
  %v7106 = vrot.slane %v7105, 2
  %v7107 = vrot.slane %v6142, 7
  %v7108 = vrot.slane %v7107, 2
  %v7109 = vrot.slane %v6141, 7
  %v7110 = vrot.slane %v7109, 2
  %v7111 = vrot.slane %v6150, 7
  %v7112 = vrot.slane %v7111, 2
  %v7113 = vrot.slane %v6158, 7
  %v7114 = vrot.slane %v7113, 2
  %v7115 = vrot.slane %v6157, 7
  %v7116 = vrot.slane %v7115, 2
  %v7117 = vrot.slane %v6159, 7
  %v7118 = vrot.slane %v7117, 2
  %v7119 = vrot.slane %v6167, 7
  %v7120 = vrot.slane %v7119, 2
  %v7121 = vrot.slane %v6175, 7
  %v7122 = vrot.slane %v7121, 2
  %v7123 = vrot.slane %v6174, 7
  %v7124 = vrot.slane %v7123, 2
  %v7125 = vrot.slane %v6183, 7
  %v7126 = vrot.slane %v7125, 2
  %v7127 = vrot.slane %v6191, 7
  %v7128 = vrot.slane %v7127, 2
  %v7129 = vrot.slane %v6190, 7
  %v7130 = vrot.slane %v7129, 2
  %v7131 = vrot.slane %v6192, 7
  %v7132 = vrot.slane %v7131, 2
  %v7133 = vrot.slane %v6200, 7
  %v7134 = vrot.slane %v7133, 2
  %v7135 = vrot.slane %v6208, 7
  %v7136 = vrot.slane %v7135, 2
  %v7137 = vrot.slane %v6207, 7
  %v7138 = vrot.slane %v7137, 2
  %v7139 = vrot.slane %v6216, 7
  %v7140 = vrot.slane %v7139, 2
  %v7141 = vrot.slane %v6224, 7
  %v7142 = vrot.slane %v7141, 2
  %v7143 = vrot.slane %v6223, 7
  %v7144 = vrot.slane %v7143, 2
  %v7145 = vrot.slane %v6225, 7
  %v7146 = vrot.slane %v7145, 2
  %v7147 = vrot.slane %v6233, 7
  %v7148 = vrot.slane %v7147, 2
  %v7149 = vrot.slane %v6241, 7
  %v7150 = vrot.slane %v7149, 2
  %v7151 = vrot.slane %v6240, 7
  %v7152 = vrot.slane %v7151, 2
  %v7153 = vrot.slane %v6249, 7
  %v7154 = vrot.slane %v7153, 2
  %v7155 = vrot.slane %v6257, 7
  %v7156 = vrot.slane %v7155, 2
  %v7157 = vrot.slane %v6256, 7
  %v7158 = vrot.slane %v7157, 2
  %v7159 = vrot.slane %v6258, 7
  %v7160 = vrot.slane %v7159, 2
  %v7161 = vrot.slane %v6266, 7
  %v7162 = vrot.slane %v7161, 2
  %v7163 = vrot.slane %v6274, 7
  %v7164 = vrot.slane %v7163, 2
  %v7165 = vrot.slane %v6273, 7
  %v7166 = vrot.slane %v7165, 2
  %v7167 = vrot.slane %v6282, 7
  %v7168 = vrot.slane %v7167, 2
  %v7169 = vrot.slane %v6290, 7
  %v7170 = vrot.slane %v7169, 2
  %v7171 = vrot.slane %v6289, 7
  %v7172 = vrot.slane %v7171, 2
  %v7173 = vrot.slane %v6291, 7
  %v7174 = vrot.slane %v7173, 2
  %v7175 = vrot.slane %v6299, 7
  %v7176 = vrot.slane %v7175, 2
  %v7177 = vrot.slane %v6307, 7
  %v7178 = vrot.slane %v7177, 2
  %v7179 = vrot.slane %v6306, 7
  %v7180 = vrot.slane %v7179, 2
  %v7181 = vrot.slane %v6315, 7
  %v7182 = vrot.slane %v7181, 2
  %v7183 = vrot.slane %v6323, 7
  %v7184 = vrot.slane %v7183, 2
  %v7185 = vrot.slane %v6322, 7
  %v7186 = vrot.slane %v7185, 2
  %v7187 = vrot.slane %v6324, 7
  %v7188 = vrot.slane %v7187, 2
  %v7189 = vrot.slane %v6332, 7
  %v7190 = vrot.slane %v7189, 2
  %v7191 = vrot.slane %v6340, 7
  %v7192 = vrot.slane %v7191, 2
  %v7193 = vrot.slane %v6339, 7
  %v7194 = vrot.slane %v7193, 2
  %v7195 = vrot.slane %v6348, 7
  %v7196 = vrot.slane %v7195, 2
  %v7197 = vrot.slane %v6356, 7
  %v7198 = vrot.slane %v7197, 2
  %v7199 = vrot.slane %v6355, 7
  %v7200 = vrot.slane %v7199, 2
  %v7201 = vrot.slane %v6357, 7
  %v7202 = vrot.slane %v7201, 2
  %v7203 = vrot.slane %v6365, 7
  %v7204 = vrot.slane %v7203, 2
  %v7205 = vrot.slane %v6373, 7
  %v7206 = vrot.slane %v7205, 2
  %v7207 = vrot.slane %v6372, 7
  %v7208 = vrot.slane %v7207, 2
  %v7209 = vrot.slane %v6381, 7
  %v7210 = vrot.slane %v7209, 2
  %v7211 = vrot.slane %v6389, 7
  %v7212 = vrot.slane %v7211, 2
  %v7213 = vrot.slane %v6388, 7
  %v7214 = vrot.slane %v7213, 2
  %v7215 = vrot.slane %v6390, 7
  %v7216 = vrot.slane %v7215, 2
  %v7217 = vrot.slane %v6398, 7
  %v7218 = vrot.slane %v7217, 2
  %v7219 = vrot.slane %v6406, 7
  %v7220 = vrot.slane %v7219, 2
  %v7221 = vrot.slane %v6405, 7
  %v7222 = vrot.slane %v7221, 2
  %v7223 = vrot.slane %v6414, 7
  %v7224 = vrot.slane %v7223, 2
  %v7225 = vrot.slane %v6422, 7
  %v7226 = vrot.slane %v7225, 2
  %v7227 = vrot.slane %v6421, 7
  %v7228 = vrot.slane %v7227, 2
  %v7229 = vrot.slane %v6423, 7
  %v7230 = vrot.slane %v7229, 2
  %v7231 = vrot.slane %v6431, 7
  %v7232 = vrot.slane %v7231, 2
  %v7233 = vrot.slane %v6439, 7
  %v7234 = vrot.slane %v7233, 2
  %v7235 = vrot.slane %v6438, 7
  %v7236 = vrot.slane %v7235, 2
  %v7237 = vrot.slane %v6447, 7
  %v7238 = vrot.slane %v7237, 2
  %v7239 = vrot.slane %v6455, 7
  %v7240 = vrot.slane %v7239, 2
  %v7241 = vrot.slane %v6454, 7
  %v7242 = vrot.slane %v7241, 2
  %v7243 = vrot.slane %v6456, 7
  %v7244 = vrot.slane %v7243, 2
  %v7245 = vrot.slane %v6464, 7
  %v7246 = vrot.slane %v7245, 2
  %v7247 = vrot.slane %v6472, 7
  %v7248 = vrot.slane %v7247, 2
  %v7249 = vrot.slane %v6471, 7
  %v7250 = vrot.slane %v7249, 2
  %v7251 = vrot.slane %v6480, 7
  %v7252 = vrot.slane %v7251, 2
  %v7253 = vrot.slane %v6488, 7
  %v7254 = vrot.slane %v7253, 2
  %v7255 = vrot.slane %v6487, 7
  %v7256 = vrot.slane %v7255, 2
  %v7257 = vrot.slane %v6489, 7
  %v7258 = vrot.slane %v7257, 2
  %v7259 = vrot.slane %v6497, 7
  %v7260 = vrot.slane %v7259, 2
  %v7261 = vrot.slane %v6505, 7
  %v7262 = vrot.slane %v7261, 2
  %v7263 = vrot.slane %v6504, 7
  %v7264 = vrot.slane %v7263, 2
  %v7265 = vrot.slane %v6513, 7
  %v7266 = vrot.slane %v7265, 2
  %v7267 = vrot.slane %v6521, 7
  %v7268 = vrot.slane %v7267, 2
  %v7269 = vrot.slane %v6520, 7
  %v7270 = vrot.slane %v7269, 2
  %v7271 = vrot.slane %v6522, 7
  %v7272 = vrot.slane %v7271, 2
  %v7273 = vrot.slane %v6530, 7
  %v7274 = vrot.slane %v7273, 2
  %v7275 = vrot.slane %v6538, 7
  %v7276 = vrot.slane %v7275, 2
  %v7277 = vrot.slane %v6537, 7
  %v7278 = vrot.slane %v7277, 2
  %v7279 = vrot.slane %v6546, 7
  %v7280 = vrot.slane %v7279, 2
  %v7281 = vrot.slane %v6554, 7
  %v7282 = vrot.slane %v7281, 2
  %v7283 = vrot.slane %v6553, 7
  %v7284 = vrot.slane %v7283, 2
  %v7285 = vrot.slane %v6555, 7
  %v7286 = vrot.slane %v7285, 2
  %v7287 = vrot.slane %v6563, 7
  %v7288 = vrot.slane %v7287, 2
  %v7289 = vrot.slane %v6571, 7
  %v7290 = vrot.slane %v7289, 2
  %v7291 = vrot.slane %v6570, 7
  %v7292 = vrot.slane %v7291, 2
  %v7293 = vrot.slane %v6579, 7
  %v7294 = vrot.slane %v7293, 2
  %v7295 = vrot.slane %v6587, 7
  %v7296 = vrot.slane %v7295, 2
  %v7297 = vrot.slane %v6586, 7
  %v7298 = vrot.slane %v7297, 2
  %v7299 = vrot.slane %v6588, 7
  %v7300 = vrot.slane %v7299, 2
  %v7301 = vrot.slane %v6596, 7
  %v7302 = vrot.slane %v7301, 2
  %v7303 = vrot.slane %v6604, 7
  %v7304 = vrot.slane %v7303, 2
  %v7305 = vrot.slane %v6603, 7
  %v7306 = vrot.slane %v7305, 2
  %v7307 = vrot.slane %v6612, 7
  %v7308 = vrot.slane %v7307, 2
  %v7309 = vrot.slane %v6620, 7
  %v7310 = vrot.slane %v7309, 2
  %v7311 = vrot.slane %v6619, 7
  %v7312 = vrot.slane %v7311, 2
  %v7313 = vrot.slane %v6621, 7
  %v7314 = vrot.slane %v7313, 2
  %v7315 = vrot.slane %v6629, 7
  %v7316 = vrot.slane %v7315, 2
  %v7317 = vrot.slane %v6637, 7
  %v7318 = vrot.slane %v7317, 2
  %v7319 = vrot.slane %v6636, 7
  %v7320 = vrot.slane %v7319, 2
  %v7321 = vrot.slane %v6645, 7
  %v7322 = vrot.slane %v7321, 2
  %v7323 = vrot.slane %v6653, 7
  %v7324 = vrot.slane %v7323, 2
  %v7325 = vrot.slane %v6652, 7
  %v7326 = vrot.slane %v7325, 2
  %v7327 = vrot.slane %v6654, 7
  %v7328 = vrot.slane %v7327, 2
  %v7329 = vrot.slane %v6662, 7
  %v7330 = vrot.slane %v7329, 2
  %v7331 = vrot.slane %v6670, 7
  %v7332 = vrot.slane %v7331, 2
  %v7333 = vrot.slane %v6669, 7
  %v7334 = vrot.slane %v7333, 2
  %v7335 = vrot.slane %v6678, 7
  %v7336 = vrot.slane %v7335, 2
  %v7337 = vrot.slane %v6686, 7
  %v7338 = vrot.slane %v7337, 2
  %v7339 = vrot.slane %v6685, 7
  %v7340 = vrot.slane %v7339, 2
  %v7341 = vrot.slane %v6687, 7
  %v7342 = vrot.slane %v7341, 2
  %v7343 = vrot.slane %v6695, 7
  %v7344 = vrot.slane %v7343, 2
  %v7345 = vrot.slane %v6703, 7
  %v7346 = vrot.slane %v7345, 2
  %v7347 = vrot.slane %v6702, 7
  %v7348 = vrot.slane %v7347, 2
  %v7349 = vrot.slane %v6711, 7
  %v7350 = vrot.slane %v7349, 2
  %v7351 = vrot.slane %v6719, 7
  %v7352 = vrot.slane %v7351, 2
  %v7353 = vrot.slane %v6718, 7
  %v7354 = vrot.slane %v7353, 2
  %v7355 = vrot.slane %v6720, 7
  %v7356 = vrot.slane %v7355, 2
  %v7357 = vrot.slane %v6728, 7
  %v7358 = vrot.slane %v7357, 2
  %v7359 = vrot.slane %v6736, 7
  %v7360 = vrot.slane %v7359, 2
  %v7361 = vrot.slane %v6735, 7
  %v7362 = vrot.slane %v7361, 2
  %v7363 = vrot.slane %v6744, 7
  %v7364 = vrot.slane %v7363, 2
  %v7365 = vrot.slane %v6752, 7
  %v7366 = vrot.slane %v7365, 2
  %v7367 = vrot.slane %v6751, 7
  %v7368 = vrot.slane %v7367, 2
  %v7369 = vrot.slane %v6753, 7
  %v7370 = vrot.slane %v7369, 2
  %v7371 = vrot.slane %v6761, 7
  %v7372 = vrot.slane %v7371, 2
  %v7373 = vrot.slane %v6769, 7
  %v7374 = vrot.slane %v7373, 2
  %v7375 = vrot.slane %v6768, 7
  %v7376 = vrot.slane %v7375, 2
  %v7377 = vrot.slane %v6777, 7
  %v7378 = vrot.slane %v7377, 2
  %v7379 = vrot.slane %v6785, 7
  %v7380 = vrot.slane %v7379, 2
  %v7381 = vrot.slane %v6784, 7
  %v7382 = vrot.slane %v7381, 2
  %v7383 = vrot.slane %v6786, 7
  %v7384 = vrot.slane %v7383, 2
  %v7385 = vrot.slane %v6794, 7
  %v7386 = vrot.slane %v7385, 2
  %v7387 = vrot.slane %v6802, 7
  %v7388 = vrot.slane %v7387, 2
  %v7389 = vrot.slane %v6801, 7
  %v7390 = vrot.slane %v7389, 2
  %v7587 = vmax.f32 %v5886, %v7000
  %v7588 = vmax.f32 %v5894, %v7002
  %v7589 = vmax.f32 %v5893, %v7004
  %v7590 = vmax.f32 %v5895, %v7006
  %v7591 = vmax.f32 %v5903, %v7008
  %v7592 = vmax.f32 %v5911, %v7010
  %v7593 = vmax.f32 %v5910, %v7012
  %v7594 = vmax.f32 %v5919, %v7014
  %v7595 = vmax.f32 %v5927, %v7016
  %v7596 = vmax.f32 %v5926, %v7018
  %v7597 = vmax.f32 %v5928, %v7020
  %v7598 = vmax.f32 %v5936, %v7022
  %v7599 = vmax.f32 %v5944, %v7024
  %v7600 = vmax.f32 %v5943, %v7026
  %v7601 = vmax.f32 %v5952, %v7028
  %v7602 = vmax.f32 %v5960, %v7030
  %v7603 = vmax.f32 %v5959, %v7032
  %v7604 = vmax.f32 %v5961, %v7034
  %v7605 = vmax.f32 %v5969, %v7036
  %v7606 = vmax.f32 %v5977, %v7038
  %v7607 = vmax.f32 %v5976, %v7040
  %v7608 = vmax.f32 %v5985, %v7042
  %v7609 = vmax.f32 %v5993, %v7044
  %v7610 = vmax.f32 %v5992, %v7046
  %v7611 = vmax.f32 %v5994, %v7048
  %v7612 = vmax.f32 %v6002, %v7050
  %v7613 = vmax.f32 %v6010, %v7052
  %v7614 = vmax.f32 %v6009, %v7054
  %v7615 = vmax.f32 %v6018, %v7056
  %v7616 = vmax.f32 %v6026, %v7058
  %v7617 = vmax.f32 %v6025, %v7060
  %v7618 = vmax.f32 %v6027, %v7062
  %v7619 = vmax.f32 %v6035, %v7064
  %v7620 = vmax.f32 %v6043, %v7066
  %v7621 = vmax.f32 %v6042, %v7068
  %v7622 = vmax.f32 %v6051, %v7070
  %v7623 = vmax.f32 %v6059, %v7072
  %v7624 = vmax.f32 %v6058, %v7074
  %v7625 = vmax.f32 %v6060, %v7076
  %v7626 = vmax.f32 %v6068, %v7078
  %v7627 = vmax.f32 %v6076, %v7080
  %v7628 = vmax.f32 %v6075, %v7082
  %v7629 = vmax.f32 %v6084, %v7084
  %v7630 = vmax.f32 %v6092, %v7086
  %v7631 = vmax.f32 %v6091, %v7088
  %v7632 = vmax.f32 %v6093, %v7090
  %v7633 = vmax.f32 %v6101, %v7092
  %v7634 = vmax.f32 %v6109, %v7094
  %v7635 = vmax.f32 %v6108, %v7096
  %v7636 = vmax.f32 %v6117, %v7098
  %v7637 = vmax.f32 %v6125, %v7100
  %v7638 = vmax.f32 %v6124, %v7102
  %v7639 = vmax.f32 %v6126, %v7104
  %v7640 = vmax.f32 %v6134, %v7106
  %v7641 = vmax.f32 %v6142, %v7108
  %v7642 = vmax.f32 %v6141, %v7110
  %v7643 = vmax.f32 %v6150, %v7112
  %v7644 = vmax.f32 %v6158, %v7114
  %v7645 = vmax.f32 %v6157, %v7116
  %v7646 = vmax.f32 %v6159, %v7118
  %v7647 = vmax.f32 %v6167, %v7120
  %v7648 = vmax.f32 %v6175, %v7122
  %v7649 = vmax.f32 %v6174, %v7124
  %v7650 = vmax.f32 %v6183, %v7126
  %v7651 = vmax.f32 %v6191, %v7128
  %v7652 = vmax.f32 %v6190, %v7130
  %v7653 = vmax.f32 %v6192, %v7132
  %v7654 = vmax.f32 %v6200, %v7134
  %v7655 = vmax.f32 %v6208, %v7136
  %v7656 = vmax.f32 %v6207, %v7138
  %v7657 = vmax.f32 %v6216, %v7140
  %v7658 = vmax.f32 %v6224, %v7142
  %v7659 = vmax.f32 %v6223, %v7144
  %v7660 = vmax.f32 %v6225, %v7146
  %v7661 = vmax.f32 %v6233, %v7148
  %v7662 = vmax.f32 %v6241, %v7150
  %v7663 = vmax.f32 %v6240, %v7152
  %v7664 = vmax.f32 %v6249, %v7154
  %v7665 = vmax.f32 %v6257, %v7156
  %v7666 = vmax.f32 %v6256, %v7158
  %v7667 = vmax.f32 %v6258, %v7160
  %v7668 = vmax.f32 %v6266, %v7162
  %v7669 = vmax.f32 %v6274, %v7164
  %v7670 = vmax.f32 %v6273, %v7166
  %v7671 = vmax.f32 %v6282, %v7168
  %v7672 = vmax.f32 %v6290, %v7170
  %v7673 = vmax.f32 %v6289, %v7172
  %v7674 = vmax.f32 %v6291, %v7174
  %v7675 = vmax.f32 %v6299, %v7176
  %v7676 = vmax.f32 %v6307, %v7178
  %v7677 = vmax.f32 %v6306, %v7180
  %v7678 = vmax.f32 %v6315, %v7182
  %v7679 = vmax.f32 %v6323, %v7184
  %v7680 = vmax.f32 %v6322, %v7186
  %v7681 = vmax.f32 %v6324, %v7188
  %v7682 = vmax.f32 %v6332, %v7190
  %v7683 = vmax.f32 %v6340, %v7192
  %v7684 = vmax.f32 %v6339, %v7194
  %v7685 = vmax.f32 %v6348, %v7196
  %v7686 = vmax.f32 %v6356, %v7198
  %v7687 = vmax.f32 %v6355, %v7200
  %v7688 = vmax.f32 %v6357, %v7202
  %v7689 = vmax.f32 %v6365, %v7204
  %v7690 = vmax.f32 %v6373, %v7206
  %v7691 = vmax.f32 %v6372, %v7208
  %v7692 = vmax.f32 %v6381, %v7210
  %v7693 = vmax.f32 %v6389, %v7212
  %v7694 = vmax.f32 %v6388, %v7214
  %v7695 = vmax.f32 %v6390, %v7216
  %v7696 = vmax.f32 %v6398, %v7218
  %v7697 = vmax.f32 %v6406, %v7220
  %v7698 = vmax.f32 %v6405, %v7222
  %v7699 = vmax.f32 %v6414, %v7224
  %v7700 = vmax.f32 %v6422, %v7226
  %v7701 = vmax.f32 %v6421, %v7228
  %v7702 = vmax.f32 %v6423, %v7230
  %v7703 = vmax.f32 %v6431, %v7232
  %v7704 = vmax.f32 %v6439, %v7234
  %v7705 = vmax.f32 %v6438, %v7236
  %v7706 = vmax.f32 %v6447, %v7238
  %v7707 = vmax.f32 %v6455, %v7240
  %v7708 = vmax.f32 %v6454, %v7242
  %v7709 = vmax.f32 %v6456, %v7244
  %v7710 = vmax.f32 %v6464, %v7246
  %v7711 = vmax.f32 %v6472, %v7248
  %v7712 = vmax.f32 %v6471, %v7250
  %v7713 = vmax.f32 %v6480, %v7252
  %v7714 = vmax.f32 %v6488, %v7254
  %v7715 = vmax.f32 %v6487, %v7256
  %v7716 = vmax.f32 %v6489, %v7258
  %v7717 = vmax.f32 %v6497, %v7260
  %v7718 = vmax.f32 %v6505, %v7262
  %v7719 = vmax.f32 %v6504, %v7264
  %v7720 = vmax.f32 %v6513, %v7266
  %v7721 = vmax.f32 %v6521, %v7268
  %v7722 = vmax.f32 %v6520, %v7270
  %v7723 = vmax.f32 %v6522, %v7272
  %v7724 = vmax.f32 %v6530, %v7274
  %v7725 = vmax.f32 %v6538, %v7276
  %v7726 = vmax.f32 %v6537, %v7278
  %v7727 = vmax.f32 %v6546, %v7280
  %v7728 = vmax.f32 %v6554, %v7282
  %v7729 = vmax.f32 %v6553, %v7284
  %v7730 = vmax.f32 %v6555, %v7286
  %v7731 = vmax.f32 %v6563, %v7288
  %v7732 = vmax.f32 %v6571, %v7290
  %v7733 = vmax.f32 %v6570, %v7292
  %v7734 = vmax.f32 %v6579, %v7294
  %v7735 = vmax.f32 %v6587, %v7296
  %v7736 = vmax.f32 %v6586, %v7298
  %v7737 = vmax.f32 %v6588, %v7300
  %v7738 = vmax.f32 %v6596, %v7302
  %v7739 = vmax.f32 %v6604, %v7304
  %v7740 = vmax.f32 %v6603, %v7306
  %v7741 = vmax.f32 %v6612, %v7308
  %v7742 = vmax.f32 %v6620, %v7310
  %v7743 = vmax.f32 %v6619, %v7312
  %v7744 = vmax.f32 %v6621, %v7314
  %v7745 = vmax.f32 %v6629, %v7316
  %v7746 = vmax.f32 %v6637, %v7318
  %v7747 = vmax.f32 %v6636, %v7320
  %v7748 = vmax.f32 %v6645, %v7322
  %v7749 = vmax.f32 %v6653, %v7324
  %v7750 = vmax.f32 %v6652, %v7326
  %v7751 = vmax.f32 %v6654, %v7328
  %v7752 = vmax.f32 %v6662, %v7330
  %v7753 = vmax.f32 %v6670, %v7332
  %v7754 = vmax.f32 %v6669, %v7334
  %v7755 = vmax.f32 %v6678, %v7336
  %v7756 = vmax.f32 %v6686, %v7338
  %v7757 = vmax.f32 %v6685, %v7340
  %v7758 = vmax.f32 %v6687, %v7342
  %v7759 = vmax.f32 %v6695, %v7344
  %v7760 = vmax.f32 %v6703, %v7346
  %v7761 = vmax.f32 %v6702, %v7348
  %v7762 = vmax.f32 %v6711, %v7350
  %v7763 = vmax.f32 %v6719, %v7352
  %v7764 = vmax.f32 %v6718, %v7354
  %v7765 = vmax.f32 %v6720, %v7356
  %v7766 = vmax.f32 %v6728, %v7358
  %v7767 = vmax.f32 %v6736, %v7360
  %v7768 = vmax.f32 %v6735, %v7362
  %v7769 = vmax.f32 %v6744, %v7364
  %v7770 = vmax.f32 %v6752, %v7366
  %v7771 = vmax.f32 %v6751, %v7368
  %v7772 = vmax.f32 %v6753, %v7370
  %v7773 = vmax.f32 %v6761, %v7372
  %v7774 = vmax.f32 %v6769, %v7374
  %v7775 = vmax.f32 %v6768, %v7376
  %v7776 = vmax.f32 %v6777, %v7378
  %v7777 = vmax.f32 %v6785, %v7380
  %v7778 = vmax.f32 %v6784, %v7382
  %v7779 = vmax.f32 %v6786, %v7384
  %v7780 = vmax.f32 %v6794, %v7386
  %v7781 = vmax.f32 %v6802, %v7388
  %v7782 = vmax.f32 %v6801, %v7390
  %v7783 = vmax.f32 %v7587, %v7594
  %v7784 = vmax.f32 %v7588, %v7595
  %v7785 = vmax.f32 %v7589, %v7596
  %v7786 = vmax.f32 %v7590, %v7597
  %v7787 = vmax.f32 %v7591, %v7598
  %v7788 = vmax.f32 %v7592, %v7599
  %v7789 = vmax.f32 %v7593, %v7600
  %v7790 = vmax.f32 %v7601, %v7608
  %v7791 = vmax.f32 %v7602, %v7609
  %v7792 = vmax.f32 %v7603, %v7610
  %v7793 = vmax.f32 %v7604, %v7611
  %v7794 = vmax.f32 %v7605, %v7612
  %v7795 = vmax.f32 %v7606, %v7613
  %v7796 = vmax.f32 %v7607, %v7614
  %v7797 = vmax.f32 %v7615, %v7622
  %v7798 = vmax.f32 %v7616, %v7623
  %v7799 = vmax.f32 %v7617, %v7624
  %v7800 = vmax.f32 %v7618, %v7625
  %v7801 = vmax.f32 %v7619, %v7626
  %v7802 = vmax.f32 %v7620, %v7627
  %v7803 = vmax.f32 %v7621, %v7628
  %v7804 = vmax.f32 %v7629, %v7636
  %v7805 = vmax.f32 %v7630, %v7637
  %v7806 = vmax.f32 %v7631, %v7638
  %v7807 = vmax.f32 %v7632, %v7639
  %v7808 = vmax.f32 %v7633, %v7640
  %v7809 = vmax.f32 %v7634, %v7641
  %v7810 = vmax.f32 %v7635, %v7642
  %v7811 = vmax.f32 %v7643, %v7650
  %v7812 = vmax.f32 %v7644, %v7651
  %v7813 = vmax.f32 %v7645, %v7652
  %v7814 = vmax.f32 %v7646, %v7653
  %v7815 = vmax.f32 %v7647, %v7654
  %v7816 = vmax.f32 %v7648, %v7655
  %v7817 = vmax.f32 %v7649, %v7656
  %v7818 = vmax.f32 %v7657, %v7664
  %v7819 = vmax.f32 %v7658, %v7665
  %v7820 = vmax.f32 %v7659, %v7666
  %v7821 = vmax.f32 %v7660, %v7667
  %v7822 = vmax.f32 %v7661, %v7668
  %v7823 = vmax.f32 %v7662, %v7669
  %v7824 = vmax.f32 %v7663, %v7670
  %v7825 = vmax.f32 %v7671, %v7678
  %v7826 = vmax.f32 %v7672, %v7679
  %v7827 = vmax.f32 %v7673, %v7680
  %v7828 = vmax.f32 %v7674, %v7681
  %v7829 = vmax.f32 %v7675, %v7682
  %v7830 = vmax.f32 %v7676, %v7683
  %v7831 = vmax.f32 %v7677, %v7684
  %v7832 = vmax.f32 %v7685, %v7692
  %v7833 = vmax.f32 %v7686, %v7693
  %v7834 = vmax.f32 %v7687, %v7694
  %v7835 = vmax.f32 %v7688, %v7695
  %v7836 = vmax.f32 %v7689, %v7696
  %v7837 = vmax.f32 %v7690, %v7697
  %v7838 = vmax.f32 %v7691, %v7698
  %v7839 = vmax.f32 %v7699, %v7706
  %v7840 = vmax.f32 %v7700, %v7707
  %v7841 = vmax.f32 %v7701, %v7708
  %v7842 = vmax.f32 %v7702, %v7709
  %v7843 = vmax.f32 %v7703, %v7710
  %v7844 = vmax.f32 %v7704, %v7711
  %v7845 = vmax.f32 %v7705, %v7712
  %v7846 = vmax.f32 %v7713, %v7720
  %v7847 = vmax.f32 %v7714, %v7721
  %v7848 = vmax.f32 %v7715, %v7722
  %v7849 = vmax.f32 %v7716, %v7723
  %v7850 = vmax.f32 %v7717, %v7724
  %v7851 = vmax.f32 %v7718, %v7725
  %v7852 = vmax.f32 %v7719, %v7726
  %v7853 = vmax.f32 %v7727, %v7734
  %v7854 = vmax.f32 %v7728, %v7735
  %v7855 = vmax.f32 %v7729, %v7736
  %v7856 = vmax.f32 %v7730, %v7737
  %v7857 = vmax.f32 %v7731, %v7738
  %v7858 = vmax.f32 %v7732, %v7739
  %v7859 = vmax.f32 %v7733, %v7740
  %v7860 = vmax.f32 %v7741, %v7748
  %v7861 = vmax.f32 %v7742, %v7749
  %v7862 = vmax.f32 %v7743, %v7750
  %v7863 = vmax.f32 %v7744, %v7751
  %v7864 = vmax.f32 %v7745, %v7752
  %v7865 = vmax.f32 %v7746, %v7753
  %v7866 = vmax.f32 %v7747, %v7754
  %v7867 = vmax.f32 %v7755, %v7762
  %v7868 = vmax.f32 %v7756, %v7763
  %v7869 = vmax.f32 %v7757, %v7764
  %v7870 = vmax.f32 %v7758, %v7765
  %v7871 = vmax.f32 %v7759, %v7766
  %v7872 = vmax.f32 %v7760, %v7767
  %v7873 = vmax.f32 %v7761, %v7768
  %v7874 = vmax.f32 %v7769, %v7776
  %v7875 = vmax.f32 %v7770, %v7777
  %v7876 = vmax.f32 %v7771, %v7778
  %v7877 = vmax.f32 %v7772, %v7779
  %v7878 = vmax.f32 %v7773, %v7780
  %v7879 = vmax.f32 %v7774, %v7781
  %v7880 = vmax.f32 %v7775, %v7782
  %vm7979 = vcmask 1044484
  %v7980 = vsel %vm7979, %v7783, %v7783
  %vm7981 = vcmask 1046534
  %v7982 = vsel %vm7981, %v7783, %v7980
  %v7983 = vrot.slane %v7784, 7
  %vm7984 = vcmask 1041409
  %v7985 = vsel %vm7984, %v7983, %v7982
  %vm7986 = vcmask 1043459
  %v7987 = vsel %vm7986, %v7983, %v7985
  %vm7988 = vcmask 1045509
  %v7989 = vsel %vm7988, %v7983, %v7987
  %vm7990 = vcmask 1047559
  %v7991 = vsel %vm7990, %v7983, %v7989
  %v7992 = vsel %vm7979, %v7785, %v7785
  %v7993 = vsel %vm7981, %v7785, %v7992
  %v7994 = vrot.slane %v7786, 7
  %v7995 = vsel %vm7984, %v7994, %v7993
  %v7996 = vsel %vm7986, %v7994, %v7995
  %v7997 = vsel %vm7988, %v7994, %v7996
  %v7998 = vsel %vm7990, %v7994, %v7997
  %v7999 = vsel %vm7979, %v7787, %v7787
  %v8000 = vsel %vm7981, %v7787, %v7999
  %v8001 = vrot.slane %v7788, 7
  %v8002 = vsel %vm7984, %v8001, %v8000
  %v8003 = vsel %vm7986, %v8001, %v8002
  %v8004 = vsel %vm7988, %v8001, %v8003
  %v8005 = vsel %vm7990, %v8001, %v8004
  %v8006 = vsel %vm7979, %v7789, %v7789
  %v8007 = vsel %vm7981, %v7789, %v8006
  %v8008 = vsel %vm7979, %v7790, %v7790
  %v8009 = vsel %vm7981, %v7790, %v8008
  %v8010 = vrot.slane %v7791, 7
  %v8011 = vsel %vm7984, %v8010, %v8009
  %v8012 = vsel %vm7986, %v8010, %v8011
  %v8013 = vsel %vm7988, %v8010, %v8012
  %v8014 = vsel %vm7990, %v8010, %v8013
  %v8015 = vsel %vm7979, %v7792, %v7792
  %v8016 = vsel %vm7981, %v7792, %v8015
  %v8017 = vrot.slane %v7793, 7
  %v8018 = vsel %vm7984, %v8017, %v8016
  %v8019 = vsel %vm7986, %v8017, %v8018
  %v8020 = vsel %vm7988, %v8017, %v8019
  %v8021 = vsel %vm7990, %v8017, %v8020
  %v8022 = vsel %vm7979, %v7794, %v7794
  %v8023 = vsel %vm7981, %v7794, %v8022
  %v8024 = vrot.slane %v7795, 7
  %v8025 = vsel %vm7984, %v8024, %v8023
  %v8026 = vsel %vm7986, %v8024, %v8025
  %v8027 = vsel %vm7988, %v8024, %v8026
  %v8028 = vsel %vm7990, %v8024, %v8027
  %v8029 = vsel %vm7979, %v7796, %v7796
  %v8030 = vsel %vm7981, %v7796, %v8029
  %v8031 = vsel %vm7979, %v7797, %v7797
  %v8032 = vsel %vm7981, %v7797, %v8031
  %v8033 = vrot.slane %v7798, 7
  %v8034 = vsel %vm7984, %v8033, %v8032
  %v8035 = vsel %vm7986, %v8033, %v8034
  %v8036 = vsel %vm7988, %v8033, %v8035
  %v8037 = vsel %vm7990, %v8033, %v8036
  %v8038 = vsel %vm7979, %v7799, %v7799
  %v8039 = vsel %vm7981, %v7799, %v8038
  %v8040 = vrot.slane %v7800, 7
  %v8041 = vsel %vm7984, %v8040, %v8039
  %v8042 = vsel %vm7986, %v8040, %v8041
  %v8043 = vsel %vm7988, %v8040, %v8042
  %v8044 = vsel %vm7990, %v8040, %v8043
  %v8045 = vsel %vm7979, %v7801, %v7801
  %v8046 = vsel %vm7981, %v7801, %v8045
  %v8047 = vrot.slane %v7802, 7
  %v8048 = vsel %vm7984, %v8047, %v8046
  %v8049 = vsel %vm7986, %v8047, %v8048
  %v8050 = vsel %vm7988, %v8047, %v8049
  %v8051 = vsel %vm7990, %v8047, %v8050
  %v8052 = vsel %vm7979, %v7803, %v7803
  %v8053 = vsel %vm7981, %v7803, %v8052
  %v8054 = vsel %vm7979, %v7804, %v7804
  %v8055 = vsel %vm7981, %v7804, %v8054
  %v8056 = vrot.slane %v7805, 7
  %v8057 = vsel %vm7984, %v8056, %v8055
  %v8058 = vsel %vm7986, %v8056, %v8057
  %v8059 = vsel %vm7988, %v8056, %v8058
  %v8060 = vsel %vm7990, %v8056, %v8059
  %v8061 = vsel %vm7979, %v7806, %v7806
  %v8062 = vsel %vm7981, %v7806, %v8061
  %v8063 = vrot.slane %v7807, 7
  %v8064 = vsel %vm7984, %v8063, %v8062
  %v8065 = vsel %vm7986, %v8063, %v8064
  %v8066 = vsel %vm7988, %v8063, %v8065
  %v8067 = vsel %vm7990, %v8063, %v8066
  %v8068 = vsel %vm7979, %v7808, %v7808
  %v8069 = vsel %vm7981, %v7808, %v8068
  %v8070 = vrot.slane %v7809, 7
  %v8071 = vsel %vm7984, %v8070, %v8069
  %v8072 = vsel %vm7986, %v8070, %v8071
  %v8073 = vsel %vm7988, %v8070, %v8072
  %v8074 = vsel %vm7990, %v8070, %v8073
  %v8075 = vsel %vm7979, %v7810, %v7810
  %v8076 = vsel %vm7981, %v7810, %v8075
  %v8077 = vsel %vm7979, %v7811, %v7811
  %v8078 = vsel %vm7981, %v7811, %v8077
  %v8079 = vrot.slane %v7812, 7
  %v8080 = vsel %vm7984, %v8079, %v8078
  %v8081 = vsel %vm7986, %v8079, %v8080
  %v8082 = vsel %vm7988, %v8079, %v8081
  %v8083 = vsel %vm7990, %v8079, %v8082
  %v8084 = vsel %vm7979, %v7813, %v7813
  %v8085 = vsel %vm7981, %v7813, %v8084
  %v8086 = vrot.slane %v7814, 7
  %v8087 = vsel %vm7984, %v8086, %v8085
  %v8088 = vsel %vm7986, %v8086, %v8087
  %v8089 = vsel %vm7988, %v8086, %v8088
  %v8090 = vsel %vm7990, %v8086, %v8089
  %v8091 = vsel %vm7979, %v7815, %v7815
  %v8092 = vsel %vm7981, %v7815, %v8091
  %v8093 = vrot.slane %v7816, 7
  %v8094 = vsel %vm7984, %v8093, %v8092
  %v8095 = vsel %vm7986, %v8093, %v8094
  %v8096 = vsel %vm7988, %v8093, %v8095
  %v8097 = vsel %vm7990, %v8093, %v8096
  %v8098 = vsel %vm7979, %v7817, %v7817
  %v8099 = vsel %vm7981, %v7817, %v8098
  %v8100 = vsel %vm7979, %v7818, %v7818
  %v8101 = vsel %vm7981, %v7818, %v8100
  %v8102 = vrot.slane %v7819, 7
  %v8103 = vsel %vm7984, %v8102, %v8101
  %v8104 = vsel %vm7986, %v8102, %v8103
  %v8105 = vsel %vm7988, %v8102, %v8104
  %v8106 = vsel %vm7990, %v8102, %v8105
  %v8107 = vsel %vm7979, %v7820, %v7820
  %v8108 = vsel %vm7981, %v7820, %v8107
  %v8109 = vrot.slane %v7821, 7
  %v8110 = vsel %vm7984, %v8109, %v8108
  %v8111 = vsel %vm7986, %v8109, %v8110
  %v8112 = vsel %vm7988, %v8109, %v8111
  %v8113 = vsel %vm7990, %v8109, %v8112
  %v8114 = vsel %vm7979, %v7822, %v7822
  %v8115 = vsel %vm7981, %v7822, %v8114
  %v8116 = vrot.slane %v7823, 7
  %v8117 = vsel %vm7984, %v8116, %v8115
  %v8118 = vsel %vm7986, %v8116, %v8117
  %v8119 = vsel %vm7988, %v8116, %v8118
  %v8120 = vsel %vm7990, %v8116, %v8119
  %v8121 = vsel %vm7979, %v7824, %v7824
  %v8122 = vsel %vm7981, %v7824, %v8121
  %v8123 = vsel %vm7979, %v7825, %v7825
  %v8124 = vsel %vm7981, %v7825, %v8123
  %v8125 = vrot.slane %v7826, 7
  %v8126 = vsel %vm7984, %v8125, %v8124
  %v8127 = vsel %vm7986, %v8125, %v8126
  %v8128 = vsel %vm7988, %v8125, %v8127
  %v8129 = vsel %vm7990, %v8125, %v8128
  %v8130 = vsel %vm7979, %v7827, %v7827
  %v8131 = vsel %vm7981, %v7827, %v8130
  %v8132 = vrot.slane %v7828, 7
  %v8133 = vsel %vm7984, %v8132, %v8131
  %v8134 = vsel %vm7986, %v8132, %v8133
  %v8135 = vsel %vm7988, %v8132, %v8134
  %v8136 = vsel %vm7990, %v8132, %v8135
  %v8137 = vsel %vm7979, %v7829, %v7829
  %v8138 = vsel %vm7981, %v7829, %v8137
  %v8139 = vrot.slane %v7830, 7
  %v8140 = vsel %vm7984, %v8139, %v8138
  %v8141 = vsel %vm7986, %v8139, %v8140
  %v8142 = vsel %vm7988, %v8139, %v8141
  %v8143 = vsel %vm7990, %v8139, %v8142
  %v8144 = vsel %vm7979, %v7831, %v7831
  %v8145 = vsel %vm7981, %v7831, %v8144
  %v8146 = vsel %vm7979, %v7832, %v7832
  %v8147 = vsel %vm7981, %v7832, %v8146
  %v8148 = vrot.slane %v7833, 7
  %v8149 = vsel %vm7984, %v8148, %v8147
  %v8150 = vsel %vm7986, %v8148, %v8149
  %v8151 = vsel %vm7988, %v8148, %v8150
  %v8152 = vsel %vm7990, %v8148, %v8151
  %v8153 = vsel %vm7979, %v7834, %v7834
  %v8154 = vsel %vm7981, %v7834, %v8153
  %v8155 = vrot.slane %v7835, 7
  %v8156 = vsel %vm7984, %v8155, %v8154
  %v8157 = vsel %vm7986, %v8155, %v8156
  %v8158 = vsel %vm7988, %v8155, %v8157
  %v8159 = vsel %vm7990, %v8155, %v8158
  %v8160 = vsel %vm7979, %v7836, %v7836
  %v8161 = vsel %vm7981, %v7836, %v8160
  %v8162 = vrot.slane %v7837, 7
  %v8163 = vsel %vm7984, %v8162, %v8161
  %v8164 = vsel %vm7986, %v8162, %v8163
  %v8165 = vsel %vm7988, %v8162, %v8164
  %v8166 = vsel %vm7990, %v8162, %v8165
  %v8167 = vsel %vm7979, %v7838, %v7838
  %v8168 = vsel %vm7981, %v7838, %v8167
  %v8169 = vsel %vm7979, %v7839, %v7839
  %v8170 = vsel %vm7981, %v7839, %v8169
  %v8171 = vrot.slane %v7840, 7
  %v8172 = vsel %vm7984, %v8171, %v8170
  %v8173 = vsel %vm7986, %v8171, %v8172
  %v8174 = vsel %vm7988, %v8171, %v8173
  %v8175 = vsel %vm7990, %v8171, %v8174
  %v8176 = vsel %vm7979, %v7841, %v7841
  %v8177 = vsel %vm7981, %v7841, %v8176
  %v8178 = vrot.slane %v7842, 7
  %v8179 = vsel %vm7984, %v8178, %v8177
  %v8180 = vsel %vm7986, %v8178, %v8179
  %v8181 = vsel %vm7988, %v8178, %v8180
  %v8182 = vsel %vm7990, %v8178, %v8181
  %v8183 = vsel %vm7979, %v7843, %v7843
  %v8184 = vsel %vm7981, %v7843, %v8183
  %v8185 = vrot.slane %v7844, 7
  %v8186 = vsel %vm7984, %v8185, %v8184
  %v8187 = vsel %vm7986, %v8185, %v8186
  %v8188 = vsel %vm7988, %v8185, %v8187
  %v8189 = vsel %vm7990, %v8185, %v8188
  %v8190 = vsel %vm7979, %v7845, %v7845
  %v8191 = vsel %vm7981, %v7845, %v8190
  %v8192 = vsel %vm7979, %v7846, %v7846
  %v8193 = vsel %vm7981, %v7846, %v8192
  %v8194 = vrot.slane %v7847, 7
  %v8195 = vsel %vm7984, %v8194, %v8193
  %v8196 = vsel %vm7986, %v8194, %v8195
  %v8197 = vsel %vm7988, %v8194, %v8196
  %v8198 = vsel %vm7990, %v8194, %v8197
  %v8199 = vsel %vm7979, %v7848, %v7848
  %v8200 = vsel %vm7981, %v7848, %v8199
  %v8201 = vrot.slane %v7849, 7
  %v8202 = vsel %vm7984, %v8201, %v8200
  %v8203 = vsel %vm7986, %v8201, %v8202
  %v8204 = vsel %vm7988, %v8201, %v8203
  %v8205 = vsel %vm7990, %v8201, %v8204
  %v8206 = vsel %vm7979, %v7850, %v7850
  %v8207 = vsel %vm7981, %v7850, %v8206
  %v8208 = vrot.slane %v7851, 7
  %v8209 = vsel %vm7984, %v8208, %v8207
  %v8210 = vsel %vm7986, %v8208, %v8209
  %v8211 = vsel %vm7988, %v8208, %v8210
  %v8212 = vsel %vm7990, %v8208, %v8211
  %v8213 = vsel %vm7979, %v7852, %v7852
  %v8214 = vsel %vm7981, %v7852, %v8213
  %v8215 = vsel %vm7979, %v7853, %v7853
  %v8216 = vsel %vm7981, %v7853, %v8215
  %v8217 = vrot.slane %v7854, 7
  %v8218 = vsel %vm7984, %v8217, %v8216
  %v8219 = vsel %vm7986, %v8217, %v8218
  %v8220 = vsel %vm7988, %v8217, %v8219
  %v8221 = vsel %vm7990, %v8217, %v8220
  %v8222 = vsel %vm7979, %v7855, %v7855
  %v8223 = vsel %vm7981, %v7855, %v8222
  %v8224 = vrot.slane %v7856, 7
  %v8225 = vsel %vm7984, %v8224, %v8223
  %v8226 = vsel %vm7986, %v8224, %v8225
  %v8227 = vsel %vm7988, %v8224, %v8226
  %v8228 = vsel %vm7990, %v8224, %v8227
  %v8229 = vsel %vm7979, %v7857, %v7857
  %v8230 = vsel %vm7981, %v7857, %v8229
  %v8231 = vrot.slane %v7858, 7
  %v8232 = vsel %vm7984, %v8231, %v8230
  %v8233 = vsel %vm7986, %v8231, %v8232
  %v8234 = vsel %vm7988, %v8231, %v8233
  %v8235 = vsel %vm7990, %v8231, %v8234
  %v8236 = vsel %vm7979, %v7859, %v7859
  %v8237 = vsel %vm7981, %v7859, %v8236
  %v8238 = vsel %vm7979, %v7860, %v7860
  %v8239 = vsel %vm7981, %v7860, %v8238
  %v8240 = vrot.slane %v7861, 7
  %v8241 = vsel %vm7984, %v8240, %v8239
  %v8242 = vsel %vm7986, %v8240, %v8241
  %v8243 = vsel %vm7988, %v8240, %v8242
  %v8244 = vsel %vm7990, %v8240, %v8243
  %v8245 = vsel %vm7979, %v7862, %v7862
  %v8246 = vsel %vm7981, %v7862, %v8245
  %v8247 = vrot.slane %v7863, 7
  %v8248 = vsel %vm7984, %v8247, %v8246
  %v8249 = vsel %vm7986, %v8247, %v8248
  %v8250 = vsel %vm7988, %v8247, %v8249
  %v8251 = vsel %vm7990, %v8247, %v8250
  %v8252 = vsel %vm7979, %v7864, %v7864
  %v8253 = vsel %vm7981, %v7864, %v8252
  %v8254 = vrot.slane %v7865, 7
  %v8255 = vsel %vm7984, %v8254, %v8253
  %v8256 = vsel %vm7986, %v8254, %v8255
  %v8257 = vsel %vm7988, %v8254, %v8256
  %v8258 = vsel %vm7990, %v8254, %v8257
  %v8259 = vsel %vm7979, %v7866, %v7866
  %v8260 = vsel %vm7981, %v7866, %v8259
  %v8261 = vsel %vm7979, %v7867, %v7867
  %v8262 = vsel %vm7981, %v7867, %v8261
  %v8263 = vrot.slane %v7868, 7
  %v8264 = vsel %vm7984, %v8263, %v8262
  %v8265 = vsel %vm7986, %v8263, %v8264
  %v8266 = vsel %vm7988, %v8263, %v8265
  %v8267 = vsel %vm7990, %v8263, %v8266
  %v8268 = vsel %vm7979, %v7869, %v7869
  %v8269 = vsel %vm7981, %v7869, %v8268
  %v8270 = vrot.slane %v7870, 7
  %v8271 = vsel %vm7984, %v8270, %v8269
  %v8272 = vsel %vm7986, %v8270, %v8271
  %v8273 = vsel %vm7988, %v8270, %v8272
  %v8274 = vsel %vm7990, %v8270, %v8273
  %v8275 = vsel %vm7979, %v7871, %v7871
  %v8276 = vsel %vm7981, %v7871, %v8275
  %v8277 = vrot.slane %v7872, 7
  %v8278 = vsel %vm7984, %v8277, %v8276
  %v8279 = vsel %vm7986, %v8277, %v8278
  %v8280 = vsel %vm7988, %v8277, %v8279
  %v8281 = vsel %vm7990, %v8277, %v8280
  %v8282 = vsel %vm7979, %v7873, %v7873
  %v8283 = vsel %vm7981, %v7873, %v8282
  %v8284 = vsel %vm7979, %v7874, %v7874
  %v8285 = vsel %vm7981, %v7874, %v8284
  %v8286 = vrot.slane %v7875, 7
  %v8287 = vsel %vm7984, %v8286, %v8285
  %v8288 = vsel %vm7986, %v8286, %v8287
  %v8289 = vsel %vm7988, %v8286, %v8288
  %v8290 = vsel %vm7990, %v8286, %v8289
  %v8291 = vsel %vm7979, %v7876, %v7876
  %v8292 = vsel %vm7981, %v7876, %v8291
  %v8293 = vrot.slane %v7877, 7
  %v8294 = vsel %vm7984, %v8293, %v8292
  %v8295 = vsel %vm7986, %v8293, %v8294
  %v8296 = vsel %vm7988, %v8293, %v8295
  %v8297 = vsel %vm7990, %v8293, %v8296
  %v8298 = vsel %vm7979, %v7878, %v7878
  %v8299 = vsel %vm7981, %v7878, %v8298
  %v8300 = vrot.slane %v7879, 7
  %v8301 = vsel %vm7984, %v8300, %v8299
  %v8302 = vsel %vm7986, %v8300, %v8301
  %v8303 = vsel %vm7988, %v8300, %v8302
  %v8304 = vsel %vm7990, %v8300, %v8303
  %v8305 = vsel %vm7979, %v7880, %v7880
  %v8306 = vsel %vm7981, %v7880, %v8305
  %v8355 = vcombine.low %v7991, %v8014
  %v8357 = vunpack.c.l.s4 1934713408
  %v8358 = vunpack.c.0.s8 %v8357
  %v8359 = vlaneseq
  %v8360 = vshrl.u32 %v8359, 7
  %v8361 = vsub.s32 %v8358, %v8360
  %v8362 = vrot.slane %v8355, %v8361
  %v8363 = vcombine.high %v8362, 0.0
  %v8364 = vcombine.low %v8037, %v8060
  %v8366 = vunpack.c.l.s4 1934713408
  %v8367 = vunpack.c.0.s8 %v8366
  %v8368 = vlaneseq
  %v8369 = vshrl.u32 %v8368, 7
  %v8370 = vsub.s32 %v8367, %v8369
  %v8371 = vrot.slane %v8364, %v8370
  %v8372 = vcombine.high %v8371, 0.0
  %v8373 = vcombine.low %v8083, %v8106
  %v8375 = vunpack.c.l.s4 1934713408
  %v8376 = vunpack.c.0.s8 %v8375
  %v8377 = vlaneseq
  %v8378 = vshrl.u32 %v8377, 7
  %v8379 = vsub.s32 %v8376, %v8378
  %v8380 = vrot.slane %v8373, %v8379
  %v8381 = vcombine.high %v8380, 0.0
  %v8384 = vunpack.c.l.s4 1934713408
  %v8385 = vunpack.c.0.s8 %v8384
  %v8386 = vlaneseq
  %v8387 = vshrl.u32 %v8386, 7
  %v8388 = vsub.s32 %v8385, %v8387
  %v8389 = vrot.slane %v8129, %v8388
  %v8390 = vcombine.high %v8389, 0.0
  %v8391 = vcombine.low %v7998, %v8021
  %v8393 = vunpack.c.l.s4 1934713408
  %v8394 = vunpack.c.0.s8 %v8393
  %v8395 = vlaneseq
  %v8396 = vshrl.u32 %v8395, 7
  %v8397 = vsub.s32 %v8394, %v8396
  %v8398 = vrot.slane %v8391, %v8397
  %v8399 = vcombine.high %v8398, 0.0
  %v8400 = vcombine.low %v8044, %v8067
  %v8402 = vunpack.c.l.s4 1934713408
  %v8403 = vunpack.c.0.s8 %v8402
  %v8404 = vlaneseq
  %v8405 = vshrl.u32 %v8404, 7
  %v8406 = vsub.s32 %v8403, %v8405
  %v8407 = vrot.slane %v8400, %v8406
  %v8408 = vcombine.high %v8407, 0.0
  %v8409 = vcombine.low %v8090, %v8113
  %v8411 = vunpack.c.l.s4 1934713408
  %v8412 = vunpack.c.0.s8 %v8411
  %v8413 = vlaneseq
  %v8414 = vshrl.u32 %v8413, 7
  %v8415 = vsub.s32 %v8412, %v8414
  %v8416 = vrot.slane %v8409, %v8415
  %v8417 = vcombine.high %v8416, 0.0
  %v8420 = vunpack.c.l.s4 1934713408
  %v8421 = vunpack.c.0.s8 %v8420
  %v8422 = vlaneseq
  %v8423 = vshrl.u32 %v8422, 7
  %v8424 = vsub.s32 %v8421, %v8423
  %v8425 = vrot.slane %v8136, %v8424
  %v8426 = vcombine.high %v8425, 0.0
  %v8427 = vcombine.low %v8005, %v8028
  %v8429 = vunpack.c.l.s4 1934713408
  %v8430 = vunpack.c.0.s8 %v8429
  %v8431 = vlaneseq
  %v8432 = vshrl.u32 %v8431, 7
  %v8433 = vsub.s32 %v8430, %v8432
  %v8434 = vrot.slane %v8427, %v8433
  %v8435 = vcombine.high %v8434, 0.0
  %v8436 = vcombine.low %v8051, %v8074
  %v8438 = vunpack.c.l.s4 1934713408
  %v8439 = vunpack.c.0.s8 %v8438
  %v8440 = vlaneseq
  %v8441 = vshrl.u32 %v8440, 7
  %v8442 = vsub.s32 %v8439, %v8441
  %v8443 = vrot.slane %v8436, %v8442
  %v8444 = vcombine.high %v8443, 0.0
  %v8445 = vcombine.low %v8097, %v8120
  %v8447 = vunpack.c.l.s4 1934713408
  %v8448 = vunpack.c.0.s8 %v8447
  %v8449 = vlaneseq
  %v8450 = vshrl.u32 %v8449, 7
  %v8451 = vsub.s32 %v8448, %v8450
  %v8452 = vrot.slane %v8445, %v8451
  %v8453 = vcombine.high %v8452, 0.0
  %v8456 = vunpack.c.l.s4 1934713408
  %v8457 = vunpack.c.0.s8 %v8456
  %v8458 = vlaneseq
  %v8459 = vshrl.u32 %v8458, 7
  %v8460 = vsub.s32 %v8457, %v8459
  %v8461 = vrot.slane %v8143, %v8460
  %v8462 = vcombine.high %v8461, 0.0
  %v8463 = vcombine.low %v8007, %v8030
  %v8465 = vunpack.c.l.s4 1934713408
  %v8466 = vunpack.c.0.s8 %v8465
  %v8467 = vlaneseq
  %v8468 = vshrl.u32 %v8467, 7
  %v8469 = vsub.s32 %v8466, %v8468
  %v8470 = vrot.slane %v8463, %v8469
  %v8471 = vcombine.low %v8053, %v8076
  %v8473 = vunpack.c.l.s4 1934713408
  %v8474 = vunpack.c.0.s8 %v8473
  %v8475 = vlaneseq
  %v8476 = vshrl.u32 %v8475, 7
  %v8477 = vsub.s32 %v8474, %v8476
  %v8478 = vrot.slane %v8471, %v8477
  %v8479 = vcombine.low %v8099, %v8122
  %v8481 = vunpack.c.l.s4 1934713408
  %v8482 = vunpack.c.0.s8 %v8481
  %v8483 = vlaneseq
  %v8484 = vshrl.u32 %v8483, 7
  %v8485 = vsub.s32 %v8482, %v8484
  %v8486 = vrot.slane %v8479, %v8485
  %v8487 = vcombine.low %v8152, %v8175
  %v8489 = vunpack.c.l.s4 1934713408
  %v8490 = vunpack.c.0.s8 %v8489
  %v8491 = vlaneseq
  %v8492 = vshrl.u32 %v8491, 7
  %v8493 = vsub.s32 %v8490, %v8492
  %v8494 = vrot.slane %v8487, %v8493
  %v8495 = vcombine.high %v8494, 0.0
  %v8496 = vcombine.low %v8198, %v8221
  %v8498 = vunpack.c.l.s4 1934713408
  %v8499 = vunpack.c.0.s8 %v8498
  %v8500 = vlaneseq
  %v8501 = vshrl.u32 %v8500, 7
  %v8502 = vsub.s32 %v8499, %v8501
  %v8503 = vrot.slane %v8496, %v8502
  %v8504 = vcombine.high %v8503, 0.0
  %v8505 = vcombine.low %v8244, %v8267
  %v8507 = vunpack.c.l.s4 1934713408
  %v8508 = vunpack.c.0.s8 %v8507
  %v8509 = vlaneseq
  %v8510 = vshrl.u32 %v8509, 7
  %v8511 = vsub.s32 %v8508, %v8510
  %v8512 = vrot.slane %v8505, %v8511
  %v8513 = vcombine.high %v8512, 0.0
  %v8516 = vunpack.c.l.s4 1934713408
  %v8517 = vunpack.c.0.s8 %v8516
  %v8518 = vlaneseq
  %v8519 = vshrl.u32 %v8518, 7
  %v8520 = vsub.s32 %v8517, %v8519
  %v8521 = vrot.slane %v8290, %v8520
  %v8522 = vcombine.high %v8521, 0.0
  %v8523 = vcombine.low %v8159, %v8182
  %v8525 = vunpack.c.l.s4 1934713408
  %v8526 = vunpack.c.0.s8 %v8525
  %v8527 = vlaneseq
  %v8528 = vshrl.u32 %v8527, 7
  %v8529 = vsub.s32 %v8526, %v8528
  %v8530 = vrot.slane %v8523, %v8529
  %v8531 = vcombine.high %v8530, 0.0
  %v8532 = vcombine.low %v8205, %v8228
  %v8534 = vunpack.c.l.s4 1934713408
  %v8535 = vunpack.c.0.s8 %v8534
  %v8536 = vlaneseq
  %v8537 = vshrl.u32 %v8536, 7
  %v8538 = vsub.s32 %v8535, %v8537
  %v8539 = vrot.slane %v8532, %v8538
  %v8540 = vcombine.high %v8539, 0.0
  %v8541 = vcombine.low %v8251, %v8274
  %v8543 = vunpack.c.l.s4 1934713408
  %v8544 = vunpack.c.0.s8 %v8543
  %v8545 = vlaneseq
  %v8546 = vshrl.u32 %v8545, 7
  %v8547 = vsub.s32 %v8544, %v8546
  %v8548 = vrot.slane %v8541, %v8547
  %v8549 = vcombine.high %v8548, 0.0
  %v8552 = vunpack.c.l.s4 1934713408
  %v8553 = vunpack.c.0.s8 %v8552
  %v8554 = vlaneseq
  %v8555 = vshrl.u32 %v8554, 7
  %v8556 = vsub.s32 %v8553, %v8555
  %v8557 = vrot.slane %v8297, %v8556
  %v8558 = vcombine.high %v8557, 0.0
  %v8559 = vcombine.low %v8166, %v8189
  %v8561 = vunpack.c.l.s4 1934713408
  %v8562 = vunpack.c.0.s8 %v8561
  %v8563 = vlaneseq
  %v8564 = vshrl.u32 %v8563, 7
  %v8565 = vsub.s32 %v8562, %v8564
  %v8566 = vrot.slane %v8559, %v8565
  %v8567 = vcombine.high %v8566, 0.0
  %v8568 = vcombine.low %v8212, %v8235
  %v8570 = vunpack.c.l.s4 1934713408
  %v8571 = vunpack.c.0.s8 %v8570
  %v8572 = vlaneseq
  %v8573 = vshrl.u32 %v8572, 7
  %v8574 = vsub.s32 %v8571, %v8573
  %v8575 = vrot.slane %v8568, %v8574
  %v8576 = vcombine.high %v8575, 0.0
  %v8577 = vcombine.low %v8258, %v8281
  %v8579 = vunpack.c.l.s4 1934713408
  %v8580 = vunpack.c.0.s8 %v8579
  %v8581 = vlaneseq
  %v8582 = vshrl.u32 %v8581, 7
  %v8583 = vsub.s32 %v8580, %v8582
  %v8584 = vrot.slane %v8577, %v8583
  %v8585 = vcombine.high %v8584, 0.0
  %v8588 = vunpack.c.l.s4 1934713408
  %v8589 = vunpack.c.0.s8 %v8588
  %v8590 = vlaneseq
  %v8591 = vshrl.u32 %v8590, 7
  %v8592 = vsub.s32 %v8589, %v8591
  %v8593 = vrot.slane %v8304, %v8592
  %v8594 = vcombine.high %v8593, 0.0
  %v8595 = vcombine.low %v8168, %v8191
  %v8597 = vunpack.c.l.s4 1934713408
  %v8598 = vunpack.c.0.s8 %v8597
  %v8599 = vlaneseq
  %v8600 = vshrl.u32 %v8599, 7
  %v8601 = vsub.s32 %v8598, %v8600
  %v8602 = vrot.slane %v8595, %v8601
  %v8603 = vcombine.low %v8214, %v8237
  %v8605 = vunpack.c.l.s4 1934713408
  %v8606 = vunpack.c.0.s8 %v8605
  %v8607 = vlaneseq
  %v8608 = vshrl.u32 %v8607, 7
  %v8609 = vsub.s32 %v8606, %v8608
  %v8610 = vrot.slane %v8603, %v8609
  %v8611 = vcombine.low %v8260, %v8283
  %v8613 = vunpack.c.l.s4 1934713408
  %v8614 = vunpack.c.0.s8 %v8613
  %v8615 = vlaneseq
  %v8616 = vshrl.u32 %v8615, 7
  %v8617 = vsub.s32 %v8614, %v8616
  %v8618 = vrot.slane %v8611, %v8617
  %v8627 = vcombine.low %v8362, %v8371
  %v8628 = vcombine.low %v8380, %v8389
  %v8630 = vunpack.c.l.s4 1983009808
  %v8631 = vunpack.c.0.s8 %v8630
  %v8632 = vlaneseq
  %v8633 = vshrl.u32 %v8632, 7
  %v8634 = vsub.s32 %v8631, %v8633
  %v8635 = vrot.slane %v8627, %v8634
  %v8637 = vunpack.c.l.s4 1983009808
  %v8638 = vunpack.c.0.s8 %v8637
  %v8639 = vlaneseq
  %v8640 = vshrl.u32 %v8639, 7
  %v8641 = vsub.s32 %v8638, %v8640
  %v8642 = vrot.slane %v8628, %v8641
  %v8643 = vcombine.low %v8635, %v8642
  %v8644 = vcombine.low %v8494, %v8503
  %v8645 = vcombine.low %v8512, %v8521
  %v8647 = vunpack.c.l.s4 1983009808
  %v8648 = vunpack.c.0.s8 %v8647
  %v8649 = vlaneseq
  %v8650 = vshrl.u32 %v8649, 7
  %v8651 = vsub.s32 %v8648, %v8650
  %v8652 = vrot.slane %v8644, %v8651
  %v8654 = vunpack.c.l.s4 1983009808
  %v8655 = vunpack.c.0.s8 %v8654
  %v8656 = vlaneseq
  %v8657 = vshrl.u32 %v8656, 7
  %v8658 = vsub.s32 %v8655, %v8657
  %v8659 = vrot.slane %v8645, %v8658
  %v8660 = vcombine.low %v8652, %v8659
  %v8671 = vcombine.low %v8363, %v8372
  %v8672 = vcombine.low %v8381, %v8390
  %v8674 = vunpack.c.l.s4 1983009808
  %v8675 = vunpack.c.0.s8 %v8674
  %v8676 = vlaneseq
  %v8677 = vshrl.u32 %v8676, 7
  %v8678 = vsub.s32 %v8675, %v8677
  %v8679 = vrot.slane %v8671, %v8678
  %v8681 = vunpack.c.l.s4 1983009808
  %v8682 = vunpack.c.0.s8 %v8681
  %v8683 = vlaneseq
  %v8684 = vshrl.u32 %v8683, 7
  %v8685 = vsub.s32 %v8682, %v8684
  %v8686 = vrot.slane %v8672, %v8685
  %v8687 = vcombine.low %v8679, %v8686
  %v8688 = vcombine.low %v8495, %v8504
  %v8689 = vcombine.low %v8513, %v8522
  %v8691 = vunpack.c.l.s4 1983009808
  %v8692 = vunpack.c.0.s8 %v8691
  %v8693 = vlaneseq
  %v8694 = vshrl.u32 %v8693, 7
  %v8695 = vsub.s32 %v8692, %v8694
  %v8696 = vrot.slane %v8688, %v8695
  %v8698 = vunpack.c.l.s4 1983009808
  %v8699 = vunpack.c.0.s8 %v8698
  %v8700 = vlaneseq
  %v8701 = vshrl.u32 %v8700, 7
  %v8702 = vsub.s32 %v8699, %v8701
  %v8703 = vrot.slane %v8689, %v8702
  %v8704 = vcombine.low %v8696, %v8703
  %8705 = vrot.lane.b32.xlu0 %v8687, 64
  %v8706 = vpop.permute.xlu0 %8705
  %8707 = vrot.lane.b32.xlu0 %v8704, 64
  %v8708 = vpop.permute.xlu0 %8707
  %v8719 = vcombine.low %v8398, %v8407
  %v8720 = vcombine.low %v8416, %v8425
  %v8722 = vunpack.c.l.s4 1983009808
  %v8723 = vunpack.c.0.s8 %v8722
  %v8724 = vlaneseq
  %v8725 = vshrl.u32 %v8724, 7
  %v8726 = vsub.s32 %v8723, %v8725
  %v8727 = vrot.slane %v8719, %v8726
  %v8729 = vunpack.c.l.s4 1983009808
  %v8730 = vunpack.c.0.s8 %v8729
  %v8731 = vlaneseq
  %v8732 = vshrl.u32 %v8731, 7
  %v8733 = vsub.s32 %v8730, %v8732
  %v8734 = vrot.slane %v8720, %v8733
  %v8735 = vcombine.low %v8727, %v8734
  %v8736 = vcombine.low %v8530, %v8539
  %v8737 = vcombine.low %v8548, %v8557
  %v8739 = vunpack.c.l.s4 1983009808
  %v8740 = vunpack.c.0.s8 %v8739
  %v8741 = vlaneseq
  %v8742 = vshrl.u32 %v8741, 7
  %v8743 = vsub.s32 %v8740, %v8742
  %v8744 = vrot.slane %v8736, %v8743
  %v8746 = vunpack.c.l.s4 1983009808
  %v8747 = vunpack.c.0.s8 %v8746
  %v8748 = vlaneseq
  %v8749 = vshrl.u32 %v8748, 7
  %v8750 = vsub.s32 %v8747, %v8749
  %v8751 = vrot.slane %v8737, %v8750
  %v8752 = vcombine.low %v8744, %v8751
  %v8763 = vcombine.low %v8399, %v8408
  %v8764 = vcombine.low %v8417, %v8426
  %v8766 = vunpack.c.l.s4 1983009808
  %v8767 = vunpack.c.0.s8 %v8766
  %v8768 = vlaneseq
  %v8769 = vshrl.u32 %v8768, 7
  %v8770 = vsub.s32 %v8767, %v8769
  %v8771 = vrot.slane %v8763, %v8770
  %v8773 = vunpack.c.l.s4 1983009808
  %v8774 = vunpack.c.0.s8 %v8773
  %v8775 = vlaneseq
  %v8776 = vshrl.u32 %v8775, 7
  %v8777 = vsub.s32 %v8774, %v8776
  %v8778 = vrot.slane %v8764, %v8777
  %v8779 = vcombine.low %v8771, %v8778
  %v8780 = vcombine.low %v8531, %v8540
  %v8781 = vcombine.low %v8549, %v8558
  %v8783 = vunpack.c.l.s4 1983009808
  %v8784 = vunpack.c.0.s8 %v8783
  %v8785 = vlaneseq
  %v8786 = vshrl.u32 %v8785, 7
  %v8787 = vsub.s32 %v8784, %v8786
  %v8788 = vrot.slane %v8780, %v8787
  %v8790 = vunpack.c.l.s4 1983009808
  %v8791 = vunpack.c.0.s8 %v8790
  %v8792 = vlaneseq
  %v8793 = vshrl.u32 %v8792, 7
  %v8794 = vsub.s32 %v8791, %v8793
  %v8795 = vrot.slane %v8781, %v8794
  %v8796 = vcombine.low %v8788, %v8795
  %8797 = vrot.lane.b32.xlu0 %v8779, 64
  %v8798 = vpop.permute.xlu0 %8797
  %8799 = vrot.lane.b32.xlu0 %v8796, 64
  %v8800 = vpop.permute.xlu0 %8799
  %v8811 = vcombine.low %v8434, %v8443
  %v8812 = vcombine.low %v8452, %v8461
  %v8814 = vunpack.c.l.s4 1983009808
  %v8815 = vunpack.c.0.s8 %v8814
  %v8816 = vlaneseq
  %v8817 = vshrl.u32 %v8816, 7
  %v8818 = vsub.s32 %v8815, %v8817
  %v8819 = vrot.slane %v8811, %v8818
  %v8821 = vunpack.c.l.s4 1983009808
  %v8822 = vunpack.c.0.s8 %v8821
  %v8823 = vlaneseq
  %v8824 = vshrl.u32 %v8823, 7
  %v8825 = vsub.s32 %v8822, %v8824
  %v8826 = vrot.slane %v8812, %v8825
  %v8827 = vcombine.low %v8819, %v8826
  %v8828 = vcombine.low %v8566, %v8575
  %v8829 = vcombine.low %v8584, %v8593
  %v8831 = vunpack.c.l.s4 1983009808
  %v8832 = vunpack.c.0.s8 %v8831
  %v8833 = vlaneseq
  %v8834 = vshrl.u32 %v8833, 7
  %v8835 = vsub.s32 %v8832, %v8834
  %v8836 = vrot.slane %v8828, %v8835
  %v8838 = vunpack.c.l.s4 1983009808
  %v8839 = vunpack.c.0.s8 %v8838
  %v8840 = vlaneseq
  %v8841 = vshrl.u32 %v8840, 7
  %v8842 = vsub.s32 %v8839, %v8841
  %v8843 = vrot.slane %v8829, %v8842
  %v8844 = vcombine.low %v8836, %v8843
  %v8855 = vcombine.low %v8435, %v8444
  %v8856 = vcombine.low %v8453, %v8462
  %v8858 = vunpack.c.l.s4 1983009808
  %v8859 = vunpack.c.0.s8 %v8858
  %v8860 = vlaneseq
  %v8861 = vshrl.u32 %v8860, 7
  %v8862 = vsub.s32 %v8859, %v8861
  %v8863 = vrot.slane %v8855, %v8862
  %v8865 = vunpack.c.l.s4 1983009808
  %v8866 = vunpack.c.0.s8 %v8865
  %v8867 = vlaneseq
  %v8868 = vshrl.u32 %v8867, 7
  %v8869 = vsub.s32 %v8866, %v8868
  %v8870 = vrot.slane %v8856, %v8869
  %v8871 = vcombine.low %v8863, %v8870
  %v8872 = vcombine.low %v8567, %v8576
  %v8873 = vcombine.low %v8585, %v8594
  %v8875 = vunpack.c.l.s4 1983009808
  %v8876 = vunpack.c.0.s8 %v8875
  %v8877 = vlaneseq
  %v8878 = vshrl.u32 %v8877, 7
  %v8879 = vsub.s32 %v8876, %v8878
  %v8880 = vrot.slane %v8872, %v8879
  %v8882 = vunpack.c.l.s4 1983009808
  %v8883 = vunpack.c.0.s8 %v8882
  %v8884 = vlaneseq
  %v8885 = vshrl.u32 %v8884, 7
  %v8886 = vsub.s32 %v8883, %v8885
  %v8887 = vrot.slane %v8873, %v8886
  %v8888 = vcombine.low %v8880, %v8887
  %8889 = vrot.lane.b32.xlu0 %v8871, 64
  %v8890 = vpop.permute.xlu0 %8889
  %8891 = vrot.lane.b32.xlu0 %v8888, 64
  %v8892 = vpop.permute.xlu0 %8891
  %v8901 = vcombine.low %v8470, %v8478
  %v8902 = vcombine.low %v8486, %v8145
  %v8904 = vunpack.c.l.s4 1983009808
  %v8905 = vunpack.c.0.s8 %v8904
  %v8906 = vlaneseq
  %v8907 = vshrl.u32 %v8906, 7
  %v8908 = vsub.s32 %v8905, %v8907
  %v8909 = vrot.slane %v8901, %v8908
  %v8911 = vunpack.c.l.s4 1983009808
  %v8912 = vunpack.c.0.s8 %v8911
  %v8913 = vlaneseq
  %v8914 = vshrl.u32 %v8913, 7
  %v8915 = vsub.s32 %v8912, %v8914
  %v8916 = vrot.slane %v8902, %v8915
  %v8917 = vcombine.low %v8909, %v8916
  %v8918 = vcombine.low %v8602, %v8610
  %v8919 = vcombine.low %v8618, %v8306
  %v8921 = vunpack.c.l.s4 1983009808
  %v8922 = vunpack.c.0.s8 %v8921
  %v8923 = vlaneseq
  %v8924 = vshrl.u32 %v8923, 7
  %v8925 = vsub.s32 %v8922, %v8924
  %v8926 = vrot.slane %v8918, %v8925
  %v8928 = vunpack.c.l.s4 1983009808
  %v8929 = vunpack.c.0.s8 %v8928
  %v8930 = vlaneseq
  %v8931 = vshrl.u32 %v8930, 7
  %v8932 = vsub.s32 %v8929, %v8931
  %v8933 = vrot.slane %v8919, %v8932
  %v8934 = vcombine.low %v8926, %v8933
  %v8937 = vsel %vm1662, %v8643, %v8706
  %v8938 = vsel %vm1662, %v8660, %v8708
  %v8939 = vsel %vm1662, %v8735, %v8798
  %v8940 = vsel %vm1662, %v8752, %v8800
  %v8941 = vsel %vm1662, %v8827, %v8890
  %v8942 = vsel %vm1662, %v8844, %v8892
  %8943 = vst [vmem:[%s5] sm:$0x7f] %v8937
  %8944 = vst [vmem:[%s5 + $0x8] sm:$0x7f] %v8939
  %8945 = vst [vmem:[%s5 + $0x10] sm:$0x7f] %v8941
  %vm8946 = vcmask 522240
  %8947 = vst.msk [vmem:[%s5 + $0x18] sm:$0x7f] %vm8946, %v8917
  %8948 = vst [vmem:[%s5 + $0x20] sm:$0x7f] %v8938
  %8949 = vst [vmem:[%s5 + $0x28] sm:$0x7f] %v8940
  %8950 = vst [vmem:[%s5 + $0x30] sm:$0x7f] %v8942
  %8951 = vst.msk [vmem:[%s5 + $0x38] sm:$0x7f] %vm8946, %v8934
  // Predicated region
  $region22: #{tpu_custom_call.1} parent=0 // pred_check
    _
  $region23: #{tpu_custom_call.1} parent=0 // pred_check_branch
    %8953 = sbr.rel (0) target = $region25
  $region24: #{tpu_custom_call.1} parent=0 // pred_region
    _
  $region25: #{tpu_custom_call.1} parent=0 // pred_fallthru
    _
  // Predicated region
  $region26: #{tpu_custom_call.1} parent=0 // pred_check
    _
  $region27: #{tpu_custom_call.1} parent=0 // pred_check_branch
    %8955 = sbr.rel (0) target = $region29
  $region28: #{tpu_custom_call.1} parent=0 // pred_region
    _
  $region29: #{tpu_custom_call.1} parent=0 // pred_fallthru
    _

</llo_original>
